<compile_context>
chip_gen: v5e
topology: v5e:2x2
jax: 0.10.0
libtpu: 0.0.40
codegen_flags: <defaults>
</compile_context>

<pallas_src>
import jax
import jax.numpy as jnp
from jax import lax
from jax.experimental import pallas as pl
from jax.experimental.pallas import tpu as pltpu


# ----------------------------------------------------------------------------
# Synthetic config (small shapes consistent with the module's forward)
# ----------------------------------------------------------------------------
B = 2          # batch
T = 16         # video sequence length
L = 8          # token sequence length (kernel assumes T >= L)
DV_IN = 32     # raw video feature dim
DT_IN = 32     # token embedding dim
HV = 16        # video LSTM hidden (unidirectional)  -> output_video dim
HQ = 16        # query LSTM hidden (unidirectional)  -> filter_start dim
# FUSION == 'CAT'  => fused dim = HQ + HV = 32
H_RNN = 16     # ACRM_CLASSIFICATION.INPUT_SIZE_RNN (rnn_localization hidden)
H_CLS = 32     # ACRM_CLASSIFICATION.HIDDEN_SIZE (head MLP hidden)
# ACRM_CLASSIFICATION.OUTPUT_SIZE = 1, LOCALIZATION.BIDIRECTIONAL = False


# ----------------------------------------------------------------------------
# Fused Pallas kernel: encoders + fusion + loc LSTM + heads + masked softmax
# ----------------------------------------------------------------------------
def _acrm_fused_kernel(
    vfeat_ref,     # (T, B, DV_IN)  time-major video features
    tokens_ref,    # (L, B, DT_IN)  time-major token features
    vlen_col_ref,  # (B, 1) int32   video lengths (column form)
    vlen_row_ref,  # (1, B) int32   video lengths (row form, for the mask)
    tlen_ref,      # (B, 1) int32   token lengths, clamped to [1, L]
    vid_wih_ref,   # (DV_IN, 4*HV)
    vid_whh_ref,   # (HV, 4*HV)     gate order i,f,g,o along the lane axis
    vid_b_ref,     # (1, 4*HV)
    qry_wih_ref,   # (DT_IN, 4*HQ)
    qry_whh_ref,   # (HQ, 4*HQ)
    qry_b_ref,     # (1, 4*HQ)
    loc_wq_ref,    # (HQ, 4*H_RNN)  query rows of the CAT-fused input proj
    loc_wv_ref,    # (HV, 4*H_RNN)  video rows of the CAT-fused input proj
    loc_whh_ref,   # (H_RNN, 4*H_RNN)
    loc_b_ref,     # (1, 4*H_RNN)
    w1_ref,        # (H_RNN, 3*H_CLS)  stacked head first layer
    b1_ref,        # (1, 3*H_CLS)
    w2_ref,        # (3*H_CLS, 3)      block-diagonal head second layer
    b2_ref,        # (1, 3)
    preds_ref,     # out (B, T, 3)     masked-softmax scores (start/end/inter)
    atten_ref,     # out (T, B)        output_video[:, :, 0], time-major
    xp_vid_sc,     # scratch (T, B, 4*HV)   lane-dense input projection
    xp_qry_sc,     # scratch (L, B, 4*HQ)
    y_vid_sc,      # scratch (T, B, HV)
    xp_loc_sc,     # scratch (T, B, 4*H_RNN)
    y_loc_sc,      # scratch (T, B, H_RNN)
):
    f32 = jnp.float32
    Tn, Bn, _ = vfeat_ref.shape
    Ln = tokens_ref.shape[0]
    Hv = vid_whh_ref.shape[0]
    Hq = qry_whh_ref.shape[0]
    Hr = loc_whh_ref.shape[0]

    # ---- hoisted input projections: one wide matmul per LSTM, biases folded
    xv = vfeat_ref[...].reshape(Tn * Bn, -1)
    xp_vid_sc[...] = (jnp.dot(xv, vid_wih_ref[...], preferred_element_type=f32)
                      + vid_b_ref[...]).reshape(Tn, Bn, 4 * Hv)
    xq = tokens_ref[...].reshape(Ln * Bn, -1)
    xp_qry_sc[...] = (jnp.dot(xq, qry_wih_ref[...], preferred_element_type=f32)
                      + qry_b_ref[...]).reshape(Ln, Bn, 4 * Hq)

    # ---- loop invariants built ONCE (weights, gate masks, length columns) --
    def g_block_mask(h):
        lane = lax.broadcasted_iota(jnp.int32, (Bn, 4 * h), 1)
        return (lane >= 2 * h) & (lane < 3 * h)      # tanh block (gate 'g')

    w_v = vid_whh_ref[...]
    w_q = qry_whh_ref[...]
    w_l = loc_whh_ref[...]
    gm_v = g_block_mask(Hv)
    gm_q = g_block_mask(Hq)
    gm_l = g_block_mask(Hr)
    vl = vlen_col_ref[...]            # (B, 1) int32
    t_last = tlen_ref[...] - 1        # (B, 1) int32

    def lstm_step(z, c, gmask, h):
        # One fused cell update from the pre-activation z = x_proj + h @ W_hh.
        a = jnp.where(gmask, jnp.tanh(z), jax.nn.sigmoid(z))   # 2 EUP passes
        i = a[:, 0 * h:1 * h]
        f = a[:, 1 * h:2 * h]
        g = a[:, 2 * h:3 * h]
        o = a[:, 3 * h:4 * h]
        c_new = f * c + i * g
        return o * jnp.tanh(c_new), c_new

    def zeros(h):
        return jnp.zeros((Bn, h), f32)

    # ---- video + query encoder LSTMs interleaved in ONE serial loop -------
    def enc_step(t, carry):
        hv, cv, hq, cq, last = carry
        # video step (always real; kernel assumes T >= L)
        zv = xp_vid_sc[t] + jnp.dot(hv, w_v, preferred_element_type=f32)
        hv, cv = lstm_step(zv, cv, gm_v, Hv)
        # pad_packed fidelity: zero padded OUTPUT rows, keep the carry intact
        y_vid_sc[t] = jnp.where(t < vl, hv, 0.0)
        # query step (real only for t < L; predicated, clamped scratch read)
        tq = jnp.minimum(t, Ln - 1)
        zq = xp_qry_sc[tq] + jnp.dot(hq, w_q, preferred_element_type=f32)
        hq_n, cq_n = lstm_step(zq, cq, gm_q, Hq)
        last = jnp.where(t == t_last, hq_n, last)
        run_q = t < Ln
        hq = jnp.where(run_q, hq_n, hq)
        cq = jnp.where(run_q, cq_n, cq)
        return hv, cv, hq, cq, last

    init = (zeros(Hv), zeros(Hv), zeros(Hq), zeros(Hq), zeros(Hq))
    _, _, _, _, filter_start = lax.fori_loop(0, Tn, enc_step, init, unroll=True)

    # ---- CAT fusion folded into the localization-LSTM input projection ----
    yv_flat = y_vid_sc[...].reshape(Tn * Bn, Hv)
    xq_part = (jnp.dot(filter_start, loc_wq_ref[...], preferred_element_type=f32)
               + loc_b_ref[...])                                    # (B, 4Hr)
    xv_part = jnp.dot(yv_flat, loc_wv_ref[...], preferred_element_type=f32)
    xp_loc_sc[...] = xv_part.reshape(Tn, Bn, 4 * Hr) + xq_part[None, :, :]

    # TODO(synk): feed_forward_rnn packs by videoFeat_lengths; here padded
    #             steps are run and masked downstream (valid steps identical).
    def loc_step(t, carry):
        hl, cl = carry
        z = xp_loc_sc[t] + jnp.dot(hl, w_l, preferred_element_type=f32)
        hl, cl = lstm_step(z, cl, gm_l, Hr)
        y_loc_sc[t] = hl
        return hl, cl

    lax.fori_loop(0, Tn, loc_step, (zeros(Hr), zeros(Hr)), unroll=True)
    # dropout_layer: eval mode -> identity.

    # ---- 3 heads (start/end/inter) + masked softmax over time -------------
    # Per-batch epilogue (B is tiny & static): every op works on small dense
    # (T, .) tiles; no in-kernel transposes, no lane-sparse (T,B,3) softmax.
    w1 = w1_ref[...]
    b1 = b1_ref[...]
    w2 = w2_ref[...]
    b2 = b2_ref[...]
    t_iota = lax.broadcasted_iota(jnp.int32, (Tn, Bn), 0)
    m_all = (t_iota < vlen_row_ref[...]).astype(f32)                # (T, B)
    y_loc_all = y_loc_sc[...]                                       # (T, B, Hr)

    for b in range(Bn):
        yb = y_loc_all[:, b, :]                                     # (T, Hr)
        zb = jnp.tanh(jnp.dot(yb, w1, preferred_element_type=f32) + b1)
        sb = jnp.dot(zb, w2, preferred_element_type=f32) + b2       # (T, 3)
        mb = m_all[:, b:b + 1]                                      # (T, 1)
        v = sb * mb
        v = v - jnp.max(v, axis=0, keepdims=True)
        e = jnp.exp(v)
        sm = e / jnp.sum(e, axis=0, keepdims=True)
        sm = sm * mb
        sm = sm / (jnp.sum(sm, axis=0, keepdims=True) + 1e-13) + 1e-13
        preds_ref[b] = sm                                           # (T, 3)

    # ---- attention = output_video[:, :, 0] (time-major; wrapper transposes)
    atten_ref[...] = y_vid_sc[...][:, :, 0]


def acrm_fused_forward(p, videoFeat, videoFeat_lengths, tokens, tokens_lengths):
    """Runs the whole Localization_ACRM forward inside one Pallas kernel."""
    Bn, Tn, _ = videoFeat.shape
    Ln = tokens.shape[1]
    assert Tn >= Ln, "encoder interleave assumes video length >= token length"
    # TODO(synk): for Ln > Tn, predicate the video side of the interleave too.

    vfeat_tm = jnp.transpose(videoFeat, (1, 0, 2))             # (T, B, DV)
    tokens_tm = jnp.transpose(tokens, (1, 0, 2))               # (L, B, DT)
    vlen = videoFeat_lengths.astype(jnp.int32)
    vlen_col = vlen.reshape(Bn, 1)
    vlen_row = vlen.reshape(1, Bn)
    tlen_col = jnp.clip(tokens_lengths.astype(jnp.int32), 1, Ln).reshape(Bn, 1)

    # CAT order is [query, video] (matches fusion_layer 'CAT')
    loc_wq = p['loc_w_ih'][:HQ, :]
    loc_wv = p['loc_w_ih'][HQ:, :]
    # 3 heads stacked into one wide first layer + block-diagonal second layer
    w1 = p['head_w1'].transpose(1, 0, 2).reshape(H_RNN, 3 * H_CLS)
    b1 = p['head_b1'].reshape(1, 3 * H_CLS)
    w2 = (p['head_w2'][:, :, 0][:, :, None]
          * jnp.eye(3, dtype=jnp.float32)[:, None, :]).reshape(3 * H_CLS, 3)
    b2 = p['head_b2'].reshape(1, 3)

    preds_bt, atten_tm = pl.pallas_call(
        _acrm_fused_kernel,
        out_shape=(jax.ShapeDtypeStruct((Bn, Tn, 3), jnp.float32),
                   jax.ShapeDtypeStruct((Tn, Bn), jnp.float32)),
        scratch_shapes=[
            pltpu.VMEM((Tn, Bn, 4 * HV), jnp.float32),      # video input proj
            pltpu.VMEM((Ln, Bn, 4 * HQ), jnp.float32),      # query input proj
            pltpu.VMEM((Tn, Bn, HV), jnp.float32),          # video LSTM output
            pltpu.VMEM((Tn, Bn, 4 * H_RNN), jnp.float32),   # loc input proj
            pltpu.VMEM((Tn, Bn, H_RNN), jnp.float32),       # loc LSTM output
        ],
    )(vfeat_tm, tokens_tm, vlen_col, vlen_row, tlen_col,
      p['vid_w_ih'], p['vid_w_hh'], p['vid_b'],
      p['qry_w_ih'], p['qry_w_hh'], p['qry_b'],
      loc_wq, loc_wv, p['loc_w_hh'], p['loc_b'],
      w1, b1, w2, b2)

    preds = jnp.transpose(preds_bt, (2, 0, 1))     # (3, B, T): start/end/inter
    attention = jnp.transpose(atten_tm)            # (B, T)
    return preds, attention


# ----------------------------------------------------------------------------
# Plain-JAX glue: losses and parameter init
# ----------------------------------------------------------------------------
def max_boundary(p, gt):
    ind = -jnp.log(p[jnp.arange(p.shape[0]), gt])
    return jnp.mean(ind), ind


def max_inter(p, gt_s, gt_e):
    Tn = p.shape[1]
    pos = jnp.arange(Tn)[None, :]
    sel = ((pos >= gt_s[:, None]) & (pos <= gt_e[:, None])).astype(jnp.float32)
    denom = jnp.maximum(gt_e - gt_s, 1).astype(jnp.float32)
    ind = -jnp.sum(jnp.log(p) * sel, axis=1) / denom
    return jnp.mean(ind), ind


def init_params(key):
    ks = jax.random.split(key, 10)
    s = 0.1
    n = lambda k, shp: s * jax.random.normal(k, shp, jnp.float32)
    return {
        # ACRM_video stand-in (single-layer LSTM); gate order i,f,g,o
        'vid_w_ih': n(ks[0], (DV_IN, 4 * HV)),
        'vid_w_hh': n(ks[1], (HV, 4 * HV)),
        'vid_b': jnp.zeros((1, 4 * HV), jnp.float32),
        # ACRM_query stand-in (single-layer LSTM, last valid state)
        'qry_w_ih': n(ks[2], (DT_IN, 4 * HQ)),
        'qry_w_hh': n(ks[3], (HQ, 4 * HQ)),
        'qry_b': jnp.zeros((1, 4 * HQ), jnp.float32),
        # rnn_localization LSTM (input = CAT[query(HQ), video(HV)])
        'loc_w_ih': n(ks[4], (HQ + HV, 4 * H_RNN)),
        'loc_w_hh': n(ks[5], (H_RNN, 4 * H_RNN)),
        'loc_b': jnp.zeros((1, 4 * H_RNN), jnp.float32),
        # starting / ending / intering heads, stacked on the leading axis
        'head_w1': n(ks[6], (3, H_RNN, H_CLS)),
        'head_b1': n(ks[7], (3, 1, H_CLS)),
        'head_w2': n(ks[8], (3, H_CLS, 1)),
        'head_b2': n(ks[9], (3, 1, 1)),
    }


@jax.jit
def localization_acrm_forward(p, videoFeat, videoFeat_lengths, tokens,
                              tokens_lengths, start, end, localiz,
                              frame_start, frame_end):
    preds, attention = acrm_fused_forward(p, videoFeat, videoFeat_lengths,
                                          tokens, tokens_lengths)
    pred_start, pred_end, pred_inter = preds[0], preds[1], preds[2]

    start_loss, ind_s = max_boundary(pred_start, frame_start)
    end_loss, ind_e = max_boundary(pred_end, frame_end)
    inter_loss, ind_i = max_inter(pred_inter, frame_start, frame_end)
    individual_loss = ind_s + ind_e + ind_i
    atten_loss = jnp.zeros((), jnp.int32)
    total_loss = start_loss + end_loss + 1 * inter_loss
    return total_loss, individual_loss, pred_start, pred_end, attention, atten_loss


if __name__ == "__main__":
    key = jax.random.PRNGKey(0)
    k_p, k_v, k_t = jax.random.split(key, 3)
    params = init_params(k_p)

    videoFeat = jax.random.normal(k_v, (B, T, DV_IN), jnp.float32)
    videoFeat_lengths = jnp.array([T, T - 4], jnp.int32)
    tokens = jax.random.normal(k_t, (B, L, DT_IN), jnp.float32)
    tokens_lengths = jnp.array([L, L - 3], jnp.int32)
    start = jnp.zeros((B, T), jnp.float32)      # unused by forward (signature parity)
    end = jnp.zeros((B, T), jnp.float32)        # unused
    localiz = jnp.zeros((B, T), jnp.float32)    # unused
    frame_start = jnp.array([2, 3], jnp.int32)
    frame_end = jnp.array([10, 7], jnp.int32)

    outs = localization_acrm_forward(params, videoFeat, videoFeat_lengths,
                                     tokens, tokens_lengths, start, end,
                                     localiz, frame_start, frame_end)
    jax.block_until_ready(outs)
    total_loss, individual_loss, pred_start, pred_end, attention, atten_loss = outs
    assert pred_start.shape == (B, T) and pred_end.shape == (B, T)
    assert attention.shape == (B, T) and individual_loss.shape == (B,)
    assert bool(jnp.isfinite(total_loss))
    assert bool(jnp.all(jnp.isfinite(pred_start))) and bool(jnp.all(jnp.isfinite(pred_end)))
    # probabilities over valid timesteps should be ~1 after masked softmax
    assert bool(jnp.all(jnp.abs(jnp.sum(pred_start, axis=1) - 1.0) < 1e-3))
    print("KERNEL_OK")
</pallas_src>

<mosaic_0001>
module attributes {stable_mosaic.version = 11 : i64} {
  func.func @_acrm_fused_kernel(%arg0: memref<16x2x32xf32, #tpu.memory_space<vmem>>, %arg1: memref<8x2x32xf32, #tpu.memory_space<vmem>>, %arg2: memref<2x1xi32, #tpu.memory_space<vmem>>, %arg3: memref<1x2xi32, #tpu.memory_space<vmem>>, %arg4: memref<2x1xi32, #tpu.memory_space<vmem>>, %arg5: memref<32x64xf32, #tpu.memory_space<vmem>>, %arg6: memref<16x64xf32, #tpu.memory_space<vmem>>, %arg7: memref<1x64xf32, #tpu.memory_space<vmem>>, %arg8: memref<32x64xf32, #tpu.memory_space<vmem>>, %arg9: memref<16x64xf32, #tpu.memory_space<vmem>>, %arg10: memref<1x64xf32, #tpu.memory_space<vmem>>, %arg11: memref<16x64xf32, #tpu.memory_space<vmem>>, %arg12: memref<16x64xf32, #tpu.memory_space<vmem>>, %arg13: memref<16x64xf32, #tpu.memory_space<vmem>>, %arg14: memref<1x64xf32, #tpu.memory_space<vmem>>, %arg15: memref<16x96xf32, #tpu.memory_space<vmem>>, %arg16: memref<1x96xf32, #tpu.memory_space<vmem>>, %arg17: memref<96x3xf32, #tpu.memory_space<vmem>>, %arg18: memref<1x3xf32, #tpu.memory_space<vmem>>, %arg19: memref<2x16x3xf32, #tpu.memory_space<vmem>>, %arg20: memref<16x2xf32, #tpu.memory_space<vmem>>, %arg21: memref<16x2x64xf32, #tpu.memory_space<vmem>>, %arg22: memref<8x2x64xf32, #tpu.memory_space<vmem>>, %arg23: memref<16x2x16xf32, #tpu.memory_space<vmem>>, %arg24: memref<16x2x64xf32, #tpu.memory_space<vmem>>, %arg25: memref<16x2x16xf32, #tpu.memory_space<vmem>>) attributes {dimension_semantics = [], scalar_prefetch = 0 : i64, scratch_operands = 5 : i64, tpu.core_type = #tpu.core_type<tc>} {
    %c0 = arith.constant 0 : index
    %c0_0 = arith.constant 0 : index
    %c0_1 = arith.constant 0 : index
    %0 = vector.load %arg0[%c0, %c0_0, %c0_1] : memref<16x2x32xf32, #tpu.memory_space<vmem>>, vector<16x2x32xf32>
    %1 = vector.shape_cast %0 : vector<16x2x32xf32> to vector<32x32xf32>
    %c0_2 = arith.constant 0 : index
    %c0_3 = arith.constant 0 : index
    %2 = vector.load %arg5[%c0_2, %c0_3] : memref<32x64xf32, #tpu.memory_space<vmem>>, vector<32x64xf32>
    %cst = arith.constant dense<0.000000e+00> : vector<32x64xf32>
    %3 = tpu.matmul %1, %2, %cst {dimension_numbers = #tpu.dot_dimension_numbers<[1], [0], [0], [1], [0, 0, 1, 1], [], []>} : vector<32x32xf32>, vector<32x64xf32>, vector<32x64xf32> -> vector<32x64xf32>
    %c0_4 = arith.constant 0 : index
    %c0_5 = arith.constant 0 : index
    %4 = vector.load %arg7[%c0_4, %c0_5] : memref<1x64xf32, #tpu.memory_space<vmem>>, vector<1x64xf32>
    %5 = vector.broadcast %4 : vector<1x64xf32> to vector<32x64xf32>
    %6 = arith.addf %3, %5 : vector<32x64xf32>
    %7 = vector.shape_cast %6 : vector<32x64xf32> to vector<16x2x64xf32>
    %c0_6 = arith.constant 0 : index
    %c0_7 = arith.constant 0 : index
    %c0_8 = arith.constant 0 : index
    %8 = vector.load %arg21[%c0_6, %c0_7, %c0_8] : memref<16x2x64xf32, #tpu.memory_space<vmem>>, vector<16x2x64xf32>
    tpu.vector_store %arg21[%c0_6, %c0_7, %c0_8], %7 {strides = array<i32>} : memref<16x2x64xf32, #tpu.memory_space<vmem>>, vector<16x2x64xf32>,
    %c0_9 = arith.constant 0 : index
    %c0_10 = arith.constant 0 : index
    %c0_11 = arith.constant 0 : index
    %9 = vector.load %arg1[%c0_9, %c0_10, %c0_11] : memref<8x2x32xf32, #tpu.memory_space<vmem>>, vector<8x2x32xf32>
    %10 = vector.shape_cast %9 : vector<8x2x32xf32> to vector<16x32xf32>
    %c0_12 = arith.constant 0 : index
    %c0_13 = arith.constant 0 : index
    %11 = vector.load %arg8[%c0_12, %c0_13] : memref<32x64xf32, #tpu.memory_space<vmem>>, vector<32x64xf32>
    %cst_14 = arith.constant dense<0.000000e+00> : vector<16x64xf32>
    %12 = tpu.matmul %10, %11, %cst_14 {dimension_numbers = #tpu.dot_dimension_numbers<[1], [0], [0], [1], [0, 0, 1, 1], [], []>} : vector<16x32xf32>, vector<32x64xf32>, vector<16x64xf32> -> vector<16x64xf32>
    %c0_15 = arith.constant 0 : index
    %c0_16 = arith.constant 0 : index
    %13 = vector.load %arg10[%c0_15, %c0_16] : memref<1x64xf32, #tpu.memory_space<vmem>>, vector<1x64xf32>
    %14 = vector.broadcast %13 : vector<1x64xf32> to vector<16x64xf32>
    %15 = arith.addf %12, %14 : vector<16x64xf32>
    %16 = vector.shape_cast %15 : vector<16x64xf32> to vector<8x2x64xf32>
    %c0_17 = arith.constant 0 : index
    %c0_18 = arith.constant 0 : index
    %c0_19 = arith.constant 0 : index
    %17 = vector.load %arg22[%c0_17, %c0_18, %c0_19] : memref<8x2x64xf32, #tpu.memory_space<vmem>>, vector<8x2x64xf32>
    tpu.vector_store %arg22[%c0_17, %c0_18, %c0_19], %16 {strides = array<i32>} : memref<8x2x64xf32, #tpu.memory_space<vmem>>, vector<8x2x64xf32>,
    %c0_20 = arith.constant 0 : index
    %c0_21 = arith.constant 0 : index
    %18 = vector.load %arg6[%c0_20, %c0_21] : memref<16x64xf32, #tpu.memory_space<vmem>>, vector<16x64xf32>
    %c0_22 = arith.constant 0 : index
    %c0_23 = arith.constant 0 : index
    %19 = vector.load %arg9[%c0_22, %c0_23] : memref<16x64xf32, #tpu.memory_space<vmem>>, vector<16x64xf32>
    %c0_24 = arith.constant 0 : index
    %c0_25 = arith.constant 0 : index
    %20 = vector.load %arg13[%c0_24, %c0_25] : memref<16x64xf32, #tpu.memory_space<vmem>>, vector<16x64xf32>
    %21 = tpu.iota {dimensions = array<i32: 1>} : vector<2x64xi32>
    %c32_i32 = arith.constant 32 : i32
    %22 = vector.broadcast %c32_i32 : i32 to vector<2x64xi32>
    %23 = arith.cmpi sge, %21, %22 : vector<2x64xi32>
    %c48_i32 = arith.constant 48 : i32
    %24 = vector.broadcast %c48_i32 : i32 to vector<2x64xi32>
    %25 = arith.cmpi slt, %21, %24 : vector<2x64xi32>
    %26 = arith.andi %23, %25 : vector<2x64xi1>
    %27 = tpu.iota {dimensions = array<i32: 1>} : vector<2x64xi32>
    %c32_i32_26 = arith.constant 32 : i32
    %28 = vector.broadcast %c32_i32_26 : i32 to vector<2x64xi32>
    %29 = arith.cmpi sge, %27, %28 : vector<2x64xi32>
    %c48_i32_27 = arith.constant 48 : i32
    %30 = vector.broadcast %c48_i32_27 : i32 to vector<2x64xi32>
    %31 = arith.cmpi slt, %27, %30 : vector<2x64xi32>
    %32 = arith.andi %29, %31 : vector<2x64xi1>
    %33 = tpu.iota {dimensions = array<i32: 1>} : vector<2x64xi32>
    %c32_i32_28 = arith.constant 32 : i32
    %34 = vector.broadcast %c32_i32_28 : i32 to vector<2x64xi32>
    %35 = arith.cmpi sge, %33, %34 : vector<2x64xi32>
    %c48_i32_29 = arith.constant 48 : i32
    %36 = vector.broadcast %c48_i32_29 : i32 to vector<2x64xi32>
    %37 = arith.cmpi slt, %33, %36 : vector<2x64xi32>
    %38 = arith.andi %35, %37 : vector<2x64xi1>
    %c0_30 = arith.constant 0 : index
    %c0_31 = arith.constant 0 : index
    %39 = vector.load %arg2[%c0_30, %c0_31] : memref<2x1xi32, #tpu.memory_space<vmem>>, vector<2x1xi32>
    %c0_32 = arith.constant 0 : index
    %c0_33 = arith.constant 0 : index
    %40 = vector.load %arg4[%c0_32, %c0_33] : memref<2x1xi32, #tpu.memory_space<vmem>>, vector<2x1xi32>
    %c1_i32 = arith.constant 1 : i32
    %41 = vector.broadcast %c1_i32 : i32 to vector<2x1xi32>
    %42 = arith.subi %40, %41 : vector<2x1xi32>
    %cst_34 = arith.constant 0.000000e+00 : f32
    %43 = vector.broadcast %cst_34 : f32 to vector<2x16xf32>
    %cst_35 = arith.constant 0.000000e+00 : f32
    %44 = vector.broadcast %cst_35 : f32 to vector<2x16xf32>
    %cst_36 = arith.constant 0.000000e+00 : f32
    %45 = vector.broadcast %cst_36 : f32 to vector<2x16xf32>
    %cst_37 = arith.constant 0.000000e+00 : f32
    %46 = vector.broadcast %cst_37 : f32 to vector<2x16xf32>
    %cst_38 = arith.constant 0.000000e+00 : f32
    %47 = vector.broadcast %cst_38 : f32 to vector<2x16xf32>
    %c0_i32 = arith.constant 0 : i32
    %48 = arith.index_cast %c0_i32 : i32 to index
    %c0_39 = arith.constant 0 : index
    %c0_40 = arith.constant 0 : index
    %49 = vector.load %arg21[%48, %c0_39, %c0_40] : memref<16x2x64xf32, #tpu.memory_space<vmem>>, vector<1x2x64xf32>
    %50 = vector.shape_cast %49 : vector<1x2x64xf32> to vector<2x64xf32>
    %cst_41 = arith.constant dense<0.000000e+00> : vector<2x64xf32>
    %51 = tpu.matmul %43, %18, %cst_41 {dimension_numbers = #tpu.dot_dimension_numbers<[1], [0], [0], [1], [0, 0, 1, 1], [], []>} : vector<2x16xf32>, vector<16x64xf32>, vector<2x64xf32> -> vector<2x64xf32>
    %52 = arith.addf %50, %51 : vector<2x64xf32>
    %53 = math.tanh %52 : vector<2x64xf32>
    %54 = arith.negf %52 : vector<2x64xf32>
    %55 = math.exp %54 : vector<2x64xf32>
    %cst_42 = arith.constant 1.000000e+00 : f32
    %56 = vector.broadcast %cst_42 : f32 to vector<2x64xf32>
    %57 = arith.addf %56, %55 : vector<2x64xf32>
    %58 = arith.divf %56, %57 : vector<2x64xf32>
    %59 = arith.select %26, %53, %58 : vector<2x64xi1>, vector<2x64xf32>
    %60 = vector.extract_strided_slice %59 {offsets = [0, 0], sizes = [2, 16], strides = [1, 1]} : vector<2x64xf32> to vector<2x16xf32>
    %61 = vector.extract_strided_slice %59 {offsets = [0, 16], sizes = [2, 16], strides = [1, 1]} : vector<2x64xf32> to vector<2x16xf32>
    %62 = vector.extract_strided_slice %59 {offsets = [0, 32], sizes = [2, 16], strides = [1, 1]} : vector<2x64xf32> to vector<2x16xf32>
    %63 = vector.extract_strided_slice %59 {offsets = [0, 48], sizes = [2, 16], strides = [1, 1]} : vector<2x64xf32> to vector<2x16xf32>
    %64 = arith.mulf %61, %44 : vector<2x16xf32>
    %65 = arith.mulf %60, %62 : vector<2x16xf32>
    %66 = arith.addf %64, %65 : vector<2x16xf32>
    %67 = math.tanh %66 : vector<2x16xf32>
    %68 = arith.mulf %63, %67 : vector<2x16xf32>
    %69 = vector.broadcast %c0_i32 : i32 to vector<2x1xi32>
    %70 = arith.cmpi slt, %69, %39 : vector<2x1xi32>
    %cst_43 = arith.constant 0.000000e+00 : f32
    %71 = vector.shape_cast %70 : vector<2x1xi1> to vector<2x1xi1>
    %72 = vector.broadcast %71 : vector<2x1xi1> to vector<2x16xi1>
    %73 = vector.broadcast %cst_43 : f32 to vector<2x16xf32>
    %74 = arith.select %72, %68, %73 : vector<2x16xi1>, vector<2x16xf32>
    %75 = arith.index_cast %c0_i32 : i32 to index
    %c0_44 = arith.constant 0 : index
    %c0_45 = arith.constant 0 : index
    %76 = vector.load %arg23[%75, %c0_44, %c0_45] : memref<16x2x16xf32, #tpu.memory_space<vmem>>, vector<1x2x16xf32>
    %77 = vector.shape_cast %76 : vector<1x2x16xf32> to vector<2x16xf32>
    %78 = vector.shape_cast %74 : vector<2x16xf32> to vector<1x2x16xf32>
    tpu.vector_store %arg23[%75, %c0_44, %c0_45], %78 {strides = array<i32>} : memref<16x2x16xf32, #tpu.memory_space<vmem>>, vector<1x2x16xf32>,
    %c7_i32 = arith.constant 7 : i32
    %79 = arith.minsi %c0_i32, %c7_i32 : i32
    %80 = arith.index_cast %79 : i32 to index
    %c0_46 = arith.constant 0 : index
    %c0_47 = arith.constant 0 : index
    %81 = vector.load %arg22[%80, %c0_46, %c0_47] : memref<8x2x64xf32, #tpu.memory_space<vmem>>, vector<1x2x64xf32>
    %82 = vector.shape_cast %81 : vector<1x2x64xf32> to vector<2x64xf32>
    %cst_48 = arith.constant dense<0.000000e+00> : vector<2x64xf32>
    %83 = tpu.matmul %45, %19, %cst_48 {dimension_numbers = #tpu.dot_dimension_numbers<[1], [0], [0], [1], [0, 0, 1, 1], [], []>} : vector<2x16xf32>, vector<16x64xf32>, vector<2x64xf32> -> vector<2x64xf32>
    %84 = arith.addf %82, %83 : vector<2x64xf32>
    %85 = math.tanh %84 : vector<2x64xf32>
    %86 = arith.negf %84 : vector<2x64xf32>
    %87 = math.exp %86 : vector<2x64xf32>
    %cst_49 = arith.constant 1.000000e+00 : f32
    %88 = vector.broadcast %cst_49 : f32 to vector<2x64xf32>
    %89 = arith.addf %88, %87 : vector<2x64xf32>
    %90 = arith.divf %88, %89 : vector<2x64xf32>
    %91 = arith.select %32, %85, %90 : vector<2x64xi1>, vector<2x64xf32>
    %92 = vector.extract_strided_slice %91 {offsets = [0, 0], sizes = [2, 16], strides = [1, 1]} : vector<2x64xf32> to vector<2x16xf32>
    %93 = vector.extract_strided_slice %91 {offsets = [0, 16], sizes = [2, 16], strides = [1, 1]} : vector<2x64xf32> to vector<2x16xf32>
    %94 = vector.extract_strided_slice %91 {offsets = [0, 32], sizes = [2, 16], strides = [1, 1]} : vector<2x64xf32> to vector<2x16xf32>
    %95 = vector.extract_strided_slice %91 {offsets = [0, 48], sizes = [2, 16], strides = [1, 1]} : vector<2x64xf32> to vector<2x16xf32>
    %96 = arith.mulf %93, %46 : vector<2x16xf32>
    %97 = arith.mulf %92, %94 : vector<2x16xf32>
    %98 = arith.addf %96, %97 : vector<2x16xf32>
    %99 = math.tanh %98 : vector<2x16xf32>
    %100 = arith.mulf %95, %99 : vector<2x16xf32>
    %101 = vector.broadcast %c0_i32 : i32 to vector<2x1xi32>
    %102 = arith.cmpi eq, %101, %42 : vector<2x1xi32>
    %103 = vector.shape_cast %102 : vector<2x1xi1> to vector<2x1xi1>
    %104 = vector.broadcast %103 : vector<2x1xi1> to vector<2x16xi1>
    %105 = arith.select %104, %100, %47 : vector<2x16xi1>, vector<2x16xf32>
    %c8_i32 = arith.constant 8 : i32
    %106 = arith.cmpi slt, %c0_i32, %c8_i32 : i32
    %107 = arith.select %106, %100, %45 : vector<2x16xf32>
    %108 = arith.select %106, %98, %46 : vector<2x16xf32>
    %c1_i32_50 = arith.constant 1 : i32
    %109 = arith.index_cast %c1_i32_50 : i32 to index
    %c0_51 = arith.constant 0 : index
    %c0_52 = arith.constant 0 : index
    %110 = vector.load %arg21[%109, %c0_51, %c0_52] : memref<16x2x64xf32, #tpu.memory_space<vmem>>, vector<1x2x64xf32>
    %111 = vector.shape_cast %110 : vector<1x2x64xf32> to vector<2x64xf32>
    %cst_53 = arith.constant dense<0.000000e+00> : vector<2x64xf32>
    %112 = tpu.matmul %68, %18, %cst_53 {dimension_numbers = #tpu.dot_dimension_numbers<[1], [0], [0], [1], [0, 0, 1, 1], [], []>} : vector<2x16xf32>, vector<16x64xf32>, vector<2x64xf32> -> vector<2x64xf32>
    %113 = arith.addf %111, %112 : vector<2x64xf32>
    %114 = math.tanh %113 : vector<2x64xf32>
    %115 = arith.negf %113 : vector<2x64xf32>
    %116 = math.exp %115 : vector<2x64xf32>
    %cst_54 = arith.constant 1.000000e+00 : f32
    %117 = vector.broadcast %cst_54 : f32 to vector<2x64xf32>
    %118 = arith.addf %117, %116 : vector<2x64xf32>
    %119 = arith.divf %117, %118 : vector<2x64xf32>
    %120 = arith.select %26, %114, %119 : vector<2x64xi1>, vector<2x64xf32>
    %121 = vector.extract_strided_slice %120 {offsets = [0, 0], sizes = [2, 16], strides = [1, 1]} : vector<2x64xf32> to vector<2x16xf32>
    %122 = vector.extract_strided_slice %120 {offsets = [0, 16], sizes = [2, 16], strides = [1, 1]} : vector<2x64xf32> to vector<2x16xf32>
    %123 = vector.extract_strided_slice %120 {offsets = [0, 32], sizes = [2, 16], strides = [1, 1]} : vector<2x64xf32> to vector<2x16xf32>
    %124 = vector.extract_strided_slice %120 {offsets = [0, 48], sizes = [2, 16], strides = [1, 1]} : vector<2x64xf32> to vector<2x16xf32>
    %125 = arith.mulf %122, %66 : vector<2x16xf32>
    %126 = arith.mulf %121, %123 : vector<2x16xf32>
    %127 = arith.addf %125, %126 : vector<2x16xf32>
    %128 = math.tanh %127 : vector<2x16xf32>
    %129 = arith.mulf %124, %128 : vector<2x16xf32>
    %130 = vector.broadcast %c1_i32_50 : i32 to vector<2x1xi32>
    %131 = arith.cmpi slt, %130, %39 : vector<2x1xi32>
    %cst_55 = arith.constant 0.000000e+00 : f32
    %132 = vector.shape_cast %131 : vector<2x1xi1> to vector<2x1xi1>
    %133 = vector.broadcast %132 : vector<2x1xi1> to vector<2x16xi1>
    %134 = vector.broadcast %cst_55 : f32 to vector<2x16xf32>
    %135 = arith.select %133, %129, %134 : vector<2x16xi1>, vector<2x16xf32>
    %136 = arith.index_cast %c1_i32_50 : i32 to index
    %c0_56 = arith.constant 0 : index
    %c0_57 = arith.constant 0 : index
    %137 = vector.load %arg23[%136, %c0_56, %c0_57] : memref<16x2x16xf32, #tpu.memory_space<vmem>>, vector<1x2x16xf32>
    %138 = vector.shape_cast %137 : vector<1x2x16xf32> to vector<2x16xf32>
    %139 = vector.shape_cast %135 : vector<2x16xf32> to vector<1x2x16xf32>
    tpu.vector_store %arg23[%136, %c0_56, %c0_57], %139 {strides = array<i32>} : memref<16x2x16xf32, #tpu.memory_space<vmem>>, vector<1x2x16xf32>,
    %c7_i32_58 = arith.constant 7 : i32
    %140 = arith.minsi %c1_i32_50, %c7_i32_58 : i32
    %141 = arith.index_cast %140 : i32 to index
    %c0_59 = arith.constant 0 : index
    %c0_60 = arith.constant 0 : index
    %142 = vector.load %arg22[%141, %c0_59, %c0_60] : memref<8x2x64xf32, #tpu.memory_space<vmem>>, vector<1x2x64xf32>
    %143 = vector.shape_cast %142 : vector<1x2x64xf32> to vector<2x64xf32>
    %cst_61 = arith.constant dense<0.000000e+00> : vector<2x64xf32>
    %144 = tpu.matmul %107, %19, %cst_61 {dimension_numbers = #tpu.dot_dimension_numbers<[1], [0], [0], [1], [0, 0, 1, 1], [], []>} : vector<2x16xf32>, vector<16x64xf32>, vector<2x64xf32> -> vector<2x64xf32>
    %145 = arith.addf %143, %144 : vector<2x64xf32>
    %146 = math.tanh %145 : vector<2x64xf32>
    %147 = arith.negf %145 : vector<2x64xf32>
    %148 = math.exp %147 : vector<2x64xf32>
    %cst_62 = arith.constant 1.000000e+00 : f32
    %149 = vector.broadcast %cst_62 : f32 to vector<2x64xf32>
    %150 = arith.addf %149, %148 : vector<2x64xf32>
    %151 = arith.divf %149, %150 : vector<2x64xf32>
    %152 = arith.select %32, %146, %151 : vector<2x64xi1>, vector<2x64xf32>
    %153 = vector.extract_strided_slice %152 {offsets = [0, 0], sizes = [2, 16], strides = [1, 1]} : vector<2x64xf32> to vector<2x16xf32>
    %154 = vector.extract_strided_slice %152 {offsets = [0, 16], sizes = [2, 16], strides = [1, 1]} : vector<2x64xf32> to vector<2x16xf32>
    %155 = vector.extract_strided_slice %152 {offsets = [0, 32], sizes = [2, 16], strides = [1, 1]} : vector<2x64xf32> to vector<2x16xf32>
    %156 = vector.extract_strided_slice %152 {offsets = [0, 48], sizes = [2, 16], strides = [1, 1]} : vector<2x64xf32> to vector<2x16xf32>
    %157 = arith.mulf %154, %108 : vector<2x16xf32>
    %158 = arith.mulf %153, %155 : vector<2x16xf32>
    %159 = arith.addf %157, %158 : vector<2x16xf32>
    %160 = math.tanh %159 : vector<2x16xf32>
    %161 = arith.mulf %156, %160 : vector<2x16xf32>
    %162 = vector.broadcast %c1_i32_50 : i32 to vector<2x1xi32>
    %163 = arith.cmpi eq, %162, %42 : vector<2x1xi32>
    %164 = vector.shape_cast %163 : vector<2x1xi1> to vector<2x1xi1>
    %165 = vector.broadcast %164 : vector<2x1xi1> to vector<2x16xi1>
    %166 = arith.select %165, %161, %105 : vector<2x16xi1>, vector<2x16xf32>
    %c8_i32_63 = arith.constant 8 : i32
    %167 = arith.cmpi slt, %c1_i32_50, %c8_i32_63 : i32
    %168 = arith.select %167, %161, %107 : vector<2x16xf32>
    %169 = arith.select %167, %159, %108 : vector<2x16xf32>
    %c2_i32 = arith.constant 2 : i32
    %170 = arith.index_cast %c2_i32 : i32 to index
    %c0_64 = arith.constant 0 : index
    %c0_65 = arith.constant 0 : index
    %171 = vector.load %arg21[%170, %c0_64, %c0_65] : memref<16x2x64xf32, #tpu.memory_space<vmem>>, vector<1x2x64xf32>
    %172 = vector.shape_cast %171 : vector<1x2x64xf32> to vector<2x64xf32>
    %cst_66 = arith.constant dense<0.000000e+00> : vector<2x64xf32>
    %173 = tpu.matmul %129, %18, %cst_66 {dimension_numbers = #tpu.dot_dimension_numbers<[1], [0], [0], [1], [0, 0, 1, 1], [], []>} : vector<2x16xf32>, vector<16x64xf32>, vector<2x64xf32> -> vector<2x64xf32>
    %174 = arith.addf %172, %173 : vector<2x64xf32>
    %175 = math.tanh %174 : vector<2x64xf32>
    %176 = arith.negf %174 : vector<2x64xf32>
    %177 = math.exp %176 : vector<2x64xf32>
    %cst_67 = arith.constant 1.000000e+00 : f32
    %178 = vector.broadcast %cst_67 : f32 to vector<2x64xf32>
    %179 = arith.addf %178, %177 : vector<2x64xf32>
    %180 = arith.divf %178, %179 : vector<2x64xf32>
    %181 = arith.select %26, %175, %180 : vector<2x64xi1>, vector<2x64xf32>
    %182 = vector.extract_strided_slice %181 {offsets = [0, 0], sizes = [2, 16], strides = [1, 1]} : vector<2x64xf32> to vector<2x16xf32>
    %183 = vector.extract_strided_slice %181 {offsets = [0, 16], sizes = [2, 16], strides = [1, 1]} : vector<2x64xf32> to vector<2x16xf32>
    %184 = vector.extract_strided_slice %181 {offsets = [0, 32], sizes = [2, 16], strides = [1, 1]} : vector<2x64xf32> to vector<2x16xf32>
    %185 = vector.extract_strided_slice %181 {offsets = [0, 48], sizes = [2, 16], strides = [1, 1]} : vector<2x64xf32> to vector<2x16xf32>
    %186 = arith.mulf %183, %127 : vector<2x16xf32>
    %187 = arith.mulf %182, %184 : vector<2x16xf32>
    %188 = arith.addf %186, %187 : vector<2x16xf32>
    %189 = math.tanh %188 : vector<2x16xf32>
    %190 = arith.mulf %185, %189 : vector<2x16xf32>
    %191 = vector.broadcast %c2_i32 : i32 to vector<2x1xi32>
    %192 = arith.cmpi slt, %191, %39 : vector<2x1xi32>
    %cst_68 = arith.constant 0.000000e+00 : f32
    %193 = vector.shape_cast %192 : vector<2x1xi1> to vector<2x1xi1>
    %194 = vector.broadcast %193 : vector<2x1xi1> to vector<2x16xi1>
    %195 = vector.broadcast %cst_68 : f32 to vector<2x16xf32>
    %196 = arith.select %194, %190, %195 : vector<2x16xi1>, vector<2x16xf32>
    %197 = arith.index_cast %c2_i32 : i32 to index
    %c0_69 = arith.constant 0 : index
    %c0_70 = arith.constant 0 : index
    %198 = vector.load %arg23[%197, %c0_69, %c0_70] : memref<16x2x16xf32, #tpu.memory_space<vmem>>, vector<1x2x16xf32>
    %199 = vector.shape_cast %198 : vector<1x2x16xf32> to vector<2x16xf32>
    %200 = vector.shape_cast %196 : vector<2x16xf32> to vector<1x2x16xf32>
    tpu.vector_store %arg23[%197, %c0_69, %c0_70], %200 {strides = array<i32>} : memref<16x2x16xf32, #tpu.memory_space<vmem>>, vector<1x2x16xf32>,
    %c7_i32_71 = arith.constant 7 : i32
    %201 = arith.minsi %c2_i32, %c7_i32_71 : i32
    %202 = arith.index_cast %201 : i32 to index
    %c0_72 = arith.constant 0 : index
    %c0_73 = arith.constant 0 : index
    %203 = vector.load %arg22[%202, %c0_72, %c0_73] : memref<8x2x64xf32, #tpu.memory_space<vmem>>, vector<1x2x64xf32>
    %204 = vector.shape_cast %203 : vector<1x2x64xf32> to vector<2x64xf32>
    %cst_74 = arith.constant dense<0.000000e+00> : vector<2x64xf32>
    %205 = tpu.matmul %168, %19, %cst_74 {dimension_numbers = #tpu.dot_dimension_numbers<[1], [0], [0], [1], [0, 0, 1, 1], [], []>} : vector<2x16xf32>, vector<16x64xf32>, vector<2x64xf32> -> vector<2x64xf32>
    %206 = arith.addf %204, %205 : vector<2x64xf32>
    %207 = math.tanh %206 : vector<2x64xf32>
    %208 = arith.negf %206 : vector<2x64xf32>
    %209 = math.exp %208 : vector<2x64xf32>
    %cst_75 = arith.constant 1.000000e+00 : f32
    %210 = vector.broadcast %cst_75 : f32 to vector<2x64xf32>
    %211 = arith.addf %210, %209 : vector<2x64xf32>
    %212 = arith.divf %210, %211 : vector<2x64xf32>
    %213 = arith.select %32, %207, %212 : vector<2x64xi1>, vector<2x64xf32>
    %214 = vector.extract_strided_slice %213 {offsets = [0, 0], sizes = [2, 16], strides = [1, 1]} : vector<2x64xf32> to vector<2x16xf32>
    %215 = vector.extract_strided_slice %213 {offsets = [0, 16], sizes = [2, 16], strides = [1, 1]} : vector<2x64xf32> to vector<2x16xf32>
    %216 = vector.extract_strided_slice %213 {offsets = [0, 32], sizes = [2, 16], strides = [1, 1]} : vector<2x64xf32> to vector<2x16xf32>
    %217 = vector.extract_strided_slice %213 {offsets = [0, 48], sizes = [2, 16], strides = [1, 1]} : vector<2x64xf32> to vector<2x16xf32>
    %218 = arith.mulf %215, %169 : vector<2x16xf32>
    %219 = arith.mulf %214, %216 : vector<2x16xf32>
    %220 = arith.addf %218, %219 : vector<2x16xf32>
    %221 = math.tanh %220 : vector<2x16xf32>
    %222 = arith.mulf %217, %221 : vector<2x16xf32>
    %223 = vector.broadcast %c2_i32 : i32 to vector<2x1xi32>
    %224 = arith.cmpi eq, %223, %42 : vector<2x1xi32>
    %225 = vector.shape_cast %224 : vector<2x1xi1> to vector<2x1xi1>
    %226 = vector.broadcast %225 : vector<2x1xi1> to vector<2x16xi1>
    %227 = arith.select %226, %222, %166 : vector<2x16xi1>, vector<2x16xf32>
    %c8_i32_76 = arith.constant 8 : i32
    %228 = arith.cmpi slt, %c2_i32, %c8_i32_76 : i32
    %229 = arith.select %228, %222, %168 : vector<2x16xf32>
    %230 = arith.select %228, %220, %169 : vector<2x16xf32>
    %c3_i32 = arith.constant 3 : i32
    %231 = arith.index_cast %c3_i32 : i32 to index
    %c0_77 = arith.constant 0 : index
    %c0_78 = arith.constant 0 : index
    %232 = vector.load %arg21[%231, %c0_77, %c0_78] : memref<16x2x64xf32, #tpu.memory_space<vmem>>, vector<1x2x64xf32>
    %233 = vector.shape_cast %232 : vector<1x2x64xf32> to vector<2x64xf32>
    %cst_79 = arith.constant dense<0.000000e+00> : vector<2x64xf32>
    %234 = tpu.matmul %190, %18, %cst_79 {dimension_numbers = #tpu.dot_dimension_numbers<[1], [0], [0], [1], [0, 0, 1, 1], [], []>} : vector<2x16xf32>, vector<16x64xf32>, vector<2x64xf32> -> vector<2x64xf32>
    %235 = arith.addf %233, %234 : vector<2x64xf32>
    %236 = math.tanh %235 : vector<2x64xf32>
    %237 = arith.negf %235 : vector<2x64xf32>
    %238 = math.exp %237 : vector<2x64xf32>
    %cst_80 = arith.constant 1.000000e+00 : f32
    %239 = vector.broadcast %cst_80 : f32 to vector<2x64xf32>
    %240 = arith.addf %239, %238 : vector<2x64xf32>
    %241 = arith.divf %239, %240 : vector<2x64xf32>
    %242 = arith.select %26, %236, %241 : vector<2x64xi1>, vector<2x64xf32>
    %243 = vector.extract_strided_slice %242 {offsets = [0, 0], sizes = [2, 16], strides = [1, 1]} : vector<2x64xf32> to vector<2x16xf32>
    %244 = vector.extract_strided_slice %242 {offsets = [0, 16], sizes = [2, 16], strides = [1, 1]} : vector<2x64xf32> to vector<2x16xf32>
    %245 = vector.extract_strided_slice %242 {offsets = [0, 32], sizes = [2, 16], strides = [1, 1]} : vector<2x64xf32> to vector<2x16xf32>
    %246 = vector.extract_strided_slice %242 {offsets = [0, 48], sizes = [2, 16], strides = [1, 1]} : vector<2x64xf32> to vector<2x16xf32>
    %247 = arith.mulf %244, %188 : vector<2x16xf32>
    %248 = arith.mulf %243, %245 : vector<2x16xf32>
    %249 = arith.addf %247, %248 : vector<2x16xf32>
    %250 = math.tanh %249 : vector<2x16xf32>
    %251 = arith.mulf %246, %250 : vector<2x16xf32>
    %252 = vector.broadcast %c3_i32 : i32 to vector<2x1xi32>
    %253 = arith.cmpi slt, %252, %39 : vector<2x1xi32>
    %cst_81 = arith.constant 0.000000e+00 : f32
    %254 = vector.shape_cast %253 : vector<2x1xi1> to vector<2x1xi1>
    %255 = vector.broadcast %254 : vector<2x1xi1> to vector<2x16xi1>
    %256 = vector.broadcast %cst_81 : f32 to vector<2x16xf32>
    %257 = arith.select %255, %251, %256 : vector<2x16xi1>, vector<2x16xf32>
    %258 = arith.index_cast %c3_i32 : i32 to index
    %c0_82 = arith.constant 0 : index
    %c0_83 = arith.constant 0 : index
    %259 = vector.load %arg23[%258, %c0_82, %c0_83] : memref<16x2x16xf32, #tpu.memory_space<vmem>>, vector<1x2x16xf32>
    %260 = vector.shape_cast %259 : vector<1x2x16xf32> to vector<2x16xf32>
    %261 = vector.shape_cast %257 : vector<2x16xf32> to vector<1x2x16xf32>
    tpu.vector_store %arg23[%258, %c0_82, %c0_83], %261 {strides = array<i32>} : memref<16x2x16xf32, #tpu.memory_space<vmem>>, vector<1x2x16xf32>,
    %c7_i32_84 = arith.constant 7 : i32
    %262 = arith.minsi %c3_i32, %c7_i32_84 : i32
    %263 = arith.index_cast %262 : i32 to index
    %c0_85 = arith.constant 0 : index
    %c0_86 = arith.constant 0 : index
    %264 = vector.load %arg22[%263, %c0_85, %c0_86] : memref<8x2x64xf32, #tpu.memory_space<vmem>>, vector<1x2x64xf32>
    %265 = vector.shape_cast %264 : vector<1x2x64xf32> to vector<2x64xf32>
    %cst_87 = arith.constant dense<0.000000e+00> : vector<2x64xf32>
    %266 = tpu.matmul %229, %19, %cst_87 {dimension_numbers = #tpu.dot_dimension_numbers<[1], [0], [0], [1], [0, 0, 1, 1], [], []>} : vector<2x16xf32>, vector<16x64xf32>, vector<2x64xf32> -> vector<2x64xf32>
    %267 = arith.addf %265, %266 : vector<2x64xf32>
    %268 = math.tanh %267 : vector<2x64xf32>
    %269 = arith.negf %267 : vector<2x64xf32>
    %270 = math.exp %269 : vector<2x64xf32>
    %cst_88 = arith.constant 1.000000e+00 : f32
    %271 = vector.broadcast %cst_88 : f32 to vector<2x64xf32>
    %272 = arith.addf %271, %270 : vector<2x64xf32>
    %273 = arith.divf %271, %272 : vector<2x64xf32>
    %274 = arith.select %32, %268, %273 : vector<2x64xi1>, vector<2x64xf32>
    %275 = vector.extract_strided_slice %274 {offsets = [0, 0], sizes = [2, 16], strides = [1, 1]} : vector<2x64xf32> to vector<2x16xf32>
    %276 = vector.extract_strided_slice %274 {offsets = [0, 16], sizes = [2, 16], strides = [1, 1]} : vector<2x64xf32> to vector<2x16xf32>
    %277 = vector.extract_strided_slice %274 {offsets = [0, 32], sizes = [2, 16], strides = [1, 1]} : vector<2x64xf32> to vector<2x16xf32>
    %278 = vector.extract_strided_slice %274 {offsets = [0, 48], sizes = [2, 16], strides = [1, 1]} : vector<2x64xf32> to vector<2x16xf32>
    %279 = arith.mulf %276, %230 : vector<2x16xf32>
    %280 = arith.mulf %275, %277 : vector<2x16xf32>
    %281 = arith.addf %279, %280 : vector<2x16xf32>
    %282 = math.tanh %281 : vector<2x16xf32>
    %283 = arith.mulf %278, %282 : vector<2x16xf32>
    %284 = vector.broadcast %c3_i32 : i32 to vector<2x1xi32>
    %285 = arith.cmpi eq, %284, %42 : vector<2x1xi32>
    %286 = vector.shape_cast %285 : vector<2x1xi1> to vector<2x1xi1>
    %287 = vector.broadcast %286 : vector<2x1xi1> to vector<2x16xi1>
    %288 = arith.select %287, %283, %227 : vector<2x16xi1>, vector<2x16xf32>
    %c8_i32_89 = arith.constant 8 : i32
    %289 = arith.cmpi slt, %c3_i32, %c8_i32_89 : i32
    %290 = arith.select %289, %283, %229 : vector<2x16xf32>
    %291 = arith.select %289, %281, %230 : vector<2x16xf32>
    %c4_i32 = arith.constant 4 : i32
    %292 = arith.index_cast %c4_i32 : i32 to index
    %c0_90 = arith.constant 0 : index
    %c0_91 = arith.constant 0 : index
    %293 = vector.load %arg21[%292, %c0_90, %c0_91] : memref<16x2x64xf32, #tpu.memory_space<vmem>>, vector<1x2x64xf32>
    %294 = vector.shape_cast %293 : vector<1x2x64xf32> to vector<2x64xf32>
    %cst_92 = arith.constant dense<0.000000e+00> : vector<2x64xf32>
    %295 = tpu.matmul %251, %18, %cst_92 {dimension_numbers = #tpu.dot_dimension_numbers<[1], [0], [0], [1], [0, 0, 1, 1], [], []>} : vector<2x16xf32>, vector<16x64xf32>, vector<2x64xf32> -> vector<2x64xf32>
    %296 = arith.addf %294, %295 : vector<2x64xf32>
    %297 = math.tanh %296 : vector<2x64xf32>
    %298 = arith.negf %296 : vector<2x64xf32>
    %299 = math.exp %298 : vector<2x64xf32>
    %cst_93 = arith.constant 1.000000e+00 : f32
    %300 = vector.broadcast %cst_93 : f32 to vector<2x64xf32>
    %301 = arith.addf %300, %299 : vector<2x64xf32>
    %302 = arith.divf %300, %301 : vector<2x64xf32>
    %303 = arith.select %26, %297, %302 : vector<2x64xi1>, vector<2x64xf32>
    %304 = vector.extract_strided_slice %303 {offsets = [0, 0], sizes = [2, 16], strides = [1, 1]} : vector<2x64xf32> to vector<2x16xf32>
    %305 = vector.extract_strided_slice %303 {offsets = [0, 16], sizes = [2, 16], strides = [1, 1]} : vector<2x64xf32> to vector<2x16xf32>
    %306 = vector.extract_strided_slice %303 {offsets = [0, 32], sizes = [2, 16], strides = [1, 1]} : vector<2x64xf32> to vector<2x16xf32>
    %307 = vector.extract_strided_slice %303 {offsets = [0, 48], sizes = [2, 16], strides = [1, 1]} : vector<2x64xf32> to vector<2x16xf32>
    %308 = arith.mulf %305, %249 : vector<2x16xf32>
    %309 = arith.mulf %304, %306 : vector<2x16xf32>
    %310 = arith.addf %308, %309 : vector<2x16xf32>
    %311 = math.tanh %310 : vector<2x16xf32>
    %312 = arith.mulf %307, %311 : vector<2x16xf32>
    %313 = vector.broadcast %c4_i32 : i32 to vector<2x1xi32>
    %314 = arith.cmpi slt, %313, %39 : vector<2x1xi32>
    %cst_94 = arith.constant 0.000000e+00 : f32
    %315 = vector.shape_cast %314 : vector<2x1xi1> to vector<2x1xi1>
    %316 = vector.broadcast %315 : vector<2x1xi1> to vector<2x16xi1>
    %317 = vector.broadcast %cst_94 : f32 to vector<2x16xf32>
    %318 = arith.select %316, %312, %317 : vector<2x16xi1>, vector<2x16xf32>
    %319 = arith.index_cast %c4_i32 : i32 to index
    %c0_95 = arith.constant 0 : index
    %c0_96 = arith.constant 0 : index
    %320 = vector.load %arg23[%319, %c0_95, %c0_96] : memref<16x2x16xf32, #tpu.memory_space<vmem>>, vector<1x2x16xf32>
    %321 = vector.shape_cast %320 : vector<1x2x16xf32> to vector<2x16xf32>
    %322 = vector.shape_cast %318 : vector<2x16xf32> to vector<1x2x16xf32>
    tpu.vector_store %arg23[%319, %c0_95, %c0_96], %322 {strides = array<i32>} : memref<16x2x16xf32, #tpu.memory_space<vmem>>, vector<1x2x16xf32>,
    %c7_i32_97 = arith.constant 7 : i32
    %323 = arith.minsi %c4_i32, %c7_i32_97 : i32
    %324 = arith.index_cast %323 : i32 to index
    %c0_98 = arith.constant 0 : index
    %c0_99 = arith.constant 0 : index
    %325 = vector.load %arg22[%324, %c0_98, %c0_99] : memref<8x2x64xf32, #tpu.memory_space<vmem>>, vector<1x2x64xf32>
    %326 = vector.shape_cast %325 : vector<1x2x64xf32> to vector<2x64xf32>
    %cst_100 = arith.constant dense<0.000000e+00> : vector<2x64xf32>
    %327 = tpu.matmul %290, %19, %cst_100 {dimension_numbers = #tpu.dot_dimension_numbers<[1], [0], [0], [1], [0, 0, 1, 1], [], []>} : vector<2x16xf32>, vector<16x64xf32>, vector<2x64xf32> -> vector<2x64xf32>
    %328 = arith.addf %326, %327 : vector<2x64xf32>
    %329 = math.tanh %328 : vector<2x64xf32>
    %330 = arith.negf %328 : vector<2x64xf32>
    %331 = math.exp %330 : vector<2x64xf32>
    %cst_101 = arith.constant 1.000000e+00 : f32
    %332 = vector.broadcast %cst_101 : f32 to vector<2x64xf32>
    %333 = arith.addf %332, %331 : vector<2x64xf32>
    %334 = arith.divf %332, %333 : vector<2x64xf32>
    %335 = arith.select %32, %329, %334 : vector<2x64xi1>, vector<2x64xf32>
    %336 = vector.extract_strided_slice %335 {offsets = [0, 0], sizes = [2, 16], strides = [1, 1]} : vector<2x64xf32> to vector<2x16xf32>
    %337 = vector.extract_strided_slice %335 {offsets = [0, 16], sizes = [2, 16], strides = [1, 1]} : vector<2x64xf32> to vector<2x16xf32>
    %338 = vector.extract_strided_slice %335 {offsets = [0, 32], sizes = [2, 16], strides = [1, 1]} : vector<2x64xf32> to vector<2x16xf32>
    %339 = vector.extract_strided_slice %335 {offsets = [0, 48], sizes = [2, 16], strides = [1, 1]} : vector<2x64xf32> to vector<2x16xf32>
    %340 = arith.mulf %337, %291 : vector<2x16xf32>
    %341 = arith.mulf %336, %338 : vector<2x16xf32>
    %342 = arith.addf %340, %341 : vector<2x16xf32>
    %343 = math.tanh %342 : vector<2x16xf32>
    %344 = arith.mulf %339, %343 : vector<2x16xf32>
    %345 = vector.broadcast %c4_i32 : i32 to vector<2x1xi32>
    %346 = arith.cmpi eq, %345, %42 : vector<2x1xi32>
    %347 = vector.shape_cast %346 : vector<2x1xi1> to vector<2x1xi1>
    %348 = vector.broadcast %347 : vector<2x1xi1> to vector<2x16xi1>
    %349 = arith.select %348, %344, %288 : vector<2x16xi1>, vector<2x16xf32>
    %c8_i32_102 = arith.constant 8 : i32
    %350 = arith.cmpi slt, %c4_i32, %c8_i32_102 : i32
    %351 = arith.select %350, %344, %290 : vector<2x16xf32>
    %352 = arith.select %350, %342, %291 : vector<2x16xf32>
    %c5_i32 = arith.constant 5 : i32
    %353 = arith.index_cast %c5_i32 : i32 to index
    %c0_103 = arith.constant 0 : index
    %c0_104 = arith.constant 0 : index
    %354 = vector.load %arg21[%353, %c0_103, %c0_104] : memref<16x2x64xf32, #tpu.memory_space<vmem>>, vector<1x2x64xf32>
    %355 = vector.shape_cast %354 : vector<1x2x64xf32> to vector<2x64xf32>
    %cst_105 = arith.constant dense<0.000000e+00> : vector<2x64xf32>
    %356 = tpu.matmul %312, %18, %cst_105 {dimension_numbers = #tpu.dot_dimension_numbers<[1], [0], [0], [1], [0, 0, 1, 1], [], []>} : vector<2x16xf32>, vector<16x64xf32>, vector<2x64xf32> -> vector<2x64xf32>
    %357 = arith.addf %355, %356 : vector<2x64xf32>
    %358 = math.tanh %357 : vector<2x64xf32>
    %359 = arith.negf %357 : vector<2x64xf32>
    %360 = math.exp %359 : vector<2x64xf32>
    %cst_106 = arith.constant 1.000000e+00 : f32
    %361 = vector.broadcast %cst_106 : f32 to vector<2x64xf32>
    %362 = arith.addf %361, %360 : vector<2x64xf32>
    %363 = arith.divf %361, %362 : vector<2x64xf32>
    %364 = arith.select %26, %358, %363 : vector<2x64xi1>, vector<2x64xf32>
    %365 = vector.extract_strided_slice %364 {offsets = [0, 0], sizes = [2, 16], strides = [1, 1]} : vector<2x64xf32> to vector<2x16xf32>
    %366 = vector.extract_strided_slice %364 {offsets = [0, 16], sizes = [2, 16], strides = [1, 1]} : vector<2x64xf32> to vector<2x16xf32>
    %367 = vector.extract_strided_slice %364 {offsets = [0, 32], sizes = [2, 16], strides = [1, 1]} : vector<2x64xf32> to vector<2x16xf32>
    %368 = vector.extract_strided_slice %364 {offsets = [0, 48], sizes = [2, 16], strides = [1, 1]} : vector<2x64xf32> to vector<2x16xf32>
    %369 = arith.mulf %366, %310 : vector<2x16xf32>
    %370 = arith.mulf %365, %367 : vector<2x16xf32>
    %371 = arith.addf %369, %370 : vector<2x16xf32>
    %372 = math.tanh %371 : vector<2x16xf32>
    %373 = arith.mulf %368, %372 : vector<2x16xf32>
    %374 = vector.broadcast %c5_i32 : i32 to vector<2x1xi32>
    %375 = arith.cmpi slt, %374, %39 : vector<2x1xi32>
    %cst_107 = arith.constant 0.000000e+00 : f32
    %376 = vector.shape_cast %375 : vector<2x1xi1> to vector<2x1xi1>
    %377 = vector.broadcast %376 : vector<2x1xi1> to vector<2x16xi1>
    %378 = vector.broadcast %cst_107 : f32 to vector<2x16xf32>
    %379 = arith.select %377, %373, %378 : vector<2x16xi1>, vector<2x16xf32>
    %380 = arith.index_cast %c5_i32 : i32 to index
    %c0_108 = arith.constant 0 : index
    %c0_109 = arith.constant 0 : index
    %381 = vector.load %arg23[%380, %c0_108, %c0_109] : memref<16x2x16xf32, #tpu.memory_space<vmem>>, vector<1x2x16xf32>
    %382 = vector.shape_cast %381 : vector<1x2x16xf32> to vector<2x16xf32>
    %383 = vector.shape_cast %379 : vector<2x16xf32> to vector<1x2x16xf32>
    tpu.vector_store %arg23[%380, %c0_108, %c0_109], %383 {strides = array<i32>} : memref<16x2x16xf32, #tpu.memory_space<vmem>>, vector<1x2x16xf32>,
    %c7_i32_110 = arith.constant 7 : i32
    %384 = arith.minsi %c5_i32, %c7_i32_110 : i32
    %385 = arith.index_cast %384 : i32 to index
    %c0_111 = arith.constant 0 : index
    %c0_112 = arith.constant 0 : index
    %386 = vector.load %arg22[%385, %c0_111, %c0_112] : memref<8x2x64xf32, #tpu.memory_space<vmem>>, vector<1x2x64xf32>
    %387 = vector.shape_cast %386 : vector<1x2x64xf32> to vector<2x64xf32>
    %cst_113 = arith.constant dense<0.000000e+00> : vector<2x64xf32>
    %388 = tpu.matmul %351, %19, %cst_113 {dimension_numbers = #tpu.dot_dimension_numbers<[1], [0], [0], [1], [0, 0, 1, 1], [], []>} : vector<2x16xf32>, vector<16x64xf32>, vector<2x64xf32> -> vector<2x64xf32>
    %389 = arith.addf %387, %388 : vector<2x64xf32>
    %390 = math.tanh %389 : vector<2x64xf32>
    %391 = arith.negf %389 : vector<2x64xf32>
    %392 = math.exp %391 : vector<2x64xf32>
    %cst_114 = arith.constant 1.000000e+00 : f32
    %393 = vector.broadcast %cst_114 : f32 to vector<2x64xf32>
    %394 = arith.addf %393, %392 : vector<2x64xf32>
    %395 = arith.divf %393, %394 : vector<2x64xf32>
    %396 = arith.select %32, %390, %395 : vector<2x64xi1>, vector<2x64xf32>
    %397 = vector.extract_strided_slice %396 {offsets = [0, 0], sizes = [2, 16], strides = [1, 1]} : vector<2x64xf32> to vector<2x16xf32>
    %398 = vector.extract_strided_slice %396 {offsets = [0, 16], sizes = [2, 16], strides = [1, 1]} : vector<2x64xf32> to vector<2x16xf32>
    %399 = vector.extract_strided_slice %396 {offsets = [0, 32], sizes = [2, 16], strides = [1, 1]} : vector<2x64xf32> to vector<2x16xf32>
    %400 = vector.extract_strided_slice %396 {offsets = [0, 48], sizes = [2, 16], strides = [1, 1]} : vector<2x64xf32> to vector<2x16xf32>
    %401 = arith.mulf %398, %352 : vector<2x16xf32>
    %402 = arith.mulf %397, %399 : vector<2x16xf32>
    %403 = arith.addf %401, %402 : vector<2x16xf32>
    %404 = math.tanh %403 : vector<2x16xf32>
    %405 = arith.mulf %400, %404 : vector<2x16xf32>
    %406 = vector.broadcast %c5_i32 : i32 to vector<2x1xi32>
    %407 = arith.cmpi eq, %406, %42 : vector<2x1xi32>
    %408 = vector.shape_cast %407 : vector<2x1xi1> to vector<2x1xi1>
    %409 = vector.broadcast %408 : vector<2x1xi1> to vector<2x16xi1>
    %410 = arith.select %409, %405, %349 : vector<2x16xi1>, vector<2x16xf32>
    %c8_i32_115 = arith.constant 8 : i32
    %411 = arith.cmpi slt, %c5_i32, %c8_i32_115 : i32
    %412 = arith.select %411, %405, %351 : vector<2x16xf32>
    %413 = arith.select %411, %403, %352 : vector<2x16xf32>
    %c6_i32 = arith.constant 6 : i32
    %414 = arith.index_cast %c6_i32 : i32 to index
    %c0_116 = arith.constant 0 : index
    %c0_117 = arith.constant 0 : index
    %415 = vector.load %arg21[%414, %c0_116, %c0_117] : memref<16x2x64xf32, #tpu.memory_space<vmem>>, vector<1x2x64xf32>
    %416 = vector.shape_cast %415 : vector<1x2x64xf32> to vector<2x64xf32>
    %cst_118 = arith.constant dense<0.000000e+00> : vector<2x64xf32>
    %417 = tpu.matmul %373, %18, %cst_118 {dimension_numbers = #tpu.dot_dimension_numbers<[1], [0], [0], [1], [0, 0, 1, 1], [], []>} : vector<2x16xf32>, vector<16x64xf32>, vector<2x64xf32> -> vector<2x64xf32>
    %418 = arith.addf %416, %417 : vector<2x64xf32>
    %419 = math.tanh %418 : vector<2x64xf32>
    %420 = arith.negf %418 : vector<2x64xf32>
    %421 = math.exp %420 : vector<2x64xf32>
    %cst_119 = arith.constant 1.000000e+00 : f32
    %422 = vector.broadcast %cst_119 : f32 to vector<2x64xf32>
    %423 = arith.addf %422, %421 : vector<2x64xf32>
    %424 = arith.divf %422, %423 : vector<2x64xf32>
    %425 = arith.select %26, %419, %424 : vector<2x64xi1>, vector<2x64xf32>
    %426 = vector.extract_strided_slice %425 {offsets = [0, 0], sizes = [2, 16], strides = [1, 1]} : vector<2x64xf32> to vector<2x16xf32>
    %427 = vector.extract_strided_slice %425 {offsets = [0, 16], sizes = [2, 16], strides = [1, 1]} : vector<2x64xf32> to vector<2x16xf32>
    %428 = vector.extract_strided_slice %425 {offsets = [0, 32], sizes = [2, 16], strides = [1, 1]} : vector<2x64xf32> to vector<2x16xf32>
    %429 = vector.extract_strided_slice %425 {offsets = [0, 48], sizes = [2, 16], strides = [1, 1]} : vector<2x64xf32> to vector<2x16xf32>
    %430 = arith.mulf %427, %371 : vector<2x16xf32>
    %431 = arith.mulf %426, %428 : vector<2x16xf32>
    %432 = arith.addf %430, %431 : vector<2x16xf32>
    %433 = math.tanh %432 : vector<2x16xf32>
    %434 = arith.mulf %429, %433 : vector<2x16xf32>
    %435 = vector.broadcast %c6_i32 : i32 to vector<2x1xi32>
    %436 = arith.cmpi slt, %435, %39 : vector<2x1xi32>
    %cst_120 = arith.constant 0.000000e+00 : f32
    %437 = vector.shape_cast %436 : vector<2x1xi1> to vector<2x1xi1>
    %438 = vector.broadcast %437 : vector<2x1xi1> to vector<2x16xi1>
    %439 = vector.broadcast %cst_120 : f32 to vector<2x16xf32>
    %440 = arith.select %438, %434, %439 : vector<2x16xi1>, vector<2x16xf32>
    %441 = arith.index_cast %c6_i32 : i32 to index
    %c0_121 = arith.constant 0 : index
    %c0_122 = arith.constant 0 : index
    %442 = vector.load %arg23[%441, %c0_121, %c0_122] : memref<16x2x16xf32, #tpu.memory_space<vmem>>, vector<1x2x16xf32>
    %443 = vector.shape_cast %442 : vector<1x2x16xf32> to vector<2x16xf32>
    %444 = vector.shape_cast %440 : vector<2x16xf32> to vector<1x2x16xf32>
    tpu.vector_store %arg23[%441, %c0_121, %c0_122], %444 {strides = array<i32>} : memref<16x2x16xf32, #tpu.memory_space<vmem>>, vector<1x2x16xf32>,
    %c7_i32_123 = arith.constant 7 : i32
    %445 = arith.minsi %c6_i32, %c7_i32_123 : i32
    %446 = arith.index_cast %445 : i32 to index
    %c0_124 = arith.constant 0 : index
    %c0_125 = arith.constant 0 : index
    %447 = vector.load %arg22[%446, %c0_124, %c0_125] : memref<8x2x64xf32, #tpu.memory_space<vmem>>, vector<1x2x64xf32>
    %448 = vector.shape_cast %447 : vector<1x2x64xf32> to vector<2x64xf32>
    %cst_126 = arith.constant dense<0.000000e+00> : vector<2x64xf32>
    %449 = tpu.matmul %412, %19, %cst_126 {dimension_numbers = #tpu.dot_dimension_numbers<[1], [0], [0], [1], [0, 0, 1, 1], [], []>} : vector<2x16xf32>, vector<16x64xf32>, vector<2x64xf32> -> vector<2x64xf32>
    %450 = arith.addf %448, %449 : vector<2x64xf32>
    %451 = math.tanh %450 : vector<2x64xf32>
    %452 = arith.negf %450 : vector<2x64xf32>
    %453 = math.exp %452 : vector<2x64xf32>
    %cst_127 = arith.constant 1.000000e+00 : f32
    %454 = vector.broadcast %cst_127 : f32 to vector<2x64xf32>
    %455 = arith.addf %454, %453 : vector<2x64xf32>
    %456 = arith.divf %454, %455 : vector<2x64xf32>
    %457 = arith.select %32, %451, %456 : vector<2x64xi1>, vector<2x64xf32>
    %458 = vector.extract_strided_slice %457 {offsets = [0, 0], sizes = [2, 16], strides = [1, 1]} : vector<2x64xf32> to vector<2x16xf32>
    %459 = vector.extract_strided_slice %457 {offsets = [0, 16], sizes = [2, 16], strides = [1, 1]} : vector<2x64xf32> to vector<2x16xf32>
    %460 = vector.extract_strided_slice %457 {offsets = [0, 32], sizes = [2, 16], strides = [1, 1]} : vector<2x64xf32> to vector<2x16xf32>
    %461 = vector.extract_strided_slice %457 {offsets = [0, 48], sizes = [2, 16], strides = [1, 1]} : vector<2x64xf32> to vector<2x16xf32>
    %462 = arith.mulf %459, %413 : vector<2x16xf32>
    %463 = arith.mulf %458, %460 : vector<2x16xf32>
    %464 = arith.addf %462, %463 : vector<2x16xf32>
    %465 = math.tanh %464 : vector<2x16xf32>
    %466 = arith.mulf %461, %465 : vector<2x16xf32>
    %467 = vector.broadcast %c6_i32 : i32 to vector<2x1xi32>
    %468 = arith.cmpi eq, %467, %42 : vector<2x1xi32>
    %469 = vector.shape_cast %468 : vector<2x1xi1> to vector<2x1xi1>
    %470 = vector.broadcast %469 : vector<2x1xi1> to vector<2x16xi1>
    %471 = arith.select %470, %466, %410 : vector<2x16xi1>, vector<2x16xf32>
    %c8_i32_128 = arith.constant 8 : i32
    %472 = arith.cmpi slt, %c6_i32, %c8_i32_128 : i32
    %473 = arith.select %472, %466, %412 : vector<2x16xf32>
    %474 = arith.select %472, %464, %413 : vector<2x16xf32>
    %c7_i32_129 = arith.constant 7 : i32
    %475 = arith.index_cast %c7_i32_129 : i32 to index
    %c0_130 = arith.constant 0 : index
    %c0_131 = arith.constant 0 : index
    %476 = vector.load %arg21[%475, %c0_130, %c0_131] : memref<16x2x64xf32, #tpu.memory_space<vmem>>, vector<1x2x64xf32>
    %477 = vector.shape_cast %476 : vector<1x2x64xf32> to vector<2x64xf32>
    %cst_132 = arith.constant dense<0.000000e+00> : vector<2x64xf32>
    %478 = tpu.matmul %434, %18, %cst_132 {dimension_numbers = #tpu.dot_dimension_numbers<[1], [0], [0], [1], [0, 0, 1, 1], [], []>} : vector<2x16xf32>, vector<16x64xf32>, vector<2x64xf32> -> vector<2x64xf32>
    %479 = arith.addf %477, %478 : vector<2x64xf32>
    %480 = math.tanh %479 : vector<2x64xf32>
    %481 = arith.negf %479 : vector<2x64xf32>
    %482 = math.exp %481 : vector<2x64xf32>
    %cst_133 = arith.constant 1.000000e+00 : f32
    %483 = vector.broadcast %cst_133 : f32 to vector<2x64xf32>
    %484 = arith.addf %483, %482 : vector<2x64xf32>
    %485 = arith.divf %483, %484 : vector<2x64xf32>
    %486 = arith.select %26, %480, %485 : vector<2x64xi1>, vector<2x64xf32>
    %487 = vector.extract_strided_slice %486 {offsets = [0, 0], sizes = [2, 16], strides = [1, 1]} : vector<2x64xf32> to vector<2x16xf32>
    %488 = vector.extract_strided_slice %486 {offsets = [0, 16], sizes = [2, 16], strides = [1, 1]} : vector<2x64xf32> to vector<2x16xf32>
    %489 = vector.extract_strided_slice %486 {offsets = [0, 32], sizes = [2, 16], strides = [1, 1]} : vector<2x64xf32> to vector<2x16xf32>
    %490 = vector.extract_strided_slice %486 {offsets = [0, 48], sizes = [2, 16], strides = [1, 1]} : vector<2x64xf32> to vector<2x16xf32>
    %491 = arith.mulf %488, %432 : vector<2x16xf32>
    %492 = arith.mulf %487, %489 : vector<2x16xf32>
    %493 = arith.addf %491, %492 : vector<2x16xf32>
    %494 = math.tanh %493 : vector<2x16xf32>
    %495 = arith.mulf %490, %494 : vector<2x16xf32>
    %496 = vector.broadcast %c7_i32_129 : i32 to vector<2x1xi32>
    %497 = arith.cmpi slt, %496, %39 : vector<2x1xi32>
    %cst_134 = arith.constant 0.000000e+00 : f32
    %498 = vector.shape_cast %497 : vector<2x1xi1> to vector<2x1xi1>
    %499 = vector.broadcast %498 : vector<2x1xi1> to vector<2x16xi1>
    %500 = vector.broadcast %cst_134 : f32 to vector<2x16xf32>
    %501 = arith.select %499, %495, %500 : vector<2x16xi1>, vector<2x16xf32>
    %502 = arith.index_cast %c7_i32_129 : i32 to index
    %c0_135 = arith.constant 0 : index
    %c0_136 = arith.constant 0 : index
    %503 = vector.load %arg23[%502, %c0_135, %c0_136] : memref<16x2x16xf32, #tpu.memory_space<vmem>>, vector<1x2x16xf32>
    %504 = vector.shape_cast %503 : vector<1x2x16xf32> to vector<2x16xf32>
    %505 = vector.shape_cast %501 : vector<2x16xf32> to vector<1x2x16xf32>
    tpu.vector_store %arg23[%502, %c0_135, %c0_136], %505 {strides = array<i32>} : memref<16x2x16xf32, #tpu.memory_space<vmem>>, vector<1x2x16xf32>,
    %c7_i32_137 = arith.constant 7 : i32
    %506 = arith.minsi %c7_i32_129, %c7_i32_137 : i32
    %507 = arith.index_cast %506 : i32 to index
    %c0_138 = arith.constant 0 : index
    %c0_139 = arith.constant 0 : index
    %508 = vector.load %arg22[%507, %c0_138, %c0_139] : memref<8x2x64xf32, #tpu.memory_space<vmem>>, vector<1x2x64xf32>
    %509 = vector.shape_cast %508 : vector<1x2x64xf32> to vector<2x64xf32>
    %cst_140 = arith.constant dense<0.000000e+00> : vector<2x64xf32>
    %510 = tpu.matmul %473, %19, %cst_140 {dimension_numbers = #tpu.dot_dimension_numbers<[1], [0], [0], [1], [0, 0, 1, 1], [], []>} : vector<2x16xf32>, vector<16x64xf32>, vector<2x64xf32> -> vector<2x64xf32>
    %511 = arith.addf %509, %510 : vector<2x64xf32>
    %512 = math.tanh %511 : vector<2x64xf32>
    %513 = arith.negf %511 : vector<2x64xf32>
    %514 = math.exp %513 : vector<2x64xf32>
    %cst_141 = arith.constant 1.000000e+00 : f32
    %515 = vector.broadcast %cst_141 : f32 to vector<2x64xf32>
    %516 = arith.addf %515, %514 : vector<2x64xf32>
    %517 = arith.divf %515, %516 : vector<2x64xf32>
    %518 = arith.select %32, %512, %517 : vector<2x64xi1>, vector<2x64xf32>
    %519 = vector.extract_strided_slice %518 {offsets = [0, 0], sizes = [2, 16], strides = [1, 1]} : vector<2x64xf32> to vector<2x16xf32>
    %520 = vector.extract_strided_slice %518 {offsets = [0, 16], sizes = [2, 16], strides = [1, 1]} : vector<2x64xf32> to vector<2x16xf32>
    %521 = vector.extract_strided_slice %518 {offsets = [0, 32], sizes = [2, 16], strides = [1, 1]} : vector<2x64xf32> to vector<2x16xf32>
    %522 = vector.extract_strided_slice %518 {offsets = [0, 48], sizes = [2, 16], strides = [1, 1]} : vector<2x64xf32> to vector<2x16xf32>
    %523 = arith.mulf %520, %474 : vector<2x16xf32>
    %524 = arith.mulf %519, %521 : vector<2x16xf32>
    %525 = arith.addf %523, %524 : vector<2x16xf32>
    %526 = math.tanh %525 : vector<2x16xf32>
    %527 = arith.mulf %522, %526 : vector<2x16xf32>
    %528 = vector.broadcast %c7_i32_129 : i32 to vector<2x1xi32>
    %529 = arith.cmpi eq, %528, %42 : vector<2x1xi32>
    %530 = vector.shape_cast %529 : vector<2x1xi1> to vector<2x1xi1>
    %531 = vector.broadcast %530 : vector<2x1xi1> to vector<2x16xi1>
    %532 = arith.select %531, %527, %471 : vector<2x16xi1>, vector<2x16xf32>
    %c8_i32_142 = arith.constant 8 : i32
    %533 = arith.cmpi slt, %c7_i32_129, %c8_i32_142 : i32
    %534 = arith.select %533, %527, %473 : vector<2x16xf32>
    %535 = arith.select %533, %525, %474 : vector<2x16xf32>
    %c8_i32_143 = arith.constant 8 : i32
    %536 = arith.index_cast %c8_i32_143 : i32 to index
    %c0_144 = arith.constant 0 : index
    %c0_145 = arith.constant 0 : index
    %537 = vector.load %arg21[%536, %c0_144, %c0_145] : memref<16x2x64xf32, #tpu.memory_space<vmem>>, vector<1x2x64xf32>
    %538 = vector.shape_cast %537 : vector<1x2x64xf32> to vector<2x64xf32>
    %cst_146 = arith.constant dense<0.000000e+00> : vector<2x64xf32>
    %539 = tpu.matmul %495, %18, %cst_146 {dimension_numbers = #tpu.dot_dimension_numbers<[1], [0], [0], [1], [0, 0, 1, 1], [], []>} : vector<2x16xf32>, vector<16x64xf32>, vector<2x64xf32> -> vector<2x64xf32>
    %540 = arith.addf %538, %539 : vector<2x64xf32>
    %541 = math.tanh %540 : vector<2x64xf32>
    %542 = arith.negf %540 : vector<2x64xf32>
    %543 = math.exp %542 : vector<2x64xf32>
    %cst_147 = arith.constant 1.000000e+00 : f32
    %544 = vector.broadcast %cst_147 : f32 to vector<2x64xf32>
    %545 = arith.addf %544, %543 : vector<2x64xf32>
    %546 = arith.divf %544, %545 : vector<2x64xf32>
    %547 = arith.select %26, %541, %546 : vector<2x64xi1>, vector<2x64xf32>
    %548 = vector.extract_strided_slice %547 {offsets = [0, 0], sizes = [2, 16], strides = [1, 1]} : vector<2x64xf32> to vector<2x16xf32>
    %549 = vector.extract_strided_slice %547 {offsets = [0, 16], sizes = [2, 16], strides = [1, 1]} : vector<2x64xf32> to vector<2x16xf32>
    %550 = vector.extract_strided_slice %547 {offsets = [0, 32], sizes = [2, 16], strides = [1, 1]} : vector<2x64xf32> to vector<2x16xf32>
    %551 = vector.extract_strided_slice %547 {offsets = [0, 48], sizes = [2, 16], strides = [1, 1]} : vector<2x64xf32> to vector<2x16xf32>
    %552 = arith.mulf %549, %493 : vector<2x16xf32>
    %553 = arith.mulf %548, %550 : vector<2x16xf32>
    %554 = arith.addf %552, %553 : vector<2x16xf32>
    %555 = math.tanh %554 : vector<2x16xf32>
    %556 = arith.mulf %551, %555 : vector<2x16xf32>
    %557 = vector.broadcast %c8_i32_143 : i32 to vector<2x1xi32>
    %558 = arith.cmpi slt, %557, %39 : vector<2x1xi32>
    %cst_148 = arith.constant 0.000000e+00 : f32
    %559 = vector.shape_cast %558 : vector<2x1xi1> to vector<2x1xi1>
    %560 = vector.broadcast %559 : vector<2x1xi1> to vector<2x16xi1>
    %561 = vector.broadcast %cst_148 : f32 to vector<2x16xf32>
    %562 = arith.select %560, %556, %561 : vector<2x16xi1>, vector<2x16xf32>
    %563 = arith.index_cast %c8_i32_143 : i32 to index
    %c0_149 = arith.constant 0 : index
    %c0_150 = arith.constant 0 : index
    %564 = vector.load %arg23[%563, %c0_149, %c0_150] : memref<16x2x16xf32, #tpu.memory_space<vmem>>, vector<1x2x16xf32>
    %565 = vector.shape_cast %564 : vector<1x2x16xf32> to vector<2x16xf32>
    %566 = vector.shape_cast %562 : vector<2x16xf32> to vector<1x2x16xf32>
    tpu.vector_store %arg23[%563, %c0_149, %c0_150], %566 {strides = array<i32>} : memref<16x2x16xf32, #tpu.memory_space<vmem>>, vector<1x2x16xf32>,
    %c7_i32_151 = arith.constant 7 : i32
    %567 = arith.minsi %c8_i32_143, %c7_i32_151 : i32
    %568 = arith.index_cast %567 : i32 to index
    %c0_152 = arith.constant 0 : index
    %c0_153 = arith.constant 0 : index
    %569 = vector.load %arg22[%568, %c0_152, %c0_153] : memref<8x2x64xf32, #tpu.memory_space<vmem>>, vector<1x2x64xf32>
    %570 = vector.shape_cast %569 : vector<1x2x64xf32> to vector<2x64xf32>
    %cst_154 = arith.constant dense<0.000000e+00> : vector<2x64xf32>
    %571 = tpu.matmul %534, %19, %cst_154 {dimension_numbers = #tpu.dot_dimension_numbers<[1], [0], [0], [1], [0, 0, 1, 1], [], []>} : vector<2x16xf32>, vector<16x64xf32>, vector<2x64xf32> -> vector<2x64xf32>
    %572 = arith.addf %570, %571 : vector<2x64xf32>
    %573 = math.tanh %572 : vector<2x64xf32>
    %574 = arith.negf %572 : vector<2x64xf32>
    %575 = math.exp %574 : vector<2x64xf32>
    %cst_155 = arith.constant 1.000000e+00 : f32
    %576 = vector.broadcast %cst_155 : f32 to vector<2x64xf32>
    %577 = arith.addf %576, %575 : vector<2x64xf32>
    %578 = arith.divf %576, %577 : vector<2x64xf32>
    %579 = arith.select %32, %573, %578 : vector<2x64xi1>, vector<2x64xf32>
    %580 = vector.extract_strided_slice %579 {offsets = [0, 0], sizes = [2, 16], strides = [1, 1]} : vector<2x64xf32> to vector<2x16xf32>
    %581 = vector.extract_strided_slice %579 {offsets = [0, 16], sizes = [2, 16], strides = [1, 1]} : vector<2x64xf32> to vector<2x16xf32>
    %582 = vector.extract_strided_slice %579 {offsets = [0, 32], sizes = [2, 16], strides = [1, 1]} : vector<2x64xf32> to vector<2x16xf32>
    %583 = vector.extract_strided_slice %579 {offsets = [0, 48], sizes = [2, 16], strides = [1, 1]} : vector<2x64xf32> to vector<2x16xf32>
    %584 = arith.mulf %581, %535 : vector<2x16xf32>
    %585 = arith.mulf %580, %582 : vector<2x16xf32>
    %586 = arith.addf %584, %585 : vector<2x16xf32>
    %587 = math.tanh %586 : vector<2x16xf32>
    %588 = arith.mulf %583, %587 : vector<2x16xf32>
    %589 = vector.broadcast %c8_i32_143 : i32 to vector<2x1xi32>
    %590 = arith.cmpi eq, %589, %42 : vector<2x1xi32>
    %591 = vector.shape_cast %590 : vector<2x1xi1> to vector<2x1xi1>
    %592 = vector.broadcast %591 : vector<2x1xi1> to vector<2x16xi1>
    %593 = arith.select %592, %588, %532 : vector<2x16xi1>, vector<2x16xf32>
    %c8_i32_156 = arith.constant 8 : i32
    %594 = arith.cmpi slt, %c8_i32_143, %c8_i32_156 : i32
    %595 = arith.select %594, %588, %534 : vector<2x16xf32>
    %596 = arith.select %594, %586, %535 : vector<2x16xf32>
    %c9_i32 = arith.constant 9 : i32
    %597 = arith.index_cast %c9_i32 : i32 to index
    %c0_157 = arith.constant 0 : index
    %c0_158 = arith.constant 0 : index
    %598 = vector.load %arg21[%597, %c0_157, %c0_158] : memref<16x2x64xf32, #tpu.memory_space<vmem>>, vector<1x2x64xf32>
    %599 = vector.shape_cast %598 : vector<1x2x64xf32> to vector<2x64xf32>
    %cst_159 = arith.constant dense<0.000000e+00> : vector<2x64xf32>
    %600 = tpu.matmul %556, %18, %cst_159 {dimension_numbers = #tpu.dot_dimension_numbers<[1], [0], [0], [1], [0, 0, 1, 1], [], []>} : vector<2x16xf32>, vector<16x64xf32>, vector<2x64xf32> -> vector<2x64xf32>
    %601 = arith.addf %599, %600 : vector<2x64xf32>
    %602 = math.tanh %601 : vector<2x64xf32>
    %603 = arith.negf %601 : vector<2x64xf32>
    %604 = math.exp %603 : vector<2x64xf32>
    %cst_160 = arith.constant 1.000000e+00 : f32
    %605 = vector.broadcast %cst_160 : f32 to vector<2x64xf32>
    %606 = arith.addf %605, %604 : vector<2x64xf32>
    %607 = arith.divf %605, %606 : vector<2x64xf32>
    %608 = arith.select %26, %602, %607 : vector<2x64xi1>, vector<2x64xf32>
    %609 = vector.extract_strided_slice %608 {offsets = [0, 0], sizes = [2, 16], strides = [1, 1]} : vector<2x64xf32> to vector<2x16xf32>
    %610 = vector.extract_strided_slice %608 {offsets = [0, 16], sizes = [2, 16], strides = [1, 1]} : vector<2x64xf32> to vector<2x16xf32>
    %611 = vector.extract_strided_slice %608 {offsets = [0, 32], sizes = [2, 16], strides = [1, 1]} : vector<2x64xf32> to vector<2x16xf32>
    %612 = vector.extract_strided_slice %608 {offsets = [0, 48], sizes = [2, 16], strides = [1, 1]} : vector<2x64xf32> to vector<2x16xf32>
    %613 = arith.mulf %610, %554 : vector<2x16xf32>
    %614 = arith.mulf %609, %611 : vector<2x16xf32>
    %615 = arith.addf %613, %614 : vector<2x16xf32>
    %616 = math.tanh %615 : vector<2x16xf32>
    %617 = arith.mulf %612, %616 : vector<2x16xf32>
    %618 = vector.broadcast %c9_i32 : i32 to vector<2x1xi32>
    %619 = arith.cmpi slt, %618, %39 : vector<2x1xi32>
    %cst_161 = arith.constant 0.000000e+00 : f32
    %620 = vector.shape_cast %619 : vector<2x1xi1> to vector<2x1xi1>
    %621 = vector.broadcast %620 : vector<2x1xi1> to vector<2x16xi1>
    %622 = vector.broadcast %cst_161 : f32 to vector<2x16xf32>
    %623 = arith.select %621, %617, %622 : vector<2x16xi1>, vector<2x16xf32>
    %624 = arith.index_cast %c9_i32 : i32 to index
    %c0_162 = arith.constant 0 : index
    %c0_163 = arith.constant 0 : index
    %625 = vector.load %arg23[%624, %c0_162, %c0_163] : memref<16x2x16xf32, #tpu.memory_space<vmem>>, vector<1x2x16xf32>
    %626 = vector.shape_cast %625 : vector<1x2x16xf32> to vector<2x16xf32>
    %627 = vector.shape_cast %623 : vector<2x16xf32> to vector<1x2x16xf32>
    tpu.vector_store %arg23[%624, %c0_162, %c0_163], %627 {strides = array<i32>} : memref<16x2x16xf32, #tpu.memory_space<vmem>>, vector<1x2x16xf32>,
    %c7_i32_164 = arith.constant 7 : i32
    %628 = arith.minsi %c9_i32, %c7_i32_164 : i32
    %629 = arith.index_cast %628 : i32 to index
    %c0_165 = arith.constant 0 : index
    %c0_166 = arith.constant 0 : index
    %630 = vector.load %arg22[%629, %c0_165, %c0_166] : memref<8x2x64xf32, #tpu.memory_space<vmem>>, vector<1x2x64xf32>
    %631 = vector.shape_cast %630 : vector<1x2x64xf32> to vector<2x64xf32>
    %cst_167 = arith.constant dense<0.000000e+00> : vector<2x64xf32>
    %632 = tpu.matmul %595, %19, %cst_167 {dimension_numbers = #tpu.dot_dimension_numbers<[1], [0], [0], [1], [0, 0, 1, 1], [], []>} : vector<2x16xf32>, vector<16x64xf32>, vector<2x64xf32> -> vector<2x64xf32>
    %633 = arith.addf %631, %632 : vector<2x64xf32>
    %634 = math.tanh %633 : vector<2x64xf32>
    %635 = arith.negf %633 : vector<2x64xf32>
    %636 = math.exp %635 : vector<2x64xf32>
    %cst_168 = arith.constant 1.000000e+00 : f32
    %637 = vector.broadcast %cst_168 : f32 to vector<2x64xf32>
    %638 = arith.addf %637, %636 : vector<2x64xf32>
    %639 = arith.divf %637, %638 : vector<2x64xf32>
    %640 = arith.select %32, %634, %639 : vector<2x64xi1>, vector<2x64xf32>
    %641 = vector.extract_strided_slice %640 {offsets = [0, 0], sizes = [2, 16], strides = [1, 1]} : vector<2x64xf32> to vector<2x16xf32>
    %642 = vector.extract_strided_slice %640 {offsets = [0, 16], sizes = [2, 16], strides = [1, 1]} : vector<2x64xf32> to vector<2x16xf32>
    %643 = vector.extract_strided_slice %640 {offsets = [0, 32], sizes = [2, 16], strides = [1, 1]} : vector<2x64xf32> to vector<2x16xf32>
    %644 = vector.extract_strided_slice %640 {offsets = [0, 48], sizes = [2, 16], strides = [1, 1]} : vector<2x64xf32> to vector<2x16xf32>
    %645 = arith.mulf %642, %596 : vector<2x16xf32>
    %646 = arith.mulf %641, %643 : vector<2x16xf32>
    %647 = arith.addf %645, %646 : vector<2x16xf32>
    %648 = math.tanh %647 : vector<2x16xf32>
    %649 = arith.mulf %644, %648 : vector<2x16xf32>
    %650 = vector.broadcast %c9_i32 : i32 to vector<2x1xi32>
    %651 = arith.cmpi eq, %650, %42 : vector<2x1xi32>
    %652 = vector.shape_cast %651 : vector<2x1xi1> to vector<2x1xi1>
    %653 = vector.broadcast %652 : vector<2x1xi1> to vector<2x16xi1>
    %654 = arith.select %653, %649, %593 : vector<2x16xi1>, vector<2x16xf32>
    %c8_i32_169 = arith.constant 8 : i32
    %655 = arith.cmpi slt, %c9_i32, %c8_i32_169 : i32
    %656 = arith.select %655, %649, %595 : vector<2x16xf32>
    %657 = arith.select %655, %647, %596 : vector<2x16xf32>
    %c10_i32 = arith.constant 10 : i32
    %658 = arith.index_cast %c10_i32 : i32 to index
    %c0_170 = arith.constant 0 : index
    %c0_171 = arith.constant 0 : index
    %659 = vector.load %arg21[%658, %c0_170, %c0_171] : memref<16x2x64xf32, #tpu.memory_space<vmem>>, vector<1x2x64xf32>
    %660 = vector.shape_cast %659 : vector<1x2x64xf32> to vector<2x64xf32>
    %cst_172 = arith.constant dense<0.000000e+00> : vector<2x64xf32>
    %661 = tpu.matmul %617, %18, %cst_172 {dimension_numbers = #tpu.dot_dimension_numbers<[1], [0], [0], [1], [0, 0, 1, 1], [], []>} : vector<2x16xf32>, vector<16x64xf32>, vector<2x64xf32> -> vector<2x64xf32>
    %662 = arith.addf %660, %661 : vector<2x64xf32>
    %663 = math.tanh %662 : vector<2x64xf32>
    %664 = arith.negf %662 : vector<2x64xf32>
    %665 = math.exp %664 : vector<2x64xf32>
    %cst_173 = arith.constant 1.000000e+00 : f32
    %666 = vector.broadcast %cst_173 : f32 to vector<2x64xf32>
    %667 = arith.addf %666, %665 : vector<2x64xf32>
    %668 = arith.divf %666, %667 : vector<2x64xf32>
    %669 = arith.select %26, %663, %668 : vector<2x64xi1>, vector<2x64xf32>
    %670 = vector.extract_strided_slice %669 {offsets = [0, 0], sizes = [2, 16], strides = [1, 1]} : vector<2x64xf32> to vector<2x16xf32>
    %671 = vector.extract_strided_slice %669 {offsets = [0, 16], sizes = [2, 16], strides = [1, 1]} : vector<2x64xf32> to vector<2x16xf32>
    %672 = vector.extract_strided_slice %669 {offsets = [0, 32], sizes = [2, 16], strides = [1, 1]} : vector<2x64xf32> to vector<2x16xf32>
    %673 = vector.extract_strided_slice %669 {offsets = [0, 48], sizes = [2, 16], strides = [1, 1]} : vector<2x64xf32> to vector<2x16xf32>
    %674 = arith.mulf %671, %615 : vector<2x16xf32>
    %675 = arith.mulf %670, %672 : vector<2x16xf32>
    %676 = arith.addf %674, %675 : vector<2x16xf32>
    %677 = math.tanh %676 : vector<2x16xf32>
    %678 = arith.mulf %673, %677 : vector<2x16xf32>
    %679 = vector.broadcast %c10_i32 : i32 to vector<2x1xi32>
    %680 = arith.cmpi slt, %679, %39 : vector<2x1xi32>
    %cst_174 = arith.constant 0.000000e+00 : f32
    %681 = vector.shape_cast %680 : vector<2x1xi1> to vector<2x1xi1>
    %682 = vector.broadcast %681 : vector<2x1xi1> to vector<2x16xi1>
    %683 = vector.broadcast %cst_174 : f32 to vector<2x16xf32>
    %684 = arith.select %682, %678, %683 : vector<2x16xi1>, vector<2x16xf32>
    %685 = arith.index_cast %c10_i32 : i32 to index
    %c0_175 = arith.constant 0 : index
    %c0_176 = arith.constant 0 : index
    %686 = vector.load %arg23[%685, %c0_175, %c0_176] : memref<16x2x16xf32, #tpu.memory_space<vmem>>, vector<1x2x16xf32>
    %687 = vector.shape_cast %686 : vector<1x2x16xf32> to vector<2x16xf32>
    %688 = vector.shape_cast %684 : vector<2x16xf32> to vector<1x2x16xf32>
    tpu.vector_store %arg23[%685, %c0_175, %c0_176], %688 {strides = array<i32>} : memref<16x2x16xf32, #tpu.memory_space<vmem>>, vector<1x2x16xf32>,
    %c7_i32_177 = arith.constant 7 : i32
    %689 = arith.minsi %c10_i32, %c7_i32_177 : i32
    %690 = arith.index_cast %689 : i32 to index
    %c0_178 = arith.constant 0 : index
    %c0_179 = arith.constant 0 : index
    %691 = vector.load %arg22[%690, %c0_178, %c0_179] : memref<8x2x64xf32, #tpu.memory_space<vmem>>, vector<1x2x64xf32>
    %692 = vector.shape_cast %691 : vector<1x2x64xf32> to vector<2x64xf32>
    %cst_180 = arith.constant dense<0.000000e+00> : vector<2x64xf32>
    %693 = tpu.matmul %656, %19, %cst_180 {dimension_numbers = #tpu.dot_dimension_numbers<[1], [0], [0], [1], [0, 0, 1, 1], [], []>} : vector<2x16xf32>, vector<16x64xf32>, vector<2x64xf32> -> vector<2x64xf32>
    %694 = arith.addf %692, %693 : vector<2x64xf32>
    %695 = math.tanh %694 : vector<2x64xf32>
    %696 = arith.negf %694 : vector<2x64xf32>
    %697 = math.exp %696 : vector<2x64xf32>
    %cst_181 = arith.constant 1.000000e+00 : f32
    %698 = vector.broadcast %cst_181 : f32 to vector<2x64xf32>
    %699 = arith.addf %698, %697 : vector<2x64xf32>
    %700 = arith.divf %698, %699 : vector<2x64xf32>
    %701 = arith.select %32, %695, %700 : vector<2x64xi1>, vector<2x64xf32>
    %702 = vector.extract_strided_slice %701 {offsets = [0, 0], sizes = [2, 16], strides = [1, 1]} : vector<2x64xf32> to vector<2x16xf32>
    %703 = vector.extract_strided_slice %701 {offsets = [0, 16], sizes = [2, 16], strides = [1, 1]} : vector<2x64xf32> to vector<2x16xf32>
    %704 = vector.extract_strided_slice %701 {offsets = [0, 32], sizes = [2, 16], strides = [1, 1]} : vector<2x64xf32> to vector<2x16xf32>
    %705 = vector.extract_strided_slice %701 {offsets = [0, 48], sizes = [2, 16], strides = [1, 1]} : vector<2x64xf32> to vector<2x16xf32>
    %706 = arith.mulf %703, %657 : vector<2x16xf32>
    %707 = arith.mulf %702, %704 : vector<2x16xf32>
    %708 = arith.addf %706, %707 : vector<2x16xf32>
    %709 = math.tanh %708 : vector<2x16xf32>
    %710 = arith.mulf %705, %709 : vector<2x16xf32>
    %711 = vector.broadcast %c10_i32 : i32 to vector<2x1xi32>
    %712 = arith.cmpi eq, %711, %42 : vector<2x1xi32>
    %713 = vector.shape_cast %712 : vector<2x1xi1> to vector<2x1xi1>
    %714 = vector.broadcast %713 : vector<2x1xi1> to vector<2x16xi1>
    %715 = arith.select %714, %710, %654 : vector<2x16xi1>, vector<2x16xf32>
    %c8_i32_182 = arith.constant 8 : i32
    %716 = arith.cmpi slt, %c10_i32, %c8_i32_182 : i32
    %717 = arith.select %716, %710, %656 : vector<2x16xf32>
    %718 = arith.select %716, %708, %657 : vector<2x16xf32>
    %c11_i32 = arith.constant 11 : i32
    %719 = arith.index_cast %c11_i32 : i32 to index
    %c0_183 = arith.constant 0 : index
    %c0_184 = arith.constant 0 : index
    %720 = vector.load %arg21[%719, %c0_183, %c0_184] : memref<16x2x64xf32, #tpu.memory_space<vmem>>, vector<1x2x64xf32>
    %721 = vector.shape_cast %720 : vector<1x2x64xf32> to vector<2x64xf32>
    %cst_185 = arith.constant dense<0.000000e+00> : vector<2x64xf32>
    %722 = tpu.matmul %678, %18, %cst_185 {dimension_numbers = #tpu.dot_dimension_numbers<[1], [0], [0], [1], [0, 0, 1, 1], [], []>} : vector<2x16xf32>, vector<16x64xf32>, vector<2x64xf32> -> vector<2x64xf32>
    %723 = arith.addf %721, %722 : vector<2x64xf32>
    %724 = math.tanh %723 : vector<2x64xf32>
    %725 = arith.negf %723 : vector<2x64xf32>
    %726 = math.exp %725 : vector<2x64xf32>
    %cst_186 = arith.constant 1.000000e+00 : f32
    %727 = vector.broadcast %cst_186 : f32 to vector<2x64xf32>
    %728 = arith.addf %727, %726 : vector<2x64xf32>
    %729 = arith.divf %727, %728 : vector<2x64xf32>
    %730 = arith.select %26, %724, %729 : vector<2x64xi1>, vector<2x64xf32>
    %731 = vector.extract_strided_slice %730 {offsets = [0, 0], sizes = [2, 16], strides = [1, 1]} : vector<2x64xf32> to vector<2x16xf32>
    %732 = vector.extract_strided_slice %730 {offsets = [0, 16], sizes = [2, 16], strides = [1, 1]} : vector<2x64xf32> to vector<2x16xf32>
    %733 = vector.extract_strided_slice %730 {offsets = [0, 32], sizes = [2, 16], strides = [1, 1]} : vector<2x64xf32> to vector<2x16xf32>
    %734 = vector.extract_strided_slice %730 {offsets = [0, 48], sizes = [2, 16], strides = [1, 1]} : vector<2x64xf32> to vector<2x16xf32>
    %735 = arith.mulf %732, %676 : vector<2x16xf32>
    %736 = arith.mulf %731, %733 : vector<2x16xf32>
    %737 = arith.addf %735, %736 : vector<2x16xf32>
    %738 = math.tanh %737 : vector<2x16xf32>
    %739 = arith.mulf %734, %738 : vector<2x16xf32>
    %740 = vector.broadcast %c11_i32 : i32 to vector<2x1xi32>
    %741 = arith.cmpi slt, %740, %39 : vector<2x1xi32>
    %cst_187 = arith.constant 0.000000e+00 : f32
    %742 = vector.shape_cast %741 : vector<2x1xi1> to vector<2x1xi1>
    %743 = vector.broadcast %742 : vector<2x1xi1> to vector<2x16xi1>
    %744 = vector.broadcast %cst_187 : f32 to vector<2x16xf32>
    %745 = arith.select %743, %739, %744 : vector<2x16xi1>, vector<2x16xf32>
    %746 = arith.index_cast %c11_i32 : i32 to index
    %c0_188 = arith.constant 0 : index
    %c0_189 = arith.constant 0 : index
    %747 = vector.load %arg23[%746, %c0_188, %c0_189] : memref<16x2x16xf32, #tpu.memory_space<vmem>>, vector<1x2x16xf32>
    %748 = vector.shape_cast %747 : vector<1x2x16xf32> to vector<2x16xf32>
    %749 = vector.shape_cast %745 : vector<2x16xf32> to vector<1x2x16xf32>
    tpu.vector_store %arg23[%746, %c0_188, %c0_189], %749 {strides = array<i32>} : memref<16x2x16xf32, #tpu.memory_space<vmem>>, vector<1x2x16xf32>,
    %c7_i32_190 = arith.constant 7 : i32
    %750 = arith.minsi %c11_i32, %c7_i32_190 : i32
    %751 = arith.index_cast %750 : i32 to index
    %c0_191 = arith.constant 0 : index
    %c0_192 = arith.constant 0 : index
    %752 = vector.load %arg22[%751, %c0_191, %c0_192] : memref<8x2x64xf32, #tpu.memory_space<vmem>>, vector<1x2x64xf32>
    %753 = vector.shape_cast %752 : vector<1x2x64xf32> to vector<2x64xf32>
    %cst_193 = arith.constant dense<0.000000e+00> : vector<2x64xf32>
    %754 = tpu.matmul %717, %19, %cst_193 {dimension_numbers = #tpu.dot_dimension_numbers<[1], [0], [0], [1], [0, 0, 1, 1], [], []>} : vector<2x16xf32>, vector<16x64xf32>, vector<2x64xf32> -> vector<2x64xf32>
    %755 = arith.addf %753, %754 : vector<2x64xf32>
    %756 = math.tanh %755 : vector<2x64xf32>
    %757 = arith.negf %755 : vector<2x64xf32>
    %758 = math.exp %757 : vector<2x64xf32>
    %cst_194 = arith.constant 1.000000e+00 : f32
    %759 = vector.broadcast %cst_194 : f32 to vector<2x64xf32>
    %760 = arith.addf %759, %758 : vector<2x64xf32>
    %761 = arith.divf %759, %760 : vector<2x64xf32>
    %762 = arith.select %32, %756, %761 : vector<2x64xi1>, vector<2x64xf32>
    %763 = vector.extract_strided_slice %762 {offsets = [0, 0], sizes = [2, 16], strides = [1, 1]} : vector<2x64xf32> to vector<2x16xf32>
    %764 = vector.extract_strided_slice %762 {offsets = [0, 16], sizes = [2, 16], strides = [1, 1]} : vector<2x64xf32> to vector<2x16xf32>
    %765 = vector.extract_strided_slice %762 {offsets = [0, 32], sizes = [2, 16], strides = [1, 1]} : vector<2x64xf32> to vector<2x16xf32>
    %766 = vector.extract_strided_slice %762 {offsets = [0, 48], sizes = [2, 16], strides = [1, 1]} : vector<2x64xf32> to vector<2x16xf32>
    %767 = arith.mulf %764, %718 : vector<2x16xf32>
    %768 = arith.mulf %763, %765 : vector<2x16xf32>
    %769 = arith.addf %767, %768 : vector<2x16xf32>
    %770 = math.tanh %769 : vector<2x16xf32>
    %771 = arith.mulf %766, %770 : vector<2x16xf32>
    %772 = vector.broadcast %c11_i32 : i32 to vector<2x1xi32>
    %773 = arith.cmpi eq, %772, %42 : vector<2x1xi32>
    %774 = vector.shape_cast %773 : vector<2x1xi1> to vector<2x1xi1>
    %775 = vector.broadcast %774 : vector<2x1xi1> to vector<2x16xi1>
    %776 = arith.select %775, %771, %715 : vector<2x16xi1>, vector<2x16xf32>
    %c8_i32_195 = arith.constant 8 : i32
    %777 = arith.cmpi slt, %c11_i32, %c8_i32_195 : i32
    %778 = arith.select %777, %771, %717 : vector<2x16xf32>
    %779 = arith.select %777, %769, %718 : vector<2x16xf32>
    %c12_i32 = arith.constant 12 : i32
    %780 = arith.index_cast %c12_i32 : i32 to index
    %c0_196 = arith.constant 0 : index
    %c0_197 = arith.constant 0 : index
    %781 = vector.load %arg21[%780, %c0_196, %c0_197] : memref<16x2x64xf32, #tpu.memory_space<vmem>>, vector<1x2x64xf32>
    %782 = vector.shape_cast %781 : vector<1x2x64xf32> to vector<2x64xf32>
    %cst_198 = arith.constant dense<0.000000e+00> : vector<2x64xf32>
    %783 = tpu.matmul %739, %18, %cst_198 {dimension_numbers = #tpu.dot_dimension_numbers<[1], [0], [0], [1], [0, 0, 1, 1], [], []>} : vector<2x16xf32>, vector<16x64xf32>, vector<2x64xf32> -> vector<2x64xf32>
    %784 = arith.addf %782, %783 : vector<2x64xf32>
    %785 = math.tanh %784 : vector<2x64xf32>
    %786 = arith.negf %784 : vector<2x64xf32>
    %787 = math.exp %786 : vector<2x64xf32>
    %cst_199 = arith.constant 1.000000e+00 : f32
    %788 = vector.broadcast %cst_199 : f32 to vector<2x64xf32>
    %789 = arith.addf %788, %787 : vector<2x64xf32>
    %790 = arith.divf %788, %789 : vector<2x64xf32>
    %791 = arith.select %26, %785, %790 : vector<2x64xi1>, vector<2x64xf32>
    %792 = vector.extract_strided_slice %791 {offsets = [0, 0], sizes = [2, 16], strides = [1, 1]} : vector<2x64xf32> to vector<2x16xf32>
    %793 = vector.extract_strided_slice %791 {offsets = [0, 16], sizes = [2, 16], strides = [1, 1]} : vector<2x64xf32> to vector<2x16xf32>
    %794 = vector.extract_strided_slice %791 {offsets = [0, 32], sizes = [2, 16], strides = [1, 1]} : vector<2x64xf32> to vector<2x16xf32>
    %795 = vector.extract_strided_slice %791 {offsets = [0, 48], sizes = [2, 16], strides = [1, 1]} : vector<2x64xf32> to vector<2x16xf32>
    %796 = arith.mulf %793, %737 : vector<2x16xf32>
    %797 = arith.mulf %792, %794 : vector<2x16xf32>
    %798 = arith.addf %796, %797 : vector<2x16xf32>
    %799 = math.tanh %798 : vector<2x16xf32>
    %800 = arith.mulf %795, %799 : vector<2x16xf32>
    %801 = vector.broadcast %c12_i32 : i32 to vector<2x1xi32>
    %802 = arith.cmpi slt, %801, %39 : vector<2x1xi32>
    %cst_200 = arith.constant 0.000000e+00 : f32
    %803 = vector.shape_cast %802 : vector<2x1xi1> to vector<2x1xi1>
    %804 = vector.broadcast %803 : vector<2x1xi1> to vector<2x16xi1>
    %805 = vector.broadcast %cst_200 : f32 to vector<2x16xf32>
    %806 = arith.select %804, %800, %805 : vector<2x16xi1>, vector<2x16xf32>
    %807 = arith.index_cast %c12_i32 : i32 to index
    %c0_201 = arith.constant 0 : index
    %c0_202 = arith.constant 0 : index
    %808 = vector.load %arg23[%807, %c0_201, %c0_202] : memref<16x2x16xf32, #tpu.memory_space<vmem>>, vector<1x2x16xf32>
    %809 = vector.shape_cast %808 : vector<1x2x16xf32> to vector<2x16xf32>
    %810 = vector.shape_cast %806 : vector<2x16xf32> to vector<1x2x16xf32>
    tpu.vector_store %arg23[%807, %c0_201, %c0_202], %810 {strides = array<i32>} : memref<16x2x16xf32, #tpu.memory_space<vmem>>, vector<1x2x16xf32>,
    %c7_i32_203 = arith.constant 7 : i32
    %811 = arith.minsi %c12_i32, %c7_i32_203 : i32
    %812 = arith.index_cast %811 : i32 to index
    %c0_204 = arith.constant 0 : index
    %c0_205 = arith.constant 0 : index
    %813 = vector.load %arg22[%812, %c0_204, %c0_205] : memref<8x2x64xf32, #tpu.memory_space<vmem>>, vector<1x2x64xf32>
    %814 = vector.shape_cast %813 : vector<1x2x64xf32> to vector<2x64xf32>
    %cst_206 = arith.constant dense<0.000000e+00> : vector<2x64xf32>
    %815 = tpu.matmul %778, %19, %cst_206 {dimension_numbers = #tpu.dot_dimension_numbers<[1], [0], [0], [1], [0, 0, 1, 1], [], []>} : vector<2x16xf32>, vector<16x64xf32>, vector<2x64xf32> -> vector<2x64xf32>
    %816 = arith.addf %814, %815 : vector<2x64xf32>
    %817 = math.tanh %816 : vector<2x64xf32>
    %818 = arith.negf %816 : vector<2x64xf32>
    %819 = math.exp %818 : vector<2x64xf32>
    %cst_207 = arith.constant 1.000000e+00 : f32
    %820 = vector.broadcast %cst_207 : f32 to vector<2x64xf32>
    %821 = arith.addf %820, %819 : vector<2x64xf32>
    %822 = arith.divf %820, %821 : vector<2x64xf32>
    %823 = arith.select %32, %817, %822 : vector<2x64xi1>, vector<2x64xf32>
    %824 = vector.extract_strided_slice %823 {offsets = [0, 0], sizes = [2, 16], strides = [1, 1]} : vector<2x64xf32> to vector<2x16xf32>
    %825 = vector.extract_strided_slice %823 {offsets = [0, 16], sizes = [2, 16], strides = [1, 1]} : vector<2x64xf32> to vector<2x16xf32>
    %826 = vector.extract_strided_slice %823 {offsets = [0, 32], sizes = [2, 16], strides = [1, 1]} : vector<2x64xf32> to vector<2x16xf32>
    %827 = vector.extract_strided_slice %823 {offsets = [0, 48], sizes = [2, 16], strides = [1, 1]} : vector<2x64xf32> to vector<2x16xf32>
    %828 = arith.mulf %825, %779 : vector<2x16xf32>
    %829 = arith.mulf %824, %826 : vector<2x16xf32>
    %830 = arith.addf %828, %829 : vector<2x16xf32>
    %831 = math.tanh %830 : vector<2x16xf32>
    %832 = arith.mulf %827, %831 : vector<2x16xf32>
    %833 = vector.broadcast %c12_i32 : i32 to vector<2x1xi32>
    %834 = arith.cmpi eq, %833, %42 : vector<2x1xi32>
    %835 = vector.shape_cast %834 : vector<2x1xi1> to vector<2x1xi1>
    %836 = vector.broadcast %835 : vector<2x1xi1> to vector<2x16xi1>
    %837 = arith.select %836, %832, %776 : vector<2x16xi1>, vector<2x16xf32>
    %c8_i32_208 = arith.constant 8 : i32
    %838 = arith.cmpi slt, %c12_i32, %c8_i32_208 : i32
    %839 = arith.select %838, %832, %778 : vector<2x16xf32>
    %840 = arith.select %838, %830, %779 : vector<2x16xf32>
    %c13_i32 = arith.constant 13 : i32
    %841 = arith.index_cast %c13_i32 : i32 to index
    %c0_209 = arith.constant 0 : index
    %c0_210 = arith.constant 0 : index
    %842 = vector.load %arg21[%841, %c0_209, %c0_210] : memref<16x2x64xf32, #tpu.memory_space<vmem>>, vector<1x2x64xf32>
    %843 = vector.shape_cast %842 : vector<1x2x64xf32> to vector<2x64xf32>
    %cst_211 = arith.constant dense<0.000000e+00> : vector<2x64xf32>
    %844 = tpu.matmul %800, %18, %cst_211 {dimension_numbers = #tpu.dot_dimension_numbers<[1], [0], [0], [1], [0, 0, 1, 1], [], []>} : vector<2x16xf32>, vector<16x64xf32>, vector<2x64xf32> -> vector<2x64xf32>
    %845 = arith.addf %843, %844 : vector<2x64xf32>
    %846 = math.tanh %845 : vector<2x64xf32>
    %847 = arith.negf %845 : vector<2x64xf32>
    %848 = math.exp %847 : vector<2x64xf32>
    %cst_212 = arith.constant 1.000000e+00 : f32
    %849 = vector.broadcast %cst_212 : f32 to vector<2x64xf32>
    %850 = arith.addf %849, %848 : vector<2x64xf32>
    %851 = arith.divf %849, %850 : vector<2x64xf32>
    %852 = arith.select %26, %846, %851 : vector<2x64xi1>, vector<2x64xf32>
    %853 = vector.extract_strided_slice %852 {offsets = [0, 0], sizes = [2, 16], strides = [1, 1]} : vector<2x64xf32> to vector<2x16xf32>
    %854 = vector.extract_strided_slice %852 {offsets = [0, 16], sizes = [2, 16], strides = [1, 1]} : vector<2x64xf32> to vector<2x16xf32>
    %855 = vector.extract_strided_slice %852 {offsets = [0, 32], sizes = [2, 16], strides = [1, 1]} : vector<2x64xf32> to vector<2x16xf32>
    %856 = vector.extract_strided_slice %852 {offsets = [0, 48], sizes = [2, 16], strides = [1, 1]} : vector<2x64xf32> to vector<2x16xf32>
    %857 = arith.mulf %854, %798 : vector<2x16xf32>
    %858 = arith.mulf %853, %855 : vector<2x16xf32>
    %859 = arith.addf %857, %858 : vector<2x16xf32>
    %860 = math.tanh %859 : vector<2x16xf32>
    %861 = arith.mulf %856, %860 : vector<2x16xf32>
    %862 = vector.broadcast %c13_i32 : i32 to vector<2x1xi32>
    %863 = arith.cmpi slt, %862, %39 : vector<2x1xi32>
    %cst_213 = arith.constant 0.000000e+00 : f32
    %864 = vector.shape_cast %863 : vector<2x1xi1> to vector<2x1xi1>
    %865 = vector.broadcast %864 : vector<2x1xi1> to vector<2x16xi1>
    %866 = vector.broadcast %cst_213 : f32 to vector<2x16xf32>
    %867 = arith.select %865, %861, %866 : vector<2x16xi1>, vector<2x16xf32>
    %868 = arith.index_cast %c13_i32 : i32 to index
    %c0_214 = arith.constant 0 : index
    %c0_215 = arith.constant 0 : index
    %869 = vector.load %arg23[%868, %c0_214, %c0_215] : memref<16x2x16xf32, #tpu.memory_space<vmem>>, vector<1x2x16xf32>
    %870 = vector.shape_cast %869 : vector<1x2x16xf32> to vector<2x16xf32>
    %871 = vector.shape_cast %867 : vector<2x16xf32> to vector<1x2x16xf32>
    tpu.vector_store %arg23[%868, %c0_214, %c0_215], %871 {strides = array<i32>} : memref<16x2x16xf32, #tpu.memory_space<vmem>>, vector<1x2x16xf32>,
    %c7_i32_216 = arith.constant 7 : i32
    %872 = arith.minsi %c13_i32, %c7_i32_216 : i32
    %873 = arith.index_cast %872 : i32 to index
    %c0_217 = arith.constant 0 : index
    %c0_218 = arith.constant 0 : index
    %874 = vector.load %arg22[%873, %c0_217, %c0_218] : memref<8x2x64xf32, #tpu.memory_space<vmem>>, vector<1x2x64xf32>
    %875 = vector.shape_cast %874 : vector<1x2x64xf32> to vector<2x64xf32>
    %cst_219 = arith.constant dense<0.000000e+00> : vector<2x64xf32>
    %876 = tpu.matmul %839, %19, %cst_219 {dimension_numbers = #tpu.dot_dimension_numbers<[1], [0], [0], [1], [0, 0, 1, 1], [], []>} : vector<2x16xf32>, vector<16x64xf32>, vector<2x64xf32> -> vector<2x64xf32>
    %877 = arith.addf %875, %876 : vector<2x64xf32>
    %878 = math.tanh %877 : vector<2x64xf32>
    %879 = arith.negf %877 : vector<2x64xf32>
    %880 = math.exp %879 : vector<2x64xf32>
    %cst_220 = arith.constant 1.000000e+00 : f32
    %881 = vector.broadcast %cst_220 : f32 to vector<2x64xf32>
    %882 = arith.addf %881, %880 : vector<2x64xf32>
    %883 = arith.divf %881, %882 : vector<2x64xf32>
    %884 = arith.select %32, %878, %883 : vector<2x64xi1>, vector<2x64xf32>
    %885 = vector.extract_strided_slice %884 {offsets = [0, 0], sizes = [2, 16], strides = [1, 1]} : vector<2x64xf32> to vector<2x16xf32>
    %886 = vector.extract_strided_slice %884 {offsets = [0, 16], sizes = [2, 16], strides = [1, 1]} : vector<2x64xf32> to vector<2x16xf32>
    %887 = vector.extract_strided_slice %884 {offsets = [0, 32], sizes = [2, 16], strides = [1, 1]} : vector<2x64xf32> to vector<2x16xf32>
    %888 = vector.extract_strided_slice %884 {offsets = [0, 48], sizes = [2, 16], strides = [1, 1]} : vector<2x64xf32> to vector<2x16xf32>
    %889 = arith.mulf %886, %840 : vector<2x16xf32>
    %890 = arith.mulf %885, %887 : vector<2x16xf32>
    %891 = arith.addf %889, %890 : vector<2x16xf32>
    %892 = math.tanh %891 : vector<2x16xf32>
    %893 = arith.mulf %888, %892 : vector<2x16xf32>
    %894 = vector.broadcast %c13_i32 : i32 to vector<2x1xi32>
    %895 = arith.cmpi eq, %894, %42 : vector<2x1xi32>
    %896 = vector.shape_cast %895 : vector<2x1xi1> to vector<2x1xi1>
    %897 = vector.broadcast %896 : vector<2x1xi1> to vector<2x16xi1>
    %898 = arith.select %897, %893, %837 : vector<2x16xi1>, vector<2x16xf32>
    %c8_i32_221 = arith.constant 8 : i32
    %899 = arith.cmpi slt, %c13_i32, %c8_i32_221 : i32
    %900 = arith.select %899, %893, %839 : vector<2x16xf32>
    %901 = arith.select %899, %891, %840 : vector<2x16xf32>
    %c14_i32 = arith.constant 14 : i32
    %902 = arith.index_cast %c14_i32 : i32 to index
    %c0_222 = arith.constant 0 : index
    %c0_223 = arith.constant 0 : index
    %903 = vector.load %arg21[%902, %c0_222, %c0_223] : memref<16x2x64xf32, #tpu.memory_space<vmem>>, vector<1x2x64xf32>
    %904 = vector.shape_cast %903 : vector<1x2x64xf32> to vector<2x64xf32>
    %cst_224 = arith.constant dense<0.000000e+00> : vector<2x64xf32>
    %905 = tpu.matmul %861, %18, %cst_224 {dimension_numbers = #tpu.dot_dimension_numbers<[1], [0], [0], [1], [0, 0, 1, 1], [], []>} : vector<2x16xf32>, vector<16x64xf32>, vector<2x64xf32> -> vector<2x64xf32>
    %906 = arith.addf %904, %905 : vector<2x64xf32>
    %907 = math.tanh %906 : vector<2x64xf32>
    %908 = arith.negf %906 : vector<2x64xf32>
    %909 = math.exp %908 : vector<2x64xf32>
    %cst_225 = arith.constant 1.000000e+00 : f32
    %910 = vector.broadcast %cst_225 : f32 to vector<2x64xf32>
    %911 = arith.addf %910, %909 : vector<2x64xf32>
    %912 = arith.divf %910, %911 : vector<2x64xf32>
    %913 = arith.select %26, %907, %912 : vector<2x64xi1>, vector<2x64xf32>
    %914 = vector.extract_strided_slice %913 {offsets = [0, 0], sizes = [2, 16], strides = [1, 1]} : vector<2x64xf32> to vector<2x16xf32>
    %915 = vector.extract_strided_slice %913 {offsets = [0, 16], sizes = [2, 16], strides = [1, 1]} : vector<2x64xf32> to vector<2x16xf32>
    %916 = vector.extract_strided_slice %913 {offsets = [0, 32], sizes = [2, 16], strides = [1, 1]} : vector<2x64xf32> to vector<2x16xf32>
    %917 = vector.extract_strided_slice %913 {offsets = [0, 48], sizes = [2, 16], strides = [1, 1]} : vector<2x64xf32> to vector<2x16xf32>
    %918 = arith.mulf %915, %859 : vector<2x16xf32>
    %919 = arith.mulf %914, %916 : vector<2x16xf32>
    %920 = arith.addf %918, %919 : vector<2x16xf32>
    %921 = math.tanh %920 : vector<2x16xf32>
    %922 = arith.mulf %917, %921 : vector<2x16xf32>
    %923 = vector.broadcast %c14_i32 : i32 to vector<2x1xi32>
    %924 = arith.cmpi slt, %923, %39 : vector<2x1xi32>
    %cst_226 = arith.constant 0.000000e+00 : f32
    %925 = vector.shape_cast %924 : vector<2x1xi1> to vector<2x1xi1>
    %926 = vector.broadcast %925 : vector<2x1xi1> to vector<2x16xi1>
    %927 = vector.broadcast %cst_226 : f32 to vector<2x16xf32>
    %928 = arith.select %926, %922, %927 : vector<2x16xi1>, vector<2x16xf32>
    %929 = arith.index_cast %c14_i32 : i32 to index
    %c0_227 = arith.constant 0 : index
    %c0_228 = arith.constant 0 : index
    %930 = vector.load %arg23[%929, %c0_227, %c0_228] : memref<16x2x16xf32, #tpu.memory_space<vmem>>, vector<1x2x16xf32>
    %931 = vector.shape_cast %930 : vector<1x2x16xf32> to vector<2x16xf32>
    %932 = vector.shape_cast %928 : vector<2x16xf32> to vector<1x2x16xf32>
    tpu.vector_store %arg23[%929, %c0_227, %c0_228], %932 {strides = array<i32>} : memref<16x2x16xf32, #tpu.memory_space<vmem>>, vector<1x2x16xf32>,
    %c7_i32_229 = arith.constant 7 : i32
    %933 = arith.minsi %c14_i32, %c7_i32_229 : i32
    %934 = arith.index_cast %933 : i32 to index
    %c0_230 = arith.constant 0 : index
    %c0_231 = arith.constant 0 : index
    %935 = vector.load %arg22[%934, %c0_230, %c0_231] : memref<8x2x64xf32, #tpu.memory_space<vmem>>, vector<1x2x64xf32>
    %936 = vector.shape_cast %935 : vector<1x2x64xf32> to vector<2x64xf32>
    %cst_232 = arith.constant dense<0.000000e+00> : vector<2x64xf32>
    %937 = tpu.matmul %900, %19, %cst_232 {dimension_numbers = #tpu.dot_dimension_numbers<[1], [0], [0], [1], [0, 0, 1, 1], [], []>} : vector<2x16xf32>, vector<16x64xf32>, vector<2x64xf32> -> vector<2x64xf32>
    %938 = arith.addf %936, %937 : vector<2x64xf32>
    %939 = math.tanh %938 : vector<2x64xf32>
    %940 = arith.negf %938 : vector<2x64xf32>
    %941 = math.exp %940 : vector<2x64xf32>
    %cst_233 = arith.constant 1.000000e+00 : f32
    %942 = vector.broadcast %cst_233 : f32 to vector<2x64xf32>
    %943 = arith.addf %942, %941 : vector<2x64xf32>
    %944 = arith.divf %942, %943 : vector<2x64xf32>
    %945 = arith.select %32, %939, %944 : vector<2x64xi1>, vector<2x64xf32>
    %946 = vector.extract_strided_slice %945 {offsets = [0, 0], sizes = [2, 16], strides = [1, 1]} : vector<2x64xf32> to vector<2x16xf32>
    %947 = vector.extract_strided_slice %945 {offsets = [0, 16], sizes = [2, 16], strides = [1, 1]} : vector<2x64xf32> to vector<2x16xf32>
    %948 = vector.extract_strided_slice %945 {offsets = [0, 32], sizes = [2, 16], strides = [1, 1]} : vector<2x64xf32> to vector<2x16xf32>
    %949 = vector.extract_strided_slice %945 {offsets = [0, 48], sizes = [2, 16], strides = [1, 1]} : vector<2x64xf32> to vector<2x16xf32>
    %950 = arith.mulf %947, %901 : vector<2x16xf32>
    %951 = arith.mulf %946, %948 : vector<2x16xf32>
    %952 = arith.addf %950, %951 : vector<2x16xf32>
    %953 = math.tanh %952 : vector<2x16xf32>
    %954 = arith.mulf %949, %953 : vector<2x16xf32>
    %955 = vector.broadcast %c14_i32 : i32 to vector<2x1xi32>
    %956 = arith.cmpi eq, %955, %42 : vector<2x1xi32>
    %957 = vector.shape_cast %956 : vector<2x1xi1> to vector<2x1xi1>
    %958 = vector.broadcast %957 : vector<2x1xi1> to vector<2x16xi1>
    %959 = arith.select %958, %954, %898 : vector<2x16xi1>, vector<2x16xf32>
    %c8_i32_234 = arith.constant 8 : i32
    %960 = arith.cmpi slt, %c14_i32, %c8_i32_234 : i32
    %961 = arith.select %960, %954, %900 : vector<2x16xf32>
    %962 = arith.select %960, %952, %901 : vector<2x16xf32>
    %c15_i32 = arith.constant 15 : i32
    %963 = arith.index_cast %c15_i32 : i32 to index
    %c0_235 = arith.constant 0 : index
    %c0_236 = arith.constant 0 : index
    %964 = vector.load %arg21[%963, %c0_235, %c0_236] : memref<16x2x64xf32, #tpu.memory_space<vmem>>, vector<1x2x64xf32>
    %965 = vector.shape_cast %964 : vector<1x2x64xf32> to vector<2x64xf32>
    %cst_237 = arith.constant dense<0.000000e+00> : vector<2x64xf32>
    %966 = tpu.matmul %922, %18, %cst_237 {dimension_numbers = #tpu.dot_dimension_numbers<[1], [0], [0], [1], [0, 0, 1, 1], [], []>} : vector<2x16xf32>, vector<16x64xf32>, vector<2x64xf32> -> vector<2x64xf32>
    %967 = arith.addf %965, %966 : vector<2x64xf32>
    %968 = math.tanh %967 : vector<2x64xf32>
    %969 = arith.negf %967 : vector<2x64xf32>
    %970 = math.exp %969 : vector<2x64xf32>
    %cst_238 = arith.constant 1.000000e+00 : f32
    %971 = vector.broadcast %cst_238 : f32 to vector<2x64xf32>
    %972 = arith.addf %971, %970 : vector<2x64xf32>
    %973 = arith.divf %971, %972 : vector<2x64xf32>
    %974 = arith.select %26, %968, %973 : vector<2x64xi1>, vector<2x64xf32>
    %975 = vector.extract_strided_slice %974 {offsets = [0, 0], sizes = [2, 16], strides = [1, 1]} : vector<2x64xf32> to vector<2x16xf32>
    %976 = vector.extract_strided_slice %974 {offsets = [0, 16], sizes = [2, 16], strides = [1, 1]} : vector<2x64xf32> to vector<2x16xf32>
    %977 = vector.extract_strided_slice %974 {offsets = [0, 32], sizes = [2, 16], strides = [1, 1]} : vector<2x64xf32> to vector<2x16xf32>
    %978 = vector.extract_strided_slice %974 {offsets = [0, 48], sizes = [2, 16], strides = [1, 1]} : vector<2x64xf32> to vector<2x16xf32>
    %979 = arith.mulf %976, %920 : vector<2x16xf32>
    %980 = arith.mulf %975, %977 : vector<2x16xf32>
    %981 = arith.addf %979, %980 : vector<2x16xf32>
    %982 = math.tanh %981 : vector<2x16xf32>
    %983 = arith.mulf %978, %982 : vector<2x16xf32>
    %984 = vector.broadcast %c15_i32 : i32 to vector<2x1xi32>
    %985 = arith.cmpi slt, %984, %39 : vector<2x1xi32>
    %cst_239 = arith.constant 0.000000e+00 : f32
    %986 = vector.shape_cast %985 : vector<2x1xi1> to vector<2x1xi1>
    %987 = vector.broadcast %986 : vector<2x1xi1> to vector<2x16xi1>
    %988 = vector.broadcast %cst_239 : f32 to vector<2x16xf32>
    %989 = arith.select %987, %983, %988 : vector<2x16xi1>, vector<2x16xf32>
    %990 = arith.index_cast %c15_i32 : i32 to index
    %c0_240 = arith.constant 0 : index
    %c0_241 = arith.constant 0 : index
    %991 = vector.load %arg23[%990, %c0_240, %c0_241] : memref<16x2x16xf32, #tpu.memory_space<vmem>>, vector<1x2x16xf32>
    %992 = vector.shape_cast %991 : vector<1x2x16xf32> to vector<2x16xf32>
    %993 = vector.shape_cast %989 : vector<2x16xf32> to vector<1x2x16xf32>
    tpu.vector_store %arg23[%990, %c0_240, %c0_241], %993 {strides = array<i32>} : memref<16x2x16xf32, #tpu.memory_space<vmem>>, vector<1x2x16xf32>,
    %c7_i32_242 = arith.constant 7 : i32
    %994 = arith.minsi %c15_i32, %c7_i32_242 : i32
    %995 = arith.index_cast %994 : i32 to index
    %c0_243 = arith.constant 0 : index
    %c0_244 = arith.constant 0 : index
    %996 = vector.load %arg22[%995, %c0_243, %c0_244] : memref<8x2x64xf32, #tpu.memory_space<vmem>>, vector<1x2x64xf32>
    %997 = vector.shape_cast %996 : vector<1x2x64xf32> to vector<2x64xf32>
    %cst_245 = arith.constant dense<0.000000e+00> : vector<2x64xf32>
    %998 = tpu.matmul %961, %19, %cst_245 {dimension_numbers = #tpu.dot_dimension_numbers<[1], [0], [0], [1], [0, 0, 1, 1], [], []>} : vector<2x16xf32>, vector<16x64xf32>, vector<2x64xf32> -> vector<2x64xf32>
    %999 = arith.addf %997, %998 : vector<2x64xf32>
    %1000 = math.tanh %999 : vector<2x64xf32>
    %1001 = arith.negf %999 : vector<2x64xf32>
    %1002 = math.exp %1001 : vector<2x64xf32>
    %cst_246 = arith.constant 1.000000e+00 : f32
    %1003 = vector.broadcast %cst_246 : f32 to vector<2x64xf32>
    %1004 = arith.addf %1003, %1002 : vector<2x64xf32>
    %1005 = arith.divf %1003, %1004 : vector<2x64xf32>
    %1006 = arith.select %32, %1000, %1005 : vector<2x64xi1>, vector<2x64xf32>
    %1007 = vector.extract_strided_slice %1006 {offsets = [0, 0], sizes = [2, 16], strides = [1, 1]} : vector<2x64xf32> to vector<2x16xf32>
    %1008 = vector.extract_strided_slice %1006 {offsets = [0, 16], sizes = [2, 16], strides = [1, 1]} : vector<2x64xf32> to vector<2x16xf32>
    %1009 = vector.extract_strided_slice %1006 {offsets = [0, 32], sizes = [2, 16], strides = [1, 1]} : vector<2x64xf32> to vector<2x16xf32>
    %1010 = vector.extract_strided_slice %1006 {offsets = [0, 48], sizes = [2, 16], strides = [1, 1]} : vector<2x64xf32> to vector<2x16xf32>
    %1011 = arith.mulf %1008, %962 : vector<2x16xf32>
    %1012 = arith.mulf %1007, %1009 : vector<2x16xf32>
    %1013 = arith.addf %1011, %1012 : vector<2x16xf32>
    %1014 = math.tanh %1013 : vector<2x16xf32>
    %1015 = arith.mulf %1010, %1014 : vector<2x16xf32>
    %1016 = vector.broadcast %c15_i32 : i32 to vector<2x1xi32>
    %1017 = arith.cmpi eq, %1016, %42 : vector<2x1xi32>
    %1018 = vector.shape_cast %1017 : vector<2x1xi1> to vector<2x1xi1>
    %1019 = vector.broadcast %1018 : vector<2x1xi1> to vector<2x16xi1>
    %1020 = arith.select %1019, %1015, %959 : vector<2x16xi1>, vector<2x16xf32>
    %c8_i32_247 = arith.constant 8 : i32
    %1021 = arith.cmpi slt, %c15_i32, %c8_i32_247 : i32
    %1022 = arith.select %1021, %1015, %961 : vector<2x16xf32>
    %1023 = arith.select %1021, %1013, %962 : vector<2x16xf32>
    %c16_i32 = arith.constant 16 : i32
    %c0_248 = arith.constant 0 : index
    %c0_249 = arith.constant 0 : index
    %c0_250 = arith.constant 0 : index
    %1024 = vector.load %arg23[%c0_248, %c0_249, %c0_250] : memref<16x2x16xf32, #tpu.memory_space<vmem>>, vector<16x2x16xf32>
    %1025 = vector.shape_cast %1024 : vector<16x2x16xf32> to vector<32x16xf32>
    %c0_251 = arith.constant 0 : index
    %c0_252 = arith.constant 0 : index
    %1026 = vector.load %arg11[%c0_251, %c0_252] : memref<16x64xf32, #tpu.memory_space<vmem>>, vector<16x64xf32>
    %cst_253 = arith.constant dense<0.000000e+00> : vector<2x64xf32>
    %1027 = tpu.matmul %1020, %1026, %cst_253 {dimension_numbers = #tpu.dot_dimension_numbers<[1], [0], [0], [1], [0, 0, 1, 1], [], []>} : vector<2x16xf32>, vector<16x64xf32>, vector<2x64xf32> -> vector<2x64xf32>
    %c0_254 = arith.constant 0 : index
    %c0_255 = arith.constant 0 : index
    %1028 = vector.load %arg14[%c0_254, %c0_255] : memref<1x64xf32, #tpu.memory_space<vmem>>, vector<1x64xf32>
    %1029 = vector.broadcast %1028 : vector<1x64xf32> to vector<2x64xf32>
    %1030 = arith.addf %1027, %1029 : vector<2x64xf32>
    %c0_256 = arith.constant 0 : index
    %c0_257 = arith.constant 0 : index
    %1031 = vector.load %arg12[%c0_256, %c0_257] : memref<16x64xf32, #tpu.memory_space<vmem>>, vector<16x64xf32>
    %cst_258 = arith.constant dense<0.000000e+00> : vector<32x64xf32>
    %1032 = tpu.matmul %1025, %1031, %cst_258 {dimension_numbers = #tpu.dot_dimension_numbers<[1], [0], [0], [1], [0, 0, 1, 1], [], []>} : vector<32x16xf32>, vector<16x64xf32>, vector<32x64xf32> -> vector<32x64xf32>
    %1033 = vector.shape_cast %1032 : vector<32x64xf32> to vector<16x2x64xf32>
    %1034 = vector.shape_cast %1030 : vector<2x64xf32> to vector<1x2x64xf32>
    %1035 = vector.broadcast %1034 : vector<1x2x64xf32> to vector<16x2x64xf32>
    %1036 = arith.addf %1033, %1035 : vector<16x2x64xf32>
    %c0_259 = arith.constant 0 : index
    %c0_260 = arith.constant 0 : index
    %c0_261 = arith.constant 0 : index
    %1037 = vector.load %arg24[%c0_259, %c0_260, %c0_261] : memref<16x2x64xf32, #tpu.memory_space<vmem>>, vector<16x2x64xf32>
    tpu.vector_store %arg24[%c0_259, %c0_260, %c0_261], %1036 {strides = array<i32>} : memref<16x2x64xf32, #tpu.memory_space<vmem>>, vector<16x2x64xf32>,
    %cst_262 = arith.constant 0.000000e+00 : f32
    %1038 = vector.broadcast %cst_262 : f32 to vector<2x16xf32>
    %cst_263 = arith.constant 0.000000e+00 : f32
    %1039 = vector.broadcast %cst_263 : f32 to vector<2x16xf32>
    %c0_i32_264 = arith.constant 0 : i32
    %1040 = arith.index_cast %c0_i32_264 : i32 to index
    %c0_265 = arith.constant 0 : index
    %c0_266 = arith.constant 0 : index
    %1041 = vector.load %arg24[%1040, %c0_265, %c0_266] : memref<16x2x64xf32, #tpu.memory_space<vmem>>, vector<1x2x64xf32>
    %1042 = vector.shape_cast %1041 : vector<1x2x64xf32> to vector<2x64xf32>
    %cst_267 = arith.constant dense<0.000000e+00> : vector<2x64xf32>
    %1043 = tpu.matmul %1038, %20, %cst_267 {dimension_numbers = #tpu.dot_dimension_numbers<[1], [0], [0], [1], [0, 0, 1, 1], [], []>} : vector<2x16xf32>, vector<16x64xf32>, vector<2x64xf32> -> vector<2x64xf32>
    %1044 = arith.addf %1042, %1043 : vector<2x64xf32>
    %1045 = math.tanh %1044 : vector<2x64xf32>
    %1046 = arith.negf %1044 : vector<2x64xf32>
    %1047 = math.exp %1046 : vector<2x64xf32>
    %cst_268 = arith.constant 1.000000e+00 : f32
    %1048 = vector.broadcast %cst_268 : f32 to vector<2x64xf32>
    %1049 = arith.addf %1048, %1047 : vector<2x64xf32>
    %1050 = arith.divf %1048, %1049 : vector<2x64xf32>
    %1051 = arith.select %38, %1045, %1050 : vector<2x64xi1>, vector<2x64xf32>
    %1052 = vector.extract_strided_slice %1051 {offsets = [0, 0], sizes = [2, 16], strides = [1, 1]} : vector<2x64xf32> to vector<2x16xf32>
    %1053 = vector.extract_strided_slice %1051 {offsets = [0, 16], sizes = [2, 16], strides = [1, 1]} : vector<2x64xf32> to vector<2x16xf32>
    %1054 = vector.extract_strided_slice %1051 {offsets = [0, 32], sizes = [2, 16], strides = [1, 1]} : vector<2x64xf32> to vector<2x16xf32>
    %1055 = vector.extract_strided_slice %1051 {offsets = [0, 48], sizes = [2, 16], strides = [1, 1]} : vector<2x64xf32> to vector<2x16xf32>
    %1056 = arith.mulf %1053, %1039 : vector<2x16xf32>
    %1057 = arith.mulf %1052, %1054 : vector<2x16xf32>
    %1058 = arith.addf %1056, %1057 : vector<2x16xf32>
    %1059 = math.tanh %1058 : vector<2x16xf32>
    %1060 = arith.mulf %1055, %1059 : vector<2x16xf32>
    %1061 = arith.index_cast %c0_i32_264 : i32 to index
    %c0_269 = arith.constant 0 : index
    %c0_270 = arith.constant 0 : index
    %1062 = vector.load %arg25[%1061, %c0_269, %c0_270] : memref<16x2x16xf32, #tpu.memory_space<vmem>>, vector<1x2x16xf32>
    %1063 = vector.shape_cast %1062 : vector<1x2x16xf32> to vector<2x16xf32>
    %1064 = vector.shape_cast %1060 : vector<2x16xf32> to vector<1x2x16xf32>
    tpu.vector_store %arg25[%1061, %c0_269, %c0_270], %1064 {strides = array<i32>} : memref<16x2x16xf32, #tpu.memory_space<vmem>>, vector<1x2x16xf32>,
    %c1_i32_271 = arith.constant 1 : i32
    %1065 = arith.index_cast %c1_i32_271 : i32 to index
    %c0_272 = arith.constant 0 : index
    %c0_273 = arith.constant 0 : index
    %1066 = vector.load %arg24[%1065, %c0_272, %c0_273] : memref<16x2x64xf32, #tpu.memory_space<vmem>>, vector<1x2x64xf32>
    %1067 = vector.shape_cast %1066 : vector<1x2x64xf32> to vector<2x64xf32>
    %cst_274 = arith.constant dense<0.000000e+00> : vector<2x64xf32>
    %1068 = tpu.matmul %1060, %20, %cst_274 {dimension_numbers = #tpu.dot_dimension_numbers<[1], [0], [0], [1], [0, 0, 1, 1], [], []>} : vector<2x16xf32>, vector<16x64xf32>, vector<2x64xf32> -> vector<2x64xf32>
    %1069 = arith.addf %1067, %1068 : vector<2x64xf32>
    %1070 = math.tanh %1069 : vector<2x64xf32>
    %1071 = arith.negf %1069 : vector<2x64xf32>
    %1072 = math.exp %1071 : vector<2x64xf32>
    %cst_275 = arith.constant 1.000000e+00 : f32
    %1073 = vector.broadcast %cst_275 : f32 to vector<2x64xf32>
    %1074 = arith.addf %1073, %1072 : vector<2x64xf32>
    %1075 = arith.divf %1073, %1074 : vector<2x64xf32>
    %1076 = arith.select %38, %1070, %1075 : vector<2x64xi1>, vector<2x64xf32>
    %1077 = vector.extract_strided_slice %1076 {offsets = [0, 0], sizes = [2, 16], strides = [1, 1]} : vector<2x64xf32> to vector<2x16xf32>
    %1078 = vector.extract_strided_slice %1076 {offsets = [0, 16], sizes = [2, 16], strides = [1, 1]} : vector<2x64xf32> to vector<2x16xf32>
    %1079 = vector.extract_strided_slice %1076 {offsets = [0, 32], sizes = [2, 16], strides = [1, 1]} : vector<2x64xf32> to vector<2x16xf32>
    %1080 = vector.extract_strided_slice %1076 {offsets = [0, 48], sizes = [2, 16], strides = [1, 1]} : vector<2x64xf32> to vector<2x16xf32>
    %1081 = arith.mulf %1078, %1058 : vector<2x16xf32>
    %1082 = arith.mulf %1077, %1079 : vector<2x16xf32>
    %1083 = arith.addf %1081, %1082 : vector<2x16xf32>
    %1084 = math.tanh %1083 : vector<2x16xf32>
    %1085 = arith.mulf %1080, %1084 : vector<2x16xf32>
    %1086 = arith.index_cast %c1_i32_271 : i32 to index
    %c0_276 = arith.constant 0 : index
    %c0_277 = arith.constant 0 : index
    %1087 = vector.load %arg25[%1086, %c0_276, %c0_277] : memref<16x2x16xf32, #tpu.memory_space<vmem>>, vector<1x2x16xf32>
    %1088 = vector.shape_cast %1087 : vector<1x2x16xf32> to vector<2x16xf32>
    %1089 = vector.shape_cast %1085 : vector<2x16xf32> to vector<1x2x16xf32>
    tpu.vector_store %arg25[%1086, %c0_276, %c0_277], %1089 {strides = array<i32>} : memref<16x2x16xf32, #tpu.memory_space<vmem>>, vector<1x2x16xf32>,
    %c2_i32_278 = arith.constant 2 : i32
    %1090 = arith.index_cast %c2_i32_278 : i32 to index
    %c0_279 = arith.constant 0 : index
    %c0_280 = arith.constant 0 : index
    %1091 = vector.load %arg24[%1090, %c0_279, %c0_280] : memref<16x2x64xf32, #tpu.memory_space<vmem>>, vector<1x2x64xf32>
    %1092 = vector.shape_cast %1091 : vector<1x2x64xf32> to vector<2x64xf32>
    %cst_281 = arith.constant dense<0.000000e+00> : vector<2x64xf32>
    %1093 = tpu.matmul %1085, %20, %cst_281 {dimension_numbers = #tpu.dot_dimension_numbers<[1], [0], [0], [1], [0, 0, 1, 1], [], []>} : vector<2x16xf32>, vector<16x64xf32>, vector<2x64xf32> -> vector<2x64xf32>
    %1094 = arith.addf %1092, %1093 : vector<2x64xf32>
    %1095 = math.tanh %1094 : vector<2x64xf32>
    %1096 = arith.negf %1094 : vector<2x64xf32>
    %1097 = math.exp %1096 : vector<2x64xf32>
    %cst_282 = arith.constant 1.000000e+00 : f32
    %1098 = vector.broadcast %cst_282 : f32 to vector<2x64xf32>
    %1099 = arith.addf %1098, %1097 : vector<2x64xf32>
    %1100 = arith.divf %1098, %1099 : vector<2x64xf32>
    %1101 = arith.select %38, %1095, %1100 : vector<2x64xi1>, vector<2x64xf32>
    %1102 = vector.extract_strided_slice %1101 {offsets = [0, 0], sizes = [2, 16], strides = [1, 1]} : vector<2x64xf32> to vector<2x16xf32>
    %1103 = vector.extract_strided_slice %1101 {offsets = [0, 16], sizes = [2, 16], strides = [1, 1]} : vector<2x64xf32> to vector<2x16xf32>
    %1104 = vector.extract_strided_slice %1101 {offsets = [0, 32], sizes = [2, 16], strides = [1, 1]} : vector<2x64xf32> to vector<2x16xf32>
    %1105 = vector.extract_strided_slice %1101 {offsets = [0, 48], sizes = [2, 16], strides = [1, 1]} : vector<2x64xf32> to vector<2x16xf32>
    %1106 = arith.mulf %1103, %1083 : vector<2x16xf32>
    %1107 = arith.mulf %1102, %1104 : vector<2x16xf32>
    %1108 = arith.addf %1106, %1107 : vector<2x16xf32>
    %1109 = math.tanh %1108 : vector<2x16xf32>
    %1110 = arith.mulf %1105, %1109 : vector<2x16xf32>
    %1111 = arith.index_cast %c2_i32_278 : i32 to index
    %c0_283 = arith.constant 0 : index
    %c0_284 = arith.constant 0 : index
    %1112 = vector.load %arg25[%1111, %c0_283, %c0_284] : memref<16x2x16xf32, #tpu.memory_space<vmem>>, vector<1x2x16xf32>
    %1113 = vector.shape_cast %1112 : vector<1x2x16xf32> to vector<2x16xf32>
    %1114 = vector.shape_cast %1110 : vector<2x16xf32> to vector<1x2x16xf32>
    tpu.vector_store %arg25[%1111, %c0_283, %c0_284], %1114 {strides = array<i32>} : memref<16x2x16xf32, #tpu.memory_space<vmem>>, vector<1x2x16xf32>,
    %c3_i32_285 = arith.constant 3 : i32
    %1115 = arith.index_cast %c3_i32_285 : i32 to index
    %c0_286 = arith.constant 0 : index
    %c0_287 = arith.constant 0 : index
    %1116 = vector.load %arg24[%1115, %c0_286, %c0_287] : memref<16x2x64xf32, #tpu.memory_space<vmem>>, vector<1x2x64xf32>
    %1117 = vector.shape_cast %1116 : vector<1x2x64xf32> to vector<2x64xf32>
    %cst_288 = arith.constant dense<0.000000e+00> : vector<2x64xf32>
    %1118 = tpu.matmul %1110, %20, %cst_288 {dimension_numbers = #tpu.dot_dimension_numbers<[1], [0], [0], [1], [0, 0, 1, 1], [], []>} : vector<2x16xf32>, vector<16x64xf32>, vector<2x64xf32> -> vector<2x64xf32>
    %1119 = arith.addf %1117, %1118 : vector<2x64xf32>
    %1120 = math.tanh %1119 : vector<2x64xf32>
    %1121 = arith.negf %1119 : vector<2x64xf32>
    %1122 = math.exp %1121 : vector<2x64xf32>
    %cst_289 = arith.constant 1.000000e+00 : f32
    %1123 = vector.broadcast %cst_289 : f32 to vector<2x64xf32>
    %1124 = arith.addf %1123, %1122 : vector<2x64xf32>
    %1125 = arith.divf %1123, %1124 : vector<2x64xf32>
    %1126 = arith.select %38, %1120, %1125 : vector<2x64xi1>, vector<2x64xf32>
    %1127 = vector.extract_strided_slice %1126 {offsets = [0, 0], sizes = [2, 16], strides = [1, 1]} : vector<2x64xf32> to vector<2x16xf32>
    %1128 = vector.extract_strided_slice %1126 {offsets = [0, 16], sizes = [2, 16], strides = [1, 1]} : vector<2x64xf32> to vector<2x16xf32>
    %1129 = vector.extract_strided_slice %1126 {offsets = [0, 32], sizes = [2, 16], strides = [1, 1]} : vector<2x64xf32> to vector<2x16xf32>
    %1130 = vector.extract_strided_slice %1126 {offsets = [0, 48], sizes = [2, 16], strides = [1, 1]} : vector<2x64xf32> to vector<2x16xf32>
    %1131 = arith.mulf %1128, %1108 : vector<2x16xf32>
    %1132 = arith.mulf %1127, %1129 : vector<2x16xf32>
    %1133 = arith.addf %1131, %1132 : vector<2x16xf32>
    %1134 = math.tanh %1133 : vector<2x16xf32>
    %1135 = arith.mulf %1130, %1134 : vector<2x16xf32>
    %1136 = arith.index_cast %c3_i32_285 : i32 to index
    %c0_290 = arith.constant 0 : index
    %c0_291 = arith.constant 0 : index
    %1137 = vector.load %arg25[%1136, %c0_290, %c0_291] : memref<16x2x16xf32, #tpu.memory_space<vmem>>, vector<1x2x16xf32>
    %1138 = vector.shape_cast %1137 : vector<1x2x16xf32> to vector<2x16xf32>
    %1139 = vector.shape_cast %1135 : vector<2x16xf32> to vector<1x2x16xf32>
    tpu.vector_store %arg25[%1136, %c0_290, %c0_291], %1139 {strides = array<i32>} : memref<16x2x16xf32, #tpu.memory_space<vmem>>, vector<1x2x16xf32>,
    %c4_i32_292 = arith.constant 4 : i32
    %1140 = arith.index_cast %c4_i32_292 : i32 to index
    %c0_293 = arith.constant 0 : index
    %c0_294 = arith.constant 0 : index
    %1141 = vector.load %arg24[%1140, %c0_293, %c0_294] : memref<16x2x64xf32, #tpu.memory_space<vmem>>, vector<1x2x64xf32>
    %1142 = vector.shape_cast %1141 : vector<1x2x64xf32> to vector<2x64xf32>
    %cst_295 = arith.constant dense<0.000000e+00> : vector<2x64xf32>
    %1143 = tpu.matmul %1135, %20, %cst_295 {dimension_numbers = #tpu.dot_dimension_numbers<[1], [0], [0], [1], [0, 0, 1, 1], [], []>} : vector<2x16xf32>, vector<16x64xf32>, vector<2x64xf32> -> vector<2x64xf32>
    %1144 = arith.addf %1142, %1143 : vector<2x64xf32>
    %1145 = math.tanh %1144 : vector<2x64xf32>
    %1146 = arith.negf %1144 : vector<2x64xf32>
    %1147 = math.exp %1146 : vector<2x64xf32>
    %cst_296 = arith.constant 1.000000e+00 : f32
    %1148 = vector.broadcast %cst_296 : f32 to vector<2x64xf32>
    %1149 = arith.addf %1148, %1147 : vector<2x64xf32>
    %1150 = arith.divf %1148, %1149 : vector<2x64xf32>
    %1151 = arith.select %38, %1145, %1150 : vector<2x64xi1>, vector<2x64xf32>
    %1152 = vector.extract_strided_slice %1151 {offsets = [0, 0], sizes = [2, 16], strides = [1, 1]} : vector<2x64xf32> to vector<2x16xf32>
    %1153 = vector.extract_strided_slice %1151 {offsets = [0, 16], sizes = [2, 16], strides = [1, 1]} : vector<2x64xf32> to vector<2x16xf32>
    %1154 = vector.extract_strided_slice %1151 {offsets = [0, 32], sizes = [2, 16], strides = [1, 1]} : vector<2x64xf32> to vector<2x16xf32>
    %1155 = vector.extract_strided_slice %1151 {offsets = [0, 48], sizes = [2, 16], strides = [1, 1]} : vector<2x64xf32> to vector<2x16xf32>
    %1156 = arith.mulf %1153, %1133 : vector<2x16xf32>
    %1157 = arith.mulf %1152, %1154 : vector<2x16xf32>
    %1158 = arith.addf %1156, %1157 : vector<2x16xf32>
    %1159 = math.tanh %1158 : vector<2x16xf32>
    %1160 = arith.mulf %1155, %1159 : vector<2x16xf32>
    %1161 = arith.index_cast %c4_i32_292 : i32 to index
    %c0_297 = arith.constant 0 : index
    %c0_298 = arith.constant 0 : index
    %1162 = vector.load %arg25[%1161, %c0_297, %c0_298] : memref<16x2x16xf32, #tpu.memory_space<vmem>>, vector<1x2x16xf32>
    %1163 = vector.shape_cast %1162 : vector<1x2x16xf32> to vector<2x16xf32>
    %1164 = vector.shape_cast %1160 : vector<2x16xf32> to vector<1x2x16xf32>
    tpu.vector_store %arg25[%1161, %c0_297, %c0_298], %1164 {strides = array<i32>} : memref<16x2x16xf32, #tpu.memory_space<vmem>>, vector<1x2x16xf32>,
    %c5_i32_299 = arith.constant 5 : i32
    %1165 = arith.index_cast %c5_i32_299 : i32 to index
    %c0_300 = arith.constant 0 : index
    %c0_301 = arith.constant 0 : index
    %1166 = vector.load %arg24[%1165, %c0_300, %c0_301] : memref<16x2x64xf32, #tpu.memory_space<vmem>>, vector<1x2x64xf32>
    %1167 = vector.shape_cast %1166 : vector<1x2x64xf32> to vector<2x64xf32>
    %cst_302 = arith.constant dense<0.000000e+00> : vector<2x64xf32>
    %1168 = tpu.matmul %1160, %20, %cst_302 {dimension_numbers = #tpu.dot_dimension_numbers<[1], [0], [0], [1], [0, 0, 1, 1], [], []>} : vector<2x16xf32>, vector<16x64xf32>, vector<2x64xf32> -> vector<2x64xf32>
    %1169 = arith.addf %1167, %1168 : vector<2x64xf32>
    %1170 = math.tanh %1169 : vector<2x64xf32>
    %1171 = arith.negf %1169 : vector<2x64xf32>
    %1172 = math.exp %1171 : vector<2x64xf32>
    %cst_303 = arith.constant 1.000000e+00 : f32
    %1173 = vector.broadcast %cst_303 : f32 to vector<2x64xf32>
    %1174 = arith.addf %1173, %1172 : vector<2x64xf32>
    %1175 = arith.divf %1173, %1174 : vector<2x64xf32>
    %1176 = arith.select %38, %1170, %1175 : vector<2x64xi1>, vector<2x64xf32>
    %1177 = vector.extract_strided_slice %1176 {offsets = [0, 0], sizes = [2, 16], strides = [1, 1]} : vector<2x64xf32> to vector<2x16xf32>
    %1178 = vector.extract_strided_slice %1176 {offsets = [0, 16], sizes = [2, 16], strides = [1, 1]} : vector<2x64xf32> to vector<2x16xf32>
    %1179 = vector.extract_strided_slice %1176 {offsets = [0, 32], sizes = [2, 16], strides = [1, 1]} : vector<2x64xf32> to vector<2x16xf32>
    %1180 = vector.extract_strided_slice %1176 {offsets = [0, 48], sizes = [2, 16], strides = [1, 1]} : vector<2x64xf32> to vector<2x16xf32>
    %1181 = arith.mulf %1178, %1158 : vector<2x16xf32>
    %1182 = arith.mulf %1177, %1179 : vector<2x16xf32>
    %1183 = arith.addf %1181, %1182 : vector<2x16xf32>
    %1184 = math.tanh %1183 : vector<2x16xf32>
    %1185 = arith.mulf %1180, %1184 : vector<2x16xf32>
    %1186 = arith.index_cast %c5_i32_299 : i32 to index
    %c0_304 = arith.constant 0 : index
    %c0_305 = arith.constant 0 : index
    %1187 = vector.load %arg25[%1186, %c0_304, %c0_305] : memref<16x2x16xf32, #tpu.memory_space<vmem>>, vector<1x2x16xf32>
    %1188 = vector.shape_cast %1187 : vector<1x2x16xf32> to vector<2x16xf32>
    %1189 = vector.shape_cast %1185 : vector<2x16xf32> to vector<1x2x16xf32>
    tpu.vector_store %arg25[%1186, %c0_304, %c0_305], %1189 {strides = array<i32>} : memref<16x2x16xf32, #tpu.memory_space<vmem>>, vector<1x2x16xf32>,
    %c6_i32_306 = arith.constant 6 : i32
    %1190 = arith.index_cast %c6_i32_306 : i32 to index
    %c0_307 = arith.constant 0 : index
    %c0_308 = arith.constant 0 : index
    %1191 = vector.load %arg24[%1190, %c0_307, %c0_308] : memref<16x2x64xf32, #tpu.memory_space<vmem>>, vector<1x2x64xf32>
    %1192 = vector.shape_cast %1191 : vector<1x2x64xf32> to vector<2x64xf32>
    %cst_309 = arith.constant dense<0.000000e+00> : vector<2x64xf32>
    %1193 = tpu.matmul %1185, %20, %cst_309 {dimension_numbers = #tpu.dot_dimension_numbers<[1], [0], [0], [1], [0, 0, 1, 1], [], []>} : vector<2x16xf32>, vector<16x64xf32>, vector<2x64xf32> -> vector<2x64xf32>
    %1194 = arith.addf %1192, %1193 : vector<2x64xf32>
    %1195 = math.tanh %1194 : vector<2x64xf32>
    %1196 = arith.negf %1194 : vector<2x64xf32>
    %1197 = math.exp %1196 : vector<2x64xf32>
    %cst_310 = arith.constant 1.000000e+00 : f32
    %1198 = vector.broadcast %cst_310 : f32 to vector<2x64xf32>
    %1199 = arith.addf %1198, %1197 : vector<2x64xf32>
    %1200 = arith.divf %1198, %1199 : vector<2x64xf32>
    %1201 = arith.select %38, %1195, %1200 : vector<2x64xi1>, vector<2x64xf32>
    %1202 = vector.extract_strided_slice %1201 {offsets = [0, 0], sizes = [2, 16], strides = [1, 1]} : vector<2x64xf32> to vector<2x16xf32>
    %1203 = vector.extract_strided_slice %1201 {offsets = [0, 16], sizes = [2, 16], strides = [1, 1]} : vector<2x64xf32> to vector<2x16xf32>
    %1204 = vector.extract_strided_slice %1201 {offsets = [0, 32], sizes = [2, 16], strides = [1, 1]} : vector<2x64xf32> to vector<2x16xf32>
    %1205 = vector.extract_strided_slice %1201 {offsets = [0, 48], sizes = [2, 16], strides = [1, 1]} : vector<2x64xf32> to vector<2x16xf32>
    %1206 = arith.mulf %1203, %1183 : vector<2x16xf32>
    %1207 = arith.mulf %1202, %1204 : vector<2x16xf32>
    %1208 = arith.addf %1206, %1207 : vector<2x16xf32>
    %1209 = math.tanh %1208 : vector<2x16xf32>
    %1210 = arith.mulf %1205, %1209 : vector<2x16xf32>
    %1211 = arith.index_cast %c6_i32_306 : i32 to index
    %c0_311 = arith.constant 0 : index
    %c0_312 = arith.constant 0 : index
    %1212 = vector.load %arg25[%1211, %c0_311, %c0_312] : memref<16x2x16xf32, #tpu.memory_space<vmem>>, vector<1x2x16xf32>
    %1213 = vector.shape_cast %1212 : vector<1x2x16xf32> to vector<2x16xf32>
    %1214 = vector.shape_cast %1210 : vector<2x16xf32> to vector<1x2x16xf32>
    tpu.vector_store %arg25[%1211, %c0_311, %c0_312], %1214 {strides = array<i32>} : memref<16x2x16xf32, #tpu.memory_space<vmem>>, vector<1x2x16xf32>,
    %c7_i32_313 = arith.constant 7 : i32
    %1215 = arith.index_cast %c7_i32_313 : i32 to index
    %c0_314 = arith.constant 0 : index
    %c0_315 = arith.constant 0 : index
    %1216 = vector.load %arg24[%1215, %c0_314, %c0_315] : memref<16x2x64xf32, #tpu.memory_space<vmem>>, vector<1x2x64xf32>
    %1217 = vector.shape_cast %1216 : vector<1x2x64xf32> to vector<2x64xf32>
    %cst_316 = arith.constant dense<0.000000e+00> : vector<2x64xf32>
    %1218 = tpu.matmul %1210, %20, %cst_316 {dimension_numbers = #tpu.dot_dimension_numbers<[1], [0], [0], [1], [0, 0, 1, 1], [], []>} : vector<2x16xf32>, vector<16x64xf32>, vector<2x64xf32> -> vector<2x64xf32>
    %1219 = arith.addf %1217, %1218 : vector<2x64xf32>
    %1220 = math.tanh %1219 : vector<2x64xf32>
    %1221 = arith.negf %1219 : vector<2x64xf32>
    %1222 = math.exp %1221 : vector<2x64xf32>
    %cst_317 = arith.constant 1.000000e+00 : f32
    %1223 = vector.broadcast %cst_317 : f32 to vector<2x64xf32>
    %1224 = arith.addf %1223, %1222 : vector<2x64xf32>
    %1225 = arith.divf %1223, %1224 : vector<2x64xf32>
    %1226 = arith.select %38, %1220, %1225 : vector<2x64xi1>, vector<2x64xf32>
    %1227 = vector.extract_strided_slice %1226 {offsets = [0, 0], sizes = [2, 16], strides = [1, 1]} : vector<2x64xf32> to vector<2x16xf32>
    %1228 = vector.extract_strided_slice %1226 {offsets = [0, 16], sizes = [2, 16], strides = [1, 1]} : vector<2x64xf32> to vector<2x16xf32>
    %1229 = vector.extract_strided_slice %1226 {offsets = [0, 32], sizes = [2, 16], strides = [1, 1]} : vector<2x64xf32> to vector<2x16xf32>
    %1230 = vector.extract_strided_slice %1226 {offsets = [0, 48], sizes = [2, 16], strides = [1, 1]} : vector<2x64xf32> to vector<2x16xf32>
    %1231 = arith.mulf %1228, %1208 : vector<2x16xf32>
    %1232 = arith.mulf %1227, %1229 : vector<2x16xf32>
    %1233 = arith.addf %1231, %1232 : vector<2x16xf32>
    %1234 = math.tanh %1233 : vector<2x16xf32>
    %1235 = arith.mulf %1230, %1234 : vector<2x16xf32>
    %1236 = arith.index_cast %c7_i32_313 : i32 to index
    %c0_318 = arith.constant 0 : index
    %c0_319 = arith.constant 0 : index
    %1237 = vector.load %arg25[%1236, %c0_318, %c0_319] : memref<16x2x16xf32, #tpu.memory_space<vmem>>, vector<1x2x16xf32>
    %1238 = vector.shape_cast %1237 : vector<1x2x16xf32> to vector<2x16xf32>
    %1239 = vector.shape_cast %1235 : vector<2x16xf32> to vector<1x2x16xf32>
    tpu.vector_store %arg25[%1236, %c0_318, %c0_319], %1239 {strides = array<i32>} : memref<16x2x16xf32, #tpu.memory_space<vmem>>, vector<1x2x16xf32>,
    %c8_i32_320 = arith.constant 8 : i32
    %1240 = arith.index_cast %c8_i32_320 : i32 to index
    %c0_321 = arith.constant 0 : index
    %c0_322 = arith.constant 0 : index
    %1241 = vector.load %arg24[%1240, %c0_321, %c0_322] : memref<16x2x64xf32, #tpu.memory_space<vmem>>, vector<1x2x64xf32>
    %1242 = vector.shape_cast %1241 : vector<1x2x64xf32> to vector<2x64xf32>
    %cst_323 = arith.constant dense<0.000000e+00> : vector<2x64xf32>
    %1243 = tpu.matmul %1235, %20, %cst_323 {dimension_numbers = #tpu.dot_dimension_numbers<[1], [0], [0], [1], [0, 0, 1, 1], [], []>} : vector<2x16xf32>, vector<16x64xf32>, vector<2x64xf32> -> vector<2x64xf32>
    %1244 = arith.addf %1242, %1243 : vector<2x64xf32>
    %1245 = math.tanh %1244 : vector<2x64xf32>
    %1246 = arith.negf %1244 : vector<2x64xf32>
    %1247 = math.exp %1246 : vector<2x64xf32>
    %cst_324 = arith.constant 1.000000e+00 : f32
    %1248 = vector.broadcast %cst_324 : f32 to vector<2x64xf32>
    %1249 = arith.addf %1248, %1247 : vector<2x64xf32>
    %1250 = arith.divf %1248, %1249 : vector<2x64xf32>
    %1251 = arith.select %38, %1245, %1250 : vector<2x64xi1>, vector<2x64xf32>
    %1252 = vector.extract_strided_slice %1251 {offsets = [0, 0], sizes = [2, 16], strides = [1, 1]} : vector<2x64xf32> to vector<2x16xf32>
    %1253 = vector.extract_strided_slice %1251 {offsets = [0, 16], sizes = [2, 16], strides = [1, 1]} : vector<2x64xf32> to vector<2x16xf32>
    %1254 = vector.extract_strided_slice %1251 {offsets = [0, 32], sizes = [2, 16], strides = [1, 1]} : vector<2x64xf32> to vector<2x16xf32>
    %1255 = vector.extract_strided_slice %1251 {offsets = [0, 48], sizes = [2, 16], strides = [1, 1]} : vector<2x64xf32> to vector<2x16xf32>
    %1256 = arith.mulf %1253, %1233 : vector<2x16xf32>
    %1257 = arith.mulf %1252, %1254 : vector<2x16xf32>
    %1258 = arith.addf %1256, %1257 : vector<2x16xf32>
    %1259 = math.tanh %1258 : vector<2x16xf32>
    %1260 = arith.mulf %1255, %1259 : vector<2x16xf32>
    %1261 = arith.index_cast %c8_i32_320 : i32 to index
    %c0_325 = arith.constant 0 : index
    %c0_326 = arith.constant 0 : index
    %1262 = vector.load %arg25[%1261, %c0_325, %c0_326] : memref<16x2x16xf32, #tpu.memory_space<vmem>>, vector<1x2x16xf32>
    %1263 = vector.shape_cast %1262 : vector<1x2x16xf32> to vector<2x16xf32>
    %1264 = vector.shape_cast %1260 : vector<2x16xf32> to vector<1x2x16xf32>
    tpu.vector_store %arg25[%1261, %c0_325, %c0_326], %1264 {strides = array<i32>} : memref<16x2x16xf32, #tpu.memory_space<vmem>>, vector<1x2x16xf32>,
    %c9_i32_327 = arith.constant 9 : i32
    %1265 = arith.index_cast %c9_i32_327 : i32 to index
    %c0_328 = arith.constant 0 : index
    %c0_329 = arith.constant 0 : index
    %1266 = vector.load %arg24[%1265, %c0_328, %c0_329] : memref<16x2x64xf32, #tpu.memory_space<vmem>>, vector<1x2x64xf32>
    %1267 = vector.shape_cast %1266 : vector<1x2x64xf32> to vector<2x64xf32>
    %cst_330 = arith.constant dense<0.000000e+00> : vector<2x64xf32>
    %1268 = tpu.matmul %1260, %20, %cst_330 {dimension_numbers = #tpu.dot_dimension_numbers<[1], [0], [0], [1], [0, 0, 1, 1], [], []>} : vector<2x16xf32>, vector<16x64xf32>, vector<2x64xf32> -> vector<2x64xf32>
    %1269 = arith.addf %1267, %1268 : vector<2x64xf32>
    %1270 = math.tanh %1269 : vector<2x64xf32>
    %1271 = arith.negf %1269 : vector<2x64xf32>
    %1272 = math.exp %1271 : vector<2x64xf32>
    %cst_331 = arith.constant 1.000000e+00 : f32
    %1273 = vector.broadcast %cst_331 : f32 to vector<2x64xf32>
    %1274 = arith.addf %1273, %1272 : vector<2x64xf32>
    %1275 = arith.divf %1273, %1274 : vector<2x64xf32>
    %1276 = arith.select %38, %1270, %1275 : vector<2x64xi1>, vector<2x64xf32>
    %1277 = vector.extract_strided_slice %1276 {offsets = [0, 0], sizes = [2, 16], strides = [1, 1]} : vector<2x64xf32> to vector<2x16xf32>
    %1278 = vector.extract_strided_slice %1276 {offsets = [0, 16], sizes = [2, 16], strides = [1, 1]} : vector<2x64xf32> to vector<2x16xf32>
    %1279 = vector.extract_strided_slice %1276 {offsets = [0, 32], sizes = [2, 16], strides = [1, 1]} : vector<2x64xf32> to vector<2x16xf32>
    %1280 = vector.extract_strided_slice %1276 {offsets = [0, 48], sizes = [2, 16], strides = [1, 1]} : vector<2x64xf32> to vector<2x16xf32>
    %1281 = arith.mulf %1278, %1258 : vector<2x16xf32>
    %1282 = arith.mulf %1277, %1279 : vector<2x16xf32>
    %1283 = arith.addf %1281, %1282 : vector<2x16xf32>
    %1284 = math.tanh %1283 : vector<2x16xf32>
    %1285 = arith.mulf %1280, %1284 : vector<2x16xf32>
    %1286 = arith.index_cast %c9_i32_327 : i32 to index
    %c0_332 = arith.constant 0 : index
    %c0_333 = arith.constant 0 : index
    %1287 = vector.load %arg25[%1286, %c0_332, %c0_333] : memref<16x2x16xf32, #tpu.memory_space<vmem>>, vector<1x2x16xf32>
    %1288 = vector.shape_cast %1287 : vector<1x2x16xf32> to vector<2x16xf32>
    %1289 = vector.shape_cast %1285 : vector<2x16xf32> to vector<1x2x16xf32>
    tpu.vector_store %arg25[%1286, %c0_332, %c0_333], %1289 {strides = array<i32>} : memref<16x2x16xf32, #tpu.memory_space<vmem>>, vector<1x2x16xf32>,
    %c10_i32_334 = arith.constant 10 : i32
    %1290 = arith.index_cast %c10_i32_334 : i32 to index
    %c0_335 = arith.constant 0 : index
    %c0_336 = arith.constant 0 : index
    %1291 = vector.load %arg24[%1290, %c0_335, %c0_336] : memref<16x2x64xf32, #tpu.memory_space<vmem>>, vector<1x2x64xf32>
    %1292 = vector.shape_cast %1291 : vector<1x2x64xf32> to vector<2x64xf32>
    %cst_337 = arith.constant dense<0.000000e+00> : vector<2x64xf32>
    %1293 = tpu.matmul %1285, %20, %cst_337 {dimension_numbers = #tpu.dot_dimension_numbers<[1], [0], [0], [1], [0, 0, 1, 1], [], []>} : vector<2x16xf32>, vector<16x64xf32>, vector<2x64xf32> -> vector<2x64xf32>
    %1294 = arith.addf %1292, %1293 : vector<2x64xf32>
    %1295 = math.tanh %1294 : vector<2x64xf32>
    %1296 = arith.negf %1294 : vector<2x64xf32>
    %1297 = math.exp %1296 : vector<2x64xf32>
    %cst_338 = arith.constant 1.000000e+00 : f32
    %1298 = vector.broadcast %cst_338 : f32 to vector<2x64xf32>
    %1299 = arith.addf %1298, %1297 : vector<2x64xf32>
    %1300 = arith.divf %1298, %1299 : vector<2x64xf32>
    %1301 = arith.select %38, %1295, %1300 : vector<2x64xi1>, vector<2x64xf32>
    %1302 = vector.extract_strided_slice %1301 {offsets = [0, 0], sizes = [2, 16], strides = [1, 1]} : vector<2x64xf32> to vector<2x16xf32>
    %1303 = vector.extract_strided_slice %1301 {offsets = [0, 16], sizes = [2, 16], strides = [1, 1]} : vector<2x64xf32> to vector<2x16xf32>
    %1304 = vector.extract_strided_slice %1301 {offsets = [0, 32], sizes = [2, 16], strides = [1, 1]} : vector<2x64xf32> to vector<2x16xf32>
    %1305 = vector.extract_strided_slice %1301 {offsets = [0, 48], sizes = [2, 16], strides = [1, 1]} : vector<2x64xf32> to vector<2x16xf32>
    %1306 = arith.mulf %1303, %1283 : vector<2x16xf32>
    %1307 = arith.mulf %1302, %1304 : vector<2x16xf32>
    %1308 = arith.addf %1306, %1307 : vector<2x16xf32>
    %1309 = math.tanh %1308 : vector<2x16xf32>
    %1310 = arith.mulf %1305, %1309 : vector<2x16xf32>
    %1311 = arith.index_cast %c10_i32_334 : i32 to index
    %c0_339 = arith.constant 0 : index
    %c0_340 = arith.constant 0 : index
    %1312 = vector.load %arg25[%1311, %c0_339, %c0_340] : memref<16x2x16xf32, #tpu.memory_space<vmem>>, vector<1x2x16xf32>
    %1313 = vector.shape_cast %1312 : vector<1x2x16xf32> to vector<2x16xf32>
    %1314 = vector.shape_cast %1310 : vector<2x16xf32> to vector<1x2x16xf32>
    tpu.vector_store %arg25[%1311, %c0_339, %c0_340], %1314 {strides = array<i32>} : memref<16x2x16xf32, #tpu.memory_space<vmem>>, vector<1x2x16xf32>,
    %c11_i32_341 = arith.constant 11 : i32
    %1315 = arith.index_cast %c11_i32_341 : i32 to index
    %c0_342 = arith.constant 0 : index
    %c0_343 = arith.constant 0 : index
    %1316 = vector.load %arg24[%1315, %c0_342, %c0_343] : memref<16x2x64xf32, #tpu.memory_space<vmem>>, vector<1x2x64xf32>
    %1317 = vector.shape_cast %1316 : vector<1x2x64xf32> to vector<2x64xf32>
    %cst_344 = arith.constant dense<0.000000e+00> : vector<2x64xf32>
    %1318 = tpu.matmul %1310, %20, %cst_344 {dimension_numbers = #tpu.dot_dimension_numbers<[1], [0], [0], [1], [0, 0, 1, 1], [], []>} : vector<2x16xf32>, vector<16x64xf32>, vector<2x64xf32> -> vector<2x64xf32>
    %1319 = arith.addf %1317, %1318 : vector<2x64xf32>
    %1320 = math.tanh %1319 : vector<2x64xf32>
    %1321 = arith.negf %1319 : vector<2x64xf32>
    %1322 = math.exp %1321 : vector<2x64xf32>
    %cst_345 = arith.constant 1.000000e+00 : f32
    %1323 = vector.broadcast %cst_345 : f32 to vector<2x64xf32>
    %1324 = arith.addf %1323, %1322 : vector<2x64xf32>
    %1325 = arith.divf %1323, %1324 : vector<2x64xf32>
    %1326 = arith.select %38, %1320, %1325 : vector<2x64xi1>, vector<2x64xf32>
    %1327 = vector.extract_strided_slice %1326 {offsets = [0, 0], sizes = [2, 16], strides = [1, 1]} : vector<2x64xf32> to vector<2x16xf32>
    %1328 = vector.extract_strided_slice %1326 {offsets = [0, 16], sizes = [2, 16], strides = [1, 1]} : vector<2x64xf32> to vector<2x16xf32>
    %1329 = vector.extract_strided_slice %1326 {offsets = [0, 32], sizes = [2, 16], strides = [1, 1]} : vector<2x64xf32> to vector<2x16xf32>
    %1330 = vector.extract_strided_slice %1326 {offsets = [0, 48], sizes = [2, 16], strides = [1, 1]} : vector<2x64xf32> to vector<2x16xf32>
    %1331 = arith.mulf %1328, %1308 : vector<2x16xf32>
    %1332 = arith.mulf %1327, %1329 : vector<2x16xf32>
    %1333 = arith.addf %1331, %1332 : vector<2x16xf32>
    %1334 = math.tanh %1333 : vector<2x16xf32>
    %1335 = arith.mulf %1330, %1334 : vector<2x16xf32>
    %1336 = arith.index_cast %c11_i32_341 : i32 to index
    %c0_346 = arith.constant 0 : index
    %c0_347 = arith.constant 0 : index
    %1337 = vector.load %arg25[%1336, %c0_346, %c0_347] : memref<16x2x16xf32, #tpu.memory_space<vmem>>, vector<1x2x16xf32>
    %1338 = vector.shape_cast %1337 : vector<1x2x16xf32> to vector<2x16xf32>
    %1339 = vector.shape_cast %1335 : vector<2x16xf32> to vector<1x2x16xf32>
    tpu.vector_store %arg25[%1336, %c0_346, %c0_347], %1339 {strides = array<i32>} : memref<16x2x16xf32, #tpu.memory_space<vmem>>, vector<1x2x16xf32>,
    %c12_i32_348 = arith.constant 12 : i32
    %1340 = arith.index_cast %c12_i32_348 : i32 to index
    %c0_349 = arith.constant 0 : index
    %c0_350 = arith.constant 0 : index
    %1341 = vector.load %arg24[%1340, %c0_349, %c0_350] : memref<16x2x64xf32, #tpu.memory_space<vmem>>, vector<1x2x64xf32>
    %1342 = vector.shape_cast %1341 : vector<1x2x64xf32> to vector<2x64xf32>
    %cst_351 = arith.constant dense<0.000000e+00> : vector<2x64xf32>
    %1343 = tpu.matmul %1335, %20, %cst_351 {dimension_numbers = #tpu.dot_dimension_numbers<[1], [0], [0], [1], [0, 0, 1, 1], [], []>} : vector<2x16xf32>, vector<16x64xf32>, vector<2x64xf32> -> vector<2x64xf32>
    %1344 = arith.addf %1342, %1343 : vector<2x64xf32>
    %1345 = math.tanh %1344 : vector<2x64xf32>
    %1346 = arith.negf %1344 : vector<2x64xf32>
    %1347 = math.exp %1346 : vector<2x64xf32>
    %cst_352 = arith.constant 1.000000e+00 : f32
    %1348 = vector.broadcast %cst_352 : f32 to vector<2x64xf32>
    %1349 = arith.addf %1348, %1347 : vector<2x64xf32>
    %1350 = arith.divf %1348, %1349 : vector<2x64xf32>
    %1351 = arith.select %38, %1345, %1350 : vector<2x64xi1>, vector<2x64xf32>
    %1352 = vector.extract_strided_slice %1351 {offsets = [0, 0], sizes = [2, 16], strides = [1, 1]} : vector<2x64xf32> to vector<2x16xf32>
    %1353 = vector.extract_strided_slice %1351 {offsets = [0, 16], sizes = [2, 16], strides = [1, 1]} : vector<2x64xf32> to vector<2x16xf32>
    %1354 = vector.extract_strided_slice %1351 {offsets = [0, 32], sizes = [2, 16], strides = [1, 1]} : vector<2x64xf32> to vector<2x16xf32>
    %1355 = vector.extract_strided_slice %1351 {offsets = [0, 48], sizes = [2, 16], strides = [1, 1]} : vector<2x64xf32> to vector<2x16xf32>
    %1356 = arith.mulf %1353, %1333 : vector<2x16xf32>
    %1357 = arith.mulf %1352, %1354 : vector<2x16xf32>
    %1358 = arith.addf %1356, %1357 : vector<2x16xf32>
    %1359 = math.tanh %1358 : vector<2x16xf32>
    %1360 = arith.mulf %1355, %1359 : vector<2x16xf32>
    %1361 = arith.index_cast %c12_i32_348 : i32 to index
    %c0_353 = arith.constant 0 : index
    %c0_354 = arith.constant 0 : index
    %1362 = vector.load %arg25[%1361, %c0_353, %c0_354] : memref<16x2x16xf32, #tpu.memory_space<vmem>>, vector<1x2x16xf32>
    %1363 = vector.shape_cast %1362 : vector<1x2x16xf32> to vector<2x16xf32>
    %1364 = vector.shape_cast %1360 : vector<2x16xf32> to vector<1x2x16xf32>
    tpu.vector_store %arg25[%1361, %c0_353, %c0_354], %1364 {strides = array<i32>} : memref<16x2x16xf32, #tpu.memory_space<vmem>>, vector<1x2x16xf32>,
    %c13_i32_355 = arith.constant 13 : i32
    %1365 = arith.index_cast %c13_i32_355 : i32 to index
    %c0_356 = arith.constant 0 : index
    %c0_357 = arith.constant 0 : index
    %1366 = vector.load %arg24[%1365, %c0_356, %c0_357] : memref<16x2x64xf32, #tpu.memory_space<vmem>>, vector<1x2x64xf32>
    %1367 = vector.shape_cast %1366 : vector<1x2x64xf32> to vector<2x64xf32>
    %cst_358 = arith.constant dense<0.000000e+00> : vector<2x64xf32>
    %1368 = tpu.matmul %1360, %20, %cst_358 {dimension_numbers = #tpu.dot_dimension_numbers<[1], [0], [0], [1], [0, 0, 1, 1], [], []>} : vector<2x16xf32>, vector<16x64xf32>, vector<2x64xf32> -> vector<2x64xf32>
    %1369 = arith.addf %1367, %1368 : vector<2x64xf32>
    %1370 = math.tanh %1369 : vector<2x64xf32>
    %1371 = arith.negf %1369 : vector<2x64xf32>
    %1372 = math.exp %1371 : vector<2x64xf32>
    %cst_359 = arith.constant 1.000000e+00 : f32
    %1373 = vector.broadcast %cst_359 : f32 to vector<2x64xf32>
    %1374 = arith.addf %1373, %1372 : vector<2x64xf32>
    %1375 = arith.divf %1373, %1374 : vector<2x64xf32>
    %1376 = arith.select %38, %1370, %1375 : vector<2x64xi1>, vector<2x64xf32>
    %1377 = vector.extract_strided_slice %1376 {offsets = [0, 0], sizes = [2, 16], strides = [1, 1]} : vector<2x64xf32> to vector<2x16xf32>
    %1378 = vector.extract_strided_slice %1376 {offsets = [0, 16], sizes = [2, 16], strides = [1, 1]} : vector<2x64xf32> to vector<2x16xf32>
    %1379 = vector.extract_strided_slice %1376 {offsets = [0, 32], sizes = [2, 16], strides = [1, 1]} : vector<2x64xf32> to vector<2x16xf32>
    %1380 = vector.extract_strided_slice %1376 {offsets = [0, 48], sizes = [2, 16], strides = [1, 1]} : vector<2x64xf32> to vector<2x16xf32>
    %1381 = arith.mulf %1378, %1358 : vector<2x16xf32>
    %1382 = arith.mulf %1377, %1379 : vector<2x16xf32>
    %1383 = arith.addf %1381, %1382 : vector<2x16xf32>
    %1384 = math.tanh %1383 : vector<2x16xf32>
    %1385 = arith.mulf %1380, %1384 : vector<2x16xf32>
    %1386 = arith.index_cast %c13_i32_355 : i32 to index
    %c0_360 = arith.constant 0 : index
    %c0_361 = arith.constant 0 : index
    %1387 = vector.load %arg25[%1386, %c0_360, %c0_361] : memref<16x2x16xf32, #tpu.memory_space<vmem>>, vector<1x2x16xf32>
    %1388 = vector.shape_cast %1387 : vector<1x2x16xf32> to vector<2x16xf32>
    %1389 = vector.shape_cast %1385 : vector<2x16xf32> to vector<1x2x16xf32>
    tpu.vector_store %arg25[%1386, %c0_360, %c0_361], %1389 {strides = array<i32>} : memref<16x2x16xf32, #tpu.memory_space<vmem>>, vector<1x2x16xf32>,
    %c14_i32_362 = arith.constant 14 : i32
    %1390 = arith.index_cast %c14_i32_362 : i32 to index
    %c0_363 = arith.constant 0 : index
    %c0_364 = arith.constant 0 : index
    %1391 = vector.load %arg24[%1390, %c0_363, %c0_364] : memref<16x2x64xf32, #tpu.memory_space<vmem>>, vector<1x2x64xf32>
    %1392 = vector.shape_cast %1391 : vector<1x2x64xf32> to vector<2x64xf32>
    %cst_365 = arith.constant dense<0.000000e+00> : vector<2x64xf32>
    %1393 = tpu.matmul %1385, %20, %cst_365 {dimension_numbers = #tpu.dot_dimension_numbers<[1], [0], [0], [1], [0, 0, 1, 1], [], []>} : vector<2x16xf32>, vector<16x64xf32>, vector<2x64xf32> -> vector<2x64xf32>
    %1394 = arith.addf %1392, %1393 : vector<2x64xf32>
    %1395 = math.tanh %1394 : vector<2x64xf32>
    %1396 = arith.negf %1394 : vector<2x64xf32>
    %1397 = math.exp %1396 : vector<2x64xf32>
    %cst_366 = arith.constant 1.000000e+00 : f32
    %1398 = vector.broadcast %cst_366 : f32 to vector<2x64xf32>
    %1399 = arith.addf %1398, %1397 : vector<2x64xf32>
    %1400 = arith.divf %1398, %1399 : vector<2x64xf32>
    %1401 = arith.select %38, %1395, %1400 : vector<2x64xi1>, vector<2x64xf32>
    %1402 = vector.extract_strided_slice %1401 {offsets = [0, 0], sizes = [2, 16], strides = [1, 1]} : vector<2x64xf32> to vector<2x16xf32>
    %1403 = vector.extract_strided_slice %1401 {offsets = [0, 16], sizes = [2, 16], strides = [1, 1]} : vector<2x64xf32> to vector<2x16xf32>
    %1404 = vector.extract_strided_slice %1401 {offsets = [0, 32], sizes = [2, 16], strides = [1, 1]} : vector<2x64xf32> to vector<2x16xf32>
    %1405 = vector.extract_strided_slice %1401 {offsets = [0, 48], sizes = [2, 16], strides = [1, 1]} : vector<2x64xf32> to vector<2x16xf32>
    %1406 = arith.mulf %1403, %1383 : vector<2x16xf32>
    %1407 = arith.mulf %1402, %1404 : vector<2x16xf32>
    %1408 = arith.addf %1406, %1407 : vector<2x16xf32>
    %1409 = math.tanh %1408 : vector<2x16xf32>
    %1410 = arith.mulf %1405, %1409 : vector<2x16xf32>
    %1411 = arith.index_cast %c14_i32_362 : i32 to index
    %c0_367 = arith.constant 0 : index
    %c0_368 = arith.constant 0 : index
    %1412 = vector.load %arg25[%1411, %c0_367, %c0_368] : memref<16x2x16xf32, #tpu.memory_space<vmem>>, vector<1x2x16xf32>
    %1413 = vector.shape_cast %1412 : vector<1x2x16xf32> to vector<2x16xf32>
    %1414 = vector.shape_cast %1410 : vector<2x16xf32> to vector<1x2x16xf32>
    tpu.vector_store %arg25[%1411, %c0_367, %c0_368], %1414 {strides = array<i32>} : memref<16x2x16xf32, #tpu.memory_space<vmem>>, vector<1x2x16xf32>,
    %c15_i32_369 = arith.constant 15 : i32
    %1415 = arith.index_cast %c15_i32_369 : i32 to index
    %c0_370 = arith.constant 0 : index
    %c0_371 = arith.constant 0 : index
    %1416 = vector.load %arg24[%1415, %c0_370, %c0_371] : memref<16x2x64xf32, #tpu.memory_space<vmem>>, vector<1x2x64xf32>
    %1417 = vector.shape_cast %1416 : vector<1x2x64xf32> to vector<2x64xf32>
    %cst_372 = arith.constant dense<0.000000e+00> : vector<2x64xf32>
    %1418 = tpu.matmul %1410, %20, %cst_372 {dimension_numbers = #tpu.dot_dimension_numbers<[1], [0], [0], [1], [0, 0, 1, 1], [], []>} : vector<2x16xf32>, vector<16x64xf32>, vector<2x64xf32> -> vector<2x64xf32>
    %1419 = arith.addf %1417, %1418 : vector<2x64xf32>
    %1420 = math.tanh %1419 : vector<2x64xf32>
    %1421 = arith.negf %1419 : vector<2x64xf32>
    %1422 = math.exp %1421 : vector<2x64xf32>
    %cst_373 = arith.constant 1.000000e+00 : f32
    %1423 = vector.broadcast %cst_373 : f32 to vector<2x64xf32>
    %1424 = arith.addf %1423, %1422 : vector<2x64xf32>
    %1425 = arith.divf %1423, %1424 : vector<2x64xf32>
    %1426 = arith.select %38, %1420, %1425 : vector<2x64xi1>, vector<2x64xf32>
    %1427 = vector.extract_strided_slice %1426 {offsets = [0, 0], sizes = [2, 16], strides = [1, 1]} : vector<2x64xf32> to vector<2x16xf32>
    %1428 = vector.extract_strided_slice %1426 {offsets = [0, 16], sizes = [2, 16], strides = [1, 1]} : vector<2x64xf32> to vector<2x16xf32>
    %1429 = vector.extract_strided_slice %1426 {offsets = [0, 32], sizes = [2, 16], strides = [1, 1]} : vector<2x64xf32> to vector<2x16xf32>
    %1430 = vector.extract_strided_slice %1426 {offsets = [0, 48], sizes = [2, 16], strides = [1, 1]} : vector<2x64xf32> to vector<2x16xf32>
    %1431 = arith.mulf %1428, %1408 : vector<2x16xf32>
    %1432 = arith.mulf %1427, %1429 : vector<2x16xf32>
    %1433 = arith.addf %1431, %1432 : vector<2x16xf32>
    %1434 = math.tanh %1433 : vector<2x16xf32>
    %1435 = arith.mulf %1430, %1434 : vector<2x16xf32>
    %1436 = arith.index_cast %c15_i32_369 : i32 to index
    %c0_374 = arith.constant 0 : index
    %c0_375 = arith.constant 0 : index
    %1437 = vector.load %arg25[%1436, %c0_374, %c0_375] : memref<16x2x16xf32, #tpu.memory_space<vmem>>, vector<1x2x16xf32>
    %1438 = vector.shape_cast %1437 : vector<1x2x16xf32> to vector<2x16xf32>
    %1439 = vector.shape_cast %1435 : vector<2x16xf32> to vector<1x2x16xf32>
    tpu.vector_store %arg25[%1436, %c0_374, %c0_375], %1439 {strides = array<i32>} : memref<16x2x16xf32, #tpu.memory_space<vmem>>, vector<1x2x16xf32>,
    %c16_i32_376 = arith.constant 16 : i32
    %c0_377 = arith.constant 0 : index
    %c0_378 = arith.constant 0 : index
    %1440 = vector.load %arg15[%c0_377, %c0_378] : memref<16x96xf32, #tpu.memory_space<vmem>>, vector<16x96xf32>
    %c0_379 = arith.constant 0 : index
    %c0_380 = arith.constant 0 : index
    %1441 = vector.load %arg16[%c0_379, %c0_380] : memref<1x96xf32, #tpu.memory_space<vmem>>, vector<1x96xf32>
    %c0_381 = arith.constant 0 : index
    %c0_382 = arith.constant 0 : index
    %1442 = vector.load %arg17[%c0_381, %c0_382] : memref<96x3xf32, #tpu.memory_space<vmem>>, vector<96x3xf32>
    %c0_383 = arith.constant 0 : index
    %c0_384 = arith.constant 0 : index
    %1443 = vector.load %arg18[%c0_383, %c0_384] : memref<1x3xf32, #tpu.memory_space<vmem>>, vector<1x3xf32>
    %1444 = tpu.iota {dimensions = array<i32: 0>} : vector<16x2xi32>
    %c0_385 = arith.constant 0 : index
    %c0_386 = arith.constant 0 : index
    %1445 = vector.load %arg3[%c0_385, %c0_386] : memref<1x2xi32, #tpu.memory_space<vmem>>, vector<1x2xi32>
    %1446 = vector.broadcast %1445 : vector<1x2xi32> to vector<16x2xi32>
    %1447 = arith.cmpi slt, %1444, %1446 : vector<16x2xi32>
    %1448 = arith.extui %1447 : vector<16x2xi1> to vector<16x2xi32>
    %1449 = arith.sitofp %1448 : vector<16x2xi32> to vector<16x2xf32>
    %c0_387 = arith.constant 0 : index
    %c0_388 = arith.constant 0 : index
    %c0_389 = arith.constant 0 : index
    %1450 = vector.load %arg25[%c0_387, %c0_388, %c0_389] : memref<16x2x16xf32, #tpu.memory_space<vmem>>, vector<16x2x16xf32>
    %1451 = vector.extract_strided_slice %1450 {offsets = [0, 0, 0], sizes = [16, 1, 16], strides = [1, 1, 1]} : vector<16x2x16xf32> to vector<16x1x16xf32>
    %1452 = vector.shape_cast %1451 : vector<16x1x16xf32> to vector<16x16xf32>
    %cst_390 = arith.constant dense<0.000000e+00> : vector<16x96xf32>
    %1453 = tpu.matmul %1452, %1440, %cst_390 {dimension_numbers = #tpu.dot_dimension_numbers<[1], [0], [0], [1], [0, 0, 1, 1], [], []>} : vector<16x16xf32>, vector<16x96xf32>, vector<16x96xf32> -> vector<16x96xf32>
    %1454 = vector.broadcast %1441 : vector<1x96xf32> to vector<16x96xf32>
    %1455 = arith.addf %1453, %1454 : vector<16x96xf32>
    %1456 = math.tanh %1455 : vector<16x96xf32>
    %cst_391 = arith.constant dense<0.000000e+00> : vector<16x3xf32>
    %1457 = tpu.matmul %1456, %1442, %cst_391 {dimension_numbers = #tpu.dot_dimension_numbers<[1], [0], [0], [1], [0, 0, 1, 1], [], []>} : vector<16x96xf32>, vector<96x3xf32>, vector<16x3xf32> -> vector<16x3xf32>
    %1458 = vector.broadcast %1443 : vector<1x3xf32> to vector<16x3xf32>
    %1459 = arith.addf %1457, %1458 : vector<16x3xf32>
    %1460 = vector.extract_strided_slice %1449 {offsets = [0, 0], sizes = [16, 1], strides = [1, 1]} : vector<16x2xf32> to vector<16x1xf32>
    %1461 = vector.broadcast %1460 : vector<16x1xf32> to vector<16x3xf32>
    %1462 = arith.mulf %1459, %1461 : vector<16x3xf32>
    %cst_392 = arith.constant dense<0xFF800000> : vector<3xf32>
    %1463 = vector.multi_reduction <maximumf>, %1462, %cst_392 [0] : vector<16x3xf32> to vector<3xf32>
    %1464 = vector.shape_cast %1463 : vector<3xf32> to vector<1x3xf32>
    %1465 = vector.broadcast %1464 : vector<1x3xf32> to vector<16x3xf32>
    %1466 = arith.subf %1462, %1465 : vector<16x3xf32>
    %1467 = math.exp %1466 : vector<16x3xf32>
    %cst_393 = arith.constant dense<0.000000e+00> : vector<3xf32>
    %1468 = vector.multi_reduction <add>, %1467, %cst_393 [0] : vector<16x3xf32> to vector<3xf32>
    %1469 = vector.shape_cast %1468 : vector<3xf32> to vector<1x3xf32>
    %1470 = vector.broadcast %1469 : vector<1x3xf32> to vector<16x3xf32>
    %1471 = arith.divf %1467, %1470 : vector<16x3xf32>
    %1472 = vector.broadcast %1460 : vector<16x1xf32> to vector<16x3xf32>
    %1473 = arith.mulf %1471, %1472 : vector<16x3xf32>
    %cst_394 = arith.constant dense<0.000000e+00> : vector<3xf32>
    %1474 = vector.multi_reduction <add>, %1473, %cst_394 [0] : vector<16x3xf32> to vector<3xf32>
    %1475 = vector.shape_cast %1474 : vector<3xf32> to vector<1x3xf32>
    %cst_395 = arith.constant 9.99999982E-14 : f32
    %1476 = vector.broadcast %cst_395 : f32 to vector<1x3xf32>
    %1477 = arith.addf %1475, %1476 : vector<1x3xf32>
    %1478 = vector.broadcast %1477 : vector<1x3xf32> to vector<16x3xf32>
    %1479 = arith.divf %1473, %1478 : vector<16x3xf32>
    %cst_396 = arith.constant 9.99999982E-14 : f32
    %1480 = vector.broadcast %cst_396 : f32 to vector<16x3xf32>
    %1481 = arith.addf %1479, %1480 : vector<16x3xf32>
    %c0_397 = arith.constant 0 : index
    %c0_398 = arith.constant 0 : index
    %c0_399 = arith.constant 0 : index
    %1482 = vector.load %arg19[%c0_397, %c0_398, %c0_399] : memref<2x16x3xf32, #tpu.memory_space<vmem>>, vector<1x16x3xf32>
    %1483 = vector.shape_cast %1482 : vector<1x16x3xf32> to vector<16x3xf32>
    %1484 = vector.shape_cast %1481 : vector<16x3xf32> to vector<1x16x3xf32>
    tpu.vector_store %arg19[%c0_397, %c0_398, %c0_399], %1484 {strides = array<i32>} : memref<2x16x3xf32, #tpu.memory_space<vmem>>, vector<1x16x3xf32>,
    %1485 = vector.extract_strided_slice %1450 {offsets = [0, 1, 0], sizes = [16, 1, 16], strides = [1, 1, 1]} : vector<16x2x16xf32> to vector<16x1x16xf32>
    %1486 = vector.shape_cast %1485 : vector<16x1x16xf32> to vector<16x16xf32>
    %cst_400 = arith.constant dense<0.000000e+00> : vector<16x96xf32>
    %1487 = tpu.matmul %1486, %1440, %cst_400 {dimension_numbers = #tpu.dot_dimension_numbers<[1], [0], [0], [1], [0, 0, 1, 1], [], []>} : vector<16x16xf32>, vector<16x96xf32>, vector<16x96xf32> -> vector<16x96xf32>
    %1488 = vector.broadcast %1441 : vector<1x96xf32> to vector<16x96xf32>
    %1489 = arith.addf %1487, %1488 : vector<16x96xf32>
    %1490 = math.tanh %1489 : vector<16x96xf32>
    %cst_401 = arith.constant dense<0.000000e+00> : vector<16x3xf32>
    %1491 = tpu.matmul %1490, %1442, %cst_401 {dimension_numbers = #tpu.dot_dimension_numbers<[1], [0], [0], [1], [0, 0, 1, 1], [], []>} : vector<16x96xf32>, vector<96x3xf32>, vector<16x3xf32> -> vector<16x3xf32>
    %1492 = vector.broadcast %1443 : vector<1x3xf32> to vector<16x3xf32>
    %1493 = arith.addf %1491, %1492 : vector<16x3xf32>
    %1494 = vector.extract_strided_slice %1449 {offsets = [0, 1], sizes = [16, 1], strides = [1, 1]} : vector<16x2xf32> to vector<16x1xf32>
    %1495 = vector.broadcast %1494 : vector<16x1xf32> to vector<16x3xf32>
    %1496 = arith.mulf %1493, %1495 : vector<16x3xf32>
    %cst_402 = arith.constant dense<0xFF800000> : vector<3xf32>
    %1497 = vector.multi_reduction <maximumf>, %1496, %cst_402 [0] : vector<16x3xf32> to vector<3xf32>
    %1498 = vector.shape_cast %1497 : vector<3xf32> to vector<1x3xf32>
    %1499 = vector.broadcast %1498 : vector<1x3xf32> to vector<16x3xf32>
    %1500 = arith.subf %1496, %1499 : vector<16x3xf32>
    %1501 = math.exp %1500 : vector<16x3xf32>
    %cst_403 = arith.constant dense<0.000000e+00> : vector<3xf32>
    %1502 = vector.multi_reduction <add>, %1501, %cst_403 [0] : vector<16x3xf32> to vector<3xf32>
    %1503 = vector.shape_cast %1502 : vector<3xf32> to vector<1x3xf32>
    %1504 = vector.broadcast %1503 : vector<1x3xf32> to vector<16x3xf32>
    %1505 = arith.divf %1501, %1504 : vector<16x3xf32>
    %1506 = vector.broadcast %1494 : vector<16x1xf32> to vector<16x3xf32>
    %1507 = arith.mulf %1505, %1506 : vector<16x3xf32>
    %cst_404 = arith.constant dense<0.000000e+00> : vector<3xf32>
    %1508 = vector.multi_reduction <add>, %1507, %cst_404 [0] : vector<16x3xf32> to vector<3xf32>
    %1509 = vector.shape_cast %1508 : vector<3xf32> to vector<1x3xf32>
    %cst_405 = arith.constant 9.99999982E-14 : f32
    %1510 = vector.broadcast %cst_405 : f32 to vector<1x3xf32>
    %1511 = arith.addf %1509, %1510 : vector<1x3xf32>
    %1512 = vector.broadcast %1511 : vector<1x3xf32> to vector<16x3xf32>
    %1513 = arith.divf %1507, %1512 : vector<16x3xf32>
    %cst_406 = arith.constant 9.99999982E-14 : f32
    %1514 = vector.broadcast %cst_406 : f32 to vector<16x3xf32>
    %1515 = arith.addf %1513, %1514 : vector<16x3xf32>
    %c1 = arith.constant 1 : index
    %c0_407 = arith.constant 0 : index
    %c0_408 = arith.constant 0 : index
    %1516 = vector.load %arg19[%c1, %c0_407, %c0_408] : memref<2x16x3xf32, #tpu.memory_space<vmem>>, vector<1x16x3xf32>
    %1517 = vector.shape_cast %1516 : vector<1x16x3xf32> to vector<16x3xf32>
    %1518 = vector.shape_cast %1515 : vector<16x3xf32> to vector<1x16x3xf32>
    tpu.vector_store %arg19[%c1, %c0_407, %c0_408], %1518 {strides = array<i32>} : memref<2x16x3xf32, #tpu.memory_space<vmem>>, vector<1x16x3xf32>,
    %c0_409 = arith.constant 0 : index
    %c0_410 = arith.constant 0 : index
    %c0_411 = arith.constant 0 : index
    %1519 = vector.load %arg23[%c0_409, %c0_410, %c0_411] : memref<16x2x16xf32, #tpu.memory_space<vmem>>, vector<16x2x16xf32>
    %1520 = vector.extract_strided_slice %1519 {offsets = [0, 0, 0], sizes = [16, 2, 1], strides = [1, 1, 1]} : vector<16x2x16xf32> to vector<16x2x1xf32>
    %1521 = vector.shape_cast %1520 : vector<16x2x1xf32> to vector<16x2xf32>
    %c0_412 = arith.constant 0 : index
    %c0_413 = arith.constant 0 : index
    %1522 = vector.load %arg20[%c0_412, %c0_413] : memref<16x2xf32, #tpu.memory_space<vmem>>, vector<16x2xf32>
    tpu.vector_store %arg20[%c0_412, %c0_413], %1521 {strides = array<i32>} : memref<16x2xf32, #tpu.memory_space<vmem>>, vector<16x2xf32>,
    return
  }
}

</mosaic_0001>

<llo_original>
// kernel: localization_acrm_forward.1
$region0: #{localization_acrm_forward.1}
  #allocation0 [shape = 'u32[]', space=smem, size = 0x4, offset = 0x4, fixed_abs, tag = 'smem constant byte address 0x4 - core index']
  #allocation1 [shape = 'u32[72,128]{1,0:T(1,128)}', space=vmem, size = 0x9000, scoped, tag = 'internal scratch']
  #allocation2 [shape = 'f32[16,2,64]{2,1,0:T(2,128)}', space=vmem, size = 0x4000, scoped, tag = 'scratch operand']
  #allocation3 [shape = 'f32[8,2,64]{2,1,0:T(2,128)}', space=vmem, size = 0x2000, scoped, tag = 'scratch operand']
  #allocation4 [shape = 'f32[16,2,16]{2,1,0:T(2,128)}', space=vmem, size = 0x4000, scoped, tag = 'scratch operand']
  #allocation5 [shape = 'f32[16,2,64]{2,1,0:T(2,128)}', space=vmem, size = 0x4000, scoped, tag = 'scratch operand']
  #allocation6 [shape = 'f32[16,2,16]{2,1,0:T(2,128)}', space=vmem, size = 0x4000, scoped, tag = 'scratch operand']
  %s0 = inlined_call_operand.vmem [shape: f32[16,2,32], index: 0, kind: input, shape index: {}]
  %s1 = inlined_call_operand.vmem [shape: f32[8,2,32], index: 1, kind: input, shape index: {}]
  %s2 = inlined_call_operand.vmem [shape: s32[2,1], index: 2, kind: input, shape index: {}]
  %s3 = inlined_call_operand.vmem [shape: s32[1,2], index: 3, kind: input, shape index: {}]
  %s4 = inlined_call_operand.vmem [shape: s32[2,1], index: 4, kind: input, shape index: {}]
  %s5 = inlined_call_operand.vmem [shape: f32[32,64], index: 5, kind: input, shape index: {}]
  %s6 = inlined_call_operand.vmem [shape: f32[16,64], index: 6, kind: input, shape index: {}]
  %s7 = inlined_call_operand.vmem [shape: f32[1,64], index: 7, kind: input, shape index: {}]
  %s8 = inlined_call_operand.vmem [shape: f32[32,64], index: 8, kind: input, shape index: {}]
  %s9 = inlined_call_operand.vmem [shape: f32[16,64], index: 9, kind: input, shape index: {}]
  %s10 = inlined_call_operand.vmem [shape: f32[1,64], index: 10, kind: input, shape index: {}]
  %s11 = inlined_call_operand.vmem [shape: f32[16,64], index: 11, kind: input, shape index: {}]
  %s12 = inlined_call_operand.vmem [shape: f32[16,64], index: 12, kind: input, shape index: {}]
  %s13 = inlined_call_operand.vmem [shape: f32[16,64], index: 13, kind: input, shape index: {}]
  %s14 = inlined_call_operand.vmem [shape: f32[1,64], index: 14, kind: input, shape index: {}]
  %s15 = inlined_call_operand.vmem [shape: f32[16,96], index: 15, kind: input, shape index: {}]
  %s16 = inlined_call_operand.vmem [shape: f32[1,96], index: 16, kind: input, shape index: {}]
  %s17 = inlined_call_operand.vmem [shape: f32[96,3], index: 17, kind: input, shape index: {}]
  %s18 = inlined_call_operand.vmem [shape: f32[1,3], index: 18, kind: input, shape index: {}]
  %s19 = inlined_call_operand.vmem [shape: f32[2,16,3], index: 19, kind: output, shape index: {0}]
  %s20 = inlined_call_operand.vmem [shape: f32[16,2], index: 20, kind: output, shape index: {1}]
  %21 = xla_tuple %s19, %s20
  %s22 = sld [smem:[#allocation0]]
  $region94: #{localization_acrm_forward.1} parent=0
    _
  %s24 = ssub.s32 1, %s22
  %s25 = scalar_select 0, %s24, %s22
  // Predicated region
  $region2: #{localization_acrm_forward.1} parent=0 // pred_check
    _
  $region3: #{localization_acrm_forward.1} parent=0 // pred_check_branch
    %27 = sbr.rel (0) target = $region5
  $region4: #{localization_acrm_forward.1} parent=0 // pred_region
    _
  $region5: #{localization_acrm_forward.1} parent=0 // pred_fallthru
    _
  // Predicated region
  $region6: #{localization_acrm_forward.1} parent=0 // pred_check
    _
  $region7: #{localization_acrm_forward.1} parent=0 // pred_check_branch
    %29 = sbr.rel (0) target = $region9
  $region8: #{localization_acrm_forward.1} parent=0 // pred_region
    _
  $region9: #{localization_acrm_forward.1} parent=0 // pred_fallthru
    _
  // Predicated region
  $region10: #{localization_acrm_forward.1} parent=0 // pred_check
    _
  $region11: #{localization_acrm_forward.1} parent=0 // pred_check_branch
    %31 = sbr.rel (0) target = $region13
  $region12: #{localization_acrm_forward.1} parent=0 // pred_region
    _
  $region13: #{localization_acrm_forward.1} parent=0 // pred_fallthru
    _
  // Predicated region
  $region14: #{localization_acrm_forward.1} parent=0 // pred_check
    _
  $region15: #{localization_acrm_forward.1} parent=0 // pred_check_branch
    %33 = sbr.rel (0) target = $region17
  $region16: #{localization_acrm_forward.1} parent=0 // pred_region
    _
  $region17: #{localization_acrm_forward.1} parent=0 // pred_fallthru
    _
  // Predicated region
  $region18: #{localization_acrm_forward.1} parent=0 // pred_check
    _
  $region19: #{localization_acrm_forward.1} parent=0 // pred_check_branch
    %35 = sbr.rel (0) target = $region21
  $region20: #{localization_acrm_forward.1} parent=0 // pred_region
    _
  $region21: #{localization_acrm_forward.1} parent=0 // pred_fallthru
    _
  // Predicated region
  $region22: #{localization_acrm_forward.1} parent=0 // pred_check
    _
  $region23: #{localization_acrm_forward.1} parent=0 // pred_check_branch
    %37 = sbr.rel (0) target = $region25
  $region24: #{localization_acrm_forward.1} parent=0 // pred_region
    _
  $region25: #{localization_acrm_forward.1} parent=0 // pred_fallthru
    _
  // Predicated region
  $region26: #{localization_acrm_forward.1} parent=0 // pred_check
    _
  $region27: #{localization_acrm_forward.1} parent=0 // pred_check_branch
    %39 = sbr.rel (0) target = $region29
  $region28: #{localization_acrm_forward.1} parent=0 // pred_region
    _
  $region29: #{localization_acrm_forward.1} parent=0 // pred_fallthru
    _
  // Predicated region
  $region30: #{localization_acrm_forward.1} parent=0 // pred_check
    _
  $region31: #{localization_acrm_forward.1} parent=0 // pred_check_branch
    %41 = sbr.rel (0) target = $region33
  $region32: #{localization_acrm_forward.1} parent=0 // pred_region
    _
  $region33: #{localization_acrm_forward.1} parent=0 // pred_fallthru
    _
  // Predicated region
  $region34: #{localization_acrm_forward.1} parent=0 // pred_check
    _
  $region35: #{localization_acrm_forward.1} parent=0 // pred_check_branch
    %43 = sbr.rel (0) target = $region37
  $region36: #{localization_acrm_forward.1} parent=0 // pred_region
    _
  $region37: #{localization_acrm_forward.1} parent=0 // pred_fallthru
    _
  // Predicated region
  $region38: #{localization_acrm_forward.1} parent=0 // pred_check
    _
  $region39: #{localization_acrm_forward.1} parent=0 // pred_check_branch
    %45 = sbr.rel (0) target = $region41
  $region40: #{localization_acrm_forward.1} parent=0 // pred_region
    _
  $region41: #{localization_acrm_forward.1} parent=0 // pred_fallthru
    _
  // Predicated region
  $region42: #{localization_acrm_forward.1} parent=0 // pred_check
    _
  $region43: #{localization_acrm_forward.1} parent=0 // pred_check_branch
    %47 = sbr.rel (0) target = $region45
  $region44: #{localization_acrm_forward.1} parent=0 // pred_region
    _
  $region45: #{localization_acrm_forward.1} parent=0 // pred_fallthru
    _
  // Predicated region
  $region46: #{localization_acrm_forward.1} parent=0 // pred_check
    _
  $region47: #{localization_acrm_forward.1} parent=0 // pred_check_branch
    %49 = sbr.rel (0) target = $region49
  $region48: #{localization_acrm_forward.1} parent=0 // pred_region
    _
  $region49: #{localization_acrm_forward.1} parent=0 // pred_fallthru
    _
  // Predicated region
  $region50: #{localization_acrm_forward.1} parent=0 // pred_check
    _
  $region51: #{localization_acrm_forward.1} parent=0 // pred_check_branch
    %51 = sbr.rel (0) target = $region53
  $region52: #{localization_acrm_forward.1} parent=0 // pred_region
    _
  $region53: #{localization_acrm_forward.1} parent=0 // pred_fallthru
    _
  // Predicated region
  $region54: #{localization_acrm_forward.1} parent=0 // pred_check
    _
  $region55: #{localization_acrm_forward.1} parent=0 // pred_check_branch
    %53 = sbr.rel (0) target = $region57
  $region56: #{localization_acrm_forward.1} parent=0 // pred_region
    _
  $region57: #{localization_acrm_forward.1} parent=0 // pred_fallthru
    _
  // Predicated region
  $region58: #{localization_acrm_forward.1} parent=0 // pred_check
    _
  $region59: #{localization_acrm_forward.1} parent=0 // pred_check_branch
    %55 = sbr.rel (0) target = $region61
  $region60: #{localization_acrm_forward.1} parent=0 // pred_region
    _
  $region61: #{localization_acrm_forward.1} parent=0 // pred_fallthru
    _
  // Predicated region
  $region62: #{localization_acrm_forward.1} parent=0 // pred_check
    _
  $region63: #{localization_acrm_forward.1} parent=0 // pred_check_branch
    %57 = sbr.rel (0) target = $region65
  $region64: #{localization_acrm_forward.1} parent=0 // pred_region
    _
  $region65: #{localization_acrm_forward.1} parent=0 // pred_fallthru
    _
  // Predicated region
  $region66: #{localization_acrm_forward.1} parent=0 // pred_check
    _
  $region67: #{localization_acrm_forward.1} parent=0 // pred_check_branch
    %59 = sbr.rel (0) target = $region69
  $region68: #{localization_acrm_forward.1} parent=0 // pred_region
    _
  $region69: #{localization_acrm_forward.1} parent=0 // pred_fallthru
    _
  // Predicated region
  $region70: #{localization_acrm_forward.1} parent=0 // pred_check
    _
  $region71: #{localization_acrm_forward.1} parent=0 // pred_check_branch
    %61 = sbr.rel (0) target = $region73
  $region72: #{localization_acrm_forward.1} parent=0 // pred_region
    _
  $region73: #{localization_acrm_forward.1} parent=0 // pred_fallthru
    _
  // Predicated region
  $region74: #{localization_acrm_forward.1} parent=0 // pred_check
    _
  $region75: #{localization_acrm_forward.1} parent=0 // pred_check_branch
    %63 = sbr.rel (0) target = $region77
  $region76: #{localization_acrm_forward.1} parent=0 // pred_region
    _
  $region77: #{localization_acrm_forward.1} parent=0 // pred_fallthru
    _
  %v64 = vld [vmem:[%s0] sm:$0x3]
  %v65 = vld [vmem:[%s0 + $0x2] sm:$0x3]
  %v66 = vld [vmem:[%s0 + $0x4] sm:$0x3]
  %v67 = vld [vmem:[%s0 + $0x6] sm:$0x3]
  %v68 = vld [vmem:[%s0 + $0x8] sm:$0x3]
  %v69 = vld [vmem:[%s0 + $0xa] sm:$0x3]
  %v70 = vld [vmem:[%s0 + $0xc] sm:$0x3]
  %v71 = vld [vmem:[%s0 + $0xe] sm:$0x3]
  %v72 = vld [vmem:[%s0 + $0x10] sm:$0x3]
  %v73 = vld [vmem:[%s0 + $0x12] sm:$0x3]
  %v74 = vld [vmem:[%s0 + $0x14] sm:$0x3]
  %v75 = vld [vmem:[%s0 + $0x16] sm:$0x3]
  %v76 = vld [vmem:[%s0 + $0x18] sm:$0x3]
  %v77 = vld [vmem:[%s0 + $0x1a] sm:$0x3]
  %v78 = vld [vmem:[%s0 + $0x1c] sm:$0x3]
  %v79 = vld [vmem:[%s0 + $0x1e] sm:$0x3]
  %v80 = vld [vmem:[%s5] sm:$0xff]
  %v81 = vld [vmem:[%s5 + $0x8] sm:$0xff]
  %v82 = vld [vmem:[%s5 + $0x10] sm:$0xff]
  %v83 = vld [vmem:[%s5 + $0x18] sm:$0xff]
  %v84 = vld [vmem:[%s7] sm:$0x1]
  %v86 = vperm.slane %v84, 0
  %104 = vst [vmem:[#allocation1] ss:$4 sm:$0xff] %v64
  %s105 = scalar_lea.vmem [#allocation1], 1
  %106 = vst [vmem:[%s105] ss:$4 sm:$0xff] %v65
  %s107 = scalar_lea.vmem [#allocation1], 2
  %108 = vst [vmem:[%s107] ss:$4 sm:$0xff] %v66
  %s109 = scalar_lea.vmem [#allocation1], 3
  %110 = vst [vmem:[%s109] ss:$4 sm:$0xff] %v67
  %s111 = scalar_lea.vmem [#allocation1], 32
  %112 = vst [vmem:[%s111] ss:$4 sm:$0xff] %v68
  %s113 = scalar_lea.vmem [#allocation1], 33
  %114 = vst [vmem:[%s113] ss:$4 sm:$0xff] %v69
  %s115 = scalar_lea.vmem [#allocation1], 34
  %116 = vst [vmem:[%s115] ss:$4 sm:$0xff] %v70
  %s117 = scalar_lea.vmem [#allocation1], 35
  %118 = vst [vmem:[%s117] ss:$4 sm:$0xff] %v71
  %v119 = vld.sshfl [vmem:[#allocation1] sm:$0xff pattern:$0x73625140]
  %v120 = vld.sshfl [vmem:[#allocation1 + $0x20] sm:$0xff pattern:$0x73625140]
  %121 = vst [vmem:[#allocation1] ss:$4 sm:$0xff] %v72
  %122 = vst [vmem:[%s105] ss:$4 sm:$0xff] %v73
  %123 = vst [vmem:[%s107] ss:$4 sm:$0xff] %v74
  %124 = vst [vmem:[%s109] ss:$4 sm:$0xff] %v75
  %125 = vst [vmem:[%s111] ss:$4 sm:$0xff] %v76
  %126 = vst [vmem:[%s113] ss:$4 sm:$0xff] %v77
  %127 = vst [vmem:[%s115] ss:$4 sm:$0xff] %v78
  %128 = vst [vmem:[%s117] ss:$4 sm:$0xff] %v79
  %v129 = vld.sshfl [vmem:[#allocation1] sm:$0xff pattern:$0x73625140]
  %v130 = vld.sshfl [vmem:[#allocation1 + $0x20] sm:$0xff pattern:$0x73625140]
  %vm131 = vcmask 261120
  %v132 = vsel %vm131, %v119, 0
  %v134 = vsel %vm131, %v120, 0
  %v136 = vsel %vm131, %v129, 0
  %v138 = vsel %vm131, %v130, 0
  %140 = vmatpush.msra.mxu0 0.0
  %141 = vmatpush.msra.mxu0 0.0
  %142 = vmatpush.msra.mxu0 0.0
  %143 = vmatpush.msra.mxu0 0.0
  %144 = vmatpush.msra.mxu0 0.0
  %145 = vmatpush.msra.mxu0 0.0
  %146 = vmatpush.msra.mxu0 0.0
  %147 = vmatpush.msra.mxu0 0.0
  %148 = vmatpush.msra.mxu0 0.0
  %149 = vmatpush.msra.mxu0 0.0
  %150 = vmatpush.msra.mxu0 0.0
  %151 = vmatpush.msra.mxu0 0.0
  %152 = vmatpush.msra.mxu0 %v83
  %153 = vmatpush.msra.mxu0 %v82
  %154 = vmatpush.msra.mxu0 %v81
  %155 = vmatpush.msra.mxu0 %v80
  %156 = vmatmul.f32.gmra.mxu0 %v132
  %v157 = vpop.f32.mrf.mxu0
  %v158 = vadd.f32 %v86, %v157
  %159 = vmatmul.f32.gmra.mxu0 %v134
  %v160 = vpop.f32.mrf.mxu0
  %v161 = vadd.f32 %v86, %v160
  %162 = vmatmul.f32.gmra.mxu0 %v136
  %v163 = vpop.f32.mrf.mxu0
  %v164 = vadd.f32 %v86, %v163
  %165 = vmatmul.f32.gmra.mxu0 %v138
  %v166 = vpop.f32.mrf.mxu0
  %v167 = vadd.f32 %v86, %v166
  %168 = vdwg.mxu0
  %v173 = vrot.slane %v158, 2
  %v174 = vrot.slane %v158, 4
  %v175 = vrot.slane %v158, 6
  %v176 = vrot.slane %v161, 2
  %v177 = vrot.slane %v161, 4
  %v178 = vrot.slane %v161, 6
  %v179 = vrot.slane %v164, 2
  %v180 = vrot.slane %v164, 4
  %v181 = vrot.slane %v164, 6
  %v182 = vrot.slane %v167, 2
  %v183 = vrot.slane %v167, 4
  %v184 = vrot.slane %v167, 6
  %vm197 = vcmask 517120
  %198 = vst.msk [vmem:[#allocation2] sm:$0x3] %vm197, %v158
  %199 = vst.msk [vmem:[#allocation2 + $0x2] sm:$0x3] %vm197, %v173
  %200 = vst.msk [vmem:[#allocation2 + $0x4] sm:$0x3] %vm197, %v174
  %201 = vst.msk [vmem:[#allocation2 + $0x6] sm:$0x3] %vm197, %v175
  %202 = vst.msk [vmem:[#allocation2 + $0x8] sm:$0x3] %vm197, %v161
  %203 = vst.msk [vmem:[#allocation2 + $0xa] sm:$0x3] %vm197, %v176
  %204 = vst.msk [vmem:[#allocation2 + $0xc] sm:$0x3] %vm197, %v177
  %205 = vst.msk [vmem:[#allocation2 + $0xe] sm:$0x3] %vm197, %v178
  %206 = vst.msk [vmem:[#allocation2 + $0x10] sm:$0x3] %vm197, %v164
  %207 = vst.msk [vmem:[#allocation2 + $0x12] sm:$0x3] %vm197, %v179
  %208 = vst.msk [vmem:[#allocation2 + $0x14] sm:$0x3] %vm197, %v180
  %209 = vst.msk [vmem:[#allocation2 + $0x16] sm:$0x3] %vm197, %v181
  %210 = vst.msk [vmem:[#allocation2 + $0x18] sm:$0x3] %vm197, %v167
  %211 = vst.msk [vmem:[#allocation2 + $0x1a] sm:$0x3] %vm197, %v182
  %212 = vst.msk [vmem:[#allocation2 + $0x1c] sm:$0x3] %vm197, %v183
  %213 = vst.msk [vmem:[#allocation2 + $0x1e] sm:$0x3] %vm197, %v184
  %v214 = vld [vmem:[%s1] sm:$0x3]
  %v215 = vld [vmem:[%s1 + $0x2] sm:$0x3]
  %v216 = vld [vmem:[%s1 + $0x4] sm:$0x3]
  %v217 = vld [vmem:[%s1 + $0x6] sm:$0x3]
  %v218 = vld [vmem:[%s1 + $0x8] sm:$0x3]
  %v219 = vld [vmem:[%s1 + $0xa] sm:$0x3]
  %v220 = vld [vmem:[%s1 + $0xc] sm:$0x3]
  %v221 = vld [vmem:[%s1 + $0xe] sm:$0x3]
  %v222 = vld [vmem:[%s8] sm:$0xff]
  %v223 = vld [vmem:[%s8 + $0x8] sm:$0xff]
  %v224 = vld [vmem:[%s8 + $0x10] sm:$0xff]
  %v225 = vld [vmem:[%s8 + $0x18] sm:$0xff]
  %v226 = vld [vmem:[%s10] sm:$0x1]
  %v228 = vperm.slane %v226, 0
  %238 = vst [vmem:[#allocation1] ss:$4 sm:$0xff] %v214
  %s239 = scalar_lea.vmem [#allocation1], 1
  %240 = vst [vmem:[%s239] ss:$4 sm:$0xff] %v215
  %s241 = scalar_lea.vmem [#allocation1], 2
  %242 = vst [vmem:[%s241] ss:$4 sm:$0xff] %v216
  %s243 = scalar_lea.vmem [#allocation1], 3
  %244 = vst [vmem:[%s243] ss:$4 sm:$0xff] %v217
  %s245 = scalar_lea.vmem [#allocation1], 32
  %246 = vst [vmem:[%s245] ss:$4 sm:$0xff] %v218
  %s247 = scalar_lea.vmem [#allocation1], 33
  %248 = vst [vmem:[%s247] ss:$4 sm:$0xff] %v219
  %s249 = scalar_lea.vmem [#allocation1], 34
  %250 = vst [vmem:[%s249] ss:$4 sm:$0xff] %v220
  %s251 = scalar_lea.vmem [#allocation1], 35
  %252 = vst [vmem:[%s251] ss:$4 sm:$0xff] %v221
  %v253 = vld.sshfl [vmem:[#allocation1] sm:$0xff pattern:$0x73625140]
  %v254 = vld.sshfl [vmem:[#allocation1 + $0x20] sm:$0xff pattern:$0x73625140]
  %v255 = vsel %vm131, %v253, 0
  %v257 = vsel %vm131, %v254, 0
  %259 = vmatpush.msra.mxu0 0.0
  %260 = vmatpush.msra.mxu0 0.0
  %261 = vmatpush.msra.mxu0 0.0
  %262 = vmatpush.msra.mxu0 0.0
  %263 = vmatpush.msra.mxu0 0.0
  %264 = vmatpush.msra.mxu0 0.0
  %265 = vmatpush.msra.mxu0 0.0
  %266 = vmatpush.msra.mxu0 0.0
  %267 = vmatpush.msra.mxu0 0.0
  %268 = vmatpush.msra.mxu0 0.0
  %269 = vmatpush.msra.mxu0 0.0
  %270 = vmatpush.msra.mxu0 0.0
  %271 = vmatpush.msra.mxu0 %v225
  %272 = vmatpush.msra.mxu0 %v224
  %273 = vmatpush.msra.mxu0 %v223
  %274 = vmatpush.msra.mxu0 %v222
  %275 = vmatmul.f32.gmra.mxu0 %v255
  %v276 = vpop.f32.mrf.mxu0
  %v277 = vadd.f32 %v228, %v276
  %278 = vmatmul.f32.gmra.mxu0 %v257
  %v279 = vpop.f32.mrf.mxu0
  %v280 = vadd.f32 %v228, %v279
  %281 = vdwg.mxu0
  %v284 = vrot.slane %v277, 2
  %v285 = vrot.slane %v277, 4
  %v286 = vrot.slane %v277, 6
  %v287 = vrot.slane %v280, 2
  %v288 = vrot.slane %v280, 4
  %v289 = vrot.slane %v280, 6
  %296 = vst.msk [vmem:[#allocation3] sm:$0x3] %vm197, %v277
  %297 = vst.msk [vmem:[#allocation3 + $0x2] sm:$0x3] %vm197, %v284
  %298 = vst.msk [vmem:[#allocation3 + $0x4] sm:$0x3] %vm197, %v285
  %299 = vst.msk [vmem:[#allocation3 + $0x6] sm:$0x3] %vm197, %v286
  %300 = vst.msk [vmem:[#allocation3 + $0x8] sm:$0x3] %vm197, %v280
  %301 = vst.msk [vmem:[#allocation3 + $0xa] sm:$0x3] %vm197, %v287
  %302 = vst.msk [vmem:[#allocation3 + $0xc] sm:$0x3] %vm197, %v288
  %303 = vst.msk [vmem:[#allocation3 + $0xe] sm:$0x3] %vm197, %v289
  %v304 = vld [vmem:[%s6] sm:$0xff]
  %v305 = vld [vmem:[%s6 + $0x8] sm:$0xff]
  %v306 = vld [vmem:[%s9] sm:$0xff]
  %v307 = vld [vmem:[%s9 + $0x8] sm:$0xff]
  %v308 = vld [vmem:[%s13] sm:$0xff]
  %v309 = vld [vmem:[%s13 + $0x8] sm:$0xff]
  %v310 = vlaneseq
  %v311 = vand.u32 %v310, 127
  %vm312 = vcmp.ge.s32.totalorder %v311, 32
  %vm313 = vcmp.lt.s32.totalorder %v311, 48
  %vm314 = vmand %vm312, %vm313
  %v315 = vld [vmem:[%s2] sm:$0x3]
  %v316 = vld [vmem:[%s4] sm:$0x3]
  %v317 = vsub.s32 %v316, 1
  %v318 = vld [vmem:[#allocation2] sm:$0x3]
  %vm319 = vcmask 130048
  %v321 = vsel %vm319, 0.0, 0
  %323 = vmatpush.msra.mxu0 0.0
  %324 = vmatpush.msra.mxu0 0.0
  %325 = vmatpush.msra.mxu0 0.0
  %326 = vmatpush.msra.mxu0 0.0
  %327 = vmatpush.msra.mxu0 0.0
  %328 = vmatpush.msra.mxu0 0.0
  %329 = vmatpush.msra.mxu0 0.0
  %330 = vmatpush.msra.mxu0 0.0
  %331 = vmatpush.msra.mxu0 0.0
  %332 = vmatpush.msra.mxu0 0.0
  %333 = vmatpush.msra.mxu0 0.0
  %334 = vmatpush.msra.mxu0 0.0
  %335 = vmatpush.msra.mxu0 0.0
  %336 = vmatpush.msra.mxu0 0.0
  %337 = vmatpush.msra.mxu0 %v305
  %338 = vmatpush.msra.mxu0 %v304
  %339 = vmatmul.f32.gmra.mxu0 %v321
  %v340 = vpop.f32.mrf.mxu0
  %v341 = vadd.f32 0.0, %v340
  %342 = vdwg.mxu0
  %v343 = vadd.f32 %v318, %v341
  %v344 = vtanh.pop %v343
  %v345 = vxor.u32 %v343, 2147483648
  %v346 = vmul.f32 %v345, 1.442695
  %v347 = vpow.pop %v346
  %v348 = vadd.f32 %v347, 1.0
  %v349 = vrcp.pop %v348
  %v350 = vmul.f32 %v348, %v349
  %v351 = vsub.f32 1.0, %v350
  %v352 = vmul.f32 %v349, %v351
  %v353 = vadd.f32 %v349, %v352
  %vm354 = vweird.f32 %v348
  %vm355 = vweird.f32 %v349
  %vm356 = vmor %vm354, %vm355
  %v357 = vsel %vm356, %v349, %v353
  %v358 = vand.u32 2147483647, %v348
  %vm359 = vcmp.eq.f32.partialorder %v358, 8.507059e+37
  %v360 = vand.u32 %v348, 2147483648
  %v361 = vor.u32 1.1754944e-38, %v360
  %v362 = vsel %vm359, %v361, %v357
  %v363 = vmul.f32 1.0, %v362
  %v364 = vsel %vm314, %v344, %v363
  %v365 = vmul.f32 %v364, 0.0
  %367 = vrot.lane.b32.xlu0 %v364, 96
  %v368 = vpop.permute.xlu0 %367
  %v370 = vmul.f32 %v364, %v368
  %372 = vrot.lane.b32.xlu0 %v370, 16
  %v373 = vpop.permute.xlu0 %372
  %v375 = vadd.f32 %v365, %v373
  %v376 = vtanh.pop %v375
  %378 = vrot.lane.b32.xlu0 %v376, 32
  %v379 = vpop.permute.xlu0 %378
  %v381 = vmul.f32 %v364, %v379
  %vm382 = vcmp.gt.s32.totalorder %v315, 0
  %v383 = vsel %vm382, 1, 0
  %384 = vset.pattern.permute.xlu0 0
  %385 = vperm.xlu0 %384, %v383
  %v386 = vpop.permute.xlu0 %385
  %vm387 = vcmp.eq.s32.totalorder %v386, 1
  %v388 = vsel %vm387, %v381, 0.0
  %390 = vrot.lane.b32.xlu0 %v388, 80
  %v391 = vpop.permute.xlu0 %390
  %vm393 = vcmask 123904
  %394 = vst.msk [vmem:[#allocation4] sm:$0x3] %vm393, %v391
  %v395 = vld [vmem:[#allocation3] sm:$0x3]
  %396 = vmatpush.msra.mxu0 0.0
  %397 = vmatpush.msra.mxu0 0.0
  %398 = vmatpush.msra.mxu0 0.0
  %399 = vmatpush.msra.mxu0 0.0
  %400 = vmatpush.msra.mxu0 0.0
  %401 = vmatpush.msra.mxu0 0.0
  %402 = vmatpush.msra.mxu0 0.0
  %403 = vmatpush.msra.mxu0 0.0
  %404 = vmatpush.msra.mxu0 0.0
  %405 = vmatpush.msra.mxu0 0.0
  %406 = vmatpush.msra.mxu0 0.0
  %407 = vmatpush.msra.mxu0 0.0
  %408 = vmatpush.msra.mxu0 0.0
  %409 = vmatpush.msra.mxu0 0.0
  %410 = vmatpush.msra.mxu0 %v307
  %411 = vmatpush.msra.mxu0 %v306
  %412 = vmatmul.f32.gmra.mxu0 %v321
  %v413 = vpop.f32.mrf.mxu0
  %v414 = vadd.f32 0.0, %v413
  %415 = vdwg.mxu0
  %v416 = vadd.f32 %v395, %v414
  %v417 = vtanh.pop %v416
  %v418 = vxor.u32 %v416, 2147483648
  %v419 = vmul.f32 %v418, 1.442695
  %v420 = vpow.pop %v419
  %v421 = vadd.f32 %v420, 1.0
  %v422 = vrcp.pop %v421
  %v423 = vmul.f32 %v421, %v422
  %v424 = vsub.f32 1.0, %v423
  %v425 = vmul.f32 %v422, %v424
  %v426 = vadd.f32 %v422, %v425
  %vm427 = vweird.f32 %v421
  %vm428 = vweird.f32 %v422
  %vm429 = vmor %vm427, %vm428
  %v430 = vsel %vm429, %v422, %v426
  %v431 = vand.u32 2147483647, %v421
  %vm432 = vcmp.eq.f32.partialorder %v431, 8.507059e+37
  %v433 = vand.u32 %v421, 2147483648
  %v434 = vor.u32 1.1754944e-38, %v433
  %v435 = vsel %vm432, %v434, %v430
  %v436 = vmul.f32 1.0, %v435
  %v437 = vsel %vm314, %v417, %v436
  %v438 = vmul.f32 %v437, 0.0
  %440 = vrot.lane.b32.xlu0 %v437, 96
  %v441 = vpop.permute.xlu0 %440
  %v443 = vmul.f32 %v437, %v441
  %445 = vrot.lane.b32.xlu0 %v443, 16
  %v446 = vpop.permute.xlu0 %445
  %v448 = vadd.f32 %v438, %v446
  %v449 = vtanh.pop %v448
  %451 = vrot.lane.b32.xlu0 %v449, 32
  %v452 = vpop.permute.xlu0 %451
  %v454 = vmul.f32 %v437, %v452
  %vm455 = vcmp.eq.s32.totalorder %v317, 0
  %v456 = vsel %vm455, 1, 0
  %457 = vset.pattern.permute.xlu0 0
  %458 = vperm.xlu0 %457, %v456
  %v459 = vpop.permute.xlu0 %458
  %vm460 = vcmp.eq.s32.totalorder %v459, 1
  %v461 = vsel %vm460, %v454, 0.0
  %s462 = scalar_lea.vmem [#allocation2], 2
  %v463 = vld [vmem:[%s462] sm:$0x3]
  %465 = vrot.lane.b32.xlu0 %v381, 80
  %v466 = vpop.permute.xlu0 %465
  %v467 = vsel %vm319, %v466, 0
  %469 = vmatpush.msra.mxu0 0.0
  %470 = vmatpush.msra.mxu0 0.0
  %471 = vmatpush.msra.mxu0 0.0
  %472 = vmatpush.msra.mxu0 0.0
  %473 = vmatpush.msra.mxu0 0.0
  %474 = vmatpush.msra.mxu0 0.0
  %475 = vmatpush.msra.mxu0 0.0
  %476 = vmatpush.msra.mxu0 0.0
  %477 = vmatpush.msra.mxu0 0.0
  %478 = vmatpush.msra.mxu0 0.0
  %479 = vmatpush.msra.mxu0 0.0
  %480 = vmatpush.msra.mxu0 0.0
  %481 = vmatpush.msra.mxu0 0.0
  %482 = vmatpush.msra.mxu0 0.0
  %483 = vmatpush.msra.mxu0 %v305
  %484 = vmatpush.msra.mxu0 %v304
  %485 = vmatmul.f32.gmra.mxu0 %v467
  %v486 = vpop.f32.mrf.mxu0
  %v487 = vadd.f32 0.0, %v486
  %488 = vdwg.mxu0
  %v489 = vadd.f32 %v463, %v487
  %v490 = vtanh.pop %v489
  %v491 = vxor.u32 %v489, 2147483648
  %v492 = vmul.f32 %v491, 1.442695
  %v493 = vpow.pop %v492
  %v494 = vadd.f32 %v493, 1.0
  %v495 = vrcp.pop %v494
  %v496 = vmul.f32 %v494, %v495
  %v497 = vsub.f32 1.0, %v496
  %v498 = vmul.f32 %v495, %v497
  %v499 = vadd.f32 %v495, %v498
  %vm500 = vweird.f32 %v494
  %vm501 = vweird.f32 %v495
  %vm502 = vmor %vm500, %vm501
  %v503 = vsel %vm502, %v495, %v499
  %v504 = vand.u32 2147483647, %v494
  %vm505 = vcmp.eq.f32.partialorder %v504, 8.507059e+37
  %v506 = vand.u32 %v494, 2147483648
  %v507 = vor.u32 1.1754944e-38, %v506
  %v508 = vsel %vm505, %v507, %v503
  %v509 = vmul.f32 1.0, %v508
  %v510 = vsel %vm314, %v490, %v509
  %v511 = vmul.f32 %v510, %v375
  %513 = vrot.lane.b32.xlu0 %v510, 96
  %v514 = vpop.permute.xlu0 %513
  %v516 = vmul.f32 %v510, %v514
  %518 = vrot.lane.b32.xlu0 %v516, 16
  %v519 = vpop.permute.xlu0 %518
  %v521 = vadd.f32 %v511, %v519
  %v522 = vtanh.pop %v521
  %524 = vrot.lane.b32.xlu0 %v522, 32
  %v525 = vpop.permute.xlu0 %524
  %v527 = vmul.f32 %v510, %v525
  %vm528 = vcmp.gt.s32.totalorder %v315, 1
  %v529 = vsel %vm528, 1, 0
  %530 = vset.pattern.permute.xlu0 0
  %531 = vperm.xlu0 %530, %v529
  %v532 = vpop.permute.xlu0 %531
  %vm533 = vcmp.eq.s32.totalorder %v532, 1
  %v534 = vsel %vm533, %v527, 0.0
  %536 = vrot.lane.b32.xlu0 %v534, 80
  %v537 = vpop.permute.xlu0 %536
  %s539 = scalar_lea.vmem [#allocation4], 2
  %540 = vst.msk [vmem:[%s539] sm:$0x3] %vm393, %v537
  %s541 = scalar_lea.vmem [#allocation3], 2
  %v542 = vld [vmem:[%s541] sm:$0x3]
  %544 = vrot.lane.b32.xlu0 %v454, 80
  %v545 = vpop.permute.xlu0 %544
  %v546 = vsel %vm319, %v545, 0
  %548 = vmatpush.msra.mxu0 0.0
  %549 = vmatpush.msra.mxu0 0.0
  %550 = vmatpush.msra.mxu0 0.0
  %551 = vmatpush.msra.mxu0 0.0
  %552 = vmatpush.msra.mxu0 0.0
  %553 = vmatpush.msra.mxu0 0.0
  %554 = vmatpush.msra.mxu0 0.0
  %555 = vmatpush.msra.mxu0 0.0
  %556 = vmatpush.msra.mxu0 0.0
  %557 = vmatpush.msra.mxu0 0.0
  %558 = vmatpush.msra.mxu0 0.0
  %559 = vmatpush.msra.mxu0 0.0
  %560 = vmatpush.msra.mxu0 0.0
  %561 = vmatpush.msra.mxu0 0.0
  %562 = vmatpush.msra.mxu0 %v307
  %563 = vmatpush.msra.mxu0 %v306
  %564 = vmatmul.f32.gmra.mxu0 %v546
  %v565 = vpop.f32.mrf.mxu0
  %v566 = vadd.f32 0.0, %v565
  %567 = vdwg.mxu0
  %v568 = vadd.f32 %v542, %v566
  %v569 = vtanh.pop %v568
  %v570 = vxor.u32 %v568, 2147483648
  %v571 = vmul.f32 %v570, 1.442695
  %v572 = vpow.pop %v571
  %v573 = vadd.f32 %v572, 1.0
  %v574 = vrcp.pop %v573
  %v575 = vmul.f32 %v573, %v574
  %v576 = vsub.f32 1.0, %v575
  %v577 = vmul.f32 %v574, %v576
  %v578 = vadd.f32 %v574, %v577
  %vm579 = vweird.f32 %v573
  %vm580 = vweird.f32 %v574
  %vm581 = vmor %vm579, %vm580
  %v582 = vsel %vm581, %v574, %v578
  %v583 = vand.u32 2147483647, %v573
  %vm584 = vcmp.eq.f32.partialorder %v583, 8.507059e+37
  %v585 = vand.u32 %v573, 2147483648
  %v586 = vor.u32 1.1754944e-38, %v585
  %v587 = vsel %vm584, %v586, %v582
  %v588 = vmul.f32 1.0, %v587
  %v589 = vsel %vm314, %v569, %v588
  %v590 = vmul.f32 %v589, %v448
  %592 = vrot.lane.b32.xlu0 %v589, 96
  %v593 = vpop.permute.xlu0 %592
  %v595 = vmul.f32 %v589, %v593
  %597 = vrot.lane.b32.xlu0 %v595, 16
  %v598 = vpop.permute.xlu0 %597
  %v600 = vadd.f32 %v590, %v598
  %v601 = vtanh.pop %v600
  %603 = vrot.lane.b32.xlu0 %v601, 32
  %v604 = vpop.permute.xlu0 %603
  %v606 = vmul.f32 %v589, %v604
  %vm607 = vcmp.eq.s32.totalorder %v317, 1
  %v608 = vsel %vm607, 1, 0
  %609 = vset.pattern.permute.xlu0 0
  %610 = vperm.xlu0 %609, %v608
  %v611 = vpop.permute.xlu0 %610
  %vm612 = vcmp.eq.s32.totalorder %v611, 1
  %v613 = vsel %vm612, %v606, %v461
  %s614 = scalar_lea.vmem [#allocation2], 4
  %v615 = vld [vmem:[%s614] sm:$0x3]
  %617 = vrot.lane.b32.xlu0 %v527, 80
  %v618 = vpop.permute.xlu0 %617
  %v619 = vsel %vm319, %v618, 0
  %621 = vmatpush.msra.mxu0 0.0
  %622 = vmatpush.msra.mxu0 0.0
  %623 = vmatpush.msra.mxu0 0.0
  %624 = vmatpush.msra.mxu0 0.0
  %625 = vmatpush.msra.mxu0 0.0
  %626 = vmatpush.msra.mxu0 0.0
  %627 = vmatpush.msra.mxu0 0.0
  %628 = vmatpush.msra.mxu0 0.0
  %629 = vmatpush.msra.mxu0 0.0
  %630 = vmatpush.msra.mxu0 0.0
  %631 = vmatpush.msra.mxu0 0.0
  %632 = vmatpush.msra.mxu0 0.0
  %633 = vmatpush.msra.mxu0 0.0
  %634 = vmatpush.msra.mxu0 0.0
  %635 = vmatpush.msra.mxu0 %v305
  %636 = vmatpush.msra.mxu0 %v304
  %637 = vmatmul.f32.gmra.mxu0 %v619
  %v638 = vpop.f32.mrf.mxu0
  %v639 = vadd.f32 0.0, %v638
  %640 = vdwg.mxu0
  %v641 = vadd.f32 %v615, %v639
  %v642 = vtanh.pop %v641
  %v643 = vxor.u32 %v641, 2147483648
  %v644 = vmul.f32 %v643, 1.442695
  %v645 = vpow.pop %v644
  %v646 = vadd.f32 %v645, 1.0
  %v647 = vrcp.pop %v646
  %v648 = vmul.f32 %v646, %v647
  %v649 = vsub.f32 1.0, %v648
  %v650 = vmul.f32 %v647, %v649
  %v651 = vadd.f32 %v647, %v650
  %vm652 = vweird.f32 %v646
  %vm653 = vweird.f32 %v647
  %vm654 = vmor %vm652, %vm653
  %v655 = vsel %vm654, %v647, %v651
  %v656 = vand.u32 2147483647, %v646
  %vm657 = vcmp.eq.f32.partialorder %v656, 8.507059e+37
  %v658 = vand.u32 %v646, 2147483648
  %v659 = vor.u32 1.1754944e-38, %v658
  %v660 = vsel %vm657, %v659, %v655
  %v661 = vmul.f32 1.0, %v660
  %v662 = vsel %vm314, %v642, %v661
  %v663 = vmul.f32 %v662, %v521
  %665 = vrot.lane.b32.xlu0 %v662, 96
  %v666 = vpop.permute.xlu0 %665
  %v668 = vmul.f32 %v662, %v666
  %670 = vrot.lane.b32.xlu0 %v668, 16
  %v671 = vpop.permute.xlu0 %670
  %v673 = vadd.f32 %v663, %v671
  %v674 = vtanh.pop %v673
  %676 = vrot.lane.b32.xlu0 %v674, 32
  %v677 = vpop.permute.xlu0 %676
  %v679 = vmul.f32 %v662, %v677
  %vm680 = vcmp.gt.s32.totalorder %v315, 2
  %v681 = vsel %vm680, 1, 0
  %682 = vset.pattern.permute.xlu0 0
  %683 = vperm.xlu0 %682, %v681
  %v684 = vpop.permute.xlu0 %683
  %vm685 = vcmp.eq.s32.totalorder %v684, 1
  %v686 = vsel %vm685, %v679, 0.0
  %688 = vrot.lane.b32.xlu0 %v686, 80
  %v689 = vpop.permute.xlu0 %688
  %s691 = scalar_lea.vmem [#allocation4], 4
  %692 = vst.msk [vmem:[%s691] sm:$0x3] %vm393, %v689
  %s693 = scalar_lea.vmem [#allocation3], 4
  %v694 = vld [vmem:[%s693] sm:$0x3]
  %696 = vrot.lane.b32.xlu0 %v606, 80
  %v697 = vpop.permute.xlu0 %696
  %v698 = vsel %vm319, %v697, 0
  %700 = vmatpush.msra.mxu0 0.0
  %701 = vmatpush.msra.mxu0 0.0
  %702 = vmatpush.msra.mxu0 0.0
  %703 = vmatpush.msra.mxu0 0.0
  %704 = vmatpush.msra.mxu0 0.0
  %705 = vmatpush.msra.mxu0 0.0
  %706 = vmatpush.msra.mxu0 0.0
  %707 = vmatpush.msra.mxu0 0.0
  %708 = vmatpush.msra.mxu0 0.0
  %709 = vmatpush.msra.mxu0 0.0
  %710 = vmatpush.msra.mxu0 0.0
  %711 = vmatpush.msra.mxu0 0.0
  %712 = vmatpush.msra.mxu0 0.0
  %713 = vmatpush.msra.mxu0 0.0
  %714 = vmatpush.msra.mxu0 %v307
  %715 = vmatpush.msra.mxu0 %v306
  %716 = vmatmul.f32.gmra.mxu0 %v698
  %v717 = vpop.f32.mrf.mxu0
  %v718 = vadd.f32 0.0, %v717
  %719 = vdwg.mxu0
  %v720 = vadd.f32 %v694, %v718
  %v721 = vtanh.pop %v720
  %v722 = vxor.u32 %v720, 2147483648
  %v723 = vmul.f32 %v722, 1.442695
  %v724 = vpow.pop %v723
  %v725 = vadd.f32 %v724, 1.0
  %v726 = vrcp.pop %v725
  %v727 = vmul.f32 %v725, %v726
  %v728 = vsub.f32 1.0, %v727
  %v729 = vmul.f32 %v726, %v728
  %v730 = vadd.f32 %v726, %v729
  %vm731 = vweird.f32 %v725
  %vm732 = vweird.f32 %v726
  %vm733 = vmor %vm731, %vm732
  %v734 = vsel %vm733, %v726, %v730
  %v735 = vand.u32 2147483647, %v725
  %vm736 = vcmp.eq.f32.partialorder %v735, 8.507059e+37
  %v737 = vand.u32 %v725, 2147483648
  %v738 = vor.u32 1.1754944e-38, %v737
  %v739 = vsel %vm736, %v738, %v734
  %v740 = vmul.f32 1.0, %v739
  %v741 = vsel %vm314, %v721, %v740
  %v742 = vmul.f32 %v741, %v600
  %744 = vrot.lane.b32.xlu0 %v741, 96
  %v745 = vpop.permute.xlu0 %744
  %v747 = vmul.f32 %v741, %v745
  %749 = vrot.lane.b32.xlu0 %v747, 16
  %v750 = vpop.permute.xlu0 %749
  %v752 = vadd.f32 %v742, %v750
  %v753 = vtanh.pop %v752
  %755 = vrot.lane.b32.xlu0 %v753, 32
  %v756 = vpop.permute.xlu0 %755
  %v758 = vmul.f32 %v741, %v756
  %vm759 = vcmp.eq.s32.totalorder %v317, 2
  %v760 = vsel %vm759, 1, 0
  %761 = vset.pattern.permute.xlu0 0
  %762 = vperm.xlu0 %761, %v760
  %v763 = vpop.permute.xlu0 %762
  %vm764 = vcmp.eq.s32.totalorder %v763, 1
  %v765 = vsel %vm764, %v758, %v613
  %s766 = scalar_lea.vmem [#allocation2], 6
  %v767 = vld [vmem:[%s766] sm:$0x3]
  %769 = vrot.lane.b32.xlu0 %v679, 80
  %v770 = vpop.permute.xlu0 %769
  %v771 = vsel %vm319, %v770, 0
  %773 = vmatpush.msra.mxu0 0.0
  %774 = vmatpush.msra.mxu0 0.0
  %775 = vmatpush.msra.mxu0 0.0
  %776 = vmatpush.msra.mxu0 0.0
  %777 = vmatpush.msra.mxu0 0.0
  %778 = vmatpush.msra.mxu0 0.0
  %779 = vmatpush.msra.mxu0 0.0
  %780 = vmatpush.msra.mxu0 0.0
  %781 = vmatpush.msra.mxu0 0.0
  %782 = vmatpush.msra.mxu0 0.0
  %783 = vmatpush.msra.mxu0 0.0
  %784 = vmatpush.msra.mxu0 0.0
  %785 = vmatpush.msra.mxu0 0.0
  %786 = vmatpush.msra.mxu0 0.0
  %787 = vmatpush.msra.mxu0 %v305
  %788 = vmatpush.msra.mxu0 %v304
  %789 = vmatmul.f32.gmra.mxu0 %v771
  %v790 = vpop.f32.mrf.mxu0
  %v791 = vadd.f32 0.0, %v790
  %792 = vdwg.mxu0
  %v793 = vadd.f32 %v767, %v791
  %v794 = vtanh.pop %v793
  %v795 = vxor.u32 %v793, 2147483648
  %v796 = vmul.f32 %v795, 1.442695
  %v797 = vpow.pop %v796
  %v798 = vadd.f32 %v797, 1.0
  %v799 = vrcp.pop %v798
  %v800 = vmul.f32 %v798, %v799
  %v801 = vsub.f32 1.0, %v800
  %v802 = vmul.f32 %v799, %v801
  %v803 = vadd.f32 %v799, %v802
  %vm804 = vweird.f32 %v798
  %vm805 = vweird.f32 %v799
  %vm806 = vmor %vm804, %vm805
  %v807 = vsel %vm806, %v799, %v803
  %v808 = vand.u32 2147483647, %v798
  %vm809 = vcmp.eq.f32.partialorder %v808, 8.507059e+37
  %v810 = vand.u32 %v798, 2147483648
  %v811 = vor.u32 1.1754944e-38, %v810
  %v812 = vsel %vm809, %v811, %v807
  %v813 = vmul.f32 1.0, %v812
  %v814 = vsel %vm314, %v794, %v813
  %v815 = vmul.f32 %v814, %v673
  %817 = vrot.lane.b32.xlu0 %v814, 96
  %v818 = vpop.permute.xlu0 %817
  %v820 = vmul.f32 %v814, %v818
  %822 = vrot.lane.b32.xlu0 %v820, 16
  %v823 = vpop.permute.xlu0 %822
  %v825 = vadd.f32 %v815, %v823
  %v826 = vtanh.pop %v825
  %828 = vrot.lane.b32.xlu0 %v826, 32
  %v829 = vpop.permute.xlu0 %828
  %v831 = vmul.f32 %v814, %v829
  %vm832 = vcmp.gt.s32.totalorder %v315, 3
  %v833 = vsel %vm832, 1, 0
  %834 = vset.pattern.permute.xlu0 0
  %835 = vperm.xlu0 %834, %v833
  %v836 = vpop.permute.xlu0 %835
  %vm837 = vcmp.eq.s32.totalorder %v836, 1
  %v838 = vsel %vm837, %v831, 0.0
  %840 = vrot.lane.b32.xlu0 %v838, 80
  %v841 = vpop.permute.xlu0 %840
  %s843 = scalar_lea.vmem [#allocation4], 6
  %844 = vst.msk [vmem:[%s843] sm:$0x3] %vm393, %v841
  %s845 = scalar_lea.vmem [#allocation3], 6
  %v846 = vld [vmem:[%s845] sm:$0x3]
  %848 = vrot.lane.b32.xlu0 %v758, 80
  %v849 = vpop.permute.xlu0 %848
  %v850 = vsel %vm319, %v849, 0
  %852 = vmatpush.msra.mxu0 0.0
  %853 = vmatpush.msra.mxu0 0.0
  %854 = vmatpush.msra.mxu0 0.0
  %855 = vmatpush.msra.mxu0 0.0
  %856 = vmatpush.msra.mxu0 0.0
  %857 = vmatpush.msra.mxu0 0.0
  %858 = vmatpush.msra.mxu0 0.0
  %859 = vmatpush.msra.mxu0 0.0
  %860 = vmatpush.msra.mxu0 0.0
  %861 = vmatpush.msra.mxu0 0.0
  %862 = vmatpush.msra.mxu0 0.0
  %863 = vmatpush.msra.mxu0 0.0
  %864 = vmatpush.msra.mxu0 0.0
  %865 = vmatpush.msra.mxu0 0.0
  %866 = vmatpush.msra.mxu0 %v307
  %867 = vmatpush.msra.mxu0 %v306
  %868 = vmatmul.f32.gmra.mxu0 %v850
  %v869 = vpop.f32.mrf.mxu0
  %v870 = vadd.f32 0.0, %v869
  %871 = vdwg.mxu0
  %v872 = vadd.f32 %v846, %v870
  %v873 = vtanh.pop %v872
  %v874 = vxor.u32 %v872, 2147483648
  %v875 = vmul.f32 %v874, 1.442695
  %v876 = vpow.pop %v875
  %v877 = vadd.f32 %v876, 1.0
  %v878 = vrcp.pop %v877
  %v879 = vmul.f32 %v877, %v878
  %v880 = vsub.f32 1.0, %v879
  %v881 = vmul.f32 %v878, %v880
  %v882 = vadd.f32 %v878, %v881
  %vm883 = vweird.f32 %v877
  %vm884 = vweird.f32 %v878
  %vm885 = vmor %vm883, %vm884
  %v886 = vsel %vm885, %v878, %v882
  %v887 = vand.u32 2147483647, %v877
  %vm888 = vcmp.eq.f32.partialorder %v887, 8.507059e+37
  %v889 = vand.u32 %v877, 2147483648
  %v890 = vor.u32 1.1754944e-38, %v889
  %v891 = vsel %vm888, %v890, %v886
  %v892 = vmul.f32 1.0, %v891
  %v893 = vsel %vm314, %v873, %v892
  %v894 = vmul.f32 %v893, %v752
  %896 = vrot.lane.b32.xlu0 %v893, 96
  %v897 = vpop.permute.xlu0 %896
  %v899 = vmul.f32 %v893, %v897
  %901 = vrot.lane.b32.xlu0 %v899, 16
  %v902 = vpop.permute.xlu0 %901
  %v904 = vadd.f32 %v894, %v902
  %v905 = vtanh.pop %v904
  %907 = vrot.lane.b32.xlu0 %v905, 32
  %v908 = vpop.permute.xlu0 %907
  %v910 = vmul.f32 %v893, %v908
  %vm911 = vcmp.eq.s32.totalorder %v317, 3
  %v912 = vsel %vm911, 1, 0
  %913 = vset.pattern.permute.xlu0 0
  %914 = vperm.xlu0 %913, %v912
  %v915 = vpop.permute.xlu0 %914
  %vm916 = vcmp.eq.s32.totalorder %v915, 1
  %v917 = vsel %vm916, %v910, %v765
  %s918 = scalar_lea.vmem [#allocation2], 8
  %v919 = vld [vmem:[%s918] sm:$0x3]
  %921 = vrot.lane.b32.xlu0 %v831, 80
  %v922 = vpop.permute.xlu0 %921
  %v923 = vsel %vm319, %v922, 0
  %925 = vmatpush.msra.mxu0 0.0
  %926 = vmatpush.msra.mxu0 0.0
  %927 = vmatpush.msra.mxu0 0.0
  %928 = vmatpush.msra.mxu0 0.0
  %929 = vmatpush.msra.mxu0 0.0
  %930 = vmatpush.msra.mxu0 0.0
  %931 = vmatpush.msra.mxu0 0.0
  %932 = vmatpush.msra.mxu0 0.0
  %933 = vmatpush.msra.mxu0 0.0
  %934 = vmatpush.msra.mxu0 0.0
  %935 = vmatpush.msra.mxu0 0.0
  %936 = vmatpush.msra.mxu0 0.0
  %937 = vmatpush.msra.mxu0 0.0
  %938 = vmatpush.msra.mxu0 0.0
  %939 = vmatpush.msra.mxu0 %v305
  %940 = vmatpush.msra.mxu0 %v304
  %941 = vmatmul.f32.gmra.mxu0 %v923
  %v942 = vpop.f32.mrf.mxu0
  %v943 = vadd.f32 0.0, %v942
  %944 = vdwg.mxu0
  %v945 = vadd.f32 %v919, %v943
  %v946 = vtanh.pop %v945
  %v947 = vxor.u32 %v945, 2147483648
  %v948 = vmul.f32 %v947, 1.442695
  %v949 = vpow.pop %v948
  %v950 = vadd.f32 %v949, 1.0
  %v951 = vrcp.pop %v950
  %v952 = vmul.f32 %v950, %v951
  %v953 = vsub.f32 1.0, %v952
  %v954 = vmul.f32 %v951, %v953
  %v955 = vadd.f32 %v951, %v954
  %vm956 = vweird.f32 %v950
  %vm957 = vweird.f32 %v951
  %vm958 = vmor %vm956, %vm957
  %v959 = vsel %vm958, %v951, %v955
  %v960 = vand.u32 2147483647, %v950
  %vm961 = vcmp.eq.f32.partialorder %v960, 8.507059e+37
  %v962 = vand.u32 %v950, 2147483648
  %v963 = vor.u32 1.1754944e-38, %v962
  %v964 = vsel %vm961, %v963, %v959
  %v965 = vmul.f32 1.0, %v964
  %v966 = vsel %vm314, %v946, %v965
  %v967 = vmul.f32 %v966, %v825
  %969 = vrot.lane.b32.xlu0 %v966, 96
  %v970 = vpop.permute.xlu0 %969
  %v972 = vmul.f32 %v966, %v970
  %974 = vrot.lane.b32.xlu0 %v972, 16
  %v975 = vpop.permute.xlu0 %974
  %v977 = vadd.f32 %v967, %v975
  %v978 = vtanh.pop %v977
  %980 = vrot.lane.b32.xlu0 %v978, 32
  %v981 = vpop.permute.xlu0 %980
  %v983 = vmul.f32 %v966, %v981
  %vm984 = vcmp.gt.s32.totalorder %v315, 4
  %v985 = vsel %vm984, 1, 0
  %986 = vset.pattern.permute.xlu0 0
  %987 = vperm.xlu0 %986, %v985
  %v988 = vpop.permute.xlu0 %987
  %vm989 = vcmp.eq.s32.totalorder %v988, 1
  %v990 = vsel %vm989, %v983, 0.0
  %992 = vrot.lane.b32.xlu0 %v990, 80
  %v993 = vpop.permute.xlu0 %992
  %s995 = scalar_lea.vmem [#allocation4], 8
  %996 = vst.msk [vmem:[%s995] sm:$0x3] %vm393, %v993
  %s997 = scalar_lea.vmem [#allocation3], 8
  %v998 = vld [vmem:[%s997] sm:$0x3]
  %1000 = vrot.lane.b32.xlu0 %v910, 80
  %v1001 = vpop.permute.xlu0 %1000
  %v1002 = vsel %vm319, %v1001, 0
  %1004 = vmatpush.msra.mxu0 0.0
  %1005 = vmatpush.msra.mxu0 0.0
  %1006 = vmatpush.msra.mxu0 0.0
  %1007 = vmatpush.msra.mxu0 0.0
  %1008 = vmatpush.msra.mxu0 0.0
  %1009 = vmatpush.msra.mxu0 0.0
  %1010 = vmatpush.msra.mxu0 0.0
  %1011 = vmatpush.msra.mxu0 0.0
  %1012 = vmatpush.msra.mxu0 0.0
  %1013 = vmatpush.msra.mxu0 0.0
  %1014 = vmatpush.msra.mxu0 0.0
  %1015 = vmatpush.msra.mxu0 0.0
  %1016 = vmatpush.msra.mxu0 0.0
  %1017 = vmatpush.msra.mxu0 0.0
  %1018 = vmatpush.msra.mxu0 %v307
  %1019 = vmatpush.msra.mxu0 %v306
  %1020 = vmatmul.f32.gmra.mxu0 %v1002
  %v1021 = vpop.f32.mrf.mxu0
  %v1022 = vadd.f32 0.0, %v1021
  %1023 = vdwg.mxu0
  %v1024 = vadd.f32 %v998, %v1022
  %v1025 = vtanh.pop %v1024
  %v1026 = vxor.u32 %v1024, 2147483648
  %v1027 = vmul.f32 %v1026, 1.442695
  %v1028 = vpow.pop %v1027
  %v1029 = vadd.f32 %v1028, 1.0
  %v1030 = vrcp.pop %v1029
  %v1031 = vmul.f32 %v1029, %v1030
  %v1032 = vsub.f32 1.0, %v1031
  %v1033 = vmul.f32 %v1030, %v1032
  %v1034 = vadd.f32 %v1030, %v1033
  %vm1035 = vweird.f32 %v1029
  %vm1036 = vweird.f32 %v1030
  %vm1037 = vmor %vm1035, %vm1036
  %v1038 = vsel %vm1037, %v1030, %v1034
  %v1039 = vand.u32 2147483647, %v1029
  %vm1040 = vcmp.eq.f32.partialorder %v1039, 8.507059e+37
  %v1041 = vand.u32 %v1029, 2147483648
  %v1042 = vor.u32 1.1754944e-38, %v1041
  %v1043 = vsel %vm1040, %v1042, %v1038
  %v1044 = vmul.f32 1.0, %v1043
  %v1045 = vsel %vm314, %v1025, %v1044
  %v1046 = vmul.f32 %v1045, %v904
  %1048 = vrot.lane.b32.xlu0 %v1045, 96
  %v1049 = vpop.permute.xlu0 %1048
  %v1051 = vmul.f32 %v1045, %v1049
  %1053 = vrot.lane.b32.xlu0 %v1051, 16
  %v1054 = vpop.permute.xlu0 %1053
  %v1056 = vadd.f32 %v1046, %v1054
  %v1057 = vtanh.pop %v1056
  %1059 = vrot.lane.b32.xlu0 %v1057, 32
  %v1060 = vpop.permute.xlu0 %1059
  %v1062 = vmul.f32 %v1045, %v1060
  %vm1063 = vcmp.eq.s32.totalorder %v317, 4
  %v1064 = vsel %vm1063, 1, 0
  %1065 = vset.pattern.permute.xlu0 0
  %1066 = vperm.xlu0 %1065, %v1064
  %v1067 = vpop.permute.xlu0 %1066
  %vm1068 = vcmp.eq.s32.totalorder %v1067, 1
  %v1069 = vsel %vm1068, %v1062, %v917
  %s1070 = scalar_lea.vmem [#allocation2], 10
  %v1071 = vld [vmem:[%s1070] sm:$0x3]
  %1073 = vrot.lane.b32.xlu0 %v983, 80
  %v1074 = vpop.permute.xlu0 %1073
  %v1075 = vsel %vm319, %v1074, 0
  %1077 = vmatpush.msra.mxu0 0.0
  %1078 = vmatpush.msra.mxu0 0.0
  %1079 = vmatpush.msra.mxu0 0.0
  %1080 = vmatpush.msra.mxu0 0.0
  %1081 = vmatpush.msra.mxu0 0.0
  %1082 = vmatpush.msra.mxu0 0.0
  %1083 = vmatpush.msra.mxu0 0.0
  %1084 = vmatpush.msra.mxu0 0.0
  %1085 = vmatpush.msra.mxu0 0.0
  %1086 = vmatpush.msra.mxu0 0.0
  %1087 = vmatpush.msra.mxu0 0.0
  %1088 = vmatpush.msra.mxu0 0.0
  %1089 = vmatpush.msra.mxu0 0.0
  %1090 = vmatpush.msra.mxu0 0.0
  %1091 = vmatpush.msra.mxu0 %v305
  %1092 = vmatpush.msra.mxu0 %v304
  %1093 = vmatmul.f32.gmra.mxu0 %v1075
  %v1094 = vpop.f32.mrf.mxu0
  %v1095 = vadd.f32 0.0, %v1094
  %1096 = vdwg.mxu0
  %v1097 = vadd.f32 %v1071, %v1095
  %v1098 = vtanh.pop %v1097
  %v1099 = vxor.u32 %v1097, 2147483648
  %v1100 = vmul.f32 %v1099, 1.442695
  %v1101 = vpow.pop %v1100
  %v1102 = vadd.f32 %v1101, 1.0
  %v1103 = vrcp.pop %v1102
  %v1104 = vmul.f32 %v1102, %v1103
  %v1105 = vsub.f32 1.0, %v1104
  %v1106 = vmul.f32 %v1103, %v1105
  %v1107 = vadd.f32 %v1103, %v1106
  %vm1108 = vweird.f32 %v1102
  %vm1109 = vweird.f32 %v1103
  %vm1110 = vmor %vm1108, %vm1109
  %v1111 = vsel %vm1110, %v1103, %v1107
  %v1112 = vand.u32 2147483647, %v1102
  %vm1113 = vcmp.eq.f32.partialorder %v1112, 8.507059e+37
  %v1114 = vand.u32 %v1102, 2147483648
  %v1115 = vor.u32 1.1754944e-38, %v1114
  %v1116 = vsel %vm1113, %v1115, %v1111
  %v1117 = vmul.f32 1.0, %v1116
  %v1118 = vsel %vm314, %v1098, %v1117
  %v1119 = vmul.f32 %v1118, %v977
  %1121 = vrot.lane.b32.xlu0 %v1118, 96
  %v1122 = vpop.permute.xlu0 %1121
  %v1124 = vmul.f32 %v1118, %v1122
  %1126 = vrot.lane.b32.xlu0 %v1124, 16
  %v1127 = vpop.permute.xlu0 %1126
  %v1129 = vadd.f32 %v1119, %v1127
  %v1130 = vtanh.pop %v1129
  %1132 = vrot.lane.b32.xlu0 %v1130, 32
  %v1133 = vpop.permute.xlu0 %1132
  %v1135 = vmul.f32 %v1118, %v1133
  %vm1136 = vcmp.gt.s32.totalorder %v315, 5
  %v1137 = vsel %vm1136, 1, 0
  %1138 = vset.pattern.permute.xlu0 0
  %1139 = vperm.xlu0 %1138, %v1137
  %v1140 = vpop.permute.xlu0 %1139
  %vm1141 = vcmp.eq.s32.totalorder %v1140, 1
  %v1142 = vsel %vm1141, %v1135, 0.0
  %1144 = vrot.lane.b32.xlu0 %v1142, 80
  %v1145 = vpop.permute.xlu0 %1144
  %s1147 = scalar_lea.vmem [#allocation4], 10
  %1148 = vst.msk [vmem:[%s1147] sm:$0x3] %vm393, %v1145
  %s1149 = scalar_lea.vmem [#allocation3], 10
  %v1150 = vld [vmem:[%s1149] sm:$0x3]
  %1152 = vrot.lane.b32.xlu0 %v1062, 80
  %v1153 = vpop.permute.xlu0 %1152
  %v1154 = vsel %vm319, %v1153, 0
  %1156 = vmatpush.msra.mxu0 0.0
  %1157 = vmatpush.msra.mxu0 0.0
  %1158 = vmatpush.msra.mxu0 0.0
  %1159 = vmatpush.msra.mxu0 0.0
  %1160 = vmatpush.msra.mxu0 0.0
  %1161 = vmatpush.msra.mxu0 0.0
  %1162 = vmatpush.msra.mxu0 0.0
  %1163 = vmatpush.msra.mxu0 0.0
  %1164 = vmatpush.msra.mxu0 0.0
  %1165 = vmatpush.msra.mxu0 0.0
  %1166 = vmatpush.msra.mxu0 0.0
  %1167 = vmatpush.msra.mxu0 0.0
  %1168 = vmatpush.msra.mxu0 0.0
  %1169 = vmatpush.msra.mxu0 0.0
  %1170 = vmatpush.msra.mxu0 %v307
  %1171 = vmatpush.msra.mxu0 %v306
  %1172 = vmatmul.f32.gmra.mxu0 %v1154
  %v1173 = vpop.f32.mrf.mxu0
  %v1174 = vadd.f32 0.0, %v1173
  %1175 = vdwg.mxu0
  %v1176 = vadd.f32 %v1150, %v1174
  %v1177 = vtanh.pop %v1176
  %v1178 = vxor.u32 %v1176, 2147483648
  %v1179 = vmul.f32 %v1178, 1.442695
  %v1180 = vpow.pop %v1179
  %v1181 = vadd.f32 %v1180, 1.0
  %v1182 = vrcp.pop %v1181
  %v1183 = vmul.f32 %v1181, %v1182
  %v1184 = vsub.f32 1.0, %v1183
  %v1185 = vmul.f32 %v1182, %v1184
  %v1186 = vadd.f32 %v1182, %v1185
  %vm1187 = vweird.f32 %v1181
  %vm1188 = vweird.f32 %v1182
  %vm1189 = vmor %vm1187, %vm1188
  %v1190 = vsel %vm1189, %v1182, %v1186
  %v1191 = vand.u32 2147483647, %v1181
  %vm1192 = vcmp.eq.f32.partialorder %v1191, 8.507059e+37
  %v1193 = vand.u32 %v1181, 2147483648
  %v1194 = vor.u32 1.1754944e-38, %v1193
  %v1195 = vsel %vm1192, %v1194, %v1190
  %v1196 = vmul.f32 1.0, %v1195
  %v1197 = vsel %vm314, %v1177, %v1196
  %v1198 = vmul.f32 %v1197, %v1056
  %1200 = vrot.lane.b32.xlu0 %v1197, 96
  %v1201 = vpop.permute.xlu0 %1200
  %v1203 = vmul.f32 %v1197, %v1201
  %1205 = vrot.lane.b32.xlu0 %v1203, 16
  %v1206 = vpop.permute.xlu0 %1205
  %v1208 = vadd.f32 %v1198, %v1206
  %v1209 = vtanh.pop %v1208
  %1211 = vrot.lane.b32.xlu0 %v1209, 32
  %v1212 = vpop.permute.xlu0 %1211
  %v1214 = vmul.f32 %v1197, %v1212
  %vm1215 = vcmp.eq.s32.totalorder %v317, 5
  %v1216 = vsel %vm1215, 1, 0
  %1217 = vset.pattern.permute.xlu0 0
  %1218 = vperm.xlu0 %1217, %v1216
  %v1219 = vpop.permute.xlu0 %1218
  %vm1220 = vcmp.eq.s32.totalorder %v1219, 1
  %v1221 = vsel %vm1220, %v1214, %v1069
  %s1222 = scalar_lea.vmem [#allocation2], 12
  %v1223 = vld [vmem:[%s1222] sm:$0x3]
  %1225 = vrot.lane.b32.xlu0 %v1135, 80
  %v1226 = vpop.permute.xlu0 %1225
  %v1227 = vsel %vm319, %v1226, 0
  %1229 = vmatpush.msra.mxu0 0.0
  %1230 = vmatpush.msra.mxu0 0.0
  %1231 = vmatpush.msra.mxu0 0.0
  %1232 = vmatpush.msra.mxu0 0.0
  %1233 = vmatpush.msra.mxu0 0.0
  %1234 = vmatpush.msra.mxu0 0.0
  %1235 = vmatpush.msra.mxu0 0.0
  %1236 = vmatpush.msra.mxu0 0.0
  %1237 = vmatpush.msra.mxu0 0.0
  %1238 = vmatpush.msra.mxu0 0.0
  %1239 = vmatpush.msra.mxu0 0.0
  %1240 = vmatpush.msra.mxu0 0.0
  %1241 = vmatpush.msra.mxu0 0.0
  %1242 = vmatpush.msra.mxu0 0.0
  %1243 = vmatpush.msra.mxu0 %v305
  %1244 = vmatpush.msra.mxu0 %v304
  %1245 = vmatmul.f32.gmra.mxu0 %v1227
  %v1246 = vpop.f32.mrf.mxu0
  %v1247 = vadd.f32 0.0, %v1246
  %1248 = vdwg.mxu0
  %v1249 = vadd.f32 %v1223, %v1247
  %v1250 = vtanh.pop %v1249
  %v1251 = vxor.u32 %v1249, 2147483648
  %v1252 = vmul.f32 %v1251, 1.442695
  %v1253 = vpow.pop %v1252
  %v1254 = vadd.f32 %v1253, 1.0
  %v1255 = vrcp.pop %v1254
  %v1256 = vmul.f32 %v1254, %v1255
  %v1257 = vsub.f32 1.0, %v1256
  %v1258 = vmul.f32 %v1255, %v1257
  %v1259 = vadd.f32 %v1255, %v1258
  %vm1260 = vweird.f32 %v1254
  %vm1261 = vweird.f32 %v1255
  %vm1262 = vmor %vm1260, %vm1261
  %v1263 = vsel %vm1262, %v1255, %v1259
  %v1264 = vand.u32 2147483647, %v1254
  %vm1265 = vcmp.eq.f32.partialorder %v1264, 8.507059e+37
  %v1266 = vand.u32 %v1254, 2147483648
  %v1267 = vor.u32 1.1754944e-38, %v1266
  %v1268 = vsel %vm1265, %v1267, %v1263
  %v1269 = vmul.f32 1.0, %v1268
  %v1270 = vsel %vm314, %v1250, %v1269
  %v1271 = vmul.f32 %v1270, %v1129
  %1273 = vrot.lane.b32.xlu0 %v1270, 96
  %v1274 = vpop.permute.xlu0 %1273
  %v1276 = vmul.f32 %v1270, %v1274
  %1278 = vrot.lane.b32.xlu0 %v1276, 16
  %v1279 = vpop.permute.xlu0 %1278
  %v1281 = vadd.f32 %v1271, %v1279
  %v1282 = vtanh.pop %v1281
  %1284 = vrot.lane.b32.xlu0 %v1282, 32
  %v1285 = vpop.permute.xlu0 %1284
  %v1287 = vmul.f32 %v1270, %v1285
  %vm1288 = vcmp.gt.s32.totalorder %v315, 6
  %v1289 = vsel %vm1288, 1, 0
  %1290 = vset.pattern.permute.xlu0 0
  %1291 = vperm.xlu0 %1290, %v1289
  %v1292 = vpop.permute.xlu0 %1291
  %vm1293 = vcmp.eq.s32.totalorder %v1292, 1
  %v1294 = vsel %vm1293, %v1287, 0.0
  %1296 = vrot.lane.b32.xlu0 %v1294, 80
  %v1297 = vpop.permute.xlu0 %1296
  %s1299 = scalar_lea.vmem [#allocation4], 12
  %1300 = vst.msk [vmem:[%s1299] sm:$0x3] %vm393, %v1297
  %s1301 = scalar_lea.vmem [#allocation3], 12
  %v1302 = vld [vmem:[%s1301] sm:$0x3]
  %1304 = vrot.lane.b32.xlu0 %v1214, 80
  %v1305 = vpop.permute.xlu0 %1304
  %v1306 = vsel %vm319, %v1305, 0
  %1308 = vmatpush.msra.mxu0 0.0
  %1309 = vmatpush.msra.mxu0 0.0
  %1310 = vmatpush.msra.mxu0 0.0
  %1311 = vmatpush.msra.mxu0 0.0
  %1312 = vmatpush.msra.mxu0 0.0
  %1313 = vmatpush.msra.mxu0 0.0
  %1314 = vmatpush.msra.mxu0 0.0
  %1315 = vmatpush.msra.mxu0 0.0
  %1316 = vmatpush.msra.mxu0 0.0
  %1317 = vmatpush.msra.mxu0 0.0
  %1318 = vmatpush.msra.mxu0 0.0
  %1319 = vmatpush.msra.mxu0 0.0
  %1320 = vmatpush.msra.mxu0 0.0
  %1321 = vmatpush.msra.mxu0 0.0
  %1322 = vmatpush.msra.mxu0 %v307
  %1323 = vmatpush.msra.mxu0 %v306
  %1324 = vmatmul.f32.gmra.mxu0 %v1306
  %v1325 = vpop.f32.mrf.mxu0
  %v1326 = vadd.f32 0.0, %v1325
  %1327 = vdwg.mxu0
  %v1328 = vadd.f32 %v1302, %v1326
  %v1329 = vtanh.pop %v1328
  %v1330 = vxor.u32 %v1328, 2147483648
  %v1331 = vmul.f32 %v1330, 1.442695
  %v1332 = vpow.pop %v1331
  %v1333 = vadd.f32 %v1332, 1.0
  %v1334 = vrcp.pop %v1333
  %v1335 = vmul.f32 %v1333, %v1334
  %v1336 = vsub.f32 1.0, %v1335
  %v1337 = vmul.f32 %v1334, %v1336
  %v1338 = vadd.f32 %v1334, %v1337
  %vm1339 = vweird.f32 %v1333
  %vm1340 = vweird.f32 %v1334
  %vm1341 = vmor %vm1339, %vm1340
  %v1342 = vsel %vm1341, %v1334, %v1338
  %v1343 = vand.u32 2147483647, %v1333
  %vm1344 = vcmp.eq.f32.partialorder %v1343, 8.507059e+37
  %v1345 = vand.u32 %v1333, 2147483648
  %v1346 = vor.u32 1.1754944e-38, %v1345
  %v1347 = vsel %vm1344, %v1346, %v1342
  %v1348 = vmul.f32 1.0, %v1347
  %v1349 = vsel %vm314, %v1329, %v1348
  %v1350 = vmul.f32 %v1349, %v1208
  %1352 = vrot.lane.b32.xlu0 %v1349, 96
  %v1353 = vpop.permute.xlu0 %1352
  %v1355 = vmul.f32 %v1349, %v1353
  %1357 = vrot.lane.b32.xlu0 %v1355, 16
  %v1358 = vpop.permute.xlu0 %1357
  %v1360 = vadd.f32 %v1350, %v1358
  %v1361 = vtanh.pop %v1360
  %1363 = vrot.lane.b32.xlu0 %v1361, 32
  %v1364 = vpop.permute.xlu0 %1363
  %v1366 = vmul.f32 %v1349, %v1364
  %vm1367 = vcmp.eq.s32.totalorder %v317, 6
  %v1368 = vsel %vm1367, 1, 0
  %1369 = vset.pattern.permute.xlu0 0
  %1370 = vperm.xlu0 %1369, %v1368
  %v1371 = vpop.permute.xlu0 %1370
  %vm1372 = vcmp.eq.s32.totalorder %v1371, 1
  %v1373 = vsel %vm1372, %v1366, %v1221
  %s1374 = scalar_lea.vmem [#allocation2], 14
  %v1375 = vld [vmem:[%s1374] sm:$0x3]
  %1377 = vrot.lane.b32.xlu0 %v1287, 80
  %v1378 = vpop.permute.xlu0 %1377
  %v1379 = vsel %vm319, %v1378, 0
  %1381 = vmatpush.msra.mxu0 0.0
  %1382 = vmatpush.msra.mxu0 0.0
  %1383 = vmatpush.msra.mxu0 0.0
  %1384 = vmatpush.msra.mxu0 0.0
  %1385 = vmatpush.msra.mxu0 0.0
  %1386 = vmatpush.msra.mxu0 0.0
  %1387 = vmatpush.msra.mxu0 0.0
  %1388 = vmatpush.msra.mxu0 0.0
  %1389 = vmatpush.msra.mxu0 0.0
  %1390 = vmatpush.msra.mxu0 0.0
  %1391 = vmatpush.msra.mxu0 0.0
  %1392 = vmatpush.msra.mxu0 0.0
  %1393 = vmatpush.msra.mxu0 0.0
  %1394 = vmatpush.msra.mxu0 0.0
  %1395 = vmatpush.msra.mxu0 %v305
  %1396 = vmatpush.msra.mxu0 %v304
  %1397 = vmatmul.f32.gmra.mxu0 %v1379
  %v1398 = vpop.f32.mrf.mxu0
  %v1399 = vadd.f32 0.0, %v1398
  %1400 = vdwg.mxu0
  %v1401 = vadd.f32 %v1375, %v1399
  %v1402 = vtanh.pop %v1401
  %v1403 = vxor.u32 %v1401, 2147483648
  %v1404 = vmul.f32 %v1403, 1.442695
  %v1405 = vpow.pop %v1404
  %v1406 = vadd.f32 %v1405, 1.0
  %v1407 = vrcp.pop %v1406
  %v1408 = vmul.f32 %v1406, %v1407
  %v1409 = vsub.f32 1.0, %v1408
  %v1410 = vmul.f32 %v1407, %v1409
  %v1411 = vadd.f32 %v1407, %v1410
  %vm1412 = vweird.f32 %v1406
  %vm1413 = vweird.f32 %v1407
  %vm1414 = vmor %vm1412, %vm1413
  %v1415 = vsel %vm1414, %v1407, %v1411
  %v1416 = vand.u32 2147483647, %v1406
  %vm1417 = vcmp.eq.f32.partialorder %v1416, 8.507059e+37
  %v1418 = vand.u32 %v1406, 2147483648
  %v1419 = vor.u32 1.1754944e-38, %v1418
  %v1420 = vsel %vm1417, %v1419, %v1415
  %v1421 = vmul.f32 1.0, %v1420
  %v1422 = vsel %vm314, %v1402, %v1421
  %v1423 = vmul.f32 %v1422, %v1281
  %1425 = vrot.lane.b32.xlu0 %v1422, 96
  %v1426 = vpop.permute.xlu0 %1425
  %v1428 = vmul.f32 %v1422, %v1426
  %1430 = vrot.lane.b32.xlu0 %v1428, 16
  %v1431 = vpop.permute.xlu0 %1430
  %v1433 = vadd.f32 %v1423, %v1431
  %v1434 = vtanh.pop %v1433
  %1436 = vrot.lane.b32.xlu0 %v1434, 32
  %v1437 = vpop.permute.xlu0 %1436
  %v1439 = vmul.f32 %v1422, %v1437
  %vm1440 = vcmp.gt.s32.totalorder %v315, 7
  %v1441 = vsel %vm1440, 1, 0
  %1442 = vset.pattern.permute.xlu0 0
  %1443 = vperm.xlu0 %1442, %v1441
  %v1444 = vpop.permute.xlu0 %1443
  %vm1445 = vcmp.eq.s32.totalorder %v1444, 1
  %v1446 = vsel %vm1445, %v1439, 0.0
  %1448 = vrot.lane.b32.xlu0 %v1446, 80
  %v1449 = vpop.permute.xlu0 %1448
  %s1451 = scalar_lea.vmem [#allocation4], 14
  %1452 = vst.msk [vmem:[%s1451] sm:$0x3] %vm393, %v1449
  %s1453 = scalar_lea.vmem [#allocation3], 14
  %v1454 = vld [vmem:[%s1453] sm:$0x3]
  %1456 = vrot.lane.b32.xlu0 %v1366, 80
  %v1457 = vpop.permute.xlu0 %1456
  %v1458 = vsel %vm319, %v1457, 0
  %1460 = vmatpush.msra.mxu0 0.0
  %1461 = vmatpush.msra.mxu0 0.0
  %1462 = vmatpush.msra.mxu0 0.0
  %1463 = vmatpush.msra.mxu0 0.0
  %1464 = vmatpush.msra.mxu0 0.0
  %1465 = vmatpush.msra.mxu0 0.0
  %1466 = vmatpush.msra.mxu0 0.0
  %1467 = vmatpush.msra.mxu0 0.0
  %1468 = vmatpush.msra.mxu0 0.0
  %1469 = vmatpush.msra.mxu0 0.0
  %1470 = vmatpush.msra.mxu0 0.0
  %1471 = vmatpush.msra.mxu0 0.0
  %1472 = vmatpush.msra.mxu0 0.0
  %1473 = vmatpush.msra.mxu0 0.0
  %1474 = vmatpush.msra.mxu0 %v307
  %1475 = vmatpush.msra.mxu0 %v306
  %1476 = vmatmul.f32.gmra.mxu0 %v1458
  %v1477 = vpop.f32.mrf.mxu0
  %v1478 = vadd.f32 0.0, %v1477
  %1479 = vdwg.mxu0
  %v1480 = vadd.f32 %v1454, %v1478
  %v1481 = vtanh.pop %v1480
  %v1482 = vxor.u32 %v1480, 2147483648
  %v1483 = vmul.f32 %v1482, 1.442695
  %v1484 = vpow.pop %v1483
  %v1485 = vadd.f32 %v1484, 1.0
  %v1486 = vrcp.pop %v1485
  %v1487 = vmul.f32 %v1485, %v1486
  %v1488 = vsub.f32 1.0, %v1487
  %v1489 = vmul.f32 %v1486, %v1488
  %v1490 = vadd.f32 %v1486, %v1489
  %vm1491 = vweird.f32 %v1485
  %vm1492 = vweird.f32 %v1486
  %vm1493 = vmor %vm1491, %vm1492
  %v1494 = vsel %vm1493, %v1486, %v1490
  %v1495 = vand.u32 2147483647, %v1485
  %vm1496 = vcmp.eq.f32.partialorder %v1495, 8.507059e+37
  %v1497 = vand.u32 %v1485, 2147483648
  %v1498 = vor.u32 1.1754944e-38, %v1497
  %v1499 = vsel %vm1496, %v1498, %v1494
  %v1500 = vmul.f32 1.0, %v1499
  %v1501 = vsel %vm314, %v1481, %v1500
  %v1502 = vmul.f32 %v1501, %v1360
  %1504 = vrot.lane.b32.xlu0 %v1501, 96
  %v1505 = vpop.permute.xlu0 %1504
  %v1507 = vmul.f32 %v1501, %v1505
  %1509 = vrot.lane.b32.xlu0 %v1507, 16
  %v1510 = vpop.permute.xlu0 %1509
  %v1512 = vadd.f32 %v1502, %v1510
  %v1513 = vtanh.pop %v1512
  %1515 = vrot.lane.b32.xlu0 %v1513, 32
  %v1516 = vpop.permute.xlu0 %1515
  %v1518 = vmul.f32 %v1501, %v1516
  %vm1519 = vcmp.eq.s32.totalorder %v317, 7
  %v1520 = vsel %vm1519, 1, 0
  %1521 = vset.pattern.permute.xlu0 0
  %1522 = vperm.xlu0 %1521, %v1520
  %v1523 = vpop.permute.xlu0 %1522
  %vm1524 = vcmp.eq.s32.totalorder %v1523, 1
  %v1525 = vsel %vm1524, %v1518, %v1373
  %s1526 = scalar_lea.vmem [#allocation2], 16
  %v1527 = vld [vmem:[%s1526] sm:$0x3]
  %1529 = vrot.lane.b32.xlu0 %v1439, 80
  %v1530 = vpop.permute.xlu0 %1529
  %v1531 = vsel %vm319, %v1530, 0
  %1533 = vmatpush.msra.mxu0 0.0
  %1534 = vmatpush.msra.mxu0 0.0
  %1535 = vmatpush.msra.mxu0 0.0
  %1536 = vmatpush.msra.mxu0 0.0
  %1537 = vmatpush.msra.mxu0 0.0
  %1538 = vmatpush.msra.mxu0 0.0
  %1539 = vmatpush.msra.mxu0 0.0
  %1540 = vmatpush.msra.mxu0 0.0
  %1541 = vmatpush.msra.mxu0 0.0
  %1542 = vmatpush.msra.mxu0 0.0
  %1543 = vmatpush.msra.mxu0 0.0
  %1544 = vmatpush.msra.mxu0 0.0
  %1545 = vmatpush.msra.mxu0 0.0
  %1546 = vmatpush.msra.mxu0 0.0
  %1547 = vmatpush.msra.mxu0 %v305
  %1548 = vmatpush.msra.mxu0 %v304
  %1549 = vmatmul.f32.gmra.mxu0 %v1531
  %v1550 = vpop.f32.mrf.mxu0
  %v1551 = vadd.f32 0.0, %v1550
  %1552 = vdwg.mxu0
  %v1553 = vadd.f32 %v1527, %v1551
  %v1554 = vtanh.pop %v1553
  %v1555 = vxor.u32 %v1553, 2147483648
  %v1556 = vmul.f32 %v1555, 1.442695
  %v1557 = vpow.pop %v1556
  %v1558 = vadd.f32 %v1557, 1.0
  %v1559 = vrcp.pop %v1558
  %v1560 = vmul.f32 %v1558, %v1559
  %v1561 = vsub.f32 1.0, %v1560
  %v1562 = vmul.f32 %v1559, %v1561
  %v1563 = vadd.f32 %v1559, %v1562
  %vm1564 = vweird.f32 %v1558
  %vm1565 = vweird.f32 %v1559
  %vm1566 = vmor %vm1564, %vm1565
  %v1567 = vsel %vm1566, %v1559, %v1563
  %v1568 = vand.u32 2147483647, %v1558
  %vm1569 = vcmp.eq.f32.partialorder %v1568, 8.507059e+37
  %v1570 = vand.u32 %v1558, 2147483648
  %v1571 = vor.u32 1.1754944e-38, %v1570
  %v1572 = vsel %vm1569, %v1571, %v1567
  %v1573 = vmul.f32 1.0, %v1572
  %v1574 = vsel %vm314, %v1554, %v1573
  %v1575 = vmul.f32 %v1574, %v1433
  %1577 = vrot.lane.b32.xlu0 %v1574, 96
  %v1578 = vpop.permute.xlu0 %1577
  %v1580 = vmul.f32 %v1574, %v1578
  %1582 = vrot.lane.b32.xlu0 %v1580, 16
  %v1583 = vpop.permute.xlu0 %1582
  %v1585 = vadd.f32 %v1575, %v1583
  %v1586 = vtanh.pop %v1585
  %1588 = vrot.lane.b32.xlu0 %v1586, 32
  %v1589 = vpop.permute.xlu0 %1588
  %v1591 = vmul.f32 %v1574, %v1589
  %vm1592 = vcmp.gt.s32.totalorder %v315, 8
  %v1593 = vsel %vm1592, 1, 0
  %1594 = vset.pattern.permute.xlu0 0
  %1595 = vperm.xlu0 %1594, %v1593
  %v1596 = vpop.permute.xlu0 %1595
  %vm1597 = vcmp.eq.s32.totalorder %v1596, 1
  %v1598 = vsel %vm1597, %v1591, 0.0
  %1600 = vrot.lane.b32.xlu0 %v1598, 80
  %v1601 = vpop.permute.xlu0 %1600
  %s1603 = scalar_lea.vmem [#allocation4], 16
  %1604 = vst.msk [vmem:[%s1603] sm:$0x3] %vm393, %v1601
  %v1605 = vld [vmem:[%s1453] sm:$0x3]
  %1607 = vrot.lane.b32.xlu0 %v1518, 80
  %v1608 = vpop.permute.xlu0 %1607
  %v1609 = vsel %vm319, %v1608, 0
  %1611 = vmatpush.msra.mxu0 0.0
  %1612 = vmatpush.msra.mxu0 0.0
  %1613 = vmatpush.msra.mxu0 0.0
  %1614 = vmatpush.msra.mxu0 0.0
  %1615 = vmatpush.msra.mxu0 0.0
  %1616 = vmatpush.msra.mxu0 0.0
  %1617 = vmatpush.msra.mxu0 0.0
  %1618 = vmatpush.msra.mxu0 0.0
  %1619 = vmatpush.msra.mxu0 0.0
  %1620 = vmatpush.msra.mxu0 0.0
  %1621 = vmatpush.msra.mxu0 0.0
  %1622 = vmatpush.msra.mxu0 0.0
  %1623 = vmatpush.msra.mxu0 0.0
  %1624 = vmatpush.msra.mxu0 0.0
  %1625 = vmatpush.msra.mxu0 %v307
  %1626 = vmatpush.msra.mxu0 %v306
  %1627 = vmatmul.f32.gmra.mxu0 %v1609
  %v1628 = vpop.f32.mrf.mxu0
  %v1629 = vadd.f32 0.0, %v1628
  %1630 = vdwg.mxu0
  %v1631 = vadd.f32 %v1605, %v1629
  %v1632 = vtanh.pop %v1631
  %v1633 = vxor.u32 %v1631, 2147483648
  %v1634 = vmul.f32 %v1633, 1.442695
  %v1635 = vpow.pop %v1634
  %v1636 = vadd.f32 %v1635, 1.0
  %v1637 = vrcp.pop %v1636
  %v1638 = vmul.f32 %v1636, %v1637
  %v1639 = vsub.f32 1.0, %v1638
  %v1640 = vmul.f32 %v1637, %v1639
  %v1641 = vadd.f32 %v1637, %v1640
  %vm1642 = vweird.f32 %v1636
  %vm1643 = vweird.f32 %v1637
  %vm1644 = vmor %vm1642, %vm1643
  %v1645 = vsel %vm1644, %v1637, %v1641
  %v1646 = vand.u32 2147483647, %v1636
  %vm1647 = vcmp.eq.f32.partialorder %v1646, 8.507059e+37
  %v1648 = vand.u32 %v1636, 2147483648
  %v1649 = vor.u32 1.1754944e-38, %v1648
  %v1650 = vsel %vm1647, %v1649, %v1645
  %v1651 = vmul.f32 1.0, %v1650
  %v1652 = vsel %vm314, %v1632, %v1651
  %v1653 = vmul.f32 %v1652, %v1512
  %1655 = vrot.lane.b32.xlu0 %v1652, 96
  %v1656 = vpop.permute.xlu0 %1655
  %v1658 = vmul.f32 %v1652, %v1656
  %1660 = vrot.lane.b32.xlu0 %v1658, 16
  %v1661 = vpop.permute.xlu0 %1660
  %v1663 = vadd.f32 %v1653, %v1661
  %v1664 = vtanh.pop %v1663
  %1666 = vrot.lane.b32.xlu0 %v1664, 32
  %v1667 = vpop.permute.xlu0 %1666
  %v1669 = vmul.f32 %v1652, %v1667
  %vm1670 = vcmp.eq.s32.totalorder %v317, 8
  %v1671 = vsel %vm1670, 1, 0
  %1672 = vset.pattern.permute.xlu0 0
  %1673 = vperm.xlu0 %1672, %v1671
  %v1674 = vpop.permute.xlu0 %1673
  %vm1675 = vcmp.eq.s32.totalorder %v1674, 1
  %v1676 = vsel %vm1675, %v1669, %v1525
  %s1677 = scalar_lea.vmem [#allocation2], 18
  %v1678 = vld [vmem:[%s1677] sm:$0x3]
  %1680 = vrot.lane.b32.xlu0 %v1591, 80
  %v1681 = vpop.permute.xlu0 %1680
  %v1682 = vsel %vm319, %v1681, 0
  %1684 = vmatpush.msra.mxu0 0.0
  %1685 = vmatpush.msra.mxu0 0.0
  %1686 = vmatpush.msra.mxu0 0.0
  %1687 = vmatpush.msra.mxu0 0.0
  %1688 = vmatpush.msra.mxu0 0.0
  %1689 = vmatpush.msra.mxu0 0.0
  %1690 = vmatpush.msra.mxu0 0.0
  %1691 = vmatpush.msra.mxu0 0.0
  %1692 = vmatpush.msra.mxu0 0.0
  %1693 = vmatpush.msra.mxu0 0.0
  %1694 = vmatpush.msra.mxu0 0.0
  %1695 = vmatpush.msra.mxu0 0.0
  %1696 = vmatpush.msra.mxu0 0.0
  %1697 = vmatpush.msra.mxu0 0.0
  %1698 = vmatpush.msra.mxu0 %v305
  %1699 = vmatpush.msra.mxu0 %v304
  %1700 = vmatmul.f32.gmra.mxu0 %v1682
  %v1701 = vpop.f32.mrf.mxu0
  %v1702 = vadd.f32 0.0, %v1701
  %1703 = vdwg.mxu0
  %v1704 = vadd.f32 %v1678, %v1702
  %v1705 = vtanh.pop %v1704
  %v1706 = vxor.u32 %v1704, 2147483648
  %v1707 = vmul.f32 %v1706, 1.442695
  %v1708 = vpow.pop %v1707
  %v1709 = vadd.f32 %v1708, 1.0
  %v1710 = vrcp.pop %v1709
  %v1711 = vmul.f32 %v1709, %v1710
  %v1712 = vsub.f32 1.0, %v1711
  %v1713 = vmul.f32 %v1710, %v1712
  %v1714 = vadd.f32 %v1710, %v1713
  %vm1715 = vweird.f32 %v1709
  %vm1716 = vweird.f32 %v1710
  %vm1717 = vmor %vm1715, %vm1716
  %v1718 = vsel %vm1717, %v1710, %v1714
  %v1719 = vand.u32 2147483647, %v1709
  %vm1720 = vcmp.eq.f32.partialorder %v1719, 8.507059e+37
  %v1721 = vand.u32 %v1709, 2147483648
  %v1722 = vor.u32 1.1754944e-38, %v1721
  %v1723 = vsel %vm1720, %v1722, %v1718
  %v1724 = vmul.f32 1.0, %v1723
  %v1725 = vsel %vm314, %v1705, %v1724
  %v1726 = vmul.f32 %v1725, %v1585
  %1728 = vrot.lane.b32.xlu0 %v1725, 96
  %v1729 = vpop.permute.xlu0 %1728
  %v1731 = vmul.f32 %v1725, %v1729
  %1733 = vrot.lane.b32.xlu0 %v1731, 16
  %v1734 = vpop.permute.xlu0 %1733
  %v1736 = vadd.f32 %v1726, %v1734
  %v1737 = vtanh.pop %v1736
  %1739 = vrot.lane.b32.xlu0 %v1737, 32
  %v1740 = vpop.permute.xlu0 %1739
  %v1742 = vmul.f32 %v1725, %v1740
  %vm1743 = vcmp.gt.s32.totalorder %v315, 9
  %v1744 = vsel %vm1743, 1, 0
  %1745 = vset.pattern.permute.xlu0 0
  %1746 = vperm.xlu0 %1745, %v1744
  %v1747 = vpop.permute.xlu0 %1746
  %vm1748 = vcmp.eq.s32.totalorder %v1747, 1
  %v1749 = vsel %vm1748, %v1742, 0.0
  %1751 = vrot.lane.b32.xlu0 %v1749, 80
  %v1752 = vpop.permute.xlu0 %1751
  %s1754 = scalar_lea.vmem [#allocation4], 18
  %1755 = vst.msk [vmem:[%s1754] sm:$0x3] %vm393, %v1752
  %v1756 = vld [vmem:[%s1453] sm:$0x3]
  %v1757 = vadd.f32 %v1756, %v1629
  %v1758 = vtanh.pop %v1757
  %v1759 = vxor.u32 %v1757, 2147483648
  %v1760 = vmul.f32 %v1759, 1.442695
  %v1761 = vpow.pop %v1760
  %v1762 = vadd.f32 %v1761, 1.0
  %v1763 = vrcp.pop %v1762
  %v1764 = vmul.f32 %v1762, %v1763
  %v1765 = vsub.f32 1.0, %v1764
  %v1766 = vmul.f32 %v1763, %v1765
  %v1767 = vadd.f32 %v1763, %v1766
  %vm1768 = vweird.f32 %v1762
  %vm1769 = vweird.f32 %v1763
  %vm1770 = vmor %vm1768, %vm1769
  %v1771 = vsel %vm1770, %v1763, %v1767
  %v1772 = vand.u32 2147483647, %v1762
  %vm1773 = vcmp.eq.f32.partialorder %v1772, 8.507059e+37
  %v1774 = vand.u32 %v1762, 2147483648
  %v1775 = vor.u32 1.1754944e-38, %v1774
  %v1776 = vsel %vm1773, %v1775, %v1771
  %v1777 = vmul.f32 1.0, %v1776
  %v1778 = vsel %vm314, %v1758, %v1777
  %v1779 = vmul.f32 %v1778, %v1512
  %1781 = vrot.lane.b32.xlu0 %v1778, 96
  %v1782 = vpop.permute.xlu0 %1781
  %v1784 = vmul.f32 %v1778, %v1782
  %1786 = vrot.lane.b32.xlu0 %v1784, 16
  %v1787 = vpop.permute.xlu0 %1786
  %v1789 = vadd.f32 %v1779, %v1787
  %v1790 = vtanh.pop %v1789
  %1792 = vrot.lane.b32.xlu0 %v1790, 32
  %v1793 = vpop.permute.xlu0 %1792
  %v1795 = vmul.f32 %v1778, %v1793
  %vm1796 = vcmp.eq.s32.totalorder %v317, 9
  %v1797 = vsel %vm1796, 1, 0
  %1798 = vset.pattern.permute.xlu0 0
  %1799 = vperm.xlu0 %1798, %v1797
  %v1800 = vpop.permute.xlu0 %1799
  %vm1801 = vcmp.eq.s32.totalorder %v1800, 1
  %v1802 = vsel %vm1801, %v1795, %v1676
  %s1803 = scalar_lea.vmem [#allocation2], 20
  %v1804 = vld [vmem:[%s1803] sm:$0x3]
  %1806 = vrot.lane.b32.xlu0 %v1742, 80
  %v1807 = vpop.permute.xlu0 %1806
  %v1808 = vsel %vm319, %v1807, 0
  %1810 = vmatpush.msra.mxu0 0.0
  %1811 = vmatpush.msra.mxu0 0.0
  %1812 = vmatpush.msra.mxu0 0.0
  %1813 = vmatpush.msra.mxu0 0.0
  %1814 = vmatpush.msra.mxu0 0.0
  %1815 = vmatpush.msra.mxu0 0.0
  %1816 = vmatpush.msra.mxu0 0.0
  %1817 = vmatpush.msra.mxu0 0.0
  %1818 = vmatpush.msra.mxu0 0.0
  %1819 = vmatpush.msra.mxu0 0.0
  %1820 = vmatpush.msra.mxu0 0.0
  %1821 = vmatpush.msra.mxu0 0.0
  %1822 = vmatpush.msra.mxu0 0.0
  %1823 = vmatpush.msra.mxu0 0.0
  %1824 = vmatpush.msra.mxu0 %v305
  %1825 = vmatpush.msra.mxu0 %v304
  %1826 = vmatmul.f32.gmra.mxu0 %v1808
  %v1827 = vpop.f32.mrf.mxu0
  %v1828 = vadd.f32 0.0, %v1827
  %1829 = vdwg.mxu0
  %v1830 = vadd.f32 %v1804, %v1828
  %v1831 = vtanh.pop %v1830
  %v1832 = vxor.u32 %v1830, 2147483648
  %v1833 = vmul.f32 %v1832, 1.442695
  %v1834 = vpow.pop %v1833
  %v1835 = vadd.f32 %v1834, 1.0
  %v1836 = vrcp.pop %v1835
  %v1837 = vmul.f32 %v1835, %v1836
  %v1838 = vsub.f32 1.0, %v1837
  %v1839 = vmul.f32 %v1836, %v1838
  %v1840 = vadd.f32 %v1836, %v1839
  %vm1841 = vweird.f32 %v1835
  %vm1842 = vweird.f32 %v1836
  %vm1843 = vmor %vm1841, %vm1842
  %v1844 = vsel %vm1843, %v1836, %v1840
  %v1845 = vand.u32 2147483647, %v1835
  %vm1846 = vcmp.eq.f32.partialorder %v1845, 8.507059e+37
  %v1847 = vand.u32 %v1835, 2147483648
  %v1848 = vor.u32 1.1754944e-38, %v1847
  %v1849 = vsel %vm1846, %v1848, %v1844
  %v1850 = vmul.f32 1.0, %v1849
  %v1851 = vsel %vm314, %v1831, %v1850
  %v1852 = vmul.f32 %v1851, %v1736
  %1854 = vrot.lane.b32.xlu0 %v1851, 96
  %v1855 = vpop.permute.xlu0 %1854
  %v1857 = vmul.f32 %v1851, %v1855
  %1859 = vrot.lane.b32.xlu0 %v1857, 16
  %v1860 = vpop.permute.xlu0 %1859
  %v1862 = vadd.f32 %v1852, %v1860
  %v1863 = vtanh.pop %v1862
  %1865 = vrot.lane.b32.xlu0 %v1863, 32
  %v1866 = vpop.permute.xlu0 %1865
  %v1868 = vmul.f32 %v1851, %v1866
  %vm1869 = vcmp.gt.s32.totalorder %v315, 10
  %v1870 = vsel %vm1869, 1, 0
  %1871 = vset.pattern.permute.xlu0 0
  %1872 = vperm.xlu0 %1871, %v1870
  %v1873 = vpop.permute.xlu0 %1872
  %vm1874 = vcmp.eq.s32.totalorder %v1873, 1
  %v1875 = vsel %vm1874, %v1868, 0.0
  %1877 = vrot.lane.b32.xlu0 %v1875, 80
  %v1878 = vpop.permute.xlu0 %1877
  %s1880 = scalar_lea.vmem [#allocation4], 20
  %1881 = vst.msk [vmem:[%s1880] sm:$0x3] %vm393, %v1878
  %v1882 = vld [vmem:[%s1453] sm:$0x3]
  %v1883 = vadd.f32 %v1882, %v1629
  %v1884 = vtanh.pop %v1883
  %v1885 = vxor.u32 %v1883, 2147483648
  %v1886 = vmul.f32 %v1885, 1.442695
  %v1887 = vpow.pop %v1886
  %v1888 = vadd.f32 %v1887, 1.0
  %v1889 = vrcp.pop %v1888
  %v1890 = vmul.f32 %v1888, %v1889
  %v1891 = vsub.f32 1.0, %v1890
  %v1892 = vmul.f32 %v1889, %v1891
  %v1893 = vadd.f32 %v1889, %v1892
  %vm1894 = vweird.f32 %v1888
  %vm1895 = vweird.f32 %v1889
  %vm1896 = vmor %vm1894, %vm1895
  %v1897 = vsel %vm1896, %v1889, %v1893
  %v1898 = vand.u32 2147483647, %v1888
  %vm1899 = vcmp.eq.f32.partialorder %v1898, 8.507059e+37
  %v1900 = vand.u32 %v1888, 2147483648
  %v1901 = vor.u32 1.1754944e-38, %v1900
  %v1902 = vsel %vm1899, %v1901, %v1897
  %v1903 = vmul.f32 1.0, %v1902
  %v1904 = vsel %vm314, %v1884, %v1903
  %v1905 = vmul.f32 %v1904, %v1512
  %1907 = vrot.lane.b32.xlu0 %v1904, 96
  %v1908 = vpop.permute.xlu0 %1907
  %v1910 = vmul.f32 %v1904, %v1908
  %1912 = vrot.lane.b32.xlu0 %v1910, 16
  %v1913 = vpop.permute.xlu0 %1912
  %v1915 = vadd.f32 %v1905, %v1913
  %v1916 = vtanh.pop %v1915
  %1918 = vrot.lane.b32.xlu0 %v1916, 32
  %v1919 = vpop.permute.xlu0 %1918
  %v1921 = vmul.f32 %v1904, %v1919
  %vm1922 = vcmp.eq.s32.totalorder %v317, 10
  %v1923 = vsel %vm1922, 1, 0
  %1924 = vset.pattern.permute.xlu0 0
  %1925 = vperm.xlu0 %1924, %v1923
  %v1926 = vpop.permute.xlu0 %1925
  %vm1927 = vcmp.eq.s32.totalorder %v1926, 1
  %v1928 = vsel %vm1927, %v1921, %v1802
  %s1929 = scalar_lea.vmem [#allocation2], 22
  %v1930 = vld [vmem:[%s1929] sm:$0x3]
  %1932 = vrot.lane.b32.xlu0 %v1868, 80
  %v1933 = vpop.permute.xlu0 %1932
  %v1934 = vsel %vm319, %v1933, 0
  %1936 = vmatpush.msra.mxu0 0.0
  %1937 = vmatpush.msra.mxu0 0.0
  %1938 = vmatpush.msra.mxu0 0.0
  %1939 = vmatpush.msra.mxu0 0.0
  %1940 = vmatpush.msra.mxu0 0.0
  %1941 = vmatpush.msra.mxu0 0.0
  %1942 = vmatpush.msra.mxu0 0.0
  %1943 = vmatpush.msra.mxu0 0.0
  %1944 = vmatpush.msra.mxu0 0.0
  %1945 = vmatpush.msra.mxu0 0.0
  %1946 = vmatpush.msra.mxu0 0.0
  %1947 = vmatpush.msra.mxu0 0.0
  %1948 = vmatpush.msra.mxu0 0.0
  %1949 = vmatpush.msra.mxu0 0.0
  %1950 = vmatpush.msra.mxu0 %v305
  %1951 = vmatpush.msra.mxu0 %v304
  %1952 = vmatmul.f32.gmra.mxu0 %v1934
  %v1953 = vpop.f32.mrf.mxu0
  %v1954 = vadd.f32 0.0, %v1953
  %1955 = vdwg.mxu0
  %v1956 = vadd.f32 %v1930, %v1954
  %v1957 = vtanh.pop %v1956
  %v1958 = vxor.u32 %v1956, 2147483648
  %v1959 = vmul.f32 %v1958, 1.442695
  %v1960 = vpow.pop %v1959
  %v1961 = vadd.f32 %v1960, 1.0
  %v1962 = vrcp.pop %v1961
  %v1963 = vmul.f32 %v1961, %v1962
  %v1964 = vsub.f32 1.0, %v1963
  %v1965 = vmul.f32 %v1962, %v1964
  %v1966 = vadd.f32 %v1962, %v1965
  %vm1967 = vweird.f32 %v1961
  %vm1968 = vweird.f32 %v1962
  %vm1969 = vmor %vm1967, %vm1968
  %v1970 = vsel %vm1969, %v1962, %v1966
  %v1971 = vand.u32 2147483647, %v1961
  %vm1972 = vcmp.eq.f32.partialorder %v1971, 8.507059e+37
  %v1973 = vand.u32 %v1961, 2147483648
  %v1974 = vor.u32 1.1754944e-38, %v1973
  %v1975 = vsel %vm1972, %v1974, %v1970
  %v1976 = vmul.f32 1.0, %v1975
  %v1977 = vsel %vm314, %v1957, %v1976
  %v1978 = vmul.f32 %v1977, %v1862
  %1980 = vrot.lane.b32.xlu0 %v1977, 96
  %v1981 = vpop.permute.xlu0 %1980
  %v1983 = vmul.f32 %v1977, %v1981
  %1985 = vrot.lane.b32.xlu0 %v1983, 16
  %v1986 = vpop.permute.xlu0 %1985
  %v1988 = vadd.f32 %v1978, %v1986
  %v1989 = vtanh.pop %v1988
  %1991 = vrot.lane.b32.xlu0 %v1989, 32
  %v1992 = vpop.permute.xlu0 %1991
  %v1994 = vmul.f32 %v1977, %v1992
  %vm1995 = vcmp.gt.s32.totalorder %v315, 11
  %v1996 = vsel %vm1995, 1, 0
  %1997 = vset.pattern.permute.xlu0 0
  %1998 = vperm.xlu0 %1997, %v1996
  %v1999 = vpop.permute.xlu0 %1998
  %vm2000 = vcmp.eq.s32.totalorder %v1999, 1
  %v2001 = vsel %vm2000, %v1994, 0.0
  %2003 = vrot.lane.b32.xlu0 %v2001, 80
  %v2004 = vpop.permute.xlu0 %2003
  %s2006 = scalar_lea.vmem [#allocation4], 22
  %2007 = vst.msk [vmem:[%s2006] sm:$0x3] %vm393, %v2004
  %v2008 = vld [vmem:[%s1453] sm:$0x3]
  %v2009 = vadd.f32 %v2008, %v1629
  %v2010 = vtanh.pop %v2009
  %v2011 = vxor.u32 %v2009, 2147483648
  %v2012 = vmul.f32 %v2011, 1.442695
  %v2013 = vpow.pop %v2012
  %v2014 = vadd.f32 %v2013, 1.0
  %v2015 = vrcp.pop %v2014
  %v2016 = vmul.f32 %v2014, %v2015
  %v2017 = vsub.f32 1.0, %v2016
  %v2018 = vmul.f32 %v2015, %v2017
  %v2019 = vadd.f32 %v2015, %v2018
  %vm2020 = vweird.f32 %v2014
  %vm2021 = vweird.f32 %v2015
  %vm2022 = vmor %vm2020, %vm2021
  %v2023 = vsel %vm2022, %v2015, %v2019
  %v2024 = vand.u32 2147483647, %v2014
  %vm2025 = vcmp.eq.f32.partialorder %v2024, 8.507059e+37
  %v2026 = vand.u32 %v2014, 2147483648
  %v2027 = vor.u32 1.1754944e-38, %v2026
  %v2028 = vsel %vm2025, %v2027, %v2023
  %v2029 = vmul.f32 1.0, %v2028
  %v2030 = vsel %vm314, %v2010, %v2029
  %v2031 = vmul.f32 %v2030, %v1512
  %2033 = vrot.lane.b32.xlu0 %v2030, 96
  %v2034 = vpop.permute.xlu0 %2033
  %v2036 = vmul.f32 %v2030, %v2034
  %2038 = vrot.lane.b32.xlu0 %v2036, 16
  %v2039 = vpop.permute.xlu0 %2038
  %v2041 = vadd.f32 %v2031, %v2039
  %v2042 = vtanh.pop %v2041
  %2044 = vrot.lane.b32.xlu0 %v2042, 32
  %v2045 = vpop.permute.xlu0 %2044
  %v2047 = vmul.f32 %v2030, %v2045
  %vm2048 = vcmp.eq.s32.totalorder %v317, 11
  %v2049 = vsel %vm2048, 1, 0
  %2050 = vset.pattern.permute.xlu0 0
  %2051 = vperm.xlu0 %2050, %v2049
  %v2052 = vpop.permute.xlu0 %2051
  %vm2053 = vcmp.eq.s32.totalorder %v2052, 1
  %v2054 = vsel %vm2053, %v2047, %v1928
  %s2055 = scalar_lea.vmem [#allocation2], 24
  %v2056 = vld [vmem:[%s2055] sm:$0x3]
  %2058 = vrot.lane.b32.xlu0 %v1994, 80
  %v2059 = vpop.permute.xlu0 %2058
  %v2060 = vsel %vm319, %v2059, 0
  %2062 = vmatpush.msra.mxu0 0.0
  %2063 = vmatpush.msra.mxu0 0.0
  %2064 = vmatpush.msra.mxu0 0.0
  %2065 = vmatpush.msra.mxu0 0.0
  %2066 = vmatpush.msra.mxu0 0.0
  %2067 = vmatpush.msra.mxu0 0.0
  %2068 = vmatpush.msra.mxu0 0.0
  %2069 = vmatpush.msra.mxu0 0.0
  %2070 = vmatpush.msra.mxu0 0.0
  %2071 = vmatpush.msra.mxu0 0.0
  %2072 = vmatpush.msra.mxu0 0.0
  %2073 = vmatpush.msra.mxu0 0.0
  %2074 = vmatpush.msra.mxu0 0.0
  %2075 = vmatpush.msra.mxu0 0.0
  %2076 = vmatpush.msra.mxu0 %v305
  %2077 = vmatpush.msra.mxu0 %v304
  %2078 = vmatmul.f32.gmra.mxu0 %v2060
  %v2079 = vpop.f32.mrf.mxu0
  %v2080 = vadd.f32 0.0, %v2079
  %2081 = vdwg.mxu0
  %v2082 = vadd.f32 %v2056, %v2080
  %v2083 = vtanh.pop %v2082
  %v2084 = vxor.u32 %v2082, 2147483648
  %v2085 = vmul.f32 %v2084, 1.442695
  %v2086 = vpow.pop %v2085
  %v2087 = vadd.f32 %v2086, 1.0
  %v2088 = vrcp.pop %v2087
  %v2089 = vmul.f32 %v2087, %v2088
  %v2090 = vsub.f32 1.0, %v2089
  %v2091 = vmul.f32 %v2088, %v2090
  %v2092 = vadd.f32 %v2088, %v2091
  %vm2093 = vweird.f32 %v2087
  %vm2094 = vweird.f32 %v2088
  %vm2095 = vmor %vm2093, %vm2094
  %v2096 = vsel %vm2095, %v2088, %v2092
  %v2097 = vand.u32 2147483647, %v2087
  %vm2098 = vcmp.eq.f32.partialorder %v2097, 8.507059e+37
  %v2099 = vand.u32 %v2087, 2147483648
  %v2100 = vor.u32 1.1754944e-38, %v2099
  %v2101 = vsel %vm2098, %v2100, %v2096
  %v2102 = vmul.f32 1.0, %v2101
  %v2103 = vsel %vm314, %v2083, %v2102
  %v2104 = vmul.f32 %v2103, %v1988
  %2106 = vrot.lane.b32.xlu0 %v2103, 96
  %v2107 = vpop.permute.xlu0 %2106
  %v2109 = vmul.f32 %v2103, %v2107
  %2111 = vrot.lane.b32.xlu0 %v2109, 16
  %v2112 = vpop.permute.xlu0 %2111
  %v2114 = vadd.f32 %v2104, %v2112
  %v2115 = vtanh.pop %v2114
  %2117 = vrot.lane.b32.xlu0 %v2115, 32
  %v2118 = vpop.permute.xlu0 %2117
  %v2120 = vmul.f32 %v2103, %v2118
  %vm2121 = vcmp.gt.s32.totalorder %v315, 12
  %v2122 = vsel %vm2121, 1, 0
  %2123 = vset.pattern.permute.xlu0 0
  %2124 = vperm.xlu0 %2123, %v2122
  %v2125 = vpop.permute.xlu0 %2124
  %vm2126 = vcmp.eq.s32.totalorder %v2125, 1
  %v2127 = vsel %vm2126, %v2120, 0.0
  %2129 = vrot.lane.b32.xlu0 %v2127, 80
  %v2130 = vpop.permute.xlu0 %2129
  %s2132 = scalar_lea.vmem [#allocation4], 24
  %2133 = vst.msk [vmem:[%s2132] sm:$0x3] %vm393, %v2130
  %v2134 = vld [vmem:[%s1453] sm:$0x3]
  %v2135 = vadd.f32 %v2134, %v1629
  %v2136 = vtanh.pop %v2135
  %v2137 = vxor.u32 %v2135, 2147483648
  %v2138 = vmul.f32 %v2137, 1.442695
  %v2139 = vpow.pop %v2138
  %v2140 = vadd.f32 %v2139, 1.0
  %v2141 = vrcp.pop %v2140
  %v2142 = vmul.f32 %v2140, %v2141
  %v2143 = vsub.f32 1.0, %v2142
  %v2144 = vmul.f32 %v2141, %v2143
  %v2145 = vadd.f32 %v2141, %v2144
  %vm2146 = vweird.f32 %v2140
  %vm2147 = vweird.f32 %v2141
  %vm2148 = vmor %vm2146, %vm2147
  %v2149 = vsel %vm2148, %v2141, %v2145
  %v2150 = vand.u32 2147483647, %v2140
  %vm2151 = vcmp.eq.f32.partialorder %v2150, 8.507059e+37
  %v2152 = vand.u32 %v2140, 2147483648
  %v2153 = vor.u32 1.1754944e-38, %v2152
  %v2154 = vsel %vm2151, %v2153, %v2149
  %v2155 = vmul.f32 1.0, %v2154
  %v2156 = vsel %vm314, %v2136, %v2155
  %v2157 = vmul.f32 %v2156, %v1512
  %2159 = vrot.lane.b32.xlu0 %v2156, 96
  %v2160 = vpop.permute.xlu0 %2159
  %v2162 = vmul.f32 %v2156, %v2160
  %2164 = vrot.lane.b32.xlu0 %v2162, 16
  %v2165 = vpop.permute.xlu0 %2164
  %v2167 = vadd.f32 %v2157, %v2165
  %v2168 = vtanh.pop %v2167
  %2170 = vrot.lane.b32.xlu0 %v2168, 32
  %v2171 = vpop.permute.xlu0 %2170
  %v2173 = vmul.f32 %v2156, %v2171
  %vm2174 = vcmp.eq.s32.totalorder %v317, 12
  %v2175 = vsel %vm2174, 1, 0
  %2176 = vset.pattern.permute.xlu0 0
  %2177 = vperm.xlu0 %2176, %v2175
  %v2178 = vpop.permute.xlu0 %2177
  %vm2179 = vcmp.eq.s32.totalorder %v2178, 1
  %v2180 = vsel %vm2179, %v2173, %v2054
  %s2181 = scalar_lea.vmem [#allocation2], 26
  %v2182 = vld [vmem:[%s2181] sm:$0x3]
  %2184 = vrot.lane.b32.xlu0 %v2120, 80
  %v2185 = vpop.permute.xlu0 %2184
  %v2186 = vsel %vm319, %v2185, 0
  %2188 = vmatpush.msra.mxu0 0.0
  %2189 = vmatpush.msra.mxu0 0.0
  %2190 = vmatpush.msra.mxu0 0.0
  %2191 = vmatpush.msra.mxu0 0.0
  %2192 = vmatpush.msra.mxu0 0.0
  %2193 = vmatpush.msra.mxu0 0.0
  %2194 = vmatpush.msra.mxu0 0.0
  %2195 = vmatpush.msra.mxu0 0.0
  %2196 = vmatpush.msra.mxu0 0.0
  %2197 = vmatpush.msra.mxu0 0.0
  %2198 = vmatpush.msra.mxu0 0.0
  %2199 = vmatpush.msra.mxu0 0.0
  %2200 = vmatpush.msra.mxu0 0.0
  %2201 = vmatpush.msra.mxu0 0.0
  %2202 = vmatpush.msra.mxu0 %v305
  %2203 = vmatpush.msra.mxu0 %v304
  %2204 = vmatmul.f32.gmra.mxu0 %v2186
  %v2205 = vpop.f32.mrf.mxu0
  %v2206 = vadd.f32 0.0, %v2205
  %2207 = vdwg.mxu0
  %v2208 = vadd.f32 %v2182, %v2206
  %v2209 = vtanh.pop %v2208
  %v2210 = vxor.u32 %v2208, 2147483648
  %v2211 = vmul.f32 %v2210, 1.442695
  %v2212 = vpow.pop %v2211
  %v2213 = vadd.f32 %v2212, 1.0
  %v2214 = vrcp.pop %v2213
  %v2215 = vmul.f32 %v2213, %v2214
  %v2216 = vsub.f32 1.0, %v2215
  %v2217 = vmul.f32 %v2214, %v2216
  %v2218 = vadd.f32 %v2214, %v2217
  %vm2219 = vweird.f32 %v2213
  %vm2220 = vweird.f32 %v2214
  %vm2221 = vmor %vm2219, %vm2220
  %v2222 = vsel %vm2221, %v2214, %v2218
  %v2223 = vand.u32 2147483647, %v2213
  %vm2224 = vcmp.eq.f32.partialorder %v2223, 8.507059e+37
  %v2225 = vand.u32 %v2213, 2147483648
  %v2226 = vor.u32 1.1754944e-38, %v2225
  %v2227 = vsel %vm2224, %v2226, %v2222
  %v2228 = vmul.f32 1.0, %v2227
  %v2229 = vsel %vm314, %v2209, %v2228
  %v2230 = vmul.f32 %v2229, %v2114
  %2232 = vrot.lane.b32.xlu0 %v2229, 96
  %v2233 = vpop.permute.xlu0 %2232
  %v2235 = vmul.f32 %v2229, %v2233
  %2237 = vrot.lane.b32.xlu0 %v2235, 16
  %v2238 = vpop.permute.xlu0 %2237
  %v2240 = vadd.f32 %v2230, %v2238
  %v2241 = vtanh.pop %v2240
  %2243 = vrot.lane.b32.xlu0 %v2241, 32
  %v2244 = vpop.permute.xlu0 %2243
  %v2246 = vmul.f32 %v2229, %v2244
  %vm2247 = vcmp.gt.s32.totalorder %v315, 13
  %v2248 = vsel %vm2247, 1, 0
  %2249 = vset.pattern.permute.xlu0 0
  %2250 = vperm.xlu0 %2249, %v2248
  %v2251 = vpop.permute.xlu0 %2250
  %vm2252 = vcmp.eq.s32.totalorder %v2251, 1
  %v2253 = vsel %vm2252, %v2246, 0.0
  %2255 = vrot.lane.b32.xlu0 %v2253, 80
  %v2256 = vpop.permute.xlu0 %2255
  %s2258 = scalar_lea.vmem [#allocation4], 26
  %2259 = vst.msk [vmem:[%s2258] sm:$0x3] %vm393, %v2256
  %v2260 = vld [vmem:[%s1453] sm:$0x3]
  %v2261 = vadd.f32 %v2260, %v1629
  %v2262 = vtanh.pop %v2261
  %v2263 = vxor.u32 %v2261, 2147483648
  %v2264 = vmul.f32 %v2263, 1.442695
  %v2265 = vpow.pop %v2264
  %v2266 = vadd.f32 %v2265, 1.0
  %v2267 = vrcp.pop %v2266
  %v2268 = vmul.f32 %v2266, %v2267
  %v2269 = vsub.f32 1.0, %v2268
  %v2270 = vmul.f32 %v2267, %v2269
  %v2271 = vadd.f32 %v2267, %v2270
  %vm2272 = vweird.f32 %v2266
  %vm2273 = vweird.f32 %v2267
  %vm2274 = vmor %vm2272, %vm2273
  %v2275 = vsel %vm2274, %v2267, %v2271
  %v2276 = vand.u32 2147483647, %v2266
  %vm2277 = vcmp.eq.f32.partialorder %v2276, 8.507059e+37
  %v2278 = vand.u32 %v2266, 2147483648
  %v2279 = vor.u32 1.1754944e-38, %v2278
  %v2280 = vsel %vm2277, %v2279, %v2275
  %v2281 = vmul.f32 1.0, %v2280
  %v2282 = vsel %vm314, %v2262, %v2281
  %v2283 = vmul.f32 %v2282, %v1512
  %2285 = vrot.lane.b32.xlu0 %v2282, 96
  %v2286 = vpop.permute.xlu0 %2285
  %v2288 = vmul.f32 %v2282, %v2286
  %2290 = vrot.lane.b32.xlu0 %v2288, 16
  %v2291 = vpop.permute.xlu0 %2290
  %v2293 = vadd.f32 %v2283, %v2291
  %v2294 = vtanh.pop %v2293
  %2296 = vrot.lane.b32.xlu0 %v2294, 32
  %v2297 = vpop.permute.xlu0 %2296
  %v2299 = vmul.f32 %v2282, %v2297
  %vm2300 = vcmp.eq.s32.totalorder %v317, 13
  %v2301 = vsel %vm2300, 1, 0
  %2302 = vset.pattern.permute.xlu0 0
  %2303 = vperm.xlu0 %2302, %v2301
  %v2304 = vpop.permute.xlu0 %2303
  %vm2305 = vcmp.eq.s32.totalorder %v2304, 1
  %v2306 = vsel %vm2305, %v2299, %v2180
  %s2307 = scalar_lea.vmem [#allocation2], 28
  %v2308 = vld [vmem:[%s2307] sm:$0x3]
  %2310 = vrot.lane.b32.xlu0 %v2246, 80
  %v2311 = vpop.permute.xlu0 %2310
  %v2312 = vsel %vm319, %v2311, 0
  %2314 = vmatpush.msra.mxu0 0.0
  %2315 = vmatpush.msra.mxu0 0.0
  %2316 = vmatpush.msra.mxu0 0.0
  %2317 = vmatpush.msra.mxu0 0.0
  %2318 = vmatpush.msra.mxu0 0.0
  %2319 = vmatpush.msra.mxu0 0.0
  %2320 = vmatpush.msra.mxu0 0.0
  %2321 = vmatpush.msra.mxu0 0.0
  %2322 = vmatpush.msra.mxu0 0.0
  %2323 = vmatpush.msra.mxu0 0.0
  %2324 = vmatpush.msra.mxu0 0.0
  %2325 = vmatpush.msra.mxu0 0.0
  %2326 = vmatpush.msra.mxu0 0.0
  %2327 = vmatpush.msra.mxu0 0.0
  %2328 = vmatpush.msra.mxu0 %v305
  %2329 = vmatpush.msra.mxu0 %v304
  %2330 = vmatmul.f32.gmra.mxu0 %v2312
  %v2331 = vpop.f32.mrf.mxu0
  %v2332 = vadd.f32 0.0, %v2331
  %2333 = vdwg.mxu0
  %v2334 = vadd.f32 %v2308, %v2332
  %v2335 = vtanh.pop %v2334
  %v2336 = vxor.u32 %v2334, 2147483648
  %v2337 = vmul.f32 %v2336, 1.442695
  %v2338 = vpow.pop %v2337
  %v2339 = vadd.f32 %v2338, 1.0
  %v2340 = vrcp.pop %v2339
  %v2341 = vmul.f32 %v2339, %v2340
  %v2342 = vsub.f32 1.0, %v2341
  %v2343 = vmul.f32 %v2340, %v2342
  %v2344 = vadd.f32 %v2340, %v2343
  %vm2345 = vweird.f32 %v2339
  %vm2346 = vweird.f32 %v2340
  %vm2347 = vmor %vm2345, %vm2346
  %v2348 = vsel %vm2347, %v2340, %v2344
  %v2349 = vand.u32 2147483647, %v2339
  %vm2350 = vcmp.eq.f32.partialorder %v2349, 8.507059e+37
  %v2351 = vand.u32 %v2339, 2147483648
  %v2352 = vor.u32 1.1754944e-38, %v2351
  %v2353 = vsel %vm2350, %v2352, %v2348
  %v2354 = vmul.f32 1.0, %v2353
  %v2355 = vsel %vm314, %v2335, %v2354
  %v2356 = vmul.f32 %v2355, %v2240
  %2358 = vrot.lane.b32.xlu0 %v2355, 96
  %v2359 = vpop.permute.xlu0 %2358
  %v2361 = vmul.f32 %v2355, %v2359
  %2363 = vrot.lane.b32.xlu0 %v2361, 16
  %v2364 = vpop.permute.xlu0 %2363
  %v2366 = vadd.f32 %v2356, %v2364
  %v2367 = vtanh.pop %v2366
  %2369 = vrot.lane.b32.xlu0 %v2367, 32
  %v2370 = vpop.permute.xlu0 %2369
  %v2372 = vmul.f32 %v2355, %v2370
  %vm2373 = vcmp.gt.s32.totalorder %v315, 14
  %v2374 = vsel %vm2373, 1, 0
  %2375 = vset.pattern.permute.xlu0 0
  %2376 = vperm.xlu0 %2375, %v2374
  %v2377 = vpop.permute.xlu0 %2376
  %vm2378 = vcmp.eq.s32.totalorder %v2377, 1
  %v2379 = vsel %vm2378, %v2372, 0.0
  %2381 = vrot.lane.b32.xlu0 %v2379, 80
  %v2382 = vpop.permute.xlu0 %2381
  %s2384 = scalar_lea.vmem [#allocation4], 28
  %2385 = vst.msk [vmem:[%s2384] sm:$0x3] %vm393, %v2382
  %v2386 = vld [vmem:[%s1453] sm:$0x3]
  %v2387 = vadd.f32 %v2386, %v1629
  %v2388 = vtanh.pop %v2387
  %v2389 = vxor.u32 %v2387, 2147483648
  %v2390 = vmul.f32 %v2389, 1.442695
  %v2391 = vpow.pop %v2390
  %v2392 = vadd.f32 %v2391, 1.0
  %v2393 = vrcp.pop %v2392
  %v2394 = vmul.f32 %v2392, %v2393
  %v2395 = vsub.f32 1.0, %v2394
  %v2396 = vmul.f32 %v2393, %v2395
  %v2397 = vadd.f32 %v2393, %v2396
  %vm2398 = vweird.f32 %v2392
  %vm2399 = vweird.f32 %v2393
  %vm2400 = vmor %vm2398, %vm2399
  %v2401 = vsel %vm2400, %v2393, %v2397
  %v2402 = vand.u32 2147483647, %v2392
  %vm2403 = vcmp.eq.f32.partialorder %v2402, 8.507059e+37
  %v2404 = vand.u32 %v2392, 2147483648
  %v2405 = vor.u32 1.1754944e-38, %v2404
  %v2406 = vsel %vm2403, %v2405, %v2401
  %v2407 = vmul.f32 1.0, %v2406
  %v2408 = vsel %vm314, %v2388, %v2407
  %v2409 = vmul.f32 %v2408, %v1512
  %2411 = vrot.lane.b32.xlu0 %v2408, 96
  %v2412 = vpop.permute.xlu0 %2411
  %v2414 = vmul.f32 %v2408, %v2412
  %2416 = vrot.lane.b32.xlu0 %v2414, 16
  %v2417 = vpop.permute.xlu0 %2416
  %v2419 = vadd.f32 %v2409, %v2417
  %v2420 = vtanh.pop %v2419
  %2422 = vrot.lane.b32.xlu0 %v2420, 32
  %v2423 = vpop.permute.xlu0 %2422
  %v2425 = vmul.f32 %v2408, %v2423
  %vm2426 = vcmp.eq.s32.totalorder %v317, 14
  %v2427 = vsel %vm2426, 1, 0
  %2428 = vset.pattern.permute.xlu0 0
  %2429 = vperm.xlu0 %2428, %v2427
  %v2430 = vpop.permute.xlu0 %2429
  %vm2431 = vcmp.eq.s32.totalorder %v2430, 1
  %v2432 = vsel %vm2431, %v2425, %v2306
  %s2433 = scalar_lea.vmem [#allocation2], 30
  %v2434 = vld [vmem:[%s2433] sm:$0x3]
  %2436 = vrot.lane.b32.xlu0 %v2372, 80
  %v2437 = vpop.permute.xlu0 %2436
  %v2438 = vsel %vm319, %v2437, 0
  %2440 = vmatpush.msra.mxu0 0.0
  %2441 = vmatpush.msra.mxu0 0.0
  %2442 = vmatpush.msra.mxu0 0.0
  %2443 = vmatpush.msra.mxu0 0.0
  %2444 = vmatpush.msra.mxu0 0.0
  %2445 = vmatpush.msra.mxu0 0.0
  %2446 = vmatpush.msra.mxu0 0.0
  %2447 = vmatpush.msra.mxu0 0.0
  %2448 = vmatpush.msra.mxu0 0.0
  %2449 = vmatpush.msra.mxu0 0.0
  %2450 = vmatpush.msra.mxu0 0.0
  %2451 = vmatpush.msra.mxu0 0.0
  %2452 = vmatpush.msra.mxu0 0.0
  %2453 = vmatpush.msra.mxu0 0.0
  %2454 = vmatpush.msra.mxu0 %v305
  %2455 = vmatpush.msra.mxu0 %v304
  %2456 = vmatmul.f32.gmra.mxu0 %v2438
  %v2457 = vpop.f32.mrf.mxu0
  %v2458 = vadd.f32 0.0, %v2457
  %2459 = vdwg.mxu0
  %v2460 = vadd.f32 %v2434, %v2458
  %v2461 = vtanh.pop %v2460
  %v2462 = vxor.u32 %v2460, 2147483648
  %v2463 = vmul.f32 %v2462, 1.442695
  %v2464 = vpow.pop %v2463
  %v2465 = vadd.f32 %v2464, 1.0
  %v2466 = vrcp.pop %v2465
  %v2467 = vmul.f32 %v2465, %v2466
  %v2468 = vsub.f32 1.0, %v2467
  %v2469 = vmul.f32 %v2466, %v2468
  %v2470 = vadd.f32 %v2466, %v2469
  %vm2471 = vweird.f32 %v2465
  %vm2472 = vweird.f32 %v2466
  %vm2473 = vmor %vm2471, %vm2472
  %v2474 = vsel %vm2473, %v2466, %v2470
  %v2475 = vand.u32 2147483647, %v2465
  %vm2476 = vcmp.eq.f32.partialorder %v2475, 8.507059e+37
  %v2477 = vand.u32 %v2465, 2147483648
  %v2478 = vor.u32 1.1754944e-38, %v2477
  %v2479 = vsel %vm2476, %v2478, %v2474
  %v2480 = vmul.f32 1.0, %v2479
  %v2481 = vsel %vm314, %v2461, %v2480
  %v2482 = vmul.f32 %v2481, %v2366
  %2484 = vrot.lane.b32.xlu0 %v2481, 96
  %v2485 = vpop.permute.xlu0 %2484
  %v2487 = vmul.f32 %v2481, %v2485
  %2489 = vrot.lane.b32.xlu0 %v2487, 16
  %v2490 = vpop.permute.xlu0 %2489
  %v2492 = vadd.f32 %v2482, %v2490
  %v2493 = vtanh.pop %v2492
  %2495 = vrot.lane.b32.xlu0 %v2493, 32
  %v2496 = vpop.permute.xlu0 %2495
  %v2498 = vmul.f32 %v2481, %v2496
  %vm2499 = vcmp.gt.s32.totalorder %v315, 15
  %v2500 = vsel %vm2499, 1, 0
  %2501 = vset.pattern.permute.xlu0 0
  %2502 = vperm.xlu0 %2501, %v2500
  %v2503 = vpop.permute.xlu0 %2502
  %vm2504 = vcmp.eq.s32.totalorder %v2503, 1
  %v2505 = vsel %vm2504, %v2498, 0.0
  %2507 = vrot.lane.b32.xlu0 %v2505, 80
  %v2508 = vpop.permute.xlu0 %2507
  %s2510 = scalar_lea.vmem [#allocation4], 30
  %2511 = vst.msk [vmem:[%s2510] sm:$0x3] %vm393, %v2508
  %v2512 = vld [vmem:[%s1453] sm:$0x3]
  %v2513 = vadd.f32 %v2512, %v1629
  %v2514 = vtanh.pop %v2513
  %v2515 = vxor.u32 %v2513, 2147483648
  %v2516 = vmul.f32 %v2515, 1.442695
  %v2517 = vpow.pop %v2516
  %v2518 = vadd.f32 %v2517, 1.0
  %v2519 = vrcp.pop %v2518
  %v2520 = vmul.f32 %v2518, %v2519
  %v2521 = vsub.f32 1.0, %v2520
  %v2522 = vmul.f32 %v2519, %v2521
  %v2523 = vadd.f32 %v2519, %v2522
  %vm2524 = vweird.f32 %v2518
  %vm2525 = vweird.f32 %v2519
  %vm2526 = vmor %vm2524, %vm2525
  %v2527 = vsel %vm2526, %v2519, %v2523
  %v2528 = vand.u32 2147483647, %v2518
  %vm2529 = vcmp.eq.f32.partialorder %v2528, 8.507059e+37
  %v2530 = vand.u32 %v2518, 2147483648
  %v2531 = vor.u32 1.1754944e-38, %v2530
  %v2532 = vsel %vm2529, %v2531, %v2527
  %v2533 = vmul.f32 1.0, %v2532
  %v2534 = vsel %vm314, %v2514, %v2533
  %v2535 = vmul.f32 %v2534, %v1512
  %2537 = vrot.lane.b32.xlu0 %v2534, 96
  %v2538 = vpop.permute.xlu0 %2537
  %v2540 = vmul.f32 %v2534, %v2538
  %2542 = vrot.lane.b32.xlu0 %v2540, 16
  %v2543 = vpop.permute.xlu0 %2542
  %v2545 = vadd.f32 %v2535, %v2543
  %v2546 = vtanh.pop %v2545
  %2548 = vrot.lane.b32.xlu0 %v2546, 32
  %v2549 = vpop.permute.xlu0 %2548
  %v2551 = vmul.f32 %v2534, %v2549
  %vm2552 = vcmp.eq.s32.totalorder %v317, 15
  %v2553 = vsel %vm2552, 1, 0
  %2554 = vset.pattern.permute.xlu0 0
  %2555 = vperm.xlu0 %2554, %v2553
  %v2556 = vpop.permute.xlu0 %2555
  %vm2557 = vcmp.eq.s32.totalorder %v2556, 1
  %v2558 = vsel %vm2557, %v2551, %v2432
  %v2559 = vld [vmem:[#allocation4] sm:$0x3]
  %v2560 = vld [vmem:[#allocation4 + $0x2] sm:$0x3]
  %v2561 = vld [vmem:[#allocation4 + $0x4] sm:$0x3]
  %v2562 = vld [vmem:[#allocation4 + $0x6] sm:$0x3]
  %v2563 = vld [vmem:[#allocation4 + $0x8] sm:$0x3]
  %v2564 = vld [vmem:[#allocation4 + $0xa] sm:$0x3]
  %v2565 = vld [vmem:[#allocation4 + $0xc] sm:$0x3]
  %v2566 = vld [vmem:[#allocation4 + $0xe] sm:$0x3]
  %v2567 = vld [vmem:[#allocation4 + $0x10] sm:$0x3]
  %v2568 = vld [vmem:[#allocation4 + $0x12] sm:$0x3]
  %v2569 = vld [vmem:[#allocation4 + $0x14] sm:$0x3]
  %v2570 = vld [vmem:[#allocation4 + $0x16] sm:$0x3]
  %v2571 = vld [vmem:[#allocation4 + $0x18] sm:$0x3]
  %v2572 = vld [vmem:[#allocation4 + $0x1a] sm:$0x3]
  %v2573 = vld [vmem:[#allocation4 + $0x1c] sm:$0x3]
  %v2574 = vld [vmem:[#allocation4 + $0x1e] sm:$0x3]
  %v2575 = vld [vmem:[%s11] sm:$0xff]
  %v2576 = vld [vmem:[%s11 + $0x8] sm:$0xff]
  %v2577 = vld [vmem:[%s14] sm:$0x1]
  %v2579 = vperm.slane %v2577, 0
  %2582 = vrot.lane.b32.xlu0 %v2558, 80
  %v2583 = vpop.permute.xlu0 %2582
  %v2584 = vsel %vm319, %v2583, 0
  %2586 = vmatpush.msra.mxu0 0.0
  %2587 = vmatpush.msra.mxu0 0.0
  %2588 = vmatpush.msra.mxu0 0.0
  %2589 = vmatpush.msra.mxu0 0.0
  %2590 = vmatpush.msra.mxu0 0.0
  %2591 = vmatpush.msra.mxu0 0.0
  %2592 = vmatpush.msra.mxu0 0.0
  %2593 = vmatpush.msra.mxu0 0.0
  %2594 = vmatpush.msra.mxu0 0.0
  %2595 = vmatpush.msra.mxu0 0.0
  %2596 = vmatpush.msra.mxu0 0.0
  %2597 = vmatpush.msra.mxu0 0.0
  %2598 = vmatpush.msra.mxu0 0.0
  %2599 = vmatpush.msra.mxu0 0.0
  %2600 = vmatpush.msra.mxu0 %v2576
  %2601 = vmatpush.msra.mxu0 %v2575
  %2602 = vmatmul.f32.gmra.mxu0 %v2584
  %v2603 = vpop.f32.mrf.mxu0
  %v2604 = vadd.f32 %v2579, %v2603
  %2605 = vdwg.mxu0
  %v2606 = vld [vmem:[%s12] sm:$0xff]
  %v2607 = vld [vmem:[%s12 + $0x8] sm:$0xff]
  %2624 = vst [vmem:[#allocation1] ss:$4 sm:$0xff] %v2559
  %s2625 = scalar_lea.vmem [#allocation1], 1
  %2626 = vst [vmem:[%s2625] ss:$4 sm:$0xff] %v2560
  %s2627 = scalar_lea.vmem [#allocation1], 2
  %2628 = vst [vmem:[%s2627] ss:$4 sm:$0xff] %v2561
  %s2629 = scalar_lea.vmem [#allocation1], 3
  %2630 = vst [vmem:[%s2629] ss:$4 sm:$0xff] %v2562
  %s2631 = scalar_lea.vmem [#allocation1], 32
  %2632 = vst [vmem:[%s2631] ss:$4 sm:$0xff] %v2563
  %s2633 = scalar_lea.vmem [#allocation1], 33
  %2634 = vst [vmem:[%s2633] ss:$4 sm:$0xff] %v2564
  %s2635 = scalar_lea.vmem [#allocation1], 34
  %2636 = vst [vmem:[%s2635] ss:$4 sm:$0xff] %v2565
  %s2637 = scalar_lea.vmem [#allocation1], 35
  %2638 = vst [vmem:[%s2637] ss:$4 sm:$0xff] %v2566
  %v2639 = vld.sshfl [vmem:[#allocation1] sm:$0xff pattern:$0x73625140]
  %v2640 = vld.sshfl [vmem:[#allocation1 + $0x20] sm:$0xff pattern:$0x73625140]
  %2641 = vst [vmem:[#allocation1] ss:$4 sm:$0xff] %v2567
  %2642 = vst [vmem:[%s2625] ss:$4 sm:$0xff] %v2568
  %2643 = vst [vmem:[%s2627] ss:$4 sm:$0xff] %v2569
  %2644 = vst [vmem:[%s2629] ss:$4 sm:$0xff] %v2570
  %2645 = vst [vmem:[%s2631] ss:$4 sm:$0xff] %v2571
  %2646 = vst [vmem:[%s2633] ss:$4 sm:$0xff] %v2572
  %2647 = vst [vmem:[%s2635] ss:$4 sm:$0xff] %v2573
  %2648 = vst [vmem:[%s2637] ss:$4 sm:$0xff] %v2574
  %v2649 = vld.sshfl [vmem:[#allocation1] sm:$0xff pattern:$0x73625140]
  %v2650 = vld.sshfl [vmem:[#allocation1 + $0x20] sm:$0xff pattern:$0x73625140]
  %v2651 = vsel %vm319, %v2639, 0
  %v2653 = vsel %vm319, %v2640, 0
  %v2655 = vsel %vm319, %v2649, 0
  %v2657 = vsel %vm319, %v2650, 0
  %2659 = vmatpush.msra.mxu0 0.0
  %2660 = vmatpush.msra.mxu0 0.0
  %2661 = vmatpush.msra.mxu0 0.0
  %2662 = vmatpush.msra.mxu0 0.0
  %2663 = vmatpush.msra.mxu0 0.0
  %2664 = vmatpush.msra.mxu0 0.0
  %2665 = vmatpush.msra.mxu0 0.0
  %2666 = vmatpush.msra.mxu0 0.0
  %2667 = vmatpush.msra.mxu0 0.0
  %2668 = vmatpush.msra.mxu0 0.0
  %2669 = vmatpush.msra.mxu0 0.0
  %2670 = vmatpush.msra.mxu0 0.0
  %2671 = vmatpush.msra.mxu0 0.0
  %2672 = vmatpush.msra.mxu0 0.0
  %2673 = vmatpush.msra.mxu0 %v2607
  %2674 = vmatpush.msra.mxu0 %v2606
  %2675 = vmatmul.f32.gmra.mxu0 %v2651
  %v2676 = vpop.f32.mrf.mxu0
  %v2677 = vadd.f32 0.0, %v2676
  %2678 = vmatmul.f32.gmra.mxu0 %v2653
  %v2679 = vpop.f32.mrf.mxu0
  %v2680 = vadd.f32 0.0, %v2679
  %2681 = vmatmul.f32.gmra.mxu0 %v2655
  %v2682 = vpop.f32.mrf.mxu0
  %v2683 = vadd.f32 0.0, %v2682
  %2684 = vmatmul.f32.gmra.mxu0 %v2657
  %v2685 = vpop.f32.mrf.mxu0
  %v2686 = vadd.f32 0.0, %v2685
  %2687 = vdwg.mxu0
  %v2692 = vrot.slane %v2677, 2
  %v2693 = vrot.slane %v2677, 4
  %v2694 = vrot.slane %v2677, 6
  %v2695 = vrot.slane %v2680, 2
  %v2696 = vrot.slane %v2680, 4
  %v2697 = vrot.slane %v2680, 6
  %v2698 = vrot.slane %v2683, 2
  %v2699 = vrot.slane %v2683, 4
  %v2700 = vrot.slane %v2683, 6
  %v2701 = vrot.slane %v2686, 2
  %v2702 = vrot.slane %v2686, 4
  %v2703 = vrot.slane %v2686, 6
  %v2716 = vadd.f32 %v2677, %v2604
  %v2717 = vadd.f32 %v2692, %v2604
  %v2718 = vadd.f32 %v2693, %v2604
  %v2719 = vadd.f32 %v2694, %v2604
  %v2720 = vadd.f32 %v2680, %v2604
  %v2721 = vadd.f32 %v2695, %v2604
  %v2722 = vadd.f32 %v2696, %v2604
  %v2723 = vadd.f32 %v2697, %v2604
  %v2724 = vadd.f32 %v2683, %v2604
  %v2725 = vadd.f32 %v2698, %v2604
  %v2726 = vadd.f32 %v2699, %v2604
  %v2727 = vadd.f32 %v2700, %v2604
  %v2728 = vadd.f32 %v2686, %v2604
  %v2729 = vadd.f32 %v2701, %v2604
  %v2730 = vadd.f32 %v2702, %v2604
  %v2731 = vadd.f32 %v2703, %v2604
  %2732 = vst.msk [vmem:[#allocation5] sm:$0x3] %vm197, %v2716
  %2733 = vst.msk [vmem:[#allocation5 + $0x2] sm:$0x3] %vm197, %v2717
  %2734 = vst.msk [vmem:[#allocation5 + $0x4] sm:$0x3] %vm197, %v2718
  %2735 = vst.msk [vmem:[#allocation5 + $0x6] sm:$0x3] %vm197, %v2719
  %2736 = vst.msk [vmem:[#allocation5 + $0x8] sm:$0x3] %vm197, %v2720
  %2737 = vst.msk [vmem:[#allocation5 + $0xa] sm:$0x3] %vm197, %v2721
  %2738 = vst.msk [vmem:[#allocation5 + $0xc] sm:$0x3] %vm197, %v2722
  %2739 = vst.msk [vmem:[#allocation5 + $0xe] sm:$0x3] %vm197, %v2723
  %2740 = vst.msk [vmem:[#allocation5 + $0x10] sm:$0x3] %vm197, %v2724
  %2741 = vst.msk [vmem:[#allocation5 + $0x12] sm:$0x3] %vm197, %v2725
  %2742 = vst.msk [vmem:[#allocation5 + $0x14] sm:$0x3] %vm197, %v2726
  %2743 = vst.msk [vmem:[#allocation5 + $0x16] sm:$0x3] %vm197, %v2727
  %2744 = vst.msk [vmem:[#allocation5 + $0x18] sm:$0x3] %vm197, %v2728
  %2745 = vst.msk [vmem:[#allocation5 + $0x1a] sm:$0x3] %vm197, %v2729
  %2746 = vst.msk [vmem:[#allocation5 + $0x1c] sm:$0x3] %vm197, %v2730
  %2747 = vst.msk [vmem:[#allocation5 + $0x1e] sm:$0x3] %vm197, %v2731
  %v2748 = vld [vmem:[#allocation5] sm:$0x3]
  %2749 = vmatpush.msra.mxu0 0.0
  %2750 = vmatpush.msra.mxu0 0.0
  %2751 = vmatpush.msra.mxu0 0.0
  %2752 = vmatpush.msra.mxu0 0.0
  %2753 = vmatpush.msra.mxu0 0.0
  %2754 = vmatpush.msra.mxu0 0.0
  %2755 = vmatpush.msra.mxu0 0.0
  %2756 = vmatpush.msra.mxu0 0.0
  %2757 = vmatpush.msra.mxu0 0.0
  %2758 = vmatpush.msra.mxu0 0.0
  %2759 = vmatpush.msra.mxu0 0.0
  %2760 = vmatpush.msra.mxu0 0.0
  %2761 = vmatpush.msra.mxu0 0.0
  %2762 = vmatpush.msra.mxu0 0.0
  %2763 = vmatpush.msra.mxu0 %v309
  %2764 = vmatpush.msra.mxu0 %v308
  %2765 = vmatmul.f32.gmra.mxu0 %v321
  %v2766 = vpop.f32.mrf.mxu0
  %v2767 = vadd.f32 0.0, %v2766
  %2768 = vdwg.mxu0
  %v2769 = vadd.f32 %v2748, %v2767
  %v2770 = vtanh.pop %v2769
  %v2771 = vxor.u32 %v2769, 2147483648
  %v2772 = vmul.f32 %v2771, 1.442695
  %v2773 = vpow.pop %v2772
  %v2774 = vadd.f32 %v2773, 1.0
  %v2775 = vrcp.pop %v2774
  %v2776 = vmul.f32 %v2774, %v2775
  %v2777 = vsub.f32 1.0, %v2776
  %v2778 = vmul.f32 %v2775, %v2777
  %v2779 = vadd.f32 %v2775, %v2778
  %vm2780 = vweird.f32 %v2774
  %vm2781 = vweird.f32 %v2775
  %vm2782 = vmor %vm2780, %vm2781
  %v2783 = vsel %vm2782, %v2775, %v2779
  %v2784 = vand.u32 2147483647, %v2774
  %vm2785 = vcmp.eq.f32.partialorder %v2784, 8.507059e+37
  %v2786 = vand.u32 %v2774, 2147483648
  %v2787 = vor.u32 1.1754944e-38, %v2786
  %v2788 = vsel %vm2785, %v2787, %v2783
  %v2789 = vmul.f32 1.0, %v2788
  %v2790 = vsel %vm314, %v2770, %v2789
  %v2791 = vmul.f32 %v2790, 0.0
  %2793 = vrot.lane.b32.xlu0 %v2790, 96
  %v2794 = vpop.permute.xlu0 %2793
  %v2796 = vmul.f32 %v2790, %v2794
  %2798 = vrot.lane.b32.xlu0 %v2796, 16
  %v2799 = vpop.permute.xlu0 %2798
  %v2801 = vadd.f32 %v2791, %v2799
  %v2802 = vtanh.pop %v2801
  %2804 = vrot.lane.b32.xlu0 %v2802, 32
  %v2805 = vpop.permute.xlu0 %2804
  %v2807 = vmul.f32 %v2790, %v2805
  %2809 = vrot.lane.b32.xlu0 %v2807, 80
  %v2810 = vpop.permute.xlu0 %2809
  %2812 = vst.msk [vmem:[#allocation6] sm:$0x3] %vm393, %v2810
  %s2813 = scalar_lea.vmem [#allocation5], 2
  %v2814 = vld [vmem:[%s2813] sm:$0x3]
  %v2815 = vsel %vm319, %v2810, 0
  %2817 = vmatpush.msra.mxu0 0.0
  %2818 = vmatpush.msra.mxu0 0.0
  %2819 = vmatpush.msra.mxu0 0.0
  %2820 = vmatpush.msra.mxu0 0.0
  %2821 = vmatpush.msra.mxu0 0.0
  %2822 = vmatpush.msra.mxu0 0.0
  %2823 = vmatpush.msra.mxu0 0.0
  %2824 = vmatpush.msra.mxu0 0.0
  %2825 = vmatpush.msra.mxu0 0.0
  %2826 = vmatpush.msra.mxu0 0.0
  %2827 = vmatpush.msra.mxu0 0.0
  %2828 = vmatpush.msra.mxu0 0.0
  %2829 = vmatpush.msra.mxu0 0.0
  %2830 = vmatpush.msra.mxu0 0.0
  %2831 = vmatpush.msra.mxu0 %v309
  %2832 = vmatpush.msra.mxu0 %v308
  %2833 = vmatmul.f32.gmra.mxu0 %v2815
  %v2834 = vpop.f32.mrf.mxu0
  %v2835 = vadd.f32 0.0, %v2834
  %2836 = vdwg.mxu0
  %v2837 = vadd.f32 %v2814, %v2835
  %v2838 = vtanh.pop %v2837
  %v2839 = vxor.u32 %v2837, 2147483648
  %v2840 = vmul.f32 %v2839, 1.442695
  %v2841 = vpow.pop %v2840
  %v2842 = vadd.f32 %v2841, 1.0
  %v2843 = vrcp.pop %v2842
  %v2844 = vmul.f32 %v2842, %v2843
  %v2845 = vsub.f32 1.0, %v2844
  %v2846 = vmul.f32 %v2843, %v2845
  %v2847 = vadd.f32 %v2843, %v2846
  %vm2848 = vweird.f32 %v2842
  %vm2849 = vweird.f32 %v2843
  %vm2850 = vmor %vm2848, %vm2849
  %v2851 = vsel %vm2850, %v2843, %v2847
  %v2852 = vand.u32 2147483647, %v2842
  %vm2853 = vcmp.eq.f32.partialorder %v2852, 8.507059e+37
  %v2854 = vand.u32 %v2842, 2147483648
  %v2855 = vor.u32 1.1754944e-38, %v2854
  %v2856 = vsel %vm2853, %v2855, %v2851
  %v2857 = vmul.f32 1.0, %v2856
  %v2858 = vsel %vm314, %v2838, %v2857
  %v2859 = vmul.f32 %v2858, %v2801
  %2861 = vrot.lane.b32.xlu0 %v2858, 96
  %v2862 = vpop.permute.xlu0 %2861
  %v2864 = vmul.f32 %v2858, %v2862
  %2866 = vrot.lane.b32.xlu0 %v2864, 16
  %v2867 = vpop.permute.xlu0 %2866
  %v2869 = vadd.f32 %v2859, %v2867
  %v2870 = vtanh.pop %v2869
  %2872 = vrot.lane.b32.xlu0 %v2870, 32
  %v2873 = vpop.permute.xlu0 %2872
  %v2875 = vmul.f32 %v2858, %v2873
  %2877 = vrot.lane.b32.xlu0 %v2875, 80
  %v2878 = vpop.permute.xlu0 %2877
  %s2880 = scalar_lea.vmem [#allocation6], 2
  %2881 = vst.msk [vmem:[%s2880] sm:$0x3] %vm393, %v2878
  %s2882 = scalar_lea.vmem [#allocation5], 4
  %v2883 = vld [vmem:[%s2882] sm:$0x3]
  %v2884 = vsel %vm319, %v2878, 0
  %2886 = vmatpush.msra.mxu0 0.0
  %2887 = vmatpush.msra.mxu0 0.0
  %2888 = vmatpush.msra.mxu0 0.0
  %2889 = vmatpush.msra.mxu0 0.0
  %2890 = vmatpush.msra.mxu0 0.0
  %2891 = vmatpush.msra.mxu0 0.0
  %2892 = vmatpush.msra.mxu0 0.0
  %2893 = vmatpush.msra.mxu0 0.0
  %2894 = vmatpush.msra.mxu0 0.0
  %2895 = vmatpush.msra.mxu0 0.0
  %2896 = vmatpush.msra.mxu0 0.0
  %2897 = vmatpush.msra.mxu0 0.0
  %2898 = vmatpush.msra.mxu0 0.0
  %2899 = vmatpush.msra.mxu0 0.0
  %2900 = vmatpush.msra.mxu0 %v309
  %2901 = vmatpush.msra.mxu0 %v308
  %2902 = vmatmul.f32.gmra.mxu0 %v2884
  %v2903 = vpop.f32.mrf.mxu0
  %v2904 = vadd.f32 0.0, %v2903
  %2905 = vdwg.mxu0
  %v2906 = vadd.f32 %v2883, %v2904
  %v2907 = vtanh.pop %v2906
  %v2908 = vxor.u32 %v2906, 2147483648
  %v2909 = vmul.f32 %v2908, 1.442695
  %v2910 = vpow.pop %v2909
  %v2911 = vadd.f32 %v2910, 1.0
  %v2912 = vrcp.pop %v2911
  %v2913 = vmul.f32 %v2911, %v2912
  %v2914 = vsub.f32 1.0, %v2913
  %v2915 = vmul.f32 %v2912, %v2914
  %v2916 = vadd.f32 %v2912, %v2915
  %vm2917 = vweird.f32 %v2911
  %vm2918 = vweird.f32 %v2912
  %vm2919 = vmor %vm2917, %vm2918
  %v2920 = vsel %vm2919, %v2912, %v2916
  %v2921 = vand.u32 2147483647, %v2911
  %vm2922 = vcmp.eq.f32.partialorder %v2921, 8.507059e+37
  %v2923 = vand.u32 %v2911, 2147483648
  %v2924 = vor.u32 1.1754944e-38, %v2923
  %v2925 = vsel %vm2922, %v2924, %v2920
  %v2926 = vmul.f32 1.0, %v2925
  %v2927 = vsel %vm314, %v2907, %v2926
  %v2928 = vmul.f32 %v2927, %v2869
  %2930 = vrot.lane.b32.xlu0 %v2927, 96
  %v2931 = vpop.permute.xlu0 %2930
  %v2933 = vmul.f32 %v2927, %v2931
  %2935 = vrot.lane.b32.xlu0 %v2933, 16
  %v2936 = vpop.permute.xlu0 %2935
  %v2938 = vadd.f32 %v2928, %v2936
  %v2939 = vtanh.pop %v2938
  %2941 = vrot.lane.b32.xlu0 %v2939, 32
  %v2942 = vpop.permute.xlu0 %2941
  %v2944 = vmul.f32 %v2927, %v2942
  %2946 = vrot.lane.b32.xlu0 %v2944, 80
  %v2947 = vpop.permute.xlu0 %2946
  %s2949 = scalar_lea.vmem [#allocation6], 4
  %2950 = vst.msk [vmem:[%s2949] sm:$0x3] %vm393, %v2947
  %s2951 = scalar_lea.vmem [#allocation5], 6
  %v2952 = vld [vmem:[%s2951] sm:$0x3]
  %v2953 = vsel %vm319, %v2947, 0
  %2955 = vmatpush.msra.mxu0 0.0
  %2956 = vmatpush.msra.mxu0 0.0
  %2957 = vmatpush.msra.mxu0 0.0
  %2958 = vmatpush.msra.mxu0 0.0
  %2959 = vmatpush.msra.mxu0 0.0
  %2960 = vmatpush.msra.mxu0 0.0
  %2961 = vmatpush.msra.mxu0 0.0
  %2962 = vmatpush.msra.mxu0 0.0
  %2963 = vmatpush.msra.mxu0 0.0
  %2964 = vmatpush.msra.mxu0 0.0
  %2965 = vmatpush.msra.mxu0 0.0
  %2966 = vmatpush.msra.mxu0 0.0
  %2967 = vmatpush.msra.mxu0 0.0
  %2968 = vmatpush.msra.mxu0 0.0
  %2969 = vmatpush.msra.mxu0 %v309
  %2970 = vmatpush.msra.mxu0 %v308
  %2971 = vmatmul.f32.gmra.mxu0 %v2953
  %v2972 = vpop.f32.mrf.mxu0
  %v2973 = vadd.f32 0.0, %v2972
  %2974 = vdwg.mxu0
  %v2975 = vadd.f32 %v2952, %v2973
  %v2976 = vtanh.pop %v2975
  %v2977 = vxor.u32 %v2975, 2147483648
  %v2978 = vmul.f32 %v2977, 1.442695
  %v2979 = vpow.pop %v2978
  %v2980 = vadd.f32 %v2979, 1.0
  %v2981 = vrcp.pop %v2980
  %v2982 = vmul.f32 %v2980, %v2981
  %v2983 = vsub.f32 1.0, %v2982
  %v2984 = vmul.f32 %v2981, %v2983
  %v2985 = vadd.f32 %v2981, %v2984
  %vm2986 = vweird.f32 %v2980
  %vm2987 = vweird.f32 %v2981
  %vm2988 = vmor %vm2986, %vm2987
  %v2989 = vsel %vm2988, %v2981, %v2985
  %v2990 = vand.u32 2147483647, %v2980
  %vm2991 = vcmp.eq.f32.partialorder %v2990, 8.507059e+37
  %v2992 = vand.u32 %v2980, 2147483648
  %v2993 = vor.u32 1.1754944e-38, %v2992
  %v2994 = vsel %vm2991, %v2993, %v2989
  %v2995 = vmul.f32 1.0, %v2994
  %v2996 = vsel %vm314, %v2976, %v2995
  %v2997 = vmul.f32 %v2996, %v2938
  %2999 = vrot.lane.b32.xlu0 %v2996, 96
  %v3000 = vpop.permute.xlu0 %2999
  %v3002 = vmul.f32 %v2996, %v3000
  %3004 = vrot.lane.b32.xlu0 %v3002, 16
  %v3005 = vpop.permute.xlu0 %3004
  %v3007 = vadd.f32 %v2997, %v3005
  %v3008 = vtanh.pop %v3007
  %3010 = vrot.lane.b32.xlu0 %v3008, 32
  %v3011 = vpop.permute.xlu0 %3010
  %v3013 = vmul.f32 %v2996, %v3011
  %3015 = vrot.lane.b32.xlu0 %v3013, 80
  %v3016 = vpop.permute.xlu0 %3015
  %s3018 = scalar_lea.vmem [#allocation6], 6
  %3019 = vst.msk [vmem:[%s3018] sm:$0x3] %vm393, %v3016
  %s3020 = scalar_lea.vmem [#allocation5], 8
  %v3021 = vld [vmem:[%s3020] sm:$0x3]
  %v3022 = vsel %vm319, %v3016, 0
  %3024 = vmatpush.msra.mxu0 0.0
  %3025 = vmatpush.msra.mxu0 0.0
  %3026 = vmatpush.msra.mxu0 0.0
  %3027 = vmatpush.msra.mxu0 0.0
  %3028 = vmatpush.msra.mxu0 0.0
  %3029 = vmatpush.msra.mxu0 0.0
  %3030 = vmatpush.msra.mxu0 0.0
  %3031 = vmatpush.msra.mxu0 0.0
  %3032 = vmatpush.msra.mxu0 0.0
  %3033 = vmatpush.msra.mxu0 0.0
  %3034 = vmatpush.msra.mxu0 0.0
  %3035 = vmatpush.msra.mxu0 0.0
  %3036 = vmatpush.msra.mxu0 0.0
  %3037 = vmatpush.msra.mxu0 0.0
  %3038 = vmatpush.msra.mxu0 %v309
  %3039 = vmatpush.msra.mxu0 %v308
  %3040 = vmatmul.f32.gmra.mxu0 %v3022
  %v3041 = vpop.f32.mrf.mxu0
  %v3042 = vadd.f32 0.0, %v3041
  %3043 = vdwg.mxu0
  %v3044 = vadd.f32 %v3021, %v3042
  %v3045 = vtanh.pop %v3044
  %v3046 = vxor.u32 %v3044, 2147483648
  %v3047 = vmul.f32 %v3046, 1.442695
  %v3048 = vpow.pop %v3047
  %v3049 = vadd.f32 %v3048, 1.0
  %v3050 = vrcp.pop %v3049
  %v3051 = vmul.f32 %v3049, %v3050
  %v3052 = vsub.f32 1.0, %v3051
  %v3053 = vmul.f32 %v3050, %v3052
  %v3054 = vadd.f32 %v3050, %v3053
  %vm3055 = vweird.f32 %v3049
  %vm3056 = vweird.f32 %v3050
  %vm3057 = vmor %vm3055, %vm3056
  %v3058 = vsel %vm3057, %v3050, %v3054
  %v3059 = vand.u32 2147483647, %v3049
  %vm3060 = vcmp.eq.f32.partialorder %v3059, 8.507059e+37
  %v3061 = vand.u32 %v3049, 2147483648
  %v3062 = vor.u32 1.1754944e-38, %v3061
  %v3063 = vsel %vm3060, %v3062, %v3058
  %v3064 = vmul.f32 1.0, %v3063
  %v3065 = vsel %vm314, %v3045, %v3064
  %v3066 = vmul.f32 %v3065, %v3007
  %3068 = vrot.lane.b32.xlu0 %v3065, 96
  %v3069 = vpop.permute.xlu0 %3068
  %v3071 = vmul.f32 %v3065, %v3069
  %3073 = vrot.lane.b32.xlu0 %v3071, 16
  %v3074 = vpop.permute.xlu0 %3073
  %v3076 = vadd.f32 %v3066, %v3074
  %v3077 = vtanh.pop %v3076
  %3079 = vrot.lane.b32.xlu0 %v3077, 32
  %v3080 = vpop.permute.xlu0 %3079
  %v3082 = vmul.f32 %v3065, %v3080
  %3084 = vrot.lane.b32.xlu0 %v3082, 80
  %v3085 = vpop.permute.xlu0 %3084
  %s3087 = scalar_lea.vmem [#allocation6], 8
  %3088 = vst.msk [vmem:[%s3087] sm:$0x3] %vm393, %v3085
  %s3089 = scalar_lea.vmem [#allocation5], 10
  %v3090 = vld [vmem:[%s3089] sm:$0x3]
  %v3091 = vsel %vm319, %v3085, 0
  %3093 = vmatpush.msra.mxu0 0.0
  %3094 = vmatpush.msra.mxu0 0.0
  %3095 = vmatpush.msra.mxu0 0.0
  %3096 = vmatpush.msra.mxu0 0.0
  %3097 = vmatpush.msra.mxu0 0.0
  %3098 = vmatpush.msra.mxu0 0.0
  %3099 = vmatpush.msra.mxu0 0.0
  %3100 = vmatpush.msra.mxu0 0.0
  %3101 = vmatpush.msra.mxu0 0.0
  %3102 = vmatpush.msra.mxu0 0.0
  %3103 = vmatpush.msra.mxu0 0.0
  %3104 = vmatpush.msra.mxu0 0.0
  %3105 = vmatpush.msra.mxu0 0.0
  %3106 = vmatpush.msra.mxu0 0.0
  %3107 = vmatpush.msra.mxu0 %v309
  %3108 = vmatpush.msra.mxu0 %v308
  %3109 = vmatmul.f32.gmra.mxu0 %v3091
  %v3110 = vpop.f32.mrf.mxu0
  %v3111 = vadd.f32 0.0, %v3110
  %3112 = vdwg.mxu0
  %v3113 = vadd.f32 %v3090, %v3111
  %v3114 = vtanh.pop %v3113
  %v3115 = vxor.u32 %v3113, 2147483648
  %v3116 = vmul.f32 %v3115, 1.442695
  %v3117 = vpow.pop %v3116
  %v3118 = vadd.f32 %v3117, 1.0
  %v3119 = vrcp.pop %v3118
  %v3120 = vmul.f32 %v3118, %v3119
  %v3121 = vsub.f32 1.0, %v3120
  %v3122 = vmul.f32 %v3119, %v3121
  %v3123 = vadd.f32 %v3119, %v3122
  %vm3124 = vweird.f32 %v3118
  %vm3125 = vweird.f32 %v3119
  %vm3126 = vmor %vm3124, %vm3125
  %v3127 = vsel %vm3126, %v3119, %v3123
  %v3128 = vand.u32 2147483647, %v3118
  %vm3129 = vcmp.eq.f32.partialorder %v3128, 8.507059e+37
  %v3130 = vand.u32 %v3118, 2147483648
  %v3131 = vor.u32 1.1754944e-38, %v3130
  %v3132 = vsel %vm3129, %v3131, %v3127
  %v3133 = vmul.f32 1.0, %v3132
  %v3134 = vsel %vm314, %v3114, %v3133
  %v3135 = vmul.f32 %v3134, %v3076
  %3137 = vrot.lane.b32.xlu0 %v3134, 96
  %v3138 = vpop.permute.xlu0 %3137
  %v3140 = vmul.f32 %v3134, %v3138
  %3142 = vrot.lane.b32.xlu0 %v3140, 16
  %v3143 = vpop.permute.xlu0 %3142
  %v3145 = vadd.f32 %v3135, %v3143
  %v3146 = vtanh.pop %v3145
  %3148 = vrot.lane.b32.xlu0 %v3146, 32
  %v3149 = vpop.permute.xlu0 %3148
  %v3151 = vmul.f32 %v3134, %v3149
  %3153 = vrot.lane.b32.xlu0 %v3151, 80
  %v3154 = vpop.permute.xlu0 %3153
  %s3156 = scalar_lea.vmem [#allocation6], 10
  %3157 = vst.msk [vmem:[%s3156] sm:$0x3] %vm393, %v3154
  %s3158 = scalar_lea.vmem [#allocation5], 12
  %v3159 = vld [vmem:[%s3158] sm:$0x3]
  %v3160 = vsel %vm319, %v3154, 0
  %3162 = vmatpush.msra.mxu0 0.0
  %3163 = vmatpush.msra.mxu0 0.0
  %3164 = vmatpush.msra.mxu0 0.0
  %3165 = vmatpush.msra.mxu0 0.0
  %3166 = vmatpush.msra.mxu0 0.0
  %3167 = vmatpush.msra.mxu0 0.0
  %3168 = vmatpush.msra.mxu0 0.0
  %3169 = vmatpush.msra.mxu0 0.0
  %3170 = vmatpush.msra.mxu0 0.0
  %3171 = vmatpush.msra.mxu0 0.0
  %3172 = vmatpush.msra.mxu0 0.0
  %3173 = vmatpush.msra.mxu0 0.0
  %3174 = vmatpush.msra.mxu0 0.0
  %3175 = vmatpush.msra.mxu0 0.0
  %3176 = vmatpush.msra.mxu0 %v309
  %3177 = vmatpush.msra.mxu0 %v308
  %3178 = vmatmul.f32.gmra.mxu0 %v3160
  %v3179 = vpop.f32.mrf.mxu0
  %v3180 = vadd.f32 0.0, %v3179
  %3181 = vdwg.mxu0
  %v3182 = vadd.f32 %v3159, %v3180
  %v3183 = vtanh.pop %v3182
  %v3184 = vxor.u32 %v3182, 2147483648
  %v3185 = vmul.f32 %v3184, 1.442695
  %v3186 = vpow.pop %v3185
  %v3187 = vadd.f32 %v3186, 1.0
  %v3188 = vrcp.pop %v3187
  %v3189 = vmul.f32 %v3187, %v3188
  %v3190 = vsub.f32 1.0, %v3189
  %v3191 = vmul.f32 %v3188, %v3190
  %v3192 = vadd.f32 %v3188, %v3191
  %vm3193 = vweird.f32 %v3187
  %vm3194 = vweird.f32 %v3188
  %vm3195 = vmor %vm3193, %vm3194
  %v3196 = vsel %vm3195, %v3188, %v3192
  %v3197 = vand.u32 2147483647, %v3187
  %vm3198 = vcmp.eq.f32.partialorder %v3197, 8.507059e+37
  %v3199 = vand.u32 %v3187, 2147483648
  %v3200 = vor.u32 1.1754944e-38, %v3199
  %v3201 = vsel %vm3198, %v3200, %v3196
  %v3202 = vmul.f32 1.0, %v3201
  %v3203 = vsel %vm314, %v3183, %v3202
  %v3204 = vmul.f32 %v3203, %v3145
  %3206 = vrot.lane.b32.xlu0 %v3203, 96
  %v3207 = vpop.permute.xlu0 %3206
  %v3209 = vmul.f32 %v3203, %v3207
  %3211 = vrot.lane.b32.xlu0 %v3209, 16
  %v3212 = vpop.permute.xlu0 %3211
  %v3214 = vadd.f32 %v3204, %v3212
  %v3215 = vtanh.pop %v3214
  %3217 = vrot.lane.b32.xlu0 %v3215, 32
  %v3218 = vpop.permute.xlu0 %3217
  %v3220 = vmul.f32 %v3203, %v3218
  %3222 = vrot.lane.b32.xlu0 %v3220, 80
  %v3223 = vpop.permute.xlu0 %3222
  %s3225 = scalar_lea.vmem [#allocation6], 12
  %3226 = vst.msk [vmem:[%s3225] sm:$0x3] %vm393, %v3223
  %s3227 = scalar_lea.vmem [#allocation5], 14
  %v3228 = vld [vmem:[%s3227] sm:$0x3]
  %v3229 = vsel %vm319, %v3223, 0
  %3231 = vmatpush.msra.mxu0 0.0
  %3232 = vmatpush.msra.mxu0 0.0
  %3233 = vmatpush.msra.mxu0 0.0
  %3234 = vmatpush.msra.mxu0 0.0
  %3235 = vmatpush.msra.mxu0 0.0
  %3236 = vmatpush.msra.mxu0 0.0
  %3237 = vmatpush.msra.mxu0 0.0
  %3238 = vmatpush.msra.mxu0 0.0
  %3239 = vmatpush.msra.mxu0 0.0
  %3240 = vmatpush.msra.mxu0 0.0
  %3241 = vmatpush.msra.mxu0 0.0
  %3242 = vmatpush.msra.mxu0 0.0
  %3243 = vmatpush.msra.mxu0 0.0
  %3244 = vmatpush.msra.mxu0 0.0
  %3245 = vmatpush.msra.mxu0 %v309
  %3246 = vmatpush.msra.mxu0 %v308
  %3247 = vmatmul.f32.gmra.mxu0 %v3229
  %v3248 = vpop.f32.mrf.mxu0
  %v3249 = vadd.f32 0.0, %v3248
  %3250 = vdwg.mxu0
  %v3251 = vadd.f32 %v3228, %v3249
  %v3252 = vtanh.pop %v3251
  %v3253 = vxor.u32 %v3251, 2147483648
  %v3254 = vmul.f32 %v3253, 1.442695
  %v3255 = vpow.pop %v3254
  %v3256 = vadd.f32 %v3255, 1.0
  %v3257 = vrcp.pop %v3256
  %v3258 = vmul.f32 %v3256, %v3257
  %v3259 = vsub.f32 1.0, %v3258
  %v3260 = vmul.f32 %v3257, %v3259
  %v3261 = vadd.f32 %v3257, %v3260
  %vm3262 = vweird.f32 %v3256
  %vm3263 = vweird.f32 %v3257
  %vm3264 = vmor %vm3262, %vm3263
  %v3265 = vsel %vm3264, %v3257, %v3261
  %v3266 = vand.u32 2147483647, %v3256
  %vm3267 = vcmp.eq.f32.partialorder %v3266, 8.507059e+37
  %v3268 = vand.u32 %v3256, 2147483648
  %v3269 = vor.u32 1.1754944e-38, %v3268
  %v3270 = vsel %vm3267, %v3269, %v3265
  %v3271 = vmul.f32 1.0, %v3270
  %v3272 = vsel %vm314, %v3252, %v3271
  %v3273 = vmul.f32 %v3272, %v3214
  %3275 = vrot.lane.b32.xlu0 %v3272, 96
  %v3276 = vpop.permute.xlu0 %3275
  %v3278 = vmul.f32 %v3272, %v3276
  %3280 = vrot.lane.b32.xlu0 %v3278, 16
  %v3281 = vpop.permute.xlu0 %3280
  %v3283 = vadd.f32 %v3273, %v3281
  %v3284 = vtanh.pop %v3283
  %3286 = vrot.lane.b32.xlu0 %v3284, 32
  %v3287 = vpop.permute.xlu0 %3286
  %v3289 = vmul.f32 %v3272, %v3287
  %3291 = vrot.lane.b32.xlu0 %v3289, 80
  %v3292 = vpop.permute.xlu0 %3291
  %s3294 = scalar_lea.vmem [#allocation6], 14
  %3295 = vst.msk [vmem:[%s3294] sm:$0x3] %vm393, %v3292
  %s3296 = scalar_lea.vmem [#allocation5], 16
  %v3297 = vld [vmem:[%s3296] sm:$0x3]
  %v3298 = vsel %vm319, %v3292, 0
  %3300 = vmatpush.msra.mxu0 0.0
  %3301 = vmatpush.msra.mxu0 0.0
  %3302 = vmatpush.msra.mxu0 0.0
  %3303 = vmatpush.msra.mxu0 0.0
  %3304 = vmatpush.msra.mxu0 0.0
  %3305 = vmatpush.msra.mxu0 0.0
  %3306 = vmatpush.msra.mxu0 0.0
  %3307 = vmatpush.msra.mxu0 0.0
  %3308 = vmatpush.msra.mxu0 0.0
  %3309 = vmatpush.msra.mxu0 0.0
  %3310 = vmatpush.msra.mxu0 0.0
  %3311 = vmatpush.msra.mxu0 0.0
  %3312 = vmatpush.msra.mxu0 0.0
  %3313 = vmatpush.msra.mxu0 0.0
  %3314 = vmatpush.msra.mxu0 %v309
  %3315 = vmatpush.msra.mxu0 %v308
  %3316 = vmatmul.f32.gmra.mxu0 %v3298
  %v3317 = vpop.f32.mrf.mxu0
  %v3318 = vadd.f32 0.0, %v3317
  %3319 = vdwg.mxu0
  %v3320 = vadd.f32 %v3297, %v3318
  %v3321 = vtanh.pop %v3320
  %v3322 = vxor.u32 %v3320, 2147483648
  %v3323 = vmul.f32 %v3322, 1.442695
  %v3324 = vpow.pop %v3323
  %v3325 = vadd.f32 %v3324, 1.0
  %v3326 = vrcp.pop %v3325
  %v3327 = vmul.f32 %v3325, %v3326
  %v3328 = vsub.f32 1.0, %v3327
  %v3329 = vmul.f32 %v3326, %v3328
  %v3330 = vadd.f32 %v3326, %v3329
  %vm3331 = vweird.f32 %v3325
  %vm3332 = vweird.f32 %v3326
  %vm3333 = vmor %vm3331, %vm3332
  %v3334 = vsel %vm3333, %v3326, %v3330
  %v3335 = vand.u32 2147483647, %v3325
  %vm3336 = vcmp.eq.f32.partialorder %v3335, 8.507059e+37
  %v3337 = vand.u32 %v3325, 2147483648
  %v3338 = vor.u32 1.1754944e-38, %v3337
  %v3339 = vsel %vm3336, %v3338, %v3334
  %v3340 = vmul.f32 1.0, %v3339
  %v3341 = vsel %vm314, %v3321, %v3340
  %v3342 = vmul.f32 %v3341, %v3283
  %3344 = vrot.lane.b32.xlu0 %v3341, 96
  %v3345 = vpop.permute.xlu0 %3344
  %v3347 = vmul.f32 %v3341, %v3345
  %3349 = vrot.lane.b32.xlu0 %v3347, 16
  %v3350 = vpop.permute.xlu0 %3349
  %v3352 = vadd.f32 %v3342, %v3350
  %v3353 = vtanh.pop %v3352
  %3355 = vrot.lane.b32.xlu0 %v3353, 32
  %v3356 = vpop.permute.xlu0 %3355
  %v3358 = vmul.f32 %v3341, %v3356
  %3360 = vrot.lane.b32.xlu0 %v3358, 80
  %v3361 = vpop.permute.xlu0 %3360
  %s3363 = scalar_lea.vmem [#allocation6], 16
  %3364 = vst.msk [vmem:[%s3363] sm:$0x3] %vm393, %v3361
  %s3365 = scalar_lea.vmem [#allocation5], 18
  %v3366 = vld [vmem:[%s3365] sm:$0x3]
  %v3367 = vsel %vm319, %v3361, 0
  %3369 = vmatpush.msra.mxu0 0.0
  %3370 = vmatpush.msra.mxu0 0.0
  %3371 = vmatpush.msra.mxu0 0.0
  %3372 = vmatpush.msra.mxu0 0.0
  %3373 = vmatpush.msra.mxu0 0.0
  %3374 = vmatpush.msra.mxu0 0.0
  %3375 = vmatpush.msra.mxu0 0.0
  %3376 = vmatpush.msra.mxu0 0.0
  %3377 = vmatpush.msra.mxu0 0.0
  %3378 = vmatpush.msra.mxu0 0.0
  %3379 = vmatpush.msra.mxu0 0.0
  %3380 = vmatpush.msra.mxu0 0.0
  %3381 = vmatpush.msra.mxu0 0.0
  %3382 = vmatpush.msra.mxu0 0.0
  %3383 = vmatpush.msra.mxu0 %v309
  %3384 = vmatpush.msra.mxu0 %v308
  %3385 = vmatmul.f32.gmra.mxu0 %v3367
  %v3386 = vpop.f32.mrf.mxu0
  %v3387 = vadd.f32 0.0, %v3386
  %3388 = vdwg.mxu0
  %v3389 = vadd.f32 %v3366, %v3387
  %v3390 = vtanh.pop %v3389
  %v3391 = vxor.u32 %v3389, 2147483648
  %v3392 = vmul.f32 %v3391, 1.442695
  %v3393 = vpow.pop %v3392
  %v3394 = vadd.f32 %v3393, 1.0
  %v3395 = vrcp.pop %v3394
  %v3396 = vmul.f32 %v3394, %v3395
  %v3397 = vsub.f32 1.0, %v3396
  %v3398 = vmul.f32 %v3395, %v3397
  %v3399 = vadd.f32 %v3395, %v3398
  %vm3400 = vweird.f32 %v3394
  %vm3401 = vweird.f32 %v3395
  %vm3402 = vmor %vm3400, %vm3401
  %v3403 = vsel %vm3402, %v3395, %v3399
  %v3404 = vand.u32 2147483647, %v3394
  %vm3405 = vcmp.eq.f32.partialorder %v3404, 8.507059e+37
  %v3406 = vand.u32 %v3394, 2147483648
  %v3407 = vor.u32 1.1754944e-38, %v3406
  %v3408 = vsel %vm3405, %v3407, %v3403
  %v3409 = vmul.f32 1.0, %v3408
  %v3410 = vsel %vm314, %v3390, %v3409
  %v3411 = vmul.f32 %v3410, %v3352
  %3413 = vrot.lane.b32.xlu0 %v3410, 96
  %v3414 = vpop.permute.xlu0 %3413
  %v3416 = vmul.f32 %v3410, %v3414
  %3418 = vrot.lane.b32.xlu0 %v3416, 16
  %v3419 = vpop.permute.xlu0 %3418
  %v3421 = vadd.f32 %v3411, %v3419
  %v3422 = vtanh.pop %v3421
  %3424 = vrot.lane.b32.xlu0 %v3422, 32
  %v3425 = vpop.permute.xlu0 %3424
  %v3427 = vmul.f32 %v3410, %v3425
  %3429 = vrot.lane.b32.xlu0 %v3427, 80
  %v3430 = vpop.permute.xlu0 %3429
  %s3432 = scalar_lea.vmem [#allocation6], 18
  %3433 = vst.msk [vmem:[%s3432] sm:$0x3] %vm393, %v3430
  %s3434 = scalar_lea.vmem [#allocation5], 20
  %v3435 = vld [vmem:[%s3434] sm:$0x3]
  %v3436 = vsel %vm319, %v3430, 0
  %3438 = vmatpush.msra.mxu0 0.0
  %3439 = vmatpush.msra.mxu0 0.0
  %3440 = vmatpush.msra.mxu0 0.0
  %3441 = vmatpush.msra.mxu0 0.0
  %3442 = vmatpush.msra.mxu0 0.0
  %3443 = vmatpush.msra.mxu0 0.0
  %3444 = vmatpush.msra.mxu0 0.0
  %3445 = vmatpush.msra.mxu0 0.0
  %3446 = vmatpush.msra.mxu0 0.0
  %3447 = vmatpush.msra.mxu0 0.0
  %3448 = vmatpush.msra.mxu0 0.0
  %3449 = vmatpush.msra.mxu0 0.0
  %3450 = vmatpush.msra.mxu0 0.0
  %3451 = vmatpush.msra.mxu0 0.0
  %3452 = vmatpush.msra.mxu0 %v309
  %3453 = vmatpush.msra.mxu0 %v308
  %3454 = vmatmul.f32.gmra.mxu0 %v3436
  %v3455 = vpop.f32.mrf.mxu0
  %v3456 = vadd.f32 0.0, %v3455
  %3457 = vdwg.mxu0
  %v3458 = vadd.f32 %v3435, %v3456
  %v3459 = vtanh.pop %v3458
  %v3460 = vxor.u32 %v3458, 2147483648
  %v3461 = vmul.f32 %v3460, 1.442695
  %v3462 = vpow.pop %v3461
  %v3463 = vadd.f32 %v3462, 1.0
  %v3464 = vrcp.pop %v3463
  %v3465 = vmul.f32 %v3463, %v3464
  %v3466 = vsub.f32 1.0, %v3465
  %v3467 = vmul.f32 %v3464, %v3466
  %v3468 = vadd.f32 %v3464, %v3467
  %vm3469 = vweird.f32 %v3463
  %vm3470 = vweird.f32 %v3464
  %vm3471 = vmor %vm3469, %vm3470
  %v3472 = vsel %vm3471, %v3464, %v3468
  %v3473 = vand.u32 2147483647, %v3463
  %vm3474 = vcmp.eq.f32.partialorder %v3473, 8.507059e+37
  %v3475 = vand.u32 %v3463, 2147483648
  %v3476 = vor.u32 1.1754944e-38, %v3475
  %v3477 = vsel %vm3474, %v3476, %v3472
  %v3478 = vmul.f32 1.0, %v3477
  %v3479 = vsel %vm314, %v3459, %v3478
  %v3480 = vmul.f32 %v3479, %v3421
  %3482 = vrot.lane.b32.xlu0 %v3479, 96
  %v3483 = vpop.permute.xlu0 %3482
  %v3485 = vmul.f32 %v3479, %v3483
  %3487 = vrot.lane.b32.xlu0 %v3485, 16
  %v3488 = vpop.permute.xlu0 %3487
  %v3490 = vadd.f32 %v3480, %v3488
  %v3491 = vtanh.pop %v3490
  %3493 = vrot.lane.b32.xlu0 %v3491, 32
  %v3494 = vpop.permute.xlu0 %3493
  %v3496 = vmul.f32 %v3479, %v3494
  %3498 = vrot.lane.b32.xlu0 %v3496, 80
  %v3499 = vpop.permute.xlu0 %3498
  %s3501 = scalar_lea.vmem [#allocation6], 20
  %3502 = vst.msk [vmem:[%s3501] sm:$0x3] %vm393, %v3499
  %s3503 = scalar_lea.vmem [#allocation5], 22
  %v3504 = vld [vmem:[%s3503] sm:$0x3]
  %v3505 = vsel %vm319, %v3499, 0
  %3507 = vmatpush.msra.mxu0 0.0
  %3508 = vmatpush.msra.mxu0 0.0
  %3509 = vmatpush.msra.mxu0 0.0
  %3510 = vmatpush.msra.mxu0 0.0
  %3511 = vmatpush.msra.mxu0 0.0
  %3512 = vmatpush.msra.mxu0 0.0
  %3513 = vmatpush.msra.mxu0 0.0
  %3514 = vmatpush.msra.mxu0 0.0
  %3515 = vmatpush.msra.mxu0 0.0
  %3516 = vmatpush.msra.mxu0 0.0
  %3517 = vmatpush.msra.mxu0 0.0
  %3518 = vmatpush.msra.mxu0 0.0
  %3519 = vmatpush.msra.mxu0 0.0
  %3520 = vmatpush.msra.mxu0 0.0
  %3521 = vmatpush.msra.mxu0 %v309
  %3522 = vmatpush.msra.mxu0 %v308
  %3523 = vmatmul.f32.gmra.mxu0 %v3505
  %v3524 = vpop.f32.mrf.mxu0
  %v3525 = vadd.f32 0.0, %v3524
  %3526 = vdwg.mxu0
  %v3527 = vadd.f32 %v3504, %v3525
  %v3528 = vtanh.pop %v3527
  %v3529 = vxor.u32 %v3527, 2147483648
  %v3530 = vmul.f32 %v3529, 1.442695
  %v3531 = vpow.pop %v3530
  %v3532 = vadd.f32 %v3531, 1.0
  %v3533 = vrcp.pop %v3532
  %v3534 = vmul.f32 %v3532, %v3533
  %v3535 = vsub.f32 1.0, %v3534
  %v3536 = vmul.f32 %v3533, %v3535
  %v3537 = vadd.f32 %v3533, %v3536
  %vm3538 = vweird.f32 %v3532
  %vm3539 = vweird.f32 %v3533
  %vm3540 = vmor %vm3538, %vm3539
  %v3541 = vsel %vm3540, %v3533, %v3537
  %v3542 = vand.u32 2147483647, %v3532
  %vm3543 = vcmp.eq.f32.partialorder %v3542, 8.507059e+37
  %v3544 = vand.u32 %v3532, 2147483648
  %v3545 = vor.u32 1.1754944e-38, %v3544
  %v3546 = vsel %vm3543, %v3545, %v3541
  %v3547 = vmul.f32 1.0, %v3546
  %v3548 = vsel %vm314, %v3528, %v3547
  %v3549 = vmul.f32 %v3548, %v3490
  %3551 = vrot.lane.b32.xlu0 %v3548, 96
  %v3552 = vpop.permute.xlu0 %3551
  %v3554 = vmul.f32 %v3548, %v3552
  %3556 = vrot.lane.b32.xlu0 %v3554, 16
  %v3557 = vpop.permute.xlu0 %3556
  %v3559 = vadd.f32 %v3549, %v3557
  %v3560 = vtanh.pop %v3559
  %3562 = vrot.lane.b32.xlu0 %v3560, 32
  %v3563 = vpop.permute.xlu0 %3562
  %v3565 = vmul.f32 %v3548, %v3563
  %3567 = vrot.lane.b32.xlu0 %v3565, 80
  %v3568 = vpop.permute.xlu0 %3567
  %s3570 = scalar_lea.vmem [#allocation6], 22
  %3571 = vst.msk [vmem:[%s3570] sm:$0x3] %vm393, %v3568
  %s3572 = scalar_lea.vmem [#allocation5], 24
  %v3573 = vld [vmem:[%s3572] sm:$0x3]
  %v3574 = vsel %vm319, %v3568, 0
  %3576 = vmatpush.msra.mxu0 0.0
  %3577 = vmatpush.msra.mxu0 0.0
  %3578 = vmatpush.msra.mxu0 0.0
  %3579 = vmatpush.msra.mxu0 0.0
  %3580 = vmatpush.msra.mxu0 0.0
  %3581 = vmatpush.msra.mxu0 0.0
  %3582 = vmatpush.msra.mxu0 0.0
  %3583 = vmatpush.msra.mxu0 0.0
  %3584 = vmatpush.msra.mxu0 0.0
  %3585 = vmatpush.msra.mxu0 0.0
  %3586 = vmatpush.msra.mxu0 0.0
  %3587 = vmatpush.msra.mxu0 0.0
  %3588 = vmatpush.msra.mxu0 0.0
  %3589 = vmatpush.msra.mxu0 0.0
  %3590 = vmatpush.msra.mxu0 %v309
  %3591 = vmatpush.msra.mxu0 %v308
  %3592 = vmatmul.f32.gmra.mxu0 %v3574
  %v3593 = vpop.f32.mrf.mxu0
  %v3594 = vadd.f32 0.0, %v3593
  %3595 = vdwg.mxu0
  %v3596 = vadd.f32 %v3573, %v3594
  %v3597 = vtanh.pop %v3596
  %v3598 = vxor.u32 %v3596, 2147483648
  %v3599 = vmul.f32 %v3598, 1.442695
  %v3600 = vpow.pop %v3599
  %v3601 = vadd.f32 %v3600, 1.0
  %v3602 = vrcp.pop %v3601
  %v3603 = vmul.f32 %v3601, %v3602
  %v3604 = vsub.f32 1.0, %v3603
  %v3605 = vmul.f32 %v3602, %v3604
  %v3606 = vadd.f32 %v3602, %v3605
  %vm3607 = vweird.f32 %v3601
  %vm3608 = vweird.f32 %v3602
  %vm3609 = vmor %vm3607, %vm3608
  %v3610 = vsel %vm3609, %v3602, %v3606
  %v3611 = vand.u32 2147483647, %v3601
  %vm3612 = vcmp.eq.f32.partialorder %v3611, 8.507059e+37
  %v3613 = vand.u32 %v3601, 2147483648
  %v3614 = vor.u32 1.1754944e-38, %v3613
  %v3615 = vsel %vm3612, %v3614, %v3610
  %v3616 = vmul.f32 1.0, %v3615
  %v3617 = vsel %vm314, %v3597, %v3616
  %v3618 = vmul.f32 %v3617, %v3559
  %3620 = vrot.lane.b32.xlu0 %v3617, 96
  %v3621 = vpop.permute.xlu0 %3620
  %v3623 = vmul.f32 %v3617, %v3621
  %3625 = vrot.lane.b32.xlu0 %v3623, 16
  %v3626 = vpop.permute.xlu0 %3625
  %v3628 = vadd.f32 %v3618, %v3626
  %v3629 = vtanh.pop %v3628
  %3631 = vrot.lane.b32.xlu0 %v3629, 32
  %v3632 = vpop.permute.xlu0 %3631
  %v3634 = vmul.f32 %v3617, %v3632
  %3636 = vrot.lane.b32.xlu0 %v3634, 80
  %v3637 = vpop.permute.xlu0 %3636
  %s3639 = scalar_lea.vmem [#allocation6], 24
  %3640 = vst.msk [vmem:[%s3639] sm:$0x3] %vm393, %v3637
  %s3641 = scalar_lea.vmem [#allocation5], 26
  %v3642 = vld [vmem:[%s3641] sm:$0x3]
  %v3643 = vsel %vm319, %v3637, 0
  %3645 = vmatpush.msra.mxu0 0.0
  %3646 = vmatpush.msra.mxu0 0.0
  %3647 = vmatpush.msra.mxu0 0.0
  %3648 = vmatpush.msra.mxu0 0.0
  %3649 = vmatpush.msra.mxu0 0.0
  %3650 = vmatpush.msra.mxu0 0.0
  %3651 = vmatpush.msra.mxu0 0.0
  %3652 = vmatpush.msra.mxu0 0.0
  %3653 = vmatpush.msra.mxu0 0.0
  %3654 = vmatpush.msra.mxu0 0.0
  %3655 = vmatpush.msra.mxu0 0.0
  %3656 = vmatpush.msra.mxu0 0.0
  %3657 = vmatpush.msra.mxu0 0.0
  %3658 = vmatpush.msra.mxu0 0.0
  %3659 = vmatpush.msra.mxu0 %v309
  %3660 = vmatpush.msra.mxu0 %v308
  %3661 = vmatmul.f32.gmra.mxu0 %v3643
  %v3662 = vpop.f32.mrf.mxu0
  %v3663 = vadd.f32 0.0, %v3662
  %3664 = vdwg.mxu0
  %v3665 = vadd.f32 %v3642, %v3663
  %v3666 = vtanh.pop %v3665
  %v3667 = vxor.u32 %v3665, 2147483648
  %v3668 = vmul.f32 %v3667, 1.442695
  %v3669 = vpow.pop %v3668
  %v3670 = vadd.f32 %v3669, 1.0
  %v3671 = vrcp.pop %v3670
  %v3672 = vmul.f32 %v3670, %v3671
  %v3673 = vsub.f32 1.0, %v3672
  %v3674 = vmul.f32 %v3671, %v3673
  %v3675 = vadd.f32 %v3671, %v3674
  %vm3676 = vweird.f32 %v3670
  %vm3677 = vweird.f32 %v3671
  %vm3678 = vmor %vm3676, %vm3677
  %v3679 = vsel %vm3678, %v3671, %v3675
  %v3680 = vand.u32 2147483647, %v3670
  %vm3681 = vcmp.eq.f32.partialorder %v3680, 8.507059e+37
  %v3682 = vand.u32 %v3670, 2147483648
  %v3683 = vor.u32 1.1754944e-38, %v3682
  %v3684 = vsel %vm3681, %v3683, %v3679
  %v3685 = vmul.f32 1.0, %v3684
  %v3686 = vsel %vm314, %v3666, %v3685
  %v3687 = vmul.f32 %v3686, %v3628
  %3689 = vrot.lane.b32.xlu0 %v3686, 96
  %v3690 = vpop.permute.xlu0 %3689
  %v3692 = vmul.f32 %v3686, %v3690
  %3694 = vrot.lane.b32.xlu0 %v3692, 16
  %v3695 = vpop.permute.xlu0 %3694
  %v3697 = vadd.f32 %v3687, %v3695
  %v3698 = vtanh.pop %v3697
  %3700 = vrot.lane.b32.xlu0 %v3698, 32
  %v3701 = vpop.permute.xlu0 %3700
  %v3703 = vmul.f32 %v3686, %v3701
  %3705 = vrot.lane.b32.xlu0 %v3703, 80
  %v3706 = vpop.permute.xlu0 %3705
  %s3708 = scalar_lea.vmem [#allocation6], 26
  %3709 = vst.msk [vmem:[%s3708] sm:$0x3] %vm393, %v3706
  %s3710 = scalar_lea.vmem [#allocation5], 28
  %v3711 = vld [vmem:[%s3710] sm:$0x3]
  %v3712 = vsel %vm319, %v3706, 0
  %3714 = vmatpush.msra.mxu0 0.0
  %3715 = vmatpush.msra.mxu0 0.0
  %3716 = vmatpush.msra.mxu0 0.0
  %3717 = vmatpush.msra.mxu0 0.0
  %3718 = vmatpush.msra.mxu0 0.0
  %3719 = vmatpush.msra.mxu0 0.0
  %3720 = vmatpush.msra.mxu0 0.0
  %3721 = vmatpush.msra.mxu0 0.0
  %3722 = vmatpush.msra.mxu0 0.0
  %3723 = vmatpush.msra.mxu0 0.0
  %3724 = vmatpush.msra.mxu0 0.0
  %3725 = vmatpush.msra.mxu0 0.0
  %3726 = vmatpush.msra.mxu0 0.0
  %3727 = vmatpush.msra.mxu0 0.0
  %3728 = vmatpush.msra.mxu0 %v309
  %3729 = vmatpush.msra.mxu0 %v308
  %3730 = vmatmul.f32.gmra.mxu0 %v3712
  %v3731 = vpop.f32.mrf.mxu0
  %v3732 = vadd.f32 0.0, %v3731
  %3733 = vdwg.mxu0
  %v3734 = vadd.f32 %v3711, %v3732
  %v3735 = vtanh.pop %v3734
  %v3736 = vxor.u32 %v3734, 2147483648
  %v3737 = vmul.f32 %v3736, 1.442695
  %v3738 = vpow.pop %v3737
  %v3739 = vadd.f32 %v3738, 1.0
  %v3740 = vrcp.pop %v3739
  %v3741 = vmul.f32 %v3739, %v3740
  %v3742 = vsub.f32 1.0, %v3741
  %v3743 = vmul.f32 %v3740, %v3742
  %v3744 = vadd.f32 %v3740, %v3743
  %vm3745 = vweird.f32 %v3739
  %vm3746 = vweird.f32 %v3740
  %vm3747 = vmor %vm3745, %vm3746
  %v3748 = vsel %vm3747, %v3740, %v3744
  %v3749 = vand.u32 2147483647, %v3739
  %vm3750 = vcmp.eq.f32.partialorder %v3749, 8.507059e+37
  %v3751 = vand.u32 %v3739, 2147483648
  %v3752 = vor.u32 1.1754944e-38, %v3751
  %v3753 = vsel %vm3750, %v3752, %v3748
  %v3754 = vmul.f32 1.0, %v3753
  %v3755 = vsel %vm314, %v3735, %v3754
  %v3756 = vmul.f32 %v3755, %v3697
  %3758 = vrot.lane.b32.xlu0 %v3755, 96
  %v3759 = vpop.permute.xlu0 %3758
  %v3761 = vmul.f32 %v3755, %v3759
  %3763 = vrot.lane.b32.xlu0 %v3761, 16
  %v3764 = vpop.permute.xlu0 %3763
  %v3766 = vadd.f32 %v3756, %v3764
  %v3767 = vtanh.pop %v3766
  %3769 = vrot.lane.b32.xlu0 %v3767, 32
  %v3770 = vpop.permute.xlu0 %3769
  %v3772 = vmul.f32 %v3755, %v3770
  %3774 = vrot.lane.b32.xlu0 %v3772, 80
  %v3775 = vpop.permute.xlu0 %3774
  %s3777 = scalar_lea.vmem [#allocation6], 28
  %3778 = vst.msk [vmem:[%s3777] sm:$0x3] %vm393, %v3775
  %s3779 = scalar_lea.vmem [#allocation5], 30
  %v3780 = vld [vmem:[%s3779] sm:$0x3]
  %v3781 = vsel %vm319, %v3775, 0
  %3783 = vmatpush.msra.mxu0 0.0
  %3784 = vmatpush.msra.mxu0 0.0
  %3785 = vmatpush.msra.mxu0 0.0
  %3786 = vmatpush.msra.mxu0 0.0
  %3787 = vmatpush.msra.mxu0 0.0
  %3788 = vmatpush.msra.mxu0 0.0
  %3789 = vmatpush.msra.mxu0 0.0
  %3790 = vmatpush.msra.mxu0 0.0
  %3791 = vmatpush.msra.mxu0 0.0
  %3792 = vmatpush.msra.mxu0 0.0
  %3793 = vmatpush.msra.mxu0 0.0
  %3794 = vmatpush.msra.mxu0 0.0
  %3795 = vmatpush.msra.mxu0 0.0
  %3796 = vmatpush.msra.mxu0 0.0
  %3797 = vmatpush.msra.mxu0 %v309
  %3798 = vmatpush.msra.mxu0 %v308
  %3799 = vmatmul.f32.gmra.mxu0 %v3781
  %v3800 = vpop.f32.mrf.mxu0
  %v3801 = vadd.f32 0.0, %v3800
  %3802 = vdwg.mxu0
  %v3803 = vadd.f32 %v3780, %v3801
  %v3804 = vtanh.pop %v3803
  %v3805 = vxor.u32 %v3803, 2147483648
  %v3806 = vmul.f32 %v3805, 1.442695
  %v3807 = vpow.pop %v3806
  %v3808 = vadd.f32 %v3807, 1.0
  %v3809 = vrcp.pop %v3808
  %v3810 = vmul.f32 %v3808, %v3809
  %v3811 = vsub.f32 1.0, %v3810
  %v3812 = vmul.f32 %v3809, %v3811
  %v3813 = vadd.f32 %v3809, %v3812
  %vm3814 = vweird.f32 %v3808
  %vm3815 = vweird.f32 %v3809
  %vm3816 = vmor %vm3814, %vm3815
  %v3817 = vsel %vm3816, %v3809, %v3813
  %v3818 = vand.u32 2147483647, %v3808
  %vm3819 = vcmp.eq.f32.partialorder %v3818, 8.507059e+37
  %v3820 = vand.u32 %v3808, 2147483648
  %v3821 = vor.u32 1.1754944e-38, %v3820
  %v3822 = vsel %vm3819, %v3821, %v3817
  %v3823 = vmul.f32 1.0, %v3822
  %v3824 = vsel %vm314, %v3804, %v3823
  %v3825 = vmul.f32 %v3824, %v3766
  %3827 = vrot.lane.b32.xlu0 %v3824, 96
  %v3828 = vpop.permute.xlu0 %3827
  %v3830 = vmul.f32 %v3824, %v3828
  %3832 = vrot.lane.b32.xlu0 %v3830, 16
  %v3833 = vpop.permute.xlu0 %3832
  %v3835 = vadd.f32 %v3825, %v3833
  %v3836 = vtanh.pop %v3835
  %3838 = vrot.lane.b32.xlu0 %v3836, 32
  %v3839 = vpop.permute.xlu0 %3838
  %v3841 = vmul.f32 %v3824, %v3839
  %3843 = vrot.lane.b32.xlu0 %v3841, 80
  %v3844 = vpop.permute.xlu0 %3843
  %s3846 = scalar_lea.vmem [#allocation6], 30
  %3847 = vst.msk [vmem:[%s3846] sm:$0x3] %vm393, %v3844
  %v3848 = vld [vmem:[%s15] sm:$0xff]
  %v3849 = vld [vmem:[%s15 + $0x8] sm:$0xff]
  %v3850 = vld [vmem:[%s16] sm:$0x1]
  %v3851 = vld [vmem:[%s17] sm:$0xff]
  %v3852 = vld [vmem:[%s17 + $0x8] sm:$0xff]
  %v3853 = vld [vmem:[%s17 + $0x10] sm:$0xff]
  %v3854 = vld [vmem:[%s17 + $0x18] sm:$0xff]
  %v3855 = vld [vmem:[%s17 + $0x20] sm:$0xff]
  %v3856 = vld [vmem:[%s17 + $0x28] sm:$0xff]
  %v3857 = vld [vmem:[%s17 + $0x30] sm:$0xff]
  %v3858 = vld [vmem:[%s17 + $0x38] sm:$0xff]
  %v3859 = vld [vmem:[%s17 + $0x40] sm:$0xff]
  %v3860 = vld [vmem:[%s17 + $0x48] sm:$0xff]
  %v3861 = vld [vmem:[%s17 + $0x50] sm:$0xff]
  %v3862 = vld [vmem:[%s17 + $0x58] sm:$0xff]
  %v3863 = vld [vmem:[%s18] sm:$0x1]
  %v3864 = vlaneseq
  %v3865 = vshrl.u32 %v3864, 7
  %v3866 = vadd.s32 %v3865, 8
  %v3867 = vld [vmem:[%s3] sm:$0x1]
  %v3868 = vperm.slane %v3867, 0
  %vm3869 = vcmp.lt.s32.totalorder %v3865, %v3868
  %vm3870 = vcmp.lt.s32.totalorder %v3866, %v3868
  %v3871 = vsel %vm3869, 1, 0
  %v3872 = vsel %vm3870, 1, 0
  %v3873 = vcvt.s32.f32 %v3871
  %v3874 = vcvt.s32.f32 %v3872
  %v3875 = vld [vmem:[#allocation6] sm:$0x3]
  %v3876 = vld [vmem:[#allocation6 + $0x2] sm:$0x3]
  %v3877 = vld [vmem:[#allocation6 + $0x4] sm:$0x3]
  %v3878 = vld [vmem:[#allocation6 + $0x6] sm:$0x3]
  %v3879 = vld [vmem:[#allocation6 + $0x8] sm:$0x3]
  %v3880 = vld [vmem:[#allocation6 + $0xa] sm:$0x3]
  %v3881 = vld [vmem:[#allocation6 + $0xc] sm:$0x3]
  %v3882 = vld [vmem:[#allocation6 + $0xe] sm:$0x3]
  %v3883 = vld [vmem:[#allocation6 + $0x10] sm:$0x3]
  %v3884 = vld [vmem:[#allocation6 + $0x12] sm:$0x3]
  %v3885 = vld [vmem:[#allocation6 + $0x14] sm:$0x3]
  %v3886 = vld [vmem:[#allocation6 + $0x16] sm:$0x3]
  %v3887 = vld [vmem:[#allocation6 + $0x18] sm:$0x3]
  %v3888 = vld [vmem:[#allocation6 + $0x1a] sm:$0x3]
  %v3889 = vld [vmem:[#allocation6 + $0x1c] sm:$0x3]
  %v3890 = vld [vmem:[#allocation6 + $0x1e] sm:$0x3]
  %v3892 = vperm.slane %v3850, 0
  %v3910 = vrot.slane %v3876, 7
  %vm3911 = vcmask 1041409
  %v3912 = vsel %vm3911, %v3910, %v3875
  %v3913 = vrot.slane %v3877, 6
  %vm3914 = vcmask 1042434
  %v3915 = vsel %vm3914, %v3913, %v3912
  %v3916 = vrot.slane %v3878, 5
  %vm3917 = vcmask 1043459
  %v3918 = vsel %vm3917, %v3916, %v3915
  %v3919 = vrot.slane %v3879, 4
  %vm3920 = vcmask 1044484
  %v3921 = vsel %vm3920, %v3919, %v3918
  %v3922 = vrot.slane %v3880, 3
  %vm3923 = vcmask 1045509
  %v3924 = vsel %vm3923, %v3922, %v3921
  %v3925 = vrot.slane %v3881, 2
  %vm3926 = vcmask 1046534
  %v3927 = vsel %vm3926, %v3925, %v3924
  %v3928 = vrot.slane %v3882, 1
  %vm3929 = vcmask 1047559
  %v3930 = vsel %vm3929, %v3928, %v3927
  %v3931 = vrot.slane %v3884, 7
  %v3932 = vsel %vm3911, %v3931, %v3883
  %v3933 = vrot.slane %v3885, 6
  %v3934 = vsel %vm3914, %v3933, %v3932
  %v3935 = vrot.slane %v3886, 5
  %v3936 = vsel %vm3917, %v3935, %v3934
  %v3937 = vrot.slane %v3887, 4
  %v3938 = vsel %vm3920, %v3937, %v3936
  %v3939 = vrot.slane %v3888, 3
  %v3940 = vsel %vm3923, %v3939, %v3938
  %v3941 = vrot.slane %v3889, 2
  %v3942 = vsel %vm3926, %v3941, %v3940
  %v3943 = vrot.slane %v3890, 1
  %v3944 = vsel %vm3929, %v3943, %v3942
  %v3945 = vsel %vm319, %v3930, 0
  %v3947 = vsel %vm319, %v3944, 0
  %3949 = vmatpush.msra.mxu0 0.0
  %3950 = vmatpush.msra.mxu0 0.0
  %3951 = vmatpush.msra.mxu0 0.0
  %3952 = vmatpush.msra.mxu0 0.0
  %3953 = vmatpush.msra.mxu0 0.0
  %3954 = vmatpush.msra.mxu0 0.0
  %3955 = vmatpush.msra.mxu0 0.0
  %3956 = vmatpush.msra.mxu0 0.0
  %3957 = vmatpush.msra.mxu0 0.0
  %3958 = vmatpush.msra.mxu0 0.0
  %3959 = vmatpush.msra.mxu0 0.0
  %3960 = vmatpush.msra.mxu0 0.0
  %3961 = vmatpush.msra.mxu0 0.0
  %3962 = vmatpush.msra.mxu0 0.0
  %3963 = vmatpush.msra.mxu0 %v3849
  %3964 = vmatpush.msra.mxu0 %v3848
  %3965 = vmatmul.f32.gmra.mxu0 %v3945
  %v3966 = vpop.f32.mrf.mxu0
  %v3967 = vadd.f32 %v3892, %v3966
  %3968 = vmatmul.f32.gmra.mxu0 %v3947
  %v3969 = vpop.f32.mrf.mxu0
  %v3970 = vadd.f32 %v3892, %v3969
  %3971 = vdwg.mxu0
  %v3972 = vtanh.pop %v3967
  %v3973 = vtanh.pop %v3970
  %v3975 = vperm.slane %v3863, 0
  %vm3977 = vcmask 785408
  %v3979 = vsel %vm3977, %v3972, 0
  %v3982 = vsel %vm3977, %v3973, 0
  %3984 = vmatpush.msra.mxu0 0.0
  %3985 = vmatpush.msra.mxu0 0.0
  %3986 = vmatpush.msra.mxu0 0.0
  %3987 = vmatpush.msra.mxu0 0.0
  %3988 = vmatpush.msra.mxu0 %v3862
  %3989 = vmatpush.msra.mxu0 %v3861
  %3990 = vmatpush.msra.mxu0 %v3860
  %3991 = vmatpush.msra.mxu0 %v3859
  %3992 = vmatpush.msra.mxu0 %v3858
  %3993 = vmatpush.msra.mxu0 %v3857
  %3994 = vmatpush.msra.mxu0 %v3856
  %3995 = vmatpush.msra.mxu0 %v3855
  %3996 = vmatpush.msra.mxu0 %v3854
  %3997 = vmatpush.msra.mxu0 %v3853
  %3998 = vmatpush.msra.mxu0 %v3852
  %3999 = vmatpush.msra.mxu0 %v3851
  %4000 = vmatmul.f32.gmra.mxu0 %v3979
  %v4001 = vpop.f32.mrf.mxu0
  %v4002 = vadd.f32 %v3975, %v4001
  %4003 = vmatmul.f32.gmra.mxu0 %v3982
  %v4004 = vpop.f32.mrf.mxu0
  %v4005 = vadd.f32 %v3975, %v4004
  %4006 = vdwg.mxu0
  %4008 = vset.pattern.permute.xlu0 0
  %4009 = vperm.xlu0 %4008, %v3873
  %v4010 = vpop.permute.xlu0 %4009
  %4013 = vset.pattern.permute.xlu0 0
  %4014 = vperm.xlu0 %4013, %v3874
  %v4015 = vpop.permute.xlu0 %4014
  %v4017 = vmul.f32 %v4002, %v4010
  %v4018 = vmul.f32 %v4005, %v4015
  %vm4019 = vcmask 23552
  %v4020 = vsel %vm4019, %v4017, -inf
  %v4021 = vsel %vm4019, %v4018, -inf
  %v4022 = vmax.f32 %v4020, %v4021
  %v4023 = vrot.slane %v4022, 4
  %v4024 = vmax.f32 %v4022, %v4023
  %v4025 = vrot.slane %v4024, 2
  %v4026 = vmax.f32 %v4024, %v4025
  %v4027 = vrot.slane %v4026, 1
  %v4028 = vmax.f32 %v4026, %v4027
  %v4029 = vsub.f32 %v4017, %v4028
  %v4030 = vsub.f32 %v4018, %v4028
  %v4031 = vmul.f32 %v4029, 1.442695
  %v4032 = vpow.pop %v4031
  %v4033 = vmul.f32 %v4030, 1.442695
  %v4034 = vpow.pop %v4033
  %v4035 = vsel %vm4019, %v4032, 0.0
  %v4036 = vsel %vm4019, %v4034, 0.0
  %v4037 = vadd.f32 %v4035, %v4036
  %v4038 = vrot.slane %v4037, 4
  %v4039 = vadd.f32 %v4037, %v4038
  %v4040 = vrot.slane %v4039, 2
  %v4041 = vadd.f32 %v4039, %v4040
  %v4042 = vrot.slane %v4041, 1
  %v4043 = vadd.f32 %v4041, %v4042
  %v4044 = vrcp.pop %v4043
  %v4045 = vmul.f32 %v4043, %v4044
  %v4046 = vsub.f32 1.0, %v4045
  %v4047 = vmul.f32 %v4044, %v4046
  %v4048 = vadd.f32 %v4044, %v4047
  %vm4049 = vweird.f32 %v4043
  %vm4050 = vweird.f32 %v4044
  %vm4051 = vmor %vm4049, %vm4050
  %v4052 = vsel %vm4051, %v4044, %v4048
  %v4053 = vand.u32 2147483647, %v4043
  %vm4054 = vcmp.eq.f32.partialorder %v4053, 8.507059e+37
  %v4055 = vand.u32 %v4043, 2147483648
  %v4056 = vor.u32 1.1754944e-38, %v4055
  %v4057 = vsel %vm4054, %v4056, %v4052
  %v4058 = vmul.f32 %v4032, %v4057
  %v4059 = vmul.f32 %v4034, %v4057
  %v4060 = vmul.f32 %v4058, %v4010
  %v4061 = vmul.f32 %v4059, %v4015
  %v4062 = vsel %vm4019, %v4060, 0.0
  %v4063 = vsel %vm4019, %v4061, 0.0
  %v4064 = vadd.f32 %v4062, %v4063
  %v4065 = vrot.slane %v4064, 4
  %v4066 = vadd.f32 %v4064, %v4065
  %v4067 = vrot.slane %v4066, 2
  %v4068 = vadd.f32 %v4066, %v4067
  %v4069 = vrot.slane %v4068, 1
  %v4070 = vadd.f32 %v4068, %v4069
  %v4071 = vadd.f32 %v4070, 1e-13
  %v4072 = vrcp.pop %v4071
  %v4073 = vmul.f32 %v4071, %v4072
  %v4074 = vsub.f32 1.0, %v4073
  %v4075 = vmul.f32 %v4072, %v4074
  %v4076 = vadd.f32 %v4072, %v4075
  %vm4077 = vweird.f32 %v4071
  %vm4078 = vweird.f32 %v4072
  %vm4079 = vmor %vm4077, %vm4078
  %v4080 = vsel %vm4079, %v4072, %v4076
  %v4081 = vand.u32 2147483647, %v4071
  %vm4082 = vcmp.eq.f32.partialorder %v4081, 8.507059e+37
  %v4083 = vand.u32 %v4071, 2147483648
  %v4084 = vor.u32 1.1754944e-38, %v4083
  %v4085 = vsel %vm4082, %v4084, %v4080
  %v4086 = vmul.f32 %v4060, %v4085
  %v4087 = vmul.f32 %v4061, %v4085
  %v4088 = vadd.f32 %v4086, 1e-13
  %v4089 = vadd.f32 %v4087, 1e-13
  %4090 = vst.msk [vmem:[%s19] sm:$0xff] %vm4019, %v4088
  %4091 = vst.msk [vmem:[%s19 + $0x8] sm:$0xff] %vm4019, %v4089
  %v4092 = vrot.slane %v3875, 1
  %v4093 = vsel %vm3911, %v3876, %v4092
  %v4094 = vrot.slane %v3877, 7
  %v4095 = vsel %vm3914, %v4094, %v4093
  %v4096 = vrot.slane %v3878, 6
  %v4097 = vsel %vm3917, %v4096, %v4095
  %v4098 = vrot.slane %v3879, 5
  %v4099 = vsel %vm3920, %v4098, %v4097
  %v4100 = vrot.slane %v3880, 4
  %v4101 = vsel %vm3923, %v4100, %v4099
  %v4102 = vrot.slane %v3881, 3
  %v4103 = vsel %vm3926, %v4102, %v4101
  %v4104 = vrot.slane %v3882, 2
  %v4105 = vsel %vm3929, %v4104, %v4103
  %v4106 = vrot.slane %v3883, 1
  %v4107 = vsel %vm3911, %v3884, %v4106
  %v4108 = vrot.slane %v3885, 7
  %v4109 = vsel %vm3914, %v4108, %v4107
  %v4110 = vrot.slane %v3886, 6
  %v4111 = vsel %vm3917, %v4110, %v4109
  %v4112 = vrot.slane %v3887, 5
  %v4113 = vsel %vm3920, %v4112, %v4111
  %v4114 = vrot.slane %v3888, 4
  %v4115 = vsel %vm3923, %v4114, %v4113
  %v4116 = vrot.slane %v3889, 3
  %v4117 = vsel %vm3926, %v4116, %v4115
  %v4118 = vrot.slane %v3890, 2
  %v4119 = vsel %vm3929, %v4118, %v4117
  %v4120 = vsel %vm319, %v4105, 0
  %v4122 = vsel %vm319, %v4119, 0
  %4124 = vmatpush.msra.mxu0 0.0
  %4125 = vmatpush.msra.mxu0 0.0
  %4126 = vmatpush.msra.mxu0 0.0
  %4127 = vmatpush.msra.mxu0 0.0
  %4128 = vmatpush.msra.mxu0 0.0
  %4129 = vmatpush.msra.mxu0 0.0
  %4130 = vmatpush.msra.mxu0 0.0
  %4131 = vmatpush.msra.mxu0 0.0
  %4132 = vmatpush.msra.mxu0 0.0
  %4133 = vmatpush.msra.mxu0 0.0
  %4134 = vmatpush.msra.mxu0 0.0
  %4135 = vmatpush.msra.mxu0 0.0
  %4136 = vmatpush.msra.mxu0 0.0
  %4137 = vmatpush.msra.mxu0 0.0
  %4138 = vmatpush.msra.mxu0 %v3849
  %4139 = vmatpush.msra.mxu0 %v3848
  %4140 = vmatmul.f32.gmra.mxu0 %v4120
  %v4141 = vpop.f32.mrf.mxu0
  %v4142 = vadd.f32 %v3892, %v4141
  %4143 = vmatmul.f32.gmra.mxu0 %v4122
  %v4144 = vpop.f32.mrf.mxu0
  %v4145 = vadd.f32 %v3892, %v4144
  %4146 = vdwg.mxu0
  %v4147 = vtanh.pop %v4142
  %v4148 = vtanh.pop %v4145
  %v4150 = vsel %vm3977, %v4147, 0
  %v4153 = vsel %vm3977, %v4148, 0
  %4155 = vmatpush.msra.mxu0 0.0
  %4156 = vmatpush.msra.mxu0 0.0
  %4157 = vmatpush.msra.mxu0 0.0
  %4158 = vmatpush.msra.mxu0 0.0
  %4159 = vmatpush.msra.mxu0 %v3862
  %4160 = vmatpush.msra.mxu0 %v3861
  %4161 = vmatpush.msra.mxu0 %v3860
  %4162 = vmatpush.msra.mxu0 %v3859
  %4163 = vmatpush.msra.mxu0 %v3858
  %4164 = vmatpush.msra.mxu0 %v3857
  %4165 = vmatpush.msra.mxu0 %v3856
  %4166 = vmatpush.msra.mxu0 %v3855
  %4167 = vmatpush.msra.mxu0 %v3854
  %4168 = vmatpush.msra.mxu0 %v3853
  %4169 = vmatpush.msra.mxu0 %v3852
  %4170 = vmatpush.msra.mxu0 %v3851
  %4171 = vmatmul.f32.gmra.mxu0 %v4150
  %v4172 = vpop.f32.mrf.mxu0
  %v4173 = vadd.f32 %v3975, %v4172
  %4174 = vmatmul.f32.gmra.mxu0 %v4153
  %v4175 = vpop.f32.mrf.mxu0
  %v4176 = vadd.f32 %v3975, %v4175
  %4177 = vdwg.mxu0
  %4178 = vset.pattern.permute.xlu0 1
  %4179 = vperm.xlu0 %4178, %v3873
  %v4180 = vpop.permute.xlu0 %4179
  %4182 = vset.pattern.permute.xlu0 1
  %4183 = vperm.xlu0 %4182, %v3874
  %v4184 = vpop.permute.xlu0 %4183
  %v4186 = vmul.f32 %v4173, %v4180
  %v4187 = vmul.f32 %v4176, %v4184
  %v4188 = vsel %vm4019, %v4186, -inf
  %v4189 = vsel %vm4019, %v4187, -inf
  %v4190 = vmax.f32 %v4188, %v4189
  %v4191 = vrot.slane %v4190, 4
  %v4192 = vmax.f32 %v4190, %v4191
  %v4193 = vrot.slane %v4192, 2
  %v4194 = vmax.f32 %v4192, %v4193
  %v4195 = vrot.slane %v4194, 1
  %v4196 = vmax.f32 %v4194, %v4195
  %v4197 = vsub.f32 %v4186, %v4196
  %v4198 = vsub.f32 %v4187, %v4196
  %v4199 = vmul.f32 %v4197, 1.442695
  %v4200 = vpow.pop %v4199
  %v4201 = vmul.f32 %v4198, 1.442695
  %v4202 = vpow.pop %v4201
  %v4203 = vsel %vm4019, %v4200, 0.0
  %v4204 = vsel %vm4019, %v4202, 0.0
  %v4205 = vadd.f32 %v4203, %v4204
  %v4206 = vrot.slane %v4205, 4
  %v4207 = vadd.f32 %v4205, %v4206
  %v4208 = vrot.slane %v4207, 2
  %v4209 = vadd.f32 %v4207, %v4208
  %v4210 = vrot.slane %v4209, 1
  %v4211 = vadd.f32 %v4209, %v4210
  %v4212 = vrcp.pop %v4211
  %v4213 = vmul.f32 %v4211, %v4212
  %v4214 = vsub.f32 1.0, %v4213
  %v4215 = vmul.f32 %v4212, %v4214
  %v4216 = vadd.f32 %v4212, %v4215
  %vm4217 = vweird.f32 %v4211
  %vm4218 = vweird.f32 %v4212
  %vm4219 = vmor %vm4217, %vm4218
  %v4220 = vsel %vm4219, %v4212, %v4216
  %v4221 = vand.u32 2147483647, %v4211
  %vm4222 = vcmp.eq.f32.partialorder %v4221, 8.507059e+37
  %v4223 = vand.u32 %v4211, 2147483648
  %v4224 = vor.u32 1.1754944e-38, %v4223
  %v4225 = vsel %vm4222, %v4224, %v4220
  %v4226 = vmul.f32 %v4200, %v4225
  %v4227 = vmul.f32 %v4202, %v4225
  %v4228 = vmul.f32 %v4226, %v4180
  %v4229 = vmul.f32 %v4227, %v4184
  %v4230 = vsel %vm4019, %v4228, 0.0
  %v4231 = vsel %vm4019, %v4229, 0.0
  %v4232 = vadd.f32 %v4230, %v4231
  %v4233 = vrot.slane %v4232, 4
  %v4234 = vadd.f32 %v4232, %v4233
  %v4235 = vrot.slane %v4234, 2
  %v4236 = vadd.f32 %v4234, %v4235
  %v4237 = vrot.slane %v4236, 1
  %v4238 = vadd.f32 %v4236, %v4237
  %v4239 = vadd.f32 %v4238, 1e-13
  %v4240 = vrcp.pop %v4239
  %v4241 = vmul.f32 %v4239, %v4240
  %v4242 = vsub.f32 1.0, %v4241
  %v4243 = vmul.f32 %v4240, %v4242
  %v4244 = vadd.f32 %v4240, %v4243
  %vm4245 = vweird.f32 %v4239
  %vm4246 = vweird.f32 %v4240
  %vm4247 = vmor %vm4245, %vm4246
  %v4248 = vsel %vm4247, %v4240, %v4244
  %v4249 = vand.u32 2147483647, %v4239
  %vm4250 = vcmp.eq.f32.partialorder %v4249, 8.507059e+37
  %v4251 = vand.u32 %v4239, 2147483648
  %v4252 = vor.u32 1.1754944e-38, %v4251
  %v4253 = vsel %vm4250, %v4252, %v4248
  %v4254 = vmul.f32 %v4228, %v4253
  %v4255 = vmul.f32 %v4229, %v4253
  %v4256 = vadd.f32 %v4254, 1e-13
  %v4257 = vadd.f32 %v4255, 1e-13
  %s4258 = scalar_lea.vmem %s19, 16
  %4259 = vst.msk [vmem:[%s4258] sm:$0xff] %vm4019, %v4256
  %4260 = vst.msk [vmem:[%s4258 + $0x8] sm:$0xff] %vm4019, %v4257
  %v4261 = vld [vmem:[#allocation4] sm:$0x3]
  %v4262 = vld [vmem:[#allocation4 + $0x2] sm:$0x3]
  %v4263 = vld [vmem:[#allocation4 + $0x4] sm:$0x3]
  %v4264 = vld [vmem:[#allocation4 + $0x6] sm:$0x3]
  %v4265 = vld [vmem:[#allocation4 + $0x8] sm:$0x3]
  %v4266 = vld [vmem:[#allocation4 + $0xa] sm:$0x3]
  %v4267 = vld [vmem:[#allocation4 + $0xc] sm:$0x3]
  %v4268 = vld [vmem:[#allocation4 + $0xe] sm:$0x3]
  %v4269 = vld [vmem:[#allocation4 + $0x10] sm:$0x3]
  %v4270 = vld [vmem:[#allocation4 + $0x12] sm:$0x3]
  %v4271 = vld [vmem:[#allocation4 + $0x14] sm:$0x3]
  %v4272 = vld [vmem:[#allocation4 + $0x16] sm:$0x3]
  %v4273 = vld [vmem:[#allocation4 + $0x18] sm:$0x3]
  %v4274 = vld [vmem:[#allocation4 + $0x1a] sm:$0x3]
  %v4275 = vld [vmem:[#allocation4 + $0x1c] sm:$0x3]
  %v4276 = vld [vmem:[#allocation4 + $0x1e] sm:$0x3]
  %4293 = vset.pattern.permute.xlu0 0
  %4294 = vperm.xlu0 %4293, %v4261
  %v4295 = vpop.permute.xlu0 %4294
  %4296 = vset.pattern.permute.xlu0 0
  %4297 = vperm.xlu0 %4296, %v4262
  %v4298 = vpop.permute.xlu0 %4297
  %4299 = vset.pattern.permute.xlu0 0
  %4300 = vperm.xlu0 %4299, %v4263
  %v4301 = vpop.permute.xlu0 %4300
  %4302 = vset.pattern.permute.xlu0 0
  %4303 = vperm.xlu0 %4302, %v4264
  %v4304 = vpop.permute.xlu0 %4303
  %4305 = vset.pattern.permute.xlu0 0
  %4306 = vperm.xlu0 %4305, %v4265
  %v4307 = vpop.permute.xlu0 %4306
  %4308 = vset.pattern.permute.xlu0 0
  %4309 = vperm.xlu0 %4308, %v4266
  %v4310 = vpop.permute.xlu0 %4309
  %4311 = vset.pattern.permute.xlu0 0
  %4312 = vperm.xlu0 %4311, %v4267
  %v4313 = vpop.permute.xlu0 %4312
  %4314 = vset.pattern.permute.xlu0 0
  %4315 = vperm.xlu0 %4314, %v4268
  %v4316 = vpop.permute.xlu0 %4315
  %4317 = vset.pattern.permute.xlu0 0
  %4318 = vperm.xlu0 %4317, %v4269
  %v4319 = vpop.permute.xlu0 %4318
  %4320 = vset.pattern.permute.xlu0 0
  %4321 = vperm.xlu0 %4320, %v4270
  %v4322 = vpop.permute.xlu0 %4321
  %4323 = vset.pattern.permute.xlu0 0
  %4324 = vperm.xlu0 %4323, %v4271
  %v4325 = vpop.permute.xlu0 %4324
  %4326 = vset.pattern.permute.xlu0 0
  %4327 = vperm.xlu0 %4326, %v4272
  %v4328 = vpop.permute.xlu0 %4327
  %4329 = vset.pattern.permute.xlu0 0
  %4330 = vperm.xlu0 %4329, %v4273
  %v4331 = vpop.permute.xlu0 %4330
  %4332 = vset.pattern.permute.xlu0 0
  %4333 = vperm.xlu0 %4332, %v4274
  %v4334 = vpop.permute.xlu0 %4333
  %4335 = vset.pattern.permute.xlu0 0
  %4336 = vperm.xlu0 %4335, %v4275
  %v4337 = vpop.permute.xlu0 %4336
  %4338 = vset.pattern.permute.xlu0 0
  %4339 = vperm.xlu0 %4338, %v4276
  %v4340 = vpop.permute.xlu0 %4339
  %v4341 = vperm.slane %v4295, %v311
  %v4342 = vperm.slane %v4298, %v311
  %v4343 = vperm.slane %v4301, %v311
  %v4344 = vperm.slane %v4304, %v311
  %v4345 = vperm.slane %v4307, %v311
  %v4346 = vperm.slane %v4310, %v311
  %v4347 = vperm.slane %v4313, %v311
  %v4348 = vperm.slane %v4316, %v311
  %v4349 = vperm.slane %v4319, %v311
  %v4350 = vperm.slane %v4322, %v311
  %v4351 = vperm.slane %v4325, %v311
  %v4352 = vperm.slane %v4328, %v311
  %v4353 = vperm.slane %v4331, %v311
  %v4354 = vperm.slane %v4334, %v311
  %v4355 = vperm.slane %v4337, %v311
  %v4356 = vperm.slane %v4340, %v311
  %v4357 = vsel %vm3911, %v4342, %v4341
  %v4358 = vsel %vm3914, %v4343, %v4357
  %v4359 = vsel %vm3917, %v4344, %v4358
  %v4360 = vsel %vm3920, %v4345, %v4359
  %v4361 = vsel %vm3923, %v4346, %v4360
  %v4362 = vsel %vm3926, %v4347, %v4361
  %v4363 = vsel %vm3929, %v4348, %v4362
  %v4364 = vsel %vm3911, %v4350, %v4349
  %v4365 = vsel %vm3914, %v4351, %v4364
  %v4366 = vsel %vm3917, %v4352, %v4365
  %v4367 = vsel %vm3920, %v4353, %v4366
  %v4368 = vsel %vm3923, %v4354, %v4367
  %v4369 = vsel %vm3926, %v4355, %v4368
  %v4370 = vsel %vm3929, %v4356, %v4369
  %vm4373 = vcmask 15360
  %4374 = vst.msk [vmem:[%s20] sm:$0xff] %vm4373, %v4363
  %4375 = vst.msk [vmem:[%s20 + $0x8] sm:$0xff] %vm4373, %v4370
  // Predicated region
  $region78: #{localization_acrm_forward.1} parent=0 // pred_check
    _
  $region79: #{localization_acrm_forward.1} parent=0 // pred_check_branch
    %4377 = sbr.rel (0) target = $region81
  $region80: #{localization_acrm_forward.1} parent=0 // pred_region
    _
  $region81: #{localization_acrm_forward.1} parent=0 // pred_fallthru
    _
  // Predicated region
  $region82: #{localization_acrm_forward.1} parent=0 // pred_check
    _
  $region83: #{localization_acrm_forward.1} parent=0 // pred_check_branch
    %4379 = sbr.rel (0) target = $region85
  $region84: #{localization_acrm_forward.1} parent=0 // pred_region
    _
  $region85: #{localization_acrm_forward.1} parent=0 // pred_fallthru
    _
  // Predicated region
  $region86: #{localization_acrm_forward.1} parent=0 // pred_check
    _
  $region87: #{localization_acrm_forward.1} parent=0 // pred_check_branch
    %4381 = sbr.rel (0) target = $region89
  $region88: #{localization_acrm_forward.1} parent=0 // pred_region
    _
  $region89: #{localization_acrm_forward.1} parent=0 // pred_fallthru
    _
  // Predicated region
  $region90: #{localization_acrm_forward.1} parent=0 // pred_check
    _
  $region91: #{localization_acrm_forward.1} parent=0 // pred_check_branch
    %4383 = sbr.rel (0) target = $region93
  $region92: #{localization_acrm_forward.1} parent=0 // pred_region
    _
  $region93: #{localization_acrm_forward.1} parent=0 // pred_fallthru
    _

</llo_original>
